<compile_context>
chip_gen: v7x
topology: tpu7x:2x2x1
jax: 0.10.0
libtpu: 0.0.40
codegen_flags: <defaults>
</compile_context>

<pallas_src>
import jax
import jax.numpy as jnp
import numpy as np
from jax import lax
from jax.experimental import pallas as pl
from jax.experimental.pallas import tpu as pltpu

BN_EPS = 1e-5   # nn.BatchNorm2d default eps


def _vmem_limit_bytes():
    """~3/4 of per-core VMEM: ~96 MiB on v5e/v6e (128 MiB), ~48 MiB on v7x (64 MiB)."""
    try:
        cap = pltpu.get_tpu_info().vmem_capacity_bytes
    except Exception:
        cap = 64 * 1024 * 1024   # conservative fallback, safe on every generation
    return int(cap * 3 // 4)


def conv_layer_2d(x, weight, gamma, beta, *, stride=1, dilation=1):
    """ConvLayer2d forward: Conv2d(bias=False, padding=(k-1)//2) -> BatchNorm2d -> SiLU.

    x: (N, C_in, H, W) NCHW f32; weight: (C_out, C_in, kh, kw); gamma/beta: (C_out,).
    """
    N, C_in, H, W = x.shape
    C_out, _, kh, kw = weight.shape
    pad = (kh - 1) // 2   # matches int((kernel_size - 1) / 2); exact for odd kernels
    H_out = (H + 2 * pad - dilation * (kh - 1) - 1) // stride + 1
    W_out = (W + 2 * pad - dilation * (kw - 1) - 1) // stride + 1
    Hp, Wp = H + 2 * pad, W + 2 * pad
    M_img = H_out * W_out
    n_taps = kh * kw

    # Operand prep (NCHW->NHWC + zero pad + bf16 cast fuse into one small XLA copy).
    # bf16 operands halve input HBM reads and double MXU rate; accumulation stays f32.
    xp = jnp.pad(jnp.transpose(x, (0, 2, 3, 1)),
                 ((0, 0), (pad, pad), (pad, pad), (0, 0))).astype(jnp.bfloat16)
    # weight (C_out, C_in, kh, kw) -> (kh*kw, C_in, C_out): one (Cin, Cout) slice per tap.
    w_taps = jnp.transpose(weight, (2, 3, 1, 0)).reshape(n_taps, C_in, C_out)
    w_taps = w_taps.astype(jnp.bfloat16)

    def _conv_image(x_ref, w_ref):
        """Direct conv of one padded NHWC image via tap accumulation -> (M_img, C_out) f32."""
        acc = jnp.zeros((M_img, C_out), jnp.float32)
        for t in range(n_taps):                       # unrolled: LLO-visible, no grid overhead
            i, j = divmod(t, kw)
            r0, c0 = i * dilation, j * dilation
            if stride == 1:
                win = x_ref[0, r0:r0 + H_out, c0:c0 + W_out, :]
            else:
                win = x_ref[0, pl.ds(r0, H_out, stride), pl.ds(c0, W_out, stride), :]
            acc = acc + jnp.dot(win.reshape(M_img, C_in), w_ref[t],
                                preferred_element_type=jnp.float32)
        return acc

    def _stats_kernel(x_ref, w_ref, sum_ref, ssq_ref):
        y = _conv_image(x_ref, w_ref)                       # (M_img, C_out) f32
        s = jnp.sum(y, axis=0, keepdims=True)               # (1, C_out)
        d = y - s * (1.0 / M_img)                           # centered -> no cancellation
        sum_ref[0] = s
        ssq_ref[0] = jnp.sum(d * d, axis=0, keepdims=True)

    def _out_kernel(x_ref, w_ref, scale_ref, shift_ref, o_ref):
        y = _conv_image(x_ref, w_ref)                       # (M_img, C_out) f32
        z = y * scale_ref[...] + shift_ref[...]             # folded BN affine (VPU)
        # SiLU (EUP) + in-kernel transpose (XLU, idle here) -> lane-dense flat-NCHW store.
        o_ref[0] = (z * jax.nn.sigmoid(z)).T.astype(o_ref.dtype)

    vmem_limit = _vmem_limit_bytes()
    x_spec = pl.BlockSpec((1, Hp, Wp, C_in), lambda n: (n, 0, 0, 0))
    w_spec = pl.BlockSpec((n_taps, C_in, C_out), lambda n: (0, 0, 0))   # resident
    conv_flops = 2 * N * M_img * n_taps * C_in * C_out

    # ---- pass 1: per-image conv -> per-channel (sum, centered sumsq) only ----------- #
    sums, ssqs = pl.pallas_call(
        _stats_kernel,
        out_shape=(jax.ShapeDtypeStruct((N, 1, C_out), jnp.float32),
                   jax.ShapeDtypeStruct((N, 1, C_out), jnp.float32)),
        grid=(N,),
        in_specs=[x_spec, w_spec],
        out_specs=(pl.BlockSpec((1, 1, C_out), lambda n: (n, 0, 0)),
                   pl.BlockSpec((1, 1, C_out), lambda n: (n, 0, 0))),
        compiler_params=pltpu.CompilerParams(
            dimension_semantics=("parallel",),               # images split across v7x TCs
            vmem_limit_bytes=vmem_limit),
        cost_estimate=pl.CostEstimate(
            flops=conv_flops + 4 * N * M_img * C_out,
            transcendentals=0,
            bytes_accessed=xp.size * 2 + w_taps.size * 2 + 2 * N * C_out * 4),
    )(xp, w_taps)

    # ---- global train-mode BN stats (pooled within/between image), tiny, in f32 ----- #
    sums = sums.reshape(N, C_out)
    ssqs = ssqs.reshape(N, C_out)
    M_total = N * M_img
    mean = jnp.sum(sums, axis=0) / M_total                   # biased stats over N*Ho*Wo
    mu_img = sums / M_img
    var = (jnp.sum(ssqs, axis=0)
           + M_img * jnp.sum((mu_img - mean[None, :]) ** 2, axis=0)) / M_total
    var = jnp.maximum(var, 0.0)
    scale = gamma.astype(jnp.float32) * lax.rsqrt(var + BN_EPS)   # (C_out,)
    shift = beta.astype(jnp.float32) - mean * scale

    # ---- pass 2: conv recompute fused with BN affine + SiLU, flat-NCHW output ------- #
    out_flat = pl.pallas_call(
        _out_kernel,
        out_shape=jax.ShapeDtypeStruct((N, C_out, M_img), jnp.float32),
        grid=(N,),
        in_specs=[x_spec, w_spec,
                  pl.BlockSpec((1, C_out), lambda n: (0, 0)),     # resident scale
                  pl.BlockSpec((1, C_out), lambda n: (0, 0))],    # resident shift
        out_specs=pl.BlockSpec((1, C_out, M_img), lambda n: (n, 0, 0)),
        compiler_params=pltpu.CompilerParams(
            dimension_semantics=("parallel",),
            vmem_limit_bytes=vmem_limit),
        cost_estimate=pl.CostEstimate(
            flops=conv_flops + 5 * N * M_img * C_out,
            transcendentals=N * M_img * C_out,
            bytes_accessed=xp.size * 2 + w_taps.size * 2
                           + N * C_out * M_img * 4 + 2 * C_out * 4),
    )(xp, w_taps, scale.reshape(1, C_out), shift.reshape(1, C_out))

    # Already channel-major / spatially-flat NCHW -> reshape is free (no XLA transpose).
    return out_flat.reshape(N, C_out, H_out, W_out)


def _reference(x, weight, gamma, beta, *, stride=1, dilation=1):
    """Pure-JAX reference of the PyTorch forward (train-mode BN), full f32."""
    C_out, _, kh, kw = weight.shape
    pad = (kh - 1) // 2
    y = lax.conv_general_dilated(
        x.astype(jnp.float32), weight.astype(jnp.float32),
        window_strides=(stride, stride),
        padding=[(pad, pad), (pad, pad)],
        rhs_dilation=(dilation, dilation),
        dimension_numbers=("NCHW", "OIHW", "NCHW"),
        precision=lax.Precision.HIGHEST)
    mean = jnp.mean(y, axis=(0, 2, 3), keepdims=True)
    var = jnp.mean((y - mean) ** 2, axis=(0, 2, 3), keepdims=True)
    y_hat = (y - mean) * lax.rsqrt(var + BN_EPS)
    z = y_hat * gamma.reshape(1, C_out, 1, 1) + beta.reshape(1, C_out, 1, 1)
    return z * jax.nn.sigmoid(z)


if __name__ == "__main__":
    # Small shapes consistent with the module: in_channels=4, out_channels=8, k=3.
    N, C_in, H, W = 2, 4, 16, 16
    C_out, ksize = 8, 3

    key = jax.random.PRNGKey(0)
    kx, kw_, kg, kb = jax.random.split(key, 4)
    x = jax.random.normal(kx, (N, C_in, H, W), dtype=jnp.float32)
    weight = 0.1 * jax.random.normal(kw_, (C_out, C_in, ksize, ksize), dtype=jnp.float32)
    gamma = 1.0 + 0.1 * jax.random.normal(kg, (C_out,), dtype=jnp.float32)
    beta = 0.1 * jax.random.normal(kb, (C_out,), dtype=jnp.float32)

    out = jax.block_until_ready(jax.jit(conv_layer_2d)(x, weight, gamma, beta))
    ref = jax.block_until_ready(_reference(x, weight, gamma, beta))

    assert out.shape == (N, C_out, H, W), out.shape
    # Kernel feeds bf16 operands to the MXU (f32 accumulation / f32 BN+SiLU epilogue),
    # so compare against the full-f32 reference with a bf16-appropriate tolerance.
    np.testing.assert_allclose(np.asarray(out), np.asarray(ref), rtol=2e-2, atol=2e-2)
    print("KERNEL_OK")
</pallas_src>

<mosaic_0001>
module attributes {stable_mosaic.version = 11 : i64} {
  func.func @_stats_kernel(%arg0: i32, %arg1: memref<1x18x18x4xbf16, #tpu.memory_space<vmem>>, %arg2: memref<9x4x8xbf16, #tpu.memory_space<vmem>>, %arg3: memref<1x1x8xf32, #tpu.memory_space<vmem>>, %arg4: memref<1x1x8xf32, #tpu.memory_space<vmem>>) attributes {dimension_semantics = [#tpu.dimension_semantics<parallel>], iteration_bounds = array<i64: 2>, scalar_prefetch = 0 : i64, scratch_operands = 0 : i64, tpu.core_type = #tpu.core_type<tc>, window_params = [{transform_indices = @transform_0, window_bounds = array<i64: 1, 18, 18, 4>}, {pipeline_mode = #tpu.pipeline_mode<synchronous>, transform_indices = @transform_1, window_bounds = array<i64: 9, 4, 8>}, {transform_indices = @transform_2, window_bounds = array<i64: 1, 1, 8>}, {transform_indices = @transform_3, window_bounds = array<i64: 1, 1, 8>}]} {
    %cst = arith.constant 0.000000e+00 : f32
    %0 = vector.broadcast %cst : f32 to vector<256x8xf32>
    %c0 = arith.constant 0 : index
    %c0_0 = arith.constant 0 : index
    %c0_1 = arith.constant 0 : index
    %c0_2 = arith.constant 0 : index
    %1 = vector.load %arg1[%c0, %c0_0, %c0_1, %c0_2] : memref<1x18x18x4xbf16, #tpu.memory_space<vmem>>, vector<1x16x16x4xbf16>
    %2 = vector.shape_cast %1 : vector<1x16x16x4xbf16> to vector<16x16x4xbf16>
    %3 = vector.shape_cast %2 : vector<16x16x4xbf16> to vector<256x4xbf16>
    %c0_3 = arith.constant 0 : index
    %c0_4 = arith.constant 0 : index
    %c0_5 = arith.constant 0 : index
    %4 = vector.load %arg2[%c0_3, %c0_4, %c0_5] : memref<9x4x8xbf16, #tpu.memory_space<vmem>>, vector<1x4x8xbf16>
    %5 = vector.shape_cast %4 : vector<1x4x8xbf16> to vector<4x8xbf16>
    %cst_6 = arith.constant dense<0.000000e+00> : vector<256x8xf32>
    %6 = tpu.matmul %3, %5, %cst_6 {dimension_numbers = #tpu.dot_dimension_numbers<[1], [0], [0], [1], [0, 0, 1, 1], [], []>} : vector<256x4xbf16>, vector<4x8xbf16>, vector<256x8xf32> -> vector<256x8xf32>
    %7 = arith.addf %0, %6 : vector<256x8xf32>
    %c0_7 = arith.constant 0 : index
    %c0_8 = arith.constant 0 : index
    %c1 = arith.constant 1 : index
    %c0_9 = arith.constant 0 : index
    %8 = vector.load %arg1[%c0_7, %c0_8, %c1, %c0_9] : memref<1x18x18x4xbf16, #tpu.memory_space<vmem>>, vector<1x16x16x4xbf16>
    %9 = vector.shape_cast %8 : vector<1x16x16x4xbf16> to vector<16x16x4xbf16>
    %10 = vector.shape_cast %9 : vector<16x16x4xbf16> to vector<256x4xbf16>
    %c1_10 = arith.constant 1 : index
    %c0_11 = arith.constant 0 : index
    %c0_12 = arith.constant 0 : index
    %11 = vector.load %arg2[%c1_10, %c0_11, %c0_12] : memref<9x4x8xbf16, #tpu.memory_space<vmem>>, vector<1x4x8xbf16>
    %12 = vector.shape_cast %11 : vector<1x4x8xbf16> to vector<4x8xbf16>
    %cst_13 = arith.constant dense<0.000000e+00> : vector<256x8xf32>
    %13 = tpu.matmul %10, %12, %cst_13 {dimension_numbers = #tpu.dot_dimension_numbers<[1], [0], [0], [1], [0, 0, 1, 1], [], []>} : vector<256x4xbf16>, vector<4x8xbf16>, vector<256x8xf32> -> vector<256x8xf32>
    %14 = arith.addf %7, %13 : vector<256x8xf32>
    %c0_14 = arith.constant 0 : index
    %c0_15 = arith.constant 0 : index
    %c2 = arith.constant 2 : index
    %c0_16 = arith.constant 0 : index
    %15 = vector.load %arg1[%c0_14, %c0_15, %c2, %c0_16] : memref<1x18x18x4xbf16, #tpu.memory_space<vmem>>, vector<1x16x16x4xbf16>
    %16 = vector.shape_cast %15 : vector<1x16x16x4xbf16> to vector<16x16x4xbf16>
    %17 = vector.shape_cast %16 : vector<16x16x4xbf16> to vector<256x4xbf16>
    %c2_17 = arith.constant 2 : index
    %c0_18 = arith.constant 0 : index
    %c0_19 = arith.constant 0 : index
    %18 = vector.load %arg2[%c2_17, %c0_18, %c0_19] : memref<9x4x8xbf16, #tpu.memory_space<vmem>>, vector<1x4x8xbf16>
    %19 = vector.shape_cast %18 : vector<1x4x8xbf16> to vector<4x8xbf16>
    %cst_20 = arith.constant dense<0.000000e+00> : vector<256x8xf32>
    %20 = tpu.matmul %17, %19, %cst_20 {dimension_numbers = #tpu.dot_dimension_numbers<[1], [0], [0], [1], [0, 0, 1, 1], [], []>} : vector<256x4xbf16>, vector<4x8xbf16>, vector<256x8xf32> -> vector<256x8xf32>
    %21 = arith.addf %14, %20 : vector<256x8xf32>
    %c0_21 = arith.constant 0 : index
    %c1_22 = arith.constant 1 : index
    %c0_23 = arith.constant 0 : index
    %c0_24 = arith.constant 0 : index
    %22 = vector.load %arg1[%c0_21, %c1_22, %c0_23, %c0_24] : memref<1x18x18x4xbf16, #tpu.memory_space<vmem>>, vector<1x16x16x4xbf16>
    %23 = vector.shape_cast %22 : vector<1x16x16x4xbf16> to vector<16x16x4xbf16>
    %24 = vector.shape_cast %23 : vector<16x16x4xbf16> to vector<256x4xbf16>
    %c3 = arith.constant 3 : index
    %c0_25 = arith.constant 0 : index
    %c0_26 = arith.constant 0 : index
    %25 = vector.load %arg2[%c3, %c0_25, %c0_26] : memref<9x4x8xbf16, #tpu.memory_space<vmem>>, vector<1x4x8xbf16>
    %26 = vector.shape_cast %25 : vector<1x4x8xbf16> to vector<4x8xbf16>
    %cst_27 = arith.constant dense<0.000000e+00> : vector<256x8xf32>
    %27 = tpu.matmul %24, %26, %cst_27 {dimension_numbers = #tpu.dot_dimension_numbers<[1], [0], [0], [1], [0, 0, 1, 1], [], []>} : vector<256x4xbf16>, vector<4x8xbf16>, vector<256x8xf32> -> vector<256x8xf32>
    %28 = arith.addf %21, %27 : vector<256x8xf32>
    %c0_28 = arith.constant 0 : index
    %c1_29 = arith.constant 1 : index
    %c1_30 = arith.constant 1 : index
    %c0_31 = arith.constant 0 : index
    %29 = vector.load %arg1[%c0_28, %c1_29, %c1_30, %c0_31] : memref<1x18x18x4xbf16, #tpu.memory_space<vmem>>, vector<1x16x16x4xbf16>
    %30 = vector.shape_cast %29 : vector<1x16x16x4xbf16> to vector<16x16x4xbf16>
    %31 = vector.shape_cast %30 : vector<16x16x4xbf16> to vector<256x4xbf16>
    %c4 = arith.constant 4 : index
    %c0_32 = arith.constant 0 : index
    %c0_33 = arith.constant 0 : index
    %32 = vector.load %arg2[%c4, %c0_32, %c0_33] : memref<9x4x8xbf16, #tpu.memory_space<vmem>>, vector<1x4x8xbf16>
    %33 = vector.shape_cast %32 : vector<1x4x8xbf16> to vector<4x8xbf16>
    %cst_34 = arith.constant dense<0.000000e+00> : vector<256x8xf32>
    %34 = tpu.matmul %31, %33, %cst_34 {dimension_numbers = #tpu.dot_dimension_numbers<[1], [0], [0], [1], [0, 0, 1, 1], [], []>} : vector<256x4xbf16>, vector<4x8xbf16>, vector<256x8xf32> -> vector<256x8xf32>
    %35 = arith.addf %28, %34 : vector<256x8xf32>
    %c0_35 = arith.constant 0 : index
    %c1_36 = arith.constant 1 : index
    %c2_37 = arith.constant 2 : index
    %c0_38 = arith.constant 0 : index
    %36 = vector.load %arg1[%c0_35, %c1_36, %c2_37, %c0_38] : memref<1x18x18x4xbf16, #tpu.memory_space<vmem>>, vector<1x16x16x4xbf16>
    %37 = vector.shape_cast %36 : vector<1x16x16x4xbf16> to vector<16x16x4xbf16>
    %38 = vector.shape_cast %37 : vector<16x16x4xbf16> to vector<256x4xbf16>
    %c5 = arith.constant 5 : index
    %c0_39 = arith.constant 0 : index
    %c0_40 = arith.constant 0 : index
    %39 = vector.load %arg2[%c5, %c0_39, %c0_40] : memref<9x4x8xbf16, #tpu.memory_space<vmem>>, vector<1x4x8xbf16>
    %40 = vector.shape_cast %39 : vector<1x4x8xbf16> to vector<4x8xbf16>
    %cst_41 = arith.constant dense<0.000000e+00> : vector<256x8xf32>
    %41 = tpu.matmul %38, %40, %cst_41 {dimension_numbers = #tpu.dot_dimension_numbers<[1], [0], [0], [1], [0, 0, 1, 1], [], []>} : vector<256x4xbf16>, vector<4x8xbf16>, vector<256x8xf32> -> vector<256x8xf32>
    %42 = arith.addf %35, %41 : vector<256x8xf32>
    %c0_42 = arith.constant 0 : index
    %c2_43 = arith.constant 2 : index
    %c0_44 = arith.constant 0 : index
    %c0_45 = arith.constant 0 : index
    %43 = vector.load %arg1[%c0_42, %c2_43, %c0_44, %c0_45] : memref<1x18x18x4xbf16, #tpu.memory_space<vmem>>, vector<1x16x16x4xbf16>
    %44 = vector.shape_cast %43 : vector<1x16x16x4xbf16> to vector<16x16x4xbf16>
    %45 = vector.shape_cast %44 : vector<16x16x4xbf16> to vector<256x4xbf16>
    %c6 = arith.constant 6 : index
    %c0_46 = arith.constant 0 : index
    %c0_47 = arith.constant 0 : index
    %46 = vector.load %arg2[%c6, %c0_46, %c0_47] : memref<9x4x8xbf16, #tpu.memory_space<vmem>>, vector<1x4x8xbf16>
    %47 = vector.shape_cast %46 : vector<1x4x8xbf16> to vector<4x8xbf16>
    %cst_48 = arith.constant dense<0.000000e+00> : vector<256x8xf32>
    %48 = tpu.matmul %45, %47, %cst_48 {dimension_numbers = #tpu.dot_dimension_numbers<[1], [0], [0], [1], [0, 0, 1, 1], [], []>} : vector<256x4xbf16>, vector<4x8xbf16>, vector<256x8xf32> -> vector<256x8xf32>
    %49 = arith.addf %42, %48 : vector<256x8xf32>
    %c0_49 = arith.constant 0 : index
    %c2_50 = arith.constant 2 : index
    %c1_51 = arith.constant 1 : index
    %c0_52 = arith.constant 0 : index
    %50 = vector.load %arg1[%c0_49, %c2_50, %c1_51, %c0_52] : memref<1x18x18x4xbf16, #tpu.memory_space<vmem>>, vector<1x16x16x4xbf16>
    %51 = vector.shape_cast %50 : vector<1x16x16x4xbf16> to vector<16x16x4xbf16>
    %52 = vector.shape_cast %51 : vector<16x16x4xbf16> to vector<256x4xbf16>
    %c7 = arith.constant 7 : index
    %c0_53 = arith.constant 0 : index
    %c0_54 = arith.constant 0 : index
    %53 = vector.load %arg2[%c7, %c0_53, %c0_54] : memref<9x4x8xbf16, #tpu.memory_space<vmem>>, vector<1x4x8xbf16>
    %54 = vector.shape_cast %53 : vector<1x4x8xbf16> to vector<4x8xbf16>
    %cst_55 = arith.constant dense<0.000000e+00> : vector<256x8xf32>
    %55 = tpu.matmul %52, %54, %cst_55 {dimension_numbers = #tpu.dot_dimension_numbers<[1], [0], [0], [1], [0, 0, 1, 1], [], []>} : vector<256x4xbf16>, vector<4x8xbf16>, vector<256x8xf32> -> vector<256x8xf32>
    %56 = arith.addf %49, %55 : vector<256x8xf32>
    %c0_56 = arith.constant 0 : index
    %c2_57 = arith.constant 2 : index
    %c2_58 = arith.constant 2 : index
    %c0_59 = arith.constant 0 : index
    %57 = vector.load %arg1[%c0_56, %c2_57, %c2_58, %c0_59] : memref<1x18x18x4xbf16, #tpu.memory_space<vmem>>, vector<1x16x16x4xbf16>
    %58 = vector.shape_cast %57 : vector<1x16x16x4xbf16> to vector<16x16x4xbf16>
    %59 = vector.shape_cast %58 : vector<16x16x4xbf16> to vector<256x4xbf16>
    %c8 = arith.constant 8 : index
    %c0_60 = arith.constant 0 : index
    %c0_61 = arith.constant 0 : index
    %60 = vector.load %arg2[%c8, %c0_60, %c0_61] : memref<9x4x8xbf16, #tpu.memory_space<vmem>>, vector<1x4x8xbf16>
    %61 = vector.shape_cast %60 : vector<1x4x8xbf16> to vector<4x8xbf16>
    %cst_62 = arith.constant dense<0.000000e+00> : vector<256x8xf32>
    %62 = tpu.matmul %59, %61, %cst_62 {dimension_numbers = #tpu.dot_dimension_numbers<[1], [0], [0], [1], [0, 0, 1, 1], [], []>} : vector<256x4xbf16>, vector<4x8xbf16>, vector<256x8xf32> -> vector<256x8xf32>
    %63 = arith.addf %56, %62 : vector<256x8xf32>
    %cst_63 = arith.constant dense<0.000000e+00> : vector<8xf32>
    %64 = vector.multi_reduction <add>, %63, %cst_63 [0] : vector<256x8xf32> to vector<8xf32>
    %65 = vector.shape_cast %64 : vector<8xf32> to vector<1x8xf32>
    %cst_64 = arith.constant 3.906250e-03 : f32
    %66 = vector.broadcast %cst_64 : f32 to vector<1x8xf32>
    %67 = arith.mulf %65, %66 : vector<1x8xf32>
    %68 = vector.broadcast %67 : vector<1x8xf32> to vector<256x8xf32>
    %69 = arith.subf %63, %68 : vector<256x8xf32>
    %c0_65 = arith.constant 0 : index
    %c0_66 = arith.constant 0 : index
    %c0_67 = arith.constant 0 : index
    %70 = vector.load %arg3[%c0_65, %c0_66, %c0_67] : memref<1x1x8xf32, #tpu.memory_space<vmem>>, vector<1x1x8xf32>
    %71 = vector.shape_cast %70 : vector<1x1x8xf32> to vector<1x8xf32>
    %72 = vector.shape_cast %65 : vector<1x8xf32> to vector<1x1x8xf32>
    tpu.vector_store %arg3[%c0_65, %c0_66, %c0_67], %72 {strides = array<i32>} : memref<1x1x8xf32, #tpu.memory_space<vmem>>, vector<1x1x8xf32>,
    %73 = arith.mulf %69, %69 : vector<256x8xf32>
    %cst_68 = arith.constant dense<0.000000e+00> : vector<8xf32>
    %74 = vector.multi_reduction <add>, %73, %cst_68 [0] : vector<256x8xf32> to vector<8xf32>
    %75 = vector.shape_cast %74 : vector<8xf32> to vector<1x8xf32>
    %c0_69 = arith.constant 0 : index
    %c0_70 = arith.constant 0 : index
    %c0_71 = arith.constant 0 : index
    %76 = vector.load %arg4[%c0_69, %c0_70, %c0_71] : memref<1x1x8xf32, #tpu.memory_space<vmem>>, vector<1x1x8xf32>
    %77 = vector.shape_cast %76 : vector<1x1x8xf32> to vector<1x8xf32>
    %78 = vector.shape_cast %75 : vector<1x8xf32> to vector<1x1x8xf32>
    tpu.vector_store %arg4[%c0_69, %c0_70, %c0_71], %78 {strides = array<i32>} : memref<1x1x8xf32, #tpu.memory_space<vmem>>, vector<1x1x8xf32>,
    return
  }
  func.func @transform_0(%arg0: i32) -> (i32, i32, i32, i32) {
    %c0_i32 = arith.constant 0 : i32
    %c0_i32_0 = arith.constant 0 : i32
    %c0_i32_1 = arith.constant 0 : i32
    %c0_i32_2 = arith.constant 0 : i32
    return %arg0, %c0_i32, %c0_i32_0, %c0_i32_1 : i32, i32, i32, i32
  }
  func.func @transform_1(%arg0: i32) -> (i32, i32, i32) {
    %c0_i32 = arith.constant 0 : i32
    %c0_i32_0 = arith.constant 0 : i32
    %c0_i32_1 = arith.constant 0 : i32
    %c0_i32_2 = arith.constant 0 : i32
    return %c0_i32, %c0_i32_0, %c0_i32_1 : i32, i32, i32
  }
  func.func @transform_2(%arg0: i32) -> (i32, i32, i32) {
    %c0_i32 = arith.constant 0 : i32
    %c0_i32_0 = arith.constant 0 : i32
    %c0_i32_1 = arith.constant 0 : i32
    return %arg0, %c0_i32, %c0_i32_0 : i32, i32, i32
  }
  func.func @transform_3(%arg0: i32) -> (i32, i32, i32) {
    %c0_i32 = arith.constant 0 : i32
    %c0_i32_0 = arith.constant 0 : i32
    %c0_i32_1 = arith.constant 0 : i32
    return %arg0, %c0_i32, %c0_i32_0 : i32, i32, i32
  }
}

module attributes {stable_mosaic.version = 11 : i64} {
  func.func @_out_kernel(%arg0: i32, %arg1: memref<1x18x18x4xbf16, #tpu.memory_space<vmem>>, %arg2: memref<9x4x8xbf16, #tpu.memory_space<vmem>>, %arg3: memref<1x8xf32, #tpu.memory_space<vmem>>, %arg4: memref<1x8xf32, #tpu.memory_space<vmem>>, %arg5: memref<1x8x256xf32, #tpu.memory_space<vmem>>) attributes {dimension_semantics = [#tpu.dimension_semantics<parallel>], iteration_bounds = array<i64: 2>, scalar_prefetch = 0 : i64, scratch_operands = 0 : i64, tpu.core_type = #tpu.core_type<tc>, window_params = [{transform_indices = @transform_0, window_bounds = array<i64: 1, 18, 18, 4>}, {pipeline_mode = #tpu.pipeline_mode<synchronous>, transform_indices = @transform_1, window_bounds = array<i64: 9, 4, 8>}, {pipeline_mode = #tpu.pipeline_mode<synchronous>, transform_indices = @transform_2, window_bounds = array<i64: 1, 8>}, {pipeline_mode = #tpu.pipeline_mode<synchronous>, transform_indices = @transform_3, window_bounds = array<i64: 1, 8>}, {transform_indices = @transform_4, window_bounds = array<i64: 1, 8, 256>}]} {
    %cst = arith.constant 0.000000e+00 : f32
    %0 = vector.broadcast %cst : f32 to vector<256x8xf32>
    %c0 = arith.constant 0 : index
    %c0_0 = arith.constant 0 : index
    %c0_1 = arith.constant 0 : index
    %c0_2 = arith.constant 0 : index
    %1 = vector.load %arg1[%c0, %c0_0, %c0_1, %c0_2] : memref<1x18x18x4xbf16, #tpu.memory_space<vmem>>, vector<1x16x16x4xbf16>
    %2 = vector.shape_cast %1 : vector<1x16x16x4xbf16> to vector<16x16x4xbf16>
    %3 = vector.shape_cast %2 : vector<16x16x4xbf16> to vector<256x4xbf16>
    %c0_3 = arith.constant 0 : index
    %c0_4 = arith.constant 0 : index
    %c0_5 = arith.constant 0 : index
    %4 = vector.load %arg2[%c0_3, %c0_4, %c0_5] : memref<9x4x8xbf16, #tpu.memory_space<vmem>>, vector<1x4x8xbf16>
    %5 = vector.shape_cast %4 : vector<1x4x8xbf16> to vector<4x8xbf16>
    %cst_6 = arith.constant dense<0.000000e+00> : vector<256x8xf32>
    %6 = tpu.matmul %3, %5, %cst_6 {dimension_numbers = #tpu.dot_dimension_numbers<[1], [0], [0], [1], [0, 0, 1, 1], [], []>} : vector<256x4xbf16>, vector<4x8xbf16>, vector<256x8xf32> -> vector<256x8xf32>
    %7 = arith.addf %0, %6 : vector<256x8xf32>
    %c0_7 = arith.constant 0 : index
    %c0_8 = arith.constant 0 : index
    %c1 = arith.constant 1 : index
    %c0_9 = arith.constant 0 : index
    %8 = vector.load %arg1[%c0_7, %c0_8, %c1, %c0_9] : memref<1x18x18x4xbf16, #tpu.memory_space<vmem>>, vector<1x16x16x4xbf16>
    %9 = vector.shape_cast %8 : vector<1x16x16x4xbf16> to vector<16x16x4xbf16>
    %10 = vector.shape_cast %9 : vector<16x16x4xbf16> to vector<256x4xbf16>
    %c1_10 = arith.constant 1 : index
    %c0_11 = arith.constant 0 : index
    %c0_12 = arith.constant 0 : index
    %11 = vector.load %arg2[%c1_10, %c0_11, %c0_12] : memref<9x4x8xbf16, #tpu.memory_space<vmem>>, vector<1x4x8xbf16>
    %12 = vector.shape_cast %11 : vector<1x4x8xbf16> to vector<4x8xbf16>
    %cst_13 = arith.constant dense<0.000000e+00> : vector<256x8xf32>
    %13 = tpu.matmul %10, %12, %cst_13 {dimension_numbers = #tpu.dot_dimension_numbers<[1], [0], [0], [1], [0, 0, 1, 1], [], []>} : vector<256x4xbf16>, vector<4x8xbf16>, vector<256x8xf32> -> vector<256x8xf32>
    %14 = arith.addf %7, %13 : vector<256x8xf32>
    %c0_14 = arith.constant 0 : index
    %c0_15 = arith.constant 0 : index
    %c2 = arith.constant 2 : index
    %c0_16 = arith.constant 0 : index
    %15 = vector.load %arg1[%c0_14, %c0_15, %c2, %c0_16] : memref<1x18x18x4xbf16, #tpu.memory_space<vmem>>, vector<1x16x16x4xbf16>
    %16 = vector.shape_cast %15 : vector<1x16x16x4xbf16> to vector<16x16x4xbf16>
    %17 = vector.shape_cast %16 : vector<16x16x4xbf16> to vector<256x4xbf16>
    %c2_17 = arith.constant 2 : index
    %c0_18 = arith.constant 0 : index
    %c0_19 = arith.constant 0 : index
    %18 = vector.load %arg2[%c2_17, %c0_18, %c0_19] : memref<9x4x8xbf16, #tpu.memory_space<vmem>>, vector<1x4x8xbf16>
    %19 = vector.shape_cast %18 : vector<1x4x8xbf16> to vector<4x8xbf16>
    %cst_20 = arith.constant dense<0.000000e+00> : vector<256x8xf32>
    %20 = tpu.matmul %17, %19, %cst_20 {dimension_numbers = #tpu.dot_dimension_numbers<[1], [0], [0], [1], [0, 0, 1, 1], [], []>} : vector<256x4xbf16>, vector<4x8xbf16>, vector<256x8xf32> -> vector<256x8xf32>
    %21 = arith.addf %14, %20 : vector<256x8xf32>
    %c0_21 = arith.constant 0 : index
    %c1_22 = arith.constant 1 : index
    %c0_23 = arith.constant 0 : index
    %c0_24 = arith.constant 0 : index
    %22 = vector.load %arg1[%c0_21, %c1_22, %c0_23, %c0_24] : memref<1x18x18x4xbf16, #tpu.memory_space<vmem>>, vector<1x16x16x4xbf16>
    %23 = vector.shape_cast %22 : vector<1x16x16x4xbf16> to vector<16x16x4xbf16>
    %24 = vector.shape_cast %23 : vector<16x16x4xbf16> to vector<256x4xbf16>
    %c3 = arith.constant 3 : index
    %c0_25 = arith.constant 0 : index
    %c0_26 = arith.constant 0 : index
    %25 = vector.load %arg2[%c3, %c0_25, %c0_26] : memref<9x4x8xbf16, #tpu.memory_space<vmem>>, vector<1x4x8xbf16>
    %26 = vector.shape_cast %25 : vector<1x4x8xbf16> to vector<4x8xbf16>
    %cst_27 = arith.constant dense<0.000000e+00> : vector<256x8xf32>
    %27 = tpu.matmul %24, %26, %cst_27 {dimension_numbers = #tpu.dot_dimension_numbers<[1], [0], [0], [1], [0, 0, 1, 1], [], []>} : vector<256x4xbf16>, vector<4x8xbf16>, vector<256x8xf32> -> vector<256x8xf32>
    %28 = arith.addf %21, %27 : vector<256x8xf32>
    %c0_28 = arith.constant 0 : index
    %c1_29 = arith.constant 1 : index
    %c1_30 = arith.constant 1 : index
    %c0_31 = arith.constant 0 : index
    %29 = vector.load %arg1[%c0_28, %c1_29, %c1_30, %c0_31] : memref<1x18x18x4xbf16, #tpu.memory_space<vmem>>, vector<1x16x16x4xbf16>
    %30 = vector.shape_cast %29 : vector<1x16x16x4xbf16> to vector<16x16x4xbf16>
    %31 = vector.shape_cast %30 : vector<16x16x4xbf16> to vector<256x4xbf16>
    %c4 = arith.constant 4 : index
    %c0_32 = arith.constant 0 : index
    %c0_33 = arith.constant 0 : index
    %32 = vector.load %arg2[%c4, %c0_32, %c0_33] : memref<9x4x8xbf16, #tpu.memory_space<vmem>>, vector<1x4x8xbf16>
    %33 = vector.shape_cast %32 : vector<1x4x8xbf16> to vector<4x8xbf16>
    %cst_34 = arith.constant dense<0.000000e+00> : vector<256x8xf32>
    %34 = tpu.matmul %31, %33, %cst_34 {dimension_numbers = #tpu.dot_dimension_numbers<[1], [0], [0], [1], [0, 0, 1, 1], [], []>} : vector<256x4xbf16>, vector<4x8xbf16>, vector<256x8xf32> -> vector<256x8xf32>
    %35 = arith.addf %28, %34 : vector<256x8xf32>
    %c0_35 = arith.constant 0 : index
    %c1_36 = arith.constant 1 : index
    %c2_37 = arith.constant 2 : index
    %c0_38 = arith.constant 0 : index
    %36 = vector.load %arg1[%c0_35, %c1_36, %c2_37, %c0_38] : memref<1x18x18x4xbf16, #tpu.memory_space<vmem>>, vector<1x16x16x4xbf16>
    %37 = vector.shape_cast %36 : vector<1x16x16x4xbf16> to vector<16x16x4xbf16>
    %38 = vector.shape_cast %37 : vector<16x16x4xbf16> to vector<256x4xbf16>
    %c5 = arith.constant 5 : index
    %c0_39 = arith.constant 0 : index
    %c0_40 = arith.constant 0 : index
    %39 = vector.load %arg2[%c5, %c0_39, %c0_40] : memref<9x4x8xbf16, #tpu.memory_space<vmem>>, vector<1x4x8xbf16>
    %40 = vector.shape_cast %39 : vector<1x4x8xbf16> to vector<4x8xbf16>
    %cst_41 = arith.constant dense<0.000000e+00> : vector<256x8xf32>
    %41 = tpu.matmul %38, %40, %cst_41 {dimension_numbers = #tpu.dot_dimension_numbers<[1], [0], [0], [1], [0, 0, 1, 1], [], []>} : vector<256x4xbf16>, vector<4x8xbf16>, vector<256x8xf32> -> vector<256x8xf32>
    %42 = arith.addf %35, %41 : vector<256x8xf32>
    %c0_42 = arith.constant 0 : index
    %c2_43 = arith.constant 2 : index
    %c0_44 = arith.constant 0 : index
    %c0_45 = arith.constant 0 : index
    %43 = vector.load %arg1[%c0_42, %c2_43, %c0_44, %c0_45] : memref<1x18x18x4xbf16, #tpu.memory_space<vmem>>, vector<1x16x16x4xbf16>
    %44 = vector.shape_cast %43 : vector<1x16x16x4xbf16> to vector<16x16x4xbf16>
    %45 = vector.shape_cast %44 : vector<16x16x4xbf16> to vector<256x4xbf16>
    %c6 = arith.constant 6 : index
    %c0_46 = arith.constant 0 : index
    %c0_47 = arith.constant 0 : index
    %46 = vector.load %arg2[%c6, %c0_46, %c0_47] : memref<9x4x8xbf16, #tpu.memory_space<vmem>>, vector<1x4x8xbf16>
    %47 = vector.shape_cast %46 : vector<1x4x8xbf16> to vector<4x8xbf16>
    %cst_48 = arith.constant dense<0.000000e+00> : vector<256x8xf32>
    %48 = tpu.matmul %45, %47, %cst_48 {dimension_numbers = #tpu.dot_dimension_numbers<[1], [0], [0], [1], [0, 0, 1, 1], [], []>} : vector<256x4xbf16>, vector<4x8xbf16>, vector<256x8xf32> -> vector<256x8xf32>
    %49 = arith.addf %42, %48 : vector<256x8xf32>
    %c0_49 = arith.constant 0 : index
    %c2_50 = arith.constant 2 : index
    %c1_51 = arith.constant 1 : index
    %c0_52 = arith.constant 0 : index
    %50 = vector.load %arg1[%c0_49, %c2_50, %c1_51, %c0_52] : memref<1x18x18x4xbf16, #tpu.memory_space<vmem>>, vector<1x16x16x4xbf16>
    %51 = vector.shape_cast %50 : vector<1x16x16x4xbf16> to vector<16x16x4xbf16>
    %52 = vector.shape_cast %51 : vector<16x16x4xbf16> to vector<256x4xbf16>
    %c7 = arith.constant 7 : index
    %c0_53 = arith.constant 0 : index
    %c0_54 = arith.constant 0 : index
    %53 = vector.load %arg2[%c7, %c0_53, %c0_54] : memref<9x4x8xbf16, #tpu.memory_space<vmem>>, vector<1x4x8xbf16>
    %54 = vector.shape_cast %53 : vector<1x4x8xbf16> to vector<4x8xbf16>
    %cst_55 = arith.constant dense<0.000000e+00> : vector<256x8xf32>
    %55 = tpu.matmul %52, %54, %cst_55 {dimension_numbers = #tpu.dot_dimension_numbers<[1], [0], [0], [1], [0, 0, 1, 1], [], []>} : vector<256x4xbf16>, vector<4x8xbf16>, vector<256x8xf32> -> vector<256x8xf32>
    %56 = arith.addf %49, %55 : vector<256x8xf32>
    %c0_56 = arith.constant 0 : index
    %c2_57 = arith.constant 2 : index
    %c2_58 = arith.constant 2 : index
    %c0_59 = arith.constant 0 : index
    %57 = vector.load %arg1[%c0_56, %c2_57, %c2_58, %c0_59] : memref<1x18x18x4xbf16, #tpu.memory_space<vmem>>, vector<1x16x16x4xbf16>
    %58 = vector.shape_cast %57 : vector<1x16x16x4xbf16> to vector<16x16x4xbf16>
    %59 = vector.shape_cast %58 : vector<16x16x4xbf16> to vector<256x4xbf16>
    %c8 = arith.constant 8 : index
    %c0_60 = arith.constant 0 : index
    %c0_61 = arith.constant 0 : index
    %60 = vector.load %arg2[%c8, %c0_60, %c0_61] : memref<9x4x8xbf16, #tpu.memory_space<vmem>>, vector<1x4x8xbf16>
    %61 = vector.shape_cast %60 : vector<1x4x8xbf16> to vector<4x8xbf16>
    %cst_62 = arith.constant dense<0.000000e+00> : vector<256x8xf32>
    %62 = tpu.matmul %59, %61, %cst_62 {dimension_numbers = #tpu.dot_dimension_numbers<[1], [0], [0], [1], [0, 0, 1, 1], [], []>} : vector<256x4xbf16>, vector<4x8xbf16>, vector<256x8xf32> -> vector<256x8xf32>
    %63 = arith.addf %56, %62 : vector<256x8xf32>
    %c0_63 = arith.constant 0 : index
    %c0_64 = arith.constant 0 : index
    %64 = vector.load %arg3[%c0_63, %c0_64] : memref<1x8xf32, #tpu.memory_space<vmem>>, vector<1x8xf32>
    %65 = vector.broadcast %64 : vector<1x8xf32> to vector<256x8xf32>
    %66 = arith.mulf %63, %65 : vector<256x8xf32>
    %c0_65 = arith.constant 0 : index
    %c0_66 = arith.constant 0 : index
    %67 = vector.load %arg4[%c0_65, %c0_66] : memref<1x8xf32, #tpu.memory_space<vmem>>, vector<1x8xf32>
    %68 = vector.broadcast %67 : vector<1x8xf32> to vector<256x8xf32>
    %69 = arith.addf %66, %68 : vector<256x8xf32>
    %70 = arith.negf %69 : vector<256x8xf32>
    %71 = math.exp %70 : vector<256x8xf32>
    %cst_67 = arith.constant 1.000000e+00 : f32
    %72 = vector.broadcast %cst_67 : f32 to vector<256x8xf32>
    %73 = arith.addf %72, %71 : vector<256x8xf32>
    %74 = arith.divf %72, %73 : vector<256x8xf32>
    %75 = arith.mulf %69, %74 : vector<256x8xf32>
    %76 = tpu.transpose %75, [1, 0] : vector<256x8xf32> -> vector<8x256xf32>
    %c0_68 = arith.constant 0 : index
    %c0_69 = arith.constant 0 : index
    %c0_70 = arith.constant 0 : index
    %77 = vector.load %arg5[%c0_68, %c0_69, %c0_70] : memref<1x8x256xf32, #tpu.memory_space<vmem>>, vector<1x8x256xf32>
    %78 = vector.shape_cast %77 : vector<1x8x256xf32> to vector<8x256xf32>
    %79 = vector.shape_cast %76 : vector<8x256xf32> to vector<1x8x256xf32>
    tpu.vector_store %arg5[%c0_68, %c0_69, %c0_70], %79 {strides = array<i32>} : memref<1x8x256xf32, #tpu.memory_space<vmem>>, vector<1x8x256xf32>,
    return
  }
  func.func @transform_0(%arg0: i32) -> (i32, i32, i32, i32) {
    %c0_i32 = arith.constant 0 : i32
    %c0_i32_0 = arith.constant 0 : i32
    %c0_i32_1 = arith.constant 0 : i32
    %c0_i32_2 = arith.constant 0 : i32
    return %arg0, %c0_i32, %c0_i32_0, %c0_i32_1 : i32, i32, i32, i32
  }
  func.func @transform_1(%arg0: i32) -> (i32, i32, i32) {
    %c0_i32 = arith.constant 0 : i32
    %c0_i32_0 = arith.constant 0 : i32
    %c0_i32_1 = arith.constant 0 : i32
    %c0_i32_2 = arith.constant 0 : i32
    return %c0_i32, %c0_i32_0, %c0_i32_1 : i32, i32, i32
  }
  func.func @transform_2(%arg0: i32) -> (i32, i32) {
    %c0_i32 = arith.constant 0 : i32
    %c0_i32_0 = arith.constant 0 : i32
    %c0_i32_1 = arith.constant 0 : i32
    return %c0_i32, %c0_i32_0 : i32, i32
  }
  func.func @transform_3(%arg0: i32) -> (i32, i32) {
    %c0_i32 = arith.constant 0 : i32
    %c0_i32_0 = arith.constant 0 : i32
    %c0_i32_1 = arith.constant 0 : i32
    return %c0_i32, %c0_i32_0 : i32, i32
  }
  func.func @transform_4(%arg0: i32) -> (i32, i32, i32) {
    %c0_i32 = arith.constant 0 : i32
    %c0_i32_0 = arith.constant 0 : i32
    %c0_i32_1 = arith.constant 0 : i32
    return %arg0, %c0_i32, %c0_i32_0 : i32, i32, i32
  }
}

</mosaic_0001>

<llo_original>
// kernel: conv_layer_2d.2
$region0: #{conv_layer_2d.2}
  #allocation0 [shape = 'u32[]', space=smem, size = 0x4, offset = 0x4, fixed_abs, tag = 'smem constant byte address 0x4 - core index']
  #allocation1 [shape = 'u32[144,128]{1,0:T(1,128)}', space=vmem, size = 0x12000, scoped, tag = 'internal scratch']
  %s0 = inlined_call_operand.vmem [shape: bf16[2,18,18,4], index: 0, kind: input, shape index: {}]
  %s1 = inlined_call_operand.vmem [shape: bf16[9,4,8], index: 1, kind: input, shape index: {}]
  %s2 = inlined_call_operand.vmem [shape: f32[2,1,8], index: 2, kind: output, shape index: {0}]
  %s3 = inlined_call_operand.vmem [shape: f32[2,1,8], index: 3, kind: output, shape index: {1}]
  %4 = xla_tuple %s2, %s3
  %s5 = sld [smem:[#allocation0]]
  $region49: #{conv_layer_2d.2} parent=0
    _
  %s7 = ssub.s32 1, %s5
  %s8 = scalar_select 0, %s7, %s5
  loop: start=0, step=1, limit=4
  $region2: #{conv_layer_2d.2} parent=0 // loop_pre_header
    _
  $region3: #{conv_layer_2d.2} parent=0 // loop_header
    %s10 = sphi 0, %s14
    %p11 = scmp.ge.s32.totalorder %s10, 4
    %s20 = sphi 0, %s22
    %s23 = sphi 0, %s20
    %s24 = sphi 0, %s23
    %s40 = sphi 0, %s24
    %s44 = sphi 0, %s44
    %s46 = sphi 0, %s44
    %s47 = sphi 0, %s46
    %s61 = sphi 0, %s47
    %s67 = sphi 0, %s69
    %s70 = sphi 0, %s67
    %s71 = sphi 0, %s70
    %s87 = sphi 0, %s71
    %s93 = sphi 0, %s95
    %s96 = sphi 0, %s93
    %s97 = sphi 0, %s96
    %s113 = sphi 0, %s97
  $region4: #{conv_layer_2d.2} parent=0 // loop_header_branch
    %13 = sbr.rel (%p11) target = $region8
  $region5: #{conv_layer_2d.2} parent=0 // loop_body
    %s15 = ssub.s32 %s10, 1
    %s16 = ssub.s32 %s10, 2
    %s17 = sadd.s32 %s10, 1
    %s18 = ssub.s32 %s10, %s17
    %p19 = scmp.eq.s32.totalorder %s18, 0
    %s21 = sadd.s32 %s20, 1
    %s22 = scalar_select %p19, %s20, %s21
    %p25 = pneg %p19
    %p26 = scmp.eq.s32.totalorder %s10, 1
    %p27 = por %p25, %p26
    %p28 = scmp.ne.s32.totalorder %s20, %s23
    %p29 = scmp.eq.s32.totalorder %s10, 0
    %p30 = por %p28, %p29
    %p31 = scmp.ne.s32.totalorder %s20, %s23
    %p32 = scmp.eq.s32.totalorder %s15, 1
    %p33 = por %p31, %p32
    %p34 = scmp.ne.s32.totalorder %s23, %s24
    %p35 = scmp.eq.s32.totalorder %s15, 0
    %p36 = por %p34, %p35
    %p37 = scmp.ne.s32.totalorder %s23, %s24
    %p38 = scmp.eq.s32.totalorder %s16, 1
    %p39 = por %p37, %p38
    %p41 = scmp.ne.s32.totalorder %s24, %s40
    %p42 = scmp.eq.s32.totalorder %s16, 0
    %p43 = por %p41, %p42
    %s45 = sadd.s32 %s44, 1
    %p48 = scmp.eq.s32.totalorder %s10, 1
    %p49 = scmp.ne.s32.totalorder %s44, %s46
    %p50 = scmp.eq.s32.totalorder %s10, 0
    %p51 = por %p49, %p50
    %p52 = scmp.ne.s32.totalorder %s44, %s46
    %p53 = scmp.eq.s32.totalorder %s15, 1
    %p54 = por %p52, %p53
    %p55 = scmp.ne.s32.totalorder %s46, %s47
    %p56 = scmp.eq.s32.totalorder %s15, 0
    %p57 = por %p55, %p56
    %p58 = scmp.ne.s32.totalorder %s46, %s47
    %p59 = scmp.eq.s32.totalorder %s16, 1
    %p60 = por %p58, %p59
    %p62 = scmp.ne.s32.totalorder %s47, %s61
    %p63 = scmp.eq.s32.totalorder %s16, 0
    %p64 = por %p62, %p63
    %s65 = ssub.s32 %s10, %s17
    %p66 = scmp.eq.s32.totalorder %s65, 0
    %s68 = sadd.s32 %s67, 1
    %s69 = scalar_select %p66, %s67, %s68
    %p72 = pneg %p66
    %p73 = scmp.eq.s32.totalorder %s10, 1
    %p74 = por %p72, %p73
    %p75 = scmp.ne.s32.totalorder %s67, %s70
    %p76 = scmp.eq.s32.totalorder %s10, 0
    %p77 = por %p75, %p76
    %p78 = scmp.ne.s32.totalorder %s67, %s70
    %p79 = scmp.eq.s32.totalorder %s15, 1
    %p80 = por %p78, %p79
    %p81 = scmp.ne.s32.totalorder %s70, %s71
    %p82 = scmp.eq.s32.totalorder %s15, 0
    %p83 = por %p81, %p82
    %p84 = scmp.ne.s32.totalorder %s70, %s71
    %p85 = scmp.eq.s32.totalorder %s16, 1
    %p86 = por %p84, %p85
    %p88 = scmp.ne.s32.totalorder %s71, %s87
    %p89 = scmp.eq.s32.totalorder %s16, 0
    %p90 = por %p88, %p89
    %s91 = ssub.s32 %s10, %s17
    %p92 = scmp.eq.s32.totalorder %s91, 0
    %s94 = sadd.s32 %s93, 1
    %s95 = scalar_select %p92, %s93, %s94
    %p98 = pneg %p92
    %p99 = scmp.eq.s32.totalorder %s10, 1
    %p100 = por %p98, %p99
    %p101 = scmp.ne.s32.totalorder %s93, %s96
    %p102 = scmp.eq.s32.totalorder %s10, 0
    %p103 = por %p101, %p102
    %p104 = scmp.ne.s32.totalorder %s93, %s96
    %p105 = scmp.eq.s32.totalorder %s15, 1
    %p106 = por %p104, %p105
    %p107 = scmp.ne.s32.totalorder %s96, %s97
    %p108 = scmp.eq.s32.totalorder %s15, 0
    %p109 = por %p107, %p108
    %p110 = scmp.ne.s32.totalorder %s96, %s97
    %p111 = scmp.eq.s32.totalorder %s16, 1
    %p112 = por %p110, %p111
    %p114 = scmp.ne.s32.totalorder %s97, %s113
    %p115 = scmp.eq.s32.totalorder %s16, 0
    %p116 = por %p114, %p115
    %p117 = scmp.le.s32.totalorder 1, %s10
    %p118 = scmp.lt.s32.totalorder %s10, 3
    %p119 = pnand %p117, %p118
    %p120 = pneg %p119
    // Predicated region
    $region9: #{conv_layer_2d.2} parent=5 // pred_check
      _
    $region10: #{conv_layer_2d.2} parent=5 // pred_check_branch
      %122 = sbr.rel (%p119) target = $region12
    $region11: #{conv_layer_2d.2} parent=5 // pred_region
      %s123 = ssub.s32 %s10, 1
      // Predicated region
      $region13: #{conv_layer_2d.2} parent=11 // pred_check
        %p124 = pneg %p57
      $region14: #{conv_layer_2d.2} parent=11 // pred_check_branch
        %126 = sbr.rel (%p124) target = $region16
      $region15: #{conv_layer_2d.2} parent=11 // pred_region
        _
      $region16: #{conv_layer_2d.2} parent=11 // pred_fallthru
        _
    $region12: #{conv_layer_2d.2} parent=5 // pred_fallthru
      _
    %p127 = scmp.lt.s32.totalorder %s10, 2
    // Predicated region
    $region17: #{conv_layer_2d.2} parent=5 // pred_check
      %p128 = pneg %p127
    $region18: #{conv_layer_2d.2} parent=5 // pred_check_branch
      %130 = sbr.rel (%p128) target = $region20
    $region19: #{conv_layer_2d.2} parent=5 // pred_region
      // Predicated region
      $region21: #{conv_layer_2d.2} parent=19 // pred_check
        %p131 = pneg %p30
      $region22: #{conv_layer_2d.2} parent=19 // pred_check_branch
        %133 = sbr.rel (%p131) target = $region24
      $region23: #{conv_layer_2d.2} parent=19 // pred_region
        %p134 = scmp.lt.s32.totalorder %s10, 1
        %s135 = scalar_select %p134, %s10, 1
        %s136 = smul.addr %s135, 54
        %s137 = smul.addr %s136, 4
        %s138 = scalar_lea.vmem %s0, %s137
      $region24: #{conv_layer_2d.2} parent=19 // pred_fallthru
        _
    $region20: #{conv_layer_2d.2} parent=5 // pred_fallthru
      _
    %p139 = scmp.le.s32.totalorder 1, %s10
    %p140 = scmp.lt.s32.totalorder %s10, 3
    %p141 = pnand %p139, %p140
    %p142 = pneg %p141
    // Predicated region
    $region25: #{conv_layer_2d.2} parent=5 // pred_check
      _
    $region26: #{conv_layer_2d.2} parent=5 // pred_check_branch
      %144 = sbr.rel (%p141) target = $region28
    $region27: #{conv_layer_2d.2} parent=5 // pred_region
      %s145 = ssub.s32 %s10, 1
      %p146 = scmp.lt.s32.totalorder %s15, 1
      %s147 = scalar_select %p146, %s15, 1
      %s148 = smul.addr %s147, 54
      %s149 = smul.addr %s148, 4
      %s150 = scalar_lea.vmem %s0, %s149
      %p151 = pneg %p36
      %p152 = pneg %p33
      %p153 = pneg %p57
      %p154 = pneg %p54
      %p155 = pneg %p83
      %p156 = pneg %p80
      %p157 = scmp.lt.s32.totalorder %s15, 1
      %s158 = scalar_select %p157, %s15, 1
      %s159 = scalar_lea.vmem %s2, %s158
      %p160 = pneg %p109
      %p161 = pneg %p106
      %p162 = scmp.lt.s32.totalorder %s15, 1
      %s163 = scalar_select %p162, %s15, 1
      %s164 = scalar_lea.vmem %s3, %s163
      %p165 = scmp.lt.s32.totalorder %s15, 1
      %s166 = scalar_select %p165, %s15, 1
      %s167 = smul.addr %s166, 54
      %s168 = smul.addr %s167, 4
      %s169 = scalar_lea.vmem %s0, %s168
      %p170 = scmp.lt.s32.totalorder %s15, 1
      %s171 = scalar_select %p170, %s15, 1
      %s172 = scalar_lea.vmem %s2, %s171
      %p173 = scmp.lt.s32.totalorder %s15, 1
      %s174 = scalar_select %p173, %s15, 1
      %s175 = scalar_lea.vmem %s3, %s174
      %v177 = vld [vmem:[%s169] sm:$0xf]
      %v178 = vld [vmem:[%s169 + $0x4] sm:$0xf]
      %v179 = vld [vmem:[%s169 + $0xc] sm:$0xf]
      %v180 = vld [vmem:[%s169 + $0x10] sm:$0xf]
      %v181 = vld [vmem:[%s169 + $0x18] sm:$0xf]
      %v182 = vld [vmem:[%s169 + $0x1c] sm:$0xf]
      %v183 = vld [vmem:[%s169 + $0x24] sm:$0xf]
      %v184 = vld [vmem:[%s169 + $0x28] sm:$0xf]
      %v185 = vld [vmem:[%s169 + $0x30] sm:$0xf]
      %v186 = vld [vmem:[%s169 + $0x34] sm:$0xf]
      %v187 = vld [vmem:[%s169 + $0x3c] sm:$0xf]
      %v188 = vld [vmem:[%s169 + $0x40] sm:$0xf]
      %v189 = vld [vmem:[%s169 + $0x48] sm:$0xf]
      %v190 = vld [vmem:[%s169 + $0x4c] sm:$0xf]
      %v191 = vld [vmem:[%s169 + $0x54] sm:$0xf]
      %v192 = vld [vmem:[%s169 + $0x58] sm:$0xf]
      %v193 = vld [vmem:[%s169 + $0x60] sm:$0xf]
      %v194 = vld [vmem:[%s169 + $0x64] sm:$0xf]
      %v195 = vld [vmem:[%s169 + $0x6c] sm:$0xf]
      %v196 = vld [vmem:[%s169 + $0x70] sm:$0xf]
      %v197 = vld [vmem:[%s169 + $0x78] sm:$0xf]
      %v198 = vld [vmem:[%s169 + $0x7c] sm:$0xf]
      %v199 = vld [vmem:[%s169 + $0x84] sm:$0xf]
      %v200 = vld [vmem:[%s169 + $0x88] sm:$0xf]
      %v201 = vld [vmem:[%s169 + $0x90] sm:$0xf]
      %v202 = vld [vmem:[%s169 + $0x94] sm:$0xf]
      %v203 = vld [vmem:[%s169 + $0x9c] sm:$0xf]
      %v204 = vld [vmem:[%s169 + $0xa0] sm:$0xf]
      %v205 = vld [vmem:[%s169 + $0xa8] sm:$0xf]
      %v206 = vld [vmem:[%s169 + $0xac] sm:$0xf]
      %v207 = vld [vmem:[%s169 + $0xb4] sm:$0xf]
      %v208 = vld [vmem:[%s169 + $0xb8] sm:$0xf]
      %v209 = vld [vmem:[%s1] sm:$0x3]
      %v210 = vld [vmem:[%s169 + $0x8] sm:$0x1]
      %v211 = vld [vmem:[%s169 + $0x14] sm:$0x1]
      %v212 = vld [vmem:[%s169 + $0x20] sm:$0x1]
      %v213 = vld [vmem:[%s169 + $0x2c] sm:$0x1]
      %v214 = vld [vmem:[%s169 + $0x38] sm:$0x1]
      %v215 = vld [vmem:[%s169 + $0x44] sm:$0x1]
      %v216 = vld [vmem:[%s169 + $0x50] sm:$0x1]
      %v217 = vld [vmem:[%s169 + $0x5c] sm:$0x1]
      %v218 = vld [vmem:[%s169 + $0x68] sm:$0x1]
      %v219 = vld [vmem:[%s169 + $0x74] sm:$0x1]
      %v220 = vld [vmem:[%s169 + $0x80] sm:$0x1]
      %v221 = vld [vmem:[%s169 + $0x8c] sm:$0x1]
      %v222 = vld [vmem:[%s169 + $0x98] sm:$0x1]
      %v223 = vld [vmem:[%s169 + $0xa4] sm:$0x1]
      %v224 = vld [vmem:[%s169 + $0xb0] sm:$0x1]
      %v225 = vld [vmem:[%s169 + $0xbc] sm:$0x1]
      %vm226 = vsmask.f32 3328
      %vm227 = vsmask.f32 7440
      %vm228 = vmor %vm226, %vm227
      %v230 = vshrl.u32 %v177, 16
      %v232 = vrot.slane %v230, 4
      %v233 = vshll.u32 %v177, 16
      %v235 = vrot.slane %v233, 5
      %v236 = vor.u32 %v232, %v235
      %v237 = vrot.slane %v236, 4
      %v239 = vshll.u32 %v178, 16
      %v241 = vrot.slane %v239, 5
      %v242 = vsel %vm228, %v237, %v241
      %v243 = vshrl.u32 %v178, 16
      %v245 = vrot.slane %v243, 4
      %v246 = vor.u32 %v245, %v241
      %v247 = vrot.slane %v246, 4
      %v249 = vshll.u32 %v210, 16
      %v251 = vrot.slane %v249, 5
      %v252 = vsel %vm228, %v247, %v251
      %v254 = vshrl.u32 %v179, 16
      %v256 = vrot.slane %v254, 4
      %v257 = vshll.u32 %v179, 16
      %v259 = vrot.slane %v257, 5
      %v260 = vor.u32 %v256, %v259
      %v261 = vrot.slane %v260, 4
      %v263 = vshll.u32 %v180, 16
      %v265 = vrot.slane %v263, 5
      %v266 = vsel %vm228, %v261, %v265
      %v267 = vshrl.u32 %v180, 16
      %v269 = vrot.slane %v267, 4
      %v270 = vor.u32 %v269, %v265
      %v271 = vrot.slane %v270, 4
      %v273 = vshll.u32 %v211, 16
      %v275 = vrot.slane %v273, 5
      %v276 = vsel %vm228, %v271, %v275
      %v278 = vshrl.u32 %v181, 16
      %v280 = vrot.slane %v278, 4
      %v281 = vshll.u32 %v181, 16
      %v283 = vrot.slane %v281, 5
      %v284 = vor.u32 %v280, %v283
      %v285 = vrot.slane %v284, 4
      %v287 = vshll.u32 %v182, 16
      %v289 = vrot.slane %v287, 5
      %v290 = vsel %vm228, %v285, %v289
      %v291 = vshrl.u32 %v182, 16
      %v293 = vrot.slane %v291, 4
      %v294 = vor.u32 %v293, %v289
      %v295 = vrot.slane %v294, 4
      %v297 = vshll.u32 %v212, 16
      %v299 = vrot.slane %v297, 5
      %v300 = vsel %vm228, %v295, %v299
      %v302 = vshrl.u32 %v183, 16
      %v304 = vrot.slane %v302, 4
      %v305 = vshll.u32 %v183, 16
      %v307 = vrot.slane %v305, 5
      %v308 = vor.u32 %v304, %v307
      %v309 = vrot.slane %v308, 4
      %v311 = vshll.u32 %v184, 16
      %v313 = vrot.slane %v311, 5
      %v314 = vsel %vm228, %v309, %v313
      %v315 = vshrl.u32 %v184, 16
      %v317 = vrot.slane %v315, 4
      %v318 = vor.u32 %v317, %v313
      %v319 = vrot.slane %v318, 4
      %v321 = vshll.u32 %v213, 16
      %v323 = vrot.slane %v321, 5
      %v324 = vsel %vm228, %v319, %v323
      %v326 = vshrl.u32 %v185, 16
      %v328 = vrot.slane %v326, 4
      %v329 = vshll.u32 %v185, 16
      %v331 = vrot.slane %v329, 5
      %v332 = vor.u32 %v328, %v331
      %v333 = vrot.slane %v332, 4
      %v335 = vshll.u32 %v186, 16
      %v337 = vrot.slane %v335, 5
      %v338 = vsel %vm228, %v333, %v337
      %v339 = vshrl.u32 %v186, 16
      %v341 = vrot.slane %v339, 4
      %v342 = vor.u32 %v341, %v337
      %v343 = vrot.slane %v342, 4
      %v345 = vshll.u32 %v214, 16
      %v347 = vrot.slane %v345, 5
      %v348 = vsel %vm228, %v343, %v347
      %v350 = vshrl.u32 %v187, 16
      %v352 = vrot.slane %v350, 4
      %v353 = vshll.u32 %v187, 16
      %v355 = vrot.slane %v353, 5
      %v356 = vor.u32 %v352, %v355
      %v357 = vrot.slane %v356, 4
      %v359 = vshll.u32 %v188, 16
      %v361 = vrot.slane %v359, 5
      %v362 = vsel %vm228, %v357, %v361
      %v363 = vshrl.u32 %v188, 16
      %v365 = vrot.slane %v363, 4
      %v366 = vor.u32 %v365, %v361
      %v367 = vrot.slane %v366, 4
      %v369 = vshll.u32 %v215, 16
      %v371 = vrot.slane %v369, 5
      %v372 = vsel %vm228, %v367, %v371
      %v374 = vshrl.u32 %v189, 16
      %v376 = vrot.slane %v374, 4
      %v377 = vshll.u32 %v189, 16
      %v379 = vrot.slane %v377, 5
      %v380 = vor.u32 %v376, %v379
      %v381 = vrot.slane %v380, 4
      %v383 = vshll.u32 %v190, 16
      %v385 = vrot.slane %v383, 5
      %v386 = vsel %vm228, %v381, %v385
      %v387 = vshrl.u32 %v190, 16
      %v389 = vrot.slane %v387, 4
      %v390 = vor.u32 %v389, %v385
      %v391 = vrot.slane %v390, 4
      %v393 = vshll.u32 %v216, 16
      %v395 = vrot.slane %v393, 5
      %v396 = vsel %vm228, %v391, %v395
      %v398 = vshrl.u32 %v191, 16
      %v400 = vrot.slane %v398, 4
      %v401 = vshll.u32 %v191, 16
      %v403 = vrot.slane %v401, 5
      %v404 = vor.u32 %v400, %v403
      %v405 = vrot.slane %v404, 4
      %v407 = vshll.u32 %v192, 16
      %v409 = vrot.slane %v407, 5
      %v410 = vsel %vm228, %v405, %v409
      %v411 = vshrl.u32 %v192, 16
      %v413 = vrot.slane %v411, 4
      %v414 = vor.u32 %v413, %v409
      %v415 = vrot.slane %v414, 4
      %v417 = vshll.u32 %v217, 16
      %v419 = vrot.slane %v417, 5
      %v420 = vsel %vm228, %v415, %v419
      %v422 = vshrl.u32 %v193, 16
      %v424 = vrot.slane %v422, 4
      %v425 = vshll.u32 %v193, 16
      %v427 = vrot.slane %v425, 5
      %v428 = vor.u32 %v424, %v427
      %v429 = vrot.slane %v428, 4
      %v431 = vshll.u32 %v194, 16
      %v433 = vrot.slane %v431, 5
      %v434 = vsel %vm228, %v429, %v433
      %v435 = vshrl.u32 %v194, 16
      %v437 = vrot.slane %v435, 4
      %v438 = vor.u32 %v437, %v433
      %v439 = vrot.slane %v438, 4
      %v441 = vshll.u32 %v218, 16
      %v443 = vrot.slane %v441, 5
      %v444 = vsel %vm228, %v439, %v443
      %v446 = vshrl.u32 %v195, 16
      %v448 = vrot.slane %v446, 4
      %v449 = vshll.u32 %v195, 16
      %v451 = vrot.slane %v449, 5
      %v452 = vor.u32 %v448, %v451
      %v453 = vrot.slane %v452, 4
      %v455 = vshll.u32 %v196, 16
      %v457 = vrot.slane %v455, 5
      %v458 = vsel %vm228, %v453, %v457
      %v459 = vshrl.u32 %v196, 16
      %v461 = vrot.slane %v459, 4
      %v462 = vor.u32 %v461, %v457
      %v463 = vrot.slane %v462, 4
      %v465 = vshll.u32 %v219, 16
      %v467 = vrot.slane %v465, 5
      %v468 = vsel %vm228, %v463, %v467
      %v470 = vshrl.u32 %v197, 16
      %v472 = vrot.slane %v470, 4
      %v473 = vshll.u32 %v197, 16
      %v475 = vrot.slane %v473, 5
      %v476 = vor.u32 %v472, %v475
      %v477 = vrot.slane %v476, 4
      %v479 = vshll.u32 %v198, 16
      %v481 = vrot.slane %v479, 5
      %v482 = vsel %vm228, %v477, %v481
      %v483 = vshrl.u32 %v198, 16
      %v485 = vrot.slane %v483, 4
      %v486 = vor.u32 %v485, %v481
      %v487 = vrot.slane %v486, 4
      %v489 = vshll.u32 %v220, 16
      %v491 = vrot.slane %v489, 5
      %v492 = vsel %vm228, %v487, %v491
      %v494 = vshrl.u32 %v199, 16
      %v496 = vrot.slane %v494, 4
      %v497 = vshll.u32 %v199, 16
      %v499 = vrot.slane %v497, 5
      %v500 = vor.u32 %v496, %v499
      %v501 = vrot.slane %v500, 4
      %v503 = vshll.u32 %v200, 16
      %v505 = vrot.slane %v503, 5
      %v506 = vsel %vm228, %v501, %v505
      %v507 = vshrl.u32 %v200, 16
      %v509 = vrot.slane %v507, 4
      %v510 = vor.u32 %v509, %v505
      %v511 = vrot.slane %v510, 4
      %v513 = vshll.u32 %v221, 16
      %v515 = vrot.slane %v513, 5
      %v516 = vsel %vm228, %v511, %v515
      %v518 = vshrl.u32 %v201, 16
      %v520 = vrot.slane %v518, 4
      %v521 = vshll.u32 %v201, 16
      %v523 = vrot.slane %v521, 5
      %v524 = vor.u32 %v520, %v523
      %v525 = vrot.slane %v524, 4
      %v527 = vshll.u32 %v202, 16
      %v529 = vrot.slane %v527, 5
      %v530 = vsel %vm228, %v525, %v529
      %v531 = vshrl.u32 %v202, 16
      %v533 = vrot.slane %v531, 4
      %v534 = vor.u32 %v533, %v529
      %v535 = vrot.slane %v534, 4
      %v537 = vshll.u32 %v222, 16
      %v539 = vrot.slane %v537, 5
      %v540 = vsel %vm228, %v535, %v539
      %v542 = vshrl.u32 %v203, 16
      %v544 = vrot.slane %v542, 4
      %v545 = vshll.u32 %v203, 16
      %v547 = vrot.slane %v545, 5
      %v548 = vor.u32 %v544, %v547
      %v549 = vrot.slane %v548, 4
      %v551 = vshll.u32 %v204, 16
      %v553 = vrot.slane %v551, 5
      %v554 = vsel %vm228, %v549, %v553
      %v555 = vshrl.u32 %v204, 16
      %v557 = vrot.slane %v555, 4
      %v558 = vor.u32 %v557, %v553
      %v559 = vrot.slane %v558, 4
      %v561 = vshll.u32 %v223, 16
      %v563 = vrot.slane %v561, 5
      %v564 = vsel %vm228, %v559, %v563
      %v566 = vshrl.u32 %v205, 16
      %v568 = vrot.slane %v566, 4
      %v569 = vshll.u32 %v205, 16
      %v571 = vrot.slane %v569, 5
      %v572 = vor.u32 %v568, %v571
      %v573 = vrot.slane %v572, 4
      %v575 = vshll.u32 %v206, 16
      %v577 = vrot.slane %v575, 5
      %v578 = vsel %vm228, %v573, %v577
      %v579 = vshrl.u32 %v206, 16
      %v581 = vrot.slane %v579, 4
      %v582 = vor.u32 %v581, %v577
      %v583 = vrot.slane %v582, 4
      %v585 = vshll.u32 %v224, 16
      %v587 = vrot.slane %v585, 5
      %v588 = vsel %vm228, %v583, %v587
      %v590 = vshrl.u32 %v207, 16
      %v592 = vrot.slane %v590, 4
      %v593 = vshll.u32 %v207, 16
      %v595 = vrot.slane %v593, 5
      %v596 = vor.u32 %v592, %v595
      %v597 = vrot.slane %v596, 4
      %v599 = vshll.u32 %v208, 16
      %v601 = vrot.slane %v599, 5
      %v602 = vsel %vm228, %v597, %v601
      %v603 = vshrl.u32 %v208, 16
      %v605 = vrot.slane %v603, 4
      %v606 = vor.u32 %v605, %v601
      %v607 = vrot.slane %v606, 4
      %v609 = vshll.u32 %v225, 16
      %v611 = vrot.slane %v609, 5
      %v612 = vsel %vm228, %v607, %v611
      %s613 = scalar_lea.vmem %s1, 2
      %v614 = vld [vmem:[%s613] sm:$0x3]
      %v615 = vunpack.c.l.b16 %v242
      %v616 = vunpack.c.l.b16 %v252
      %v617 = vunpack.c.l.b16 %v266
      %v618 = vunpack.c.l.b16 %v276
      %v619 = vunpack.c.l.b16 %v290
      %v620 = vunpack.c.l.b16 %v300
      %v621 = vunpack.c.l.b16 %v314
      %v622 = vunpack.c.l.b16 %v324
      %v623 = vunpack.c.l.b16 %v338
      %v624 = vunpack.c.l.b16 %v348
      %v625 = vunpack.c.l.b16 %v362
      %v626 = vunpack.c.l.b16 %v372
      %v627 = vunpack.c.l.b16 %v386
      %v628 = vunpack.c.l.b16 %v396
      %v629 = vunpack.c.l.b16 %v410
      %v630 = vunpack.c.l.b16 %v420
      %v631 = vunpack.c.l.b16 %v434
      %v632 = vunpack.c.l.b16 %v444
      %v633 = vunpack.c.l.b16 %v458
      %v634 = vunpack.c.l.b16 %v468
      %v635 = vunpack.c.l.b16 %v482
      %v636 = vunpack.c.l.b16 %v492
      %v637 = vunpack.c.l.b16 %v506
      %v638 = vunpack.c.l.b16 %v516
      %v639 = vunpack.c.l.b16 %v530
      %v640 = vunpack.c.l.b16 %v540
      %v641 = vunpack.c.l.b16 %v554
      %v642 = vunpack.c.l.b16 %v564
      %v643 = vunpack.c.l.b16 %v578
      %v644 = vunpack.c.l.b16 %v588
      %v645 = vunpack.c.l.b16 %v602
      %v646 = vunpack.c.l.b16 %v612
      %v647 = vpack.c.b16 %v616, %v615
      %v648 = vpack.c.b16 %v618, %v617
      %v649 = vpack.c.b16 %v620, %v619
      %v650 = vpack.c.b16 %v622, %v621
      %v651 = vpack.c.b16 %v624, %v623
      %v652 = vpack.c.b16 %v626, %v625
      %v653 = vpack.c.b16 %v628, %v627
      %v654 = vpack.c.b16 %v630, %v629
      %v655 = vpack.c.b16 %v632, %v631
      %v656 = vpack.c.b16 %v634, %v633
      %v657 = vpack.c.b16 %v636, %v635
      %v658 = vpack.c.b16 %v638, %v637
      %v659 = vpack.c.b16 %v640, %v639
      %v660 = vpack.c.b16 %v642, %v641
      %v661 = vpack.c.b16 %v644, %v643
      %v662 = vpack.c.b16 %v646, %v645
      %vm663 = vcmask 31744
      %v665 = vsel %vm663, %v647, 0
      %v668 = vsel %vm663, %v648, 0
      %v671 = vsel %vm663, %v649, 0
      %v674 = vsel %vm663, %v650, 0
      %v677 = vsel %vm663, %v651, 0
      %v680 = vsel %vm663, %v652, 0
      %v683 = vsel %vm663, %v653, 0
      %v686 = vsel %vm663, %v654, 0
      %v689 = vsel %vm663, %v655, 0
      %v692 = vsel %vm663, %v656, 0
      %v695 = vsel %vm663, %v657, 0
      %v698 = vsel %vm663, %v658, 0
      %v701 = vsel %vm663, %v659, 0
      %v704 = vsel %vm663, %v660, 0
      %v707 = vsel %vm663, %v661, 0
      %v710 = vsel %vm663, %v662, 0
      %vm712 = vcmask 1041408
      %v714 = vsel %vm712, %v614, 0
      %716 = vmatprep.subr.bf16.mxu0 0
      %717 = vmatpush1.bf16.msra.mxu0 %v714
      %718 = vmatprep.subr.bf16.mxu0 0
      %719 = vmatpush1.bf16.msra.mxu0 0
      %720 = vmatprep.subr.bf16.mxu0 0
      %721 = vmatpush1.bf16.msra.mxu0 0
      %722 = vmatprep.subr.bf16.mxu0 0
      %723 = vmatpush1.bf16.msra.mxu0 0
      %724 = vmatprep.subr.bf16.mxu0 0
      %725 = vmatpush1.bf16.msra.mxu0 0
      %726 = vmatprep.subr.bf16.mxu0 0
      %727 = vmatpush1.bf16.msra.mxu0 0
      %728 = vmatprep.subr.bf16.mxu0 0
      %729 = vmatpush1.bf16.msra.mxu0 0
      %730 = vmatprep.subr.bf16.mxu0 0
      %731 = vmatpush1.bf16.msra.mxu0 0
      %732 = vmatprep.subr.bf16.mxu0 0
      %733 = vmatpush1.bf16.msra.mxu0 0
      %734 = vmatprep.subr.bf16.mxu0 0
      %735 = vmatpush1.bf16.msra.mxu0 0
      %736 = vmatprep.subr.bf16.mxu0 0
      %737 = vmatpush1.bf16.msra.mxu0 0
      %738 = vmatprep.subr.bf16.mxu0 0
      %739 = vmatpush1.bf16.msra.mxu0 0
      %740 = vmatprep.subr.bf16.mxu0 0
      %741 = vmatpush1.bf16.msra.mxu0 0
      %742 = vmatprep.subr.bf16.mxu0 0
      %743 = vmatpush1.bf16.msra.mxu0 0
      %744 = vmatprep.subr.bf16.mxu0 0
      %745 = vmatpush1.bf16.msra.mxu0 0
      %746 = vmatprep.subr.bf16.mxu0 0
      %747 = vmatpush1.bf16.msra.mxu0 0
      %748 = vmatprep.mubr.bf16.mxu0 0
      %749 = vmatmul.mubr.bf16.gmra.mrb[0].mxu0 %v665
      %v750 = vpop.f32.mrb[0].mxu0
      %v751 = vadd.f32 0.0, %v750
      %v752 = vpop.f32.mrb[0].mxu0
      %v753 = vpop.f32.mrb[0].mxu0
      %v754 = vadd.f32 0.0, %v753
      %v755 = vpop.f32.mrb[0].mxu0
      %756 = vmatprep.mubr.bf16.mxu0 0
      %757 = vmatmul.mubr.bf16.gmra.mrb[0].mxu0 %v668
      %v758 = vpop.f32.mrb[0].mxu0
      %v759 = vadd.f32 0.0, %v758
      %v760 = vpop.f32.mrb[0].mxu0
      %v761 = vpop.f32.mrb[0].mxu0
      %v762 = vadd.f32 0.0, %v761
      %v763 = vpop.f32.mrb[0].mxu0
      %764 = vmatprep.mubr.bf16.mxu0 0
      %765 = vmatmul.mubr.bf16.gmra.mrb[0].mxu0 %v671
      %v766 = vpop.f32.mrb[0].mxu0
      %v767 = vadd.f32 0.0, %v766
      %v768 = vpop.f32.mrb[0].mxu0
      %v769 = vpop.f32.mrb[0].mxu0
      %v770 = vadd.f32 0.0, %v769
      %v771 = vpop.f32.mrb[0].mxu0
      %772 = vmatprep.mubr.bf16.mxu0 0
      %773 = vmatmul.mubr.bf16.gmra.mrb[0].mxu0 %v674
      %v774 = vpop.f32.mrb[0].mxu0
      %v775 = vadd.f32 0.0, %v774
      %v776 = vpop.f32.mrb[0].mxu0
      %v777 = vpop.f32.mrb[0].mxu0
      %v778 = vadd.f32 0.0, %v777
      %v779 = vpop.f32.mrb[0].mxu0
      %780 = vmatprep.mubr.bf16.mxu0 0
      %781 = vmatmul.mubr.bf16.gmra.mrb[0].mxu0 %v677
      %v782 = vpop.f32.mrb[0].mxu0
      %v783 = vadd.f32 0.0, %v782
      %v784 = vpop.f32.mrb[0].mxu0
      %v785 = vpop.f32.mrb[0].mxu0
      %v786 = vadd.f32 0.0, %v785
      %v787 = vpop.f32.mrb[0].mxu0
      %788 = vmatprep.mubr.bf16.mxu0 0
      %789 = vmatmul.mubr.bf16.gmra.mrb[0].mxu0 %v680
      %v790 = vpop.f32.mrb[0].mxu0
      %v791 = vadd.f32 0.0, %v790
      %v792 = vpop.f32.mrb[0].mxu0
      %v793 = vpop.f32.mrb[0].mxu0
      %v794 = vadd.f32 0.0, %v793
      %v795 = vpop.f32.mrb[0].mxu0
      %796 = vmatprep.mubr.bf16.mxu0 0
      %797 = vmatmul.mubr.bf16.gmra.mrb[0].mxu0 %v683
      %v798 = vpop.f32.mrb[0].mxu0
      %v799 = vadd.f32 0.0, %v798
      %v800 = vpop.f32.mrb[0].mxu0
      %v801 = vpop.f32.mrb[0].mxu0
      %v802 = vadd.f32 0.0, %v801
      %v803 = vpop.f32.mrb[0].mxu0
      %804 = vmatprep.mubr.bf16.mxu0 0
      %805 = vmatmul.mubr.bf16.gmra.mrb[0].mxu0 %v686
      %v806 = vpop.f32.mrb[0].mxu0
      %v807 = vadd.f32 0.0, %v806
      %v808 = vpop.f32.mrb[0].mxu0
      %v809 = vpop.f32.mrb[0].mxu0
      %v810 = vadd.f32 0.0, %v809
      %v811 = vpop.f32.mrb[0].mxu0
      %812 = vmatprep.mubr.bf16.mxu0 0
      %813 = vmatmul.mubr.bf16.gmra.mrb[0].mxu0 %v689
      %v814 = vpop.f32.mrb[0].mxu0
      %v815 = vadd.f32 0.0, %v814
      %v816 = vpop.f32.mrb[0].mxu0
      %v817 = vpop.f32.mrb[0].mxu0
      %v818 = vadd.f32 0.0, %v817
      %v819 = vpop.f32.mrb[0].mxu0
      %820 = vmatprep.mubr.bf16.mxu0 0
      %821 = vmatmul.mubr.bf16.gmra.mrb[0].mxu0 %v692
      %v822 = vpop.f32.mrb[0].mxu0
      %v823 = vadd.f32 0.0, %v822
      %v824 = vpop.f32.mrb[0].mxu0
      %v825 = vpop.f32.mrb[0].mxu0
      %v826 = vadd.f32 0.0, %v825
      %v827 = vpop.f32.mrb[0].mxu0
      %828 = vmatprep.mubr.bf16.mxu0 0
      %829 = vmatmul.mubr.bf16.gmra.mrb[0].mxu0 %v695
      %v830 = vpop.f32.mrb[0].mxu0
      %v831 = vadd.f32 0.0, %v830
      %v832 = vpop.f32.mrb[0].mxu0
      %v833 = vpop.f32.mrb[0].mxu0
      %v834 = vadd.f32 0.0, %v833
      %v835 = vpop.f32.mrb[0].mxu0
      %836 = vmatprep.mubr.bf16.mxu0 0
      %837 = vmatmul.mubr.bf16.gmra.mrb[0].mxu0 %v698
      %v838 = vpop.f32.mrb[0].mxu0
      %v839 = vadd.f32 0.0, %v838
      %v840 = vpop.f32.mrb[0].mxu0
      %v841 = vpop.f32.mrb[0].mxu0
      %v842 = vadd.f32 0.0, %v841
      %v843 = vpop.f32.mrb[0].mxu0
      %844 = vmatprep.mubr.bf16.mxu0 0
      %845 = vmatmul.mubr.bf16.gmra.mrb[0].mxu0 %v701
      %v846 = vpop.f32.mrb[0].mxu0
      %v847 = vadd.f32 0.0, %v846
      %v848 = vpop.f32.mrb[0].mxu0
      %v849 = vpop.f32.mrb[0].mxu0
      %v850 = vadd.f32 0.0, %v849
      %v851 = vpop.f32.mrb[0].mxu0
      %852 = vmatprep.mubr.bf16.mxu0 0
      %853 = vmatmul.mubr.bf16.gmra.mrb[0].mxu0 %v704
      %v854 = vpop.f32.mrb[0].mxu0
      %v855 = vadd.f32 0.0, %v854
      %v856 = vpop.f32.mrb[0].mxu0
      %v857 = vpop.f32.mrb[0].mxu0
      %v858 = vadd.f32 0.0, %v857
      %v859 = vpop.f32.mrb[0].mxu0
      %860 = vmatprep.mubr.bf16.mxu0 0
      %861 = vmatmul.mubr.bf16.gmra.mrb[0].mxu0 %v707
      %v862 = vpop.f32.mrb[0].mxu0
      %v863 = vadd.f32 0.0, %v862
      %v864 = vpop.f32.mrb[0].mxu0
      %v865 = vpop.f32.mrb[0].mxu0
      %v866 = vadd.f32 0.0, %v865
      %v867 = vpop.f32.mrb[0].mxu0
      %868 = vmatprep.mubr.bf16.mxu0 0
      %869 = vmatmul.mubr.bf16.gmra.mrb[0].mxu0 %v710
      %v870 = vpop.f32.mrb[0].mxu0
      %v871 = vadd.f32 0.0, %v870
      %v872 = vpop.f32.mrb[0].mxu0
      %v873 = vpop.f32.mrb[0].mxu0
      %v874 = vadd.f32 0.0, %v873
      %v875 = vpop.f32.mrb[0].mxu0
      %876 = vdwg.mxu0
      %v909 = vunpack.c.l.b16 %v177
      %v910 = vunpack.c.l.b16 %v178
      %v911 = vunpack.c.l.b16 %v179
      %v912 = vunpack.c.l.b16 %v180
      %v913 = vunpack.c.l.b16 %v181
      %v914 = vunpack.c.l.b16 %v182
      %v915 = vunpack.c.l.b16 %v183
      %v916 = vunpack.c.l.b16 %v184
      %v917 = vunpack.c.l.b16 %v185
      %v918 = vunpack.c.l.b16 %v186
      %v919 = vunpack.c.l.b16 %v187
      %v920 = vunpack.c.l.b16 %v188
      %v921 = vunpack.c.l.b16 %v189
      %v922 = vunpack.c.l.b16 %v190
      %v923 = vunpack.c.l.b16 %v191
      %v924 = vunpack.c.l.b16 %v192
      %v925 = vunpack.c.l.b16 %v193
      %v926 = vunpack.c.l.b16 %v194
      %v927 = vunpack.c.l.b16 %v195
      %v928 = vunpack.c.l.b16 %v196
      %v929 = vunpack.c.l.b16 %v197
      %v930 = vunpack.c.l.b16 %v198
      %v931 = vunpack.c.l.b16 %v199
      %v932 = vunpack.c.l.b16 %v200
      %v933 = vunpack.c.l.b16 %v201
      %v934 = vunpack.c.l.b16 %v202
      %v935 = vunpack.c.l.b16 %v203
      %v936 = vunpack.c.l.b16 %v204
      %v937 = vunpack.c.l.b16 %v205
      %v938 = vunpack.c.l.b16 %v206
      %v939 = vunpack.c.l.b16 %v207
      %v940 = vunpack.c.l.b16 %v208
      %v941 = vpack.c.b16 %v910, %v909
      %v942 = vpack.c.b16 %v912, %v911
      %v943 = vpack.c.b16 %v914, %v913
      %v944 = vpack.c.b16 %v916, %v915
      %v945 = vpack.c.b16 %v918, %v917
      %v946 = vpack.c.b16 %v920, %v919
      %v947 = vpack.c.b16 %v922, %v921
      %v948 = vpack.c.b16 %v924, %v923
      %v949 = vpack.c.b16 %v926, %v925
      %v950 = vpack.c.b16 %v928, %v927
      %v951 = vpack.c.b16 %v930, %v929
      %v952 = vpack.c.b16 %v932, %v931
      %v953 = vpack.c.b16 %v934, %v933
      %v954 = vpack.c.b16 %v936, %v935
      %v955 = vpack.c.b16 %v938, %v937
      %v956 = vpack.c.b16 %v940, %v939
      %v958 = vsel %vm663, %v941, 0
      %v961 = vsel %vm663, %v942, 0
      %v964 = vsel %vm663, %v943, 0
      %v967 = vsel %vm663, %v944, 0
      %v970 = vsel %vm663, %v945, 0
      %v973 = vsel %vm663, %v946, 0
      %v976 = vsel %vm663, %v947, 0
      %v979 = vsel %vm663, %v948, 0
      %v982 = vsel %vm663, %v949, 0
      %v985 = vsel %vm663, %v950, 0
      %v988 = vsel %vm663, %v951, 0
      %v991 = vsel %vm663, %v952, 0
      %v994 = vsel %vm663, %v953, 0
      %v997 = vsel %vm663, %v954, 0
      %v1000 = vsel %vm663, %v955, 0
      %v1003 = vsel %vm663, %v956, 0
      %v1006 = vsel %vm712, %v209, 0
      %1008 = vmatprep.subr.bf16.mxu0 0
      %1009 = vmatpush1.bf16.msra.mxu0 %v1006
      %1010 = vmatprep.subr.bf16.mxu0 0
      %1011 = vmatpush1.bf16.msra.mxu0 0
      %1012 = vmatprep.subr.bf16.mxu0 0
      %1013 = vmatpush1.bf16.msra.mxu0 0
      %1014 = vmatprep.subr.bf16.mxu0 0
      %1015 = vmatpush1.bf16.msra.mxu0 0
      %1016 = vmatprep.subr.bf16.mxu0 0
      %1017 = vmatpush1.bf16.msra.mxu0 0
      %1018 = vmatprep.subr.bf16.mxu0 0
      %1019 = vmatpush1.bf16.msra.mxu0 0
      %1020 = vmatprep.subr.bf16.mxu0 0
      %1021 = vmatpush1.bf16.msra.mxu0 0
      %1022 = vmatprep.subr.bf16.mxu0 0
      %1023 = vmatpush1.bf16.msra.mxu0 0
      %1024 = vmatprep.subr.bf16.mxu0 0
      %1025 = vmatpush1.bf16.msra.mxu0 0
      %1026 = vmatprep.subr.bf16.mxu0 0
      %1027 = vmatpush1.bf16.msra.mxu0 0
      %1028 = vmatprep.subr.bf16.mxu0 0
      %1029 = vmatpush1.bf16.msra.mxu0 0
      %1030 = vmatprep.subr.bf16.mxu0 0
      %1031 = vmatpush1.bf16.msra.mxu0 0
      %1032 = vmatprep.subr.bf16.mxu0 0
      %1033 = vmatpush1.bf16.msra.mxu0 0
      %1034 = vmatprep.subr.bf16.mxu0 0
      %1035 = vmatpush1.bf16.msra.mxu0 0
      %1036 = vmatprep.subr.bf16.mxu0 0
      %1037 = vmatpush1.bf16.msra.mxu0 0
      %1038 = vmatprep.subr.bf16.mxu0 0
      %1039 = vmatpush1.bf16.msra.mxu0 0
      %1040 = vmatprep.mubr.bf16.mxu0 0
      %1041 = vmatmul.mubr.bf16.gmra.mrb[0].mxu0 %v958
      %v1042 = vpop.f32.mrb[0].mxu0
      %v1043 = vadd.f32 %v751, %v1042
      %v1044 = vpop.f32.mrb[0].mxu0
      %v1045 = vpop.f32.mrb[0].mxu0
      %v1046 = vadd.f32 %v754, %v1045
      %v1047 = vpop.f32.mrb[0].mxu0
      %1048 = vmatprep.mubr.bf16.mxu0 0
      %1049 = vmatmul.mubr.bf16.gmra.mrb[0].mxu0 %v961
      %v1050 = vpop.f32.mrb[0].mxu0
      %v1051 = vadd.f32 %v759, %v1050
      %v1052 = vpop.f32.mrb[0].mxu0
      %v1053 = vpop.f32.mrb[0].mxu0
      %v1054 = vadd.f32 %v762, %v1053
      %v1055 = vpop.f32.mrb[0].mxu0
      %1056 = vmatprep.mubr.bf16.mxu0 0
      %1057 = vmatmul.mubr.bf16.gmra.mrb[0].mxu0 %v964
      %v1058 = vpop.f32.mrb[0].mxu0
      %v1059 = vadd.f32 %v767, %v1058
      %v1060 = vpop.f32.mrb[0].mxu0
      %v1061 = vpop.f32.mrb[0].mxu0
      %v1062 = vadd.f32 %v770, %v1061
      %v1063 = vpop.f32.mrb[0].mxu0
      %1064 = vmatprep.mubr.bf16.mxu0 0
      %1065 = vmatmul.mubr.bf16.gmra.mrb[0].mxu0 %v967
      %v1066 = vpop.f32.mrb[0].mxu0
      %v1067 = vadd.f32 %v775, %v1066
      %v1068 = vpop.f32.mrb[0].mxu0
      %v1069 = vpop.f32.mrb[0].mxu0
      %v1070 = vadd.f32 %v778, %v1069
      %v1071 = vpop.f32.mrb[0].mxu0
      %1072 = vmatprep.mubr.bf16.mxu0 0
      %1073 = vmatmul.mubr.bf16.gmra.mrb[0].mxu0 %v970
      %v1074 = vpop.f32.mrb[0].mxu0
      %v1075 = vadd.f32 %v783, %v1074
      %v1076 = vpop.f32.mrb[0].mxu0
      %v1077 = vpop.f32.mrb[0].mxu0
      %v1078 = vadd.f32 %v786, %v1077
      %v1079 = vpop.f32.mrb[0].mxu0
      %1080 = vmatprep.mubr.bf16.mxu0 0
      %1081 = vmatmul.mubr.bf16.gmra.mrb[0].mxu0 %v973
      %v1082 = vpop.f32.mrb[0].mxu0
      %v1083 = vadd.f32 %v791, %v1082
      %v1084 = vpop.f32.mrb[0].mxu0
      %v1085 = vpop.f32.mrb[0].mxu0
      %v1086 = vadd.f32 %v794, %v1085
      %v1087 = vpop.f32.mrb[0].mxu0
      %1088 = vmatprep.mubr.bf16.mxu0 0
      %1089 = vmatmul.mubr.bf16.gmra.mrb[0].mxu0 %v976
      %v1090 = vpop.f32.mrb[0].mxu0
      %v1091 = vadd.f32 %v799, %v1090
      %v1092 = vpop.f32.mrb[0].mxu0
      %v1093 = vpop.f32.mrb[0].mxu0
      %v1094 = vadd.f32 %v802, %v1093
      %v1095 = vpop.f32.mrb[0].mxu0
      %1096 = vmatprep.mubr.bf16.mxu0 0
      %1097 = vmatmul.mubr.bf16.gmra.mrb[0].mxu0 %v979
      %v1098 = vpop.f32.mrb[0].mxu0
      %v1099 = vadd.f32 %v807, %v1098
      %v1100 = vpop.f32.mrb[0].mxu0
      %v1101 = vpop.f32.mrb[0].mxu0
      %v1102 = vadd.f32 %v810, %v1101
      %v1103 = vpop.f32.mrb[0].mxu0
      %1104 = vmatprep.mubr.bf16.mxu0 0
      %1105 = vmatmul.mubr.bf16.gmra.mrb[0].mxu0 %v982
      %v1106 = vpop.f32.mrb[0].mxu0
      %v1107 = vadd.f32 %v815, %v1106
      %v1108 = vpop.f32.mrb[0].mxu0
      %v1109 = vpop.f32.mrb[0].mxu0
      %v1110 = vadd.f32 %v818, %v1109
      %v1111 = vpop.f32.mrb[0].mxu0
      %1112 = vmatprep.mubr.bf16.mxu0 0
      %1113 = vmatmul.mubr.bf16.gmra.mrb[0].mxu0 %v985
      %v1114 = vpop.f32.mrb[0].mxu0
      %v1115 = vadd.f32 %v823, %v1114
      %v1116 = vpop.f32.mrb[0].mxu0
      %v1117 = vpop.f32.mrb[0].mxu0
      %v1118 = vadd.f32 %v826, %v1117
      %v1119 = vpop.f32.mrb[0].mxu0
      %1120 = vmatprep.mubr.bf16.mxu0 0
      %1121 = vmatmul.mubr.bf16.gmra.mrb[0].mxu0 %v988
      %v1122 = vpop.f32.mrb[0].mxu0
      %v1123 = vadd.f32 %v831, %v1122
      %v1124 = vpop.f32.mrb[0].mxu0
      %v1125 = vpop.f32.mrb[0].mxu0
      %v1126 = vadd.f32 %v834, %v1125
      %v1127 = vpop.f32.mrb[0].mxu0
      %1128 = vmatprep.mubr.bf16.mxu0 0
      %1129 = vmatmul.mubr.bf16.gmra.mrb[0].mxu0 %v991
      %v1130 = vpop.f32.mrb[0].mxu0
      %v1131 = vadd.f32 %v839, %v1130
      %v1132 = vpop.f32.mrb[0].mxu0
      %v1133 = vpop.f32.mrb[0].mxu0
      %v1134 = vadd.f32 %v842, %v1133
      %v1135 = vpop.f32.mrb[0].mxu0
      %1136 = vmatprep.mubr.bf16.mxu0 0
      %1137 = vmatmul.mubr.bf16.gmra.mrb[0].mxu0 %v994
      %v1138 = vpop.f32.mrb[0].mxu0
      %v1139 = vadd.f32 %v847, %v1138
      %v1140 = vpop.f32.mrb[0].mxu0
      %v1141 = vpop.f32.mrb[0].mxu0
      %v1142 = vadd.f32 %v850, %v1141
      %v1143 = vpop.f32.mrb[0].mxu0
      %1144 = vmatprep.mubr.bf16.mxu0 0
      %1145 = vmatmul.mubr.bf16.gmra.mrb[0].mxu0 %v997
      %v1146 = vpop.f32.mrb[0].mxu0
      %v1147 = vadd.f32 %v855, %v1146
      %v1148 = vpop.f32.mrb[0].mxu0
      %v1149 = vpop.f32.mrb[0].mxu0
      %v1150 = vadd.f32 %v858, %v1149
      %v1151 = vpop.f32.mrb[0].mxu0
      %1152 = vmatprep.mubr.bf16.mxu0 0
      %1153 = vmatmul.mubr.bf16.gmra.mrb[0].mxu0 %v1000
      %v1154 = vpop.f32.mrb[0].mxu0
      %v1155 = vadd.f32 %v863, %v1154
      %v1156 = vpop.f32.mrb[0].mxu0
      %v1157 = vpop.f32.mrb[0].mxu0
      %v1158 = vadd.f32 %v866, %v1157
      %v1159 = vpop.f32.mrb[0].mxu0
      %1160 = vmatprep.mubr.bf16.mxu0 0
      %1161 = vmatmul.mubr.bf16.gmra.mrb[0].mxu0 %v1003
      %v1162 = vpop.f32.mrb[0].mxu0
      %v1163 = vadd.f32 %v871, %v1162
      %v1164 = vpop.f32.mrb[0].mxu0
      %v1165 = vpop.f32.mrb[0].mxu0
      %v1166 = vadd.f32 %v874, %v1165
      %v1167 = vpop.f32.mrb[0].mxu0
      %1168 = vdwg.mxu0
      %v1169 = vld [vmem:[%s169] sm:$0xe]
      %v1170 = vld [vmem:[%s169 + $0xc] sm:$0xe]
      %v1171 = vld [vmem:[%s169 + $0x18] sm:$0xe]
      %v1172 = vld [vmem:[%s169 + $0x24] sm:$0xe]
      %v1173 = vld [vmem:[%s169 + $0x30] sm:$0xe]
      %v1174 = vld [vmem:[%s169 + $0x3c] sm:$0xe]
      %v1175 = vld [vmem:[%s169 + $0x48] sm:$0xe]
      %v1176 = vld [vmem:[%s169 + $0x54] sm:$0xe]
      %v1177 = vld [vmem:[%s169 + $0x60] sm:$0xe]
      %v1178 = vld [vmem:[%s169 + $0x6c] sm:$0xe]
      %v1179 = vld [vmem:[%s169 + $0x78] sm:$0xe]
      %v1180 = vld [vmem:[%s169 + $0x84] sm:$0xe]
      %v1181 = vld [vmem:[%s169 + $0x90] sm:$0xe]
      %v1182 = vld [vmem:[%s169 + $0x9c] sm:$0xe]
      %v1183 = vld [vmem:[%s169 + $0xa8] sm:$0xe]
      %v1184 = vld [vmem:[%s169 + $0xb4] sm:$0xe]
      %vm1217 = vcmask 1042432
      %vm1218 = vcmask 1046532
      %vm1219 = vmor %vm1217, %vm1218
      %v1220 = vrot.slane %v1169, 5
      %v1221 = vrot.slane %v1220, 4
      %v1222 = vrot.slane %v178, 5
      %v1223 = vsel %vm1219, %v1221, %v1222
      %v1224 = vrot.slane %v1222, 4
      %v1225 = vrot.slane %v210, 5
      %v1226 = vsel %vm1219, %v1224, %v1225
      %v1227 = vrot.slane %v1170, 5
      %v1228 = vrot.slane %v1227, 4
      %v1229 = vrot.slane %v180, 5
      %v1230 = vsel %vm1219, %v1228, %v1229
      %v1231 = vrot.slane %v1229, 4
      %v1232 = vrot.slane %v211, 5
      %v1233 = vsel %vm1219, %v1231, %v1232
      %v1234 = vrot.slane %v1171, 5
      %v1235 = vrot.slane %v1234, 4
      %v1236 = vrot.slane %v182, 5
      %v1237 = vsel %vm1219, %v1235, %v1236
      %v1238 = vrot.slane %v1236, 4
      %v1239 = vrot.slane %v212, 5
      %v1240 = vsel %vm1219, %v1238, %v1239
      %v1241 = vrot.slane %v1172, 5
      %v1242 = vrot.slane %v1241, 4
      %v1243 = vrot.slane %v184, 5
      %v1244 = vsel %vm1219, %v1242, %v1243
      %v1245 = vrot.slane %v1243, 4
      %v1246 = vrot.slane %v213, 5
      %v1247 = vsel %vm1219, %v1245, %v1246
      %v1248 = vrot.slane %v1173, 5
      %v1249 = vrot.slane %v1248, 4
      %v1250 = vrot.slane %v186, 5
      %v1251 = vsel %vm1219, %v1249, %v1250
      %v1252 = vrot.slane %v1250, 4
      %v1253 = vrot.slane %v214, 5
      %v1254 = vsel %vm1219, %v1252, %v1253
      %v1255 = vrot.slane %v1174, 5
      %v1256 = vrot.slane %v1255, 4
      %v1257 = vrot.slane %v188, 5
      %v1258 = vsel %vm1219, %v1256, %v1257
      %v1259 = vrot.slane %v1257, 4
      %v1260 = vrot.slane %v215, 5
      %v1261 = vsel %vm1219, %v1259, %v1260
      %v1262 = vrot.slane %v1175, 5
      %v1263 = vrot.slane %v1262, 4
      %v1264 = vrot.slane %v190, 5
      %v1265 = vsel %vm1219, %v1263, %v1264
      %v1266 = vrot.slane %v1264, 4
      %v1267 = vrot.slane %v216, 5
      %v1268 = vsel %vm1219, %v1266, %v1267
      %v1269 = vrot.slane %v1176, 5
      %v1270 = vrot.slane %v1269, 4
      %v1271 = vrot.slane %v192, 5
      %v1272 = vsel %vm1219, %v1270, %v1271
      %v1273 = vrot.slane %v1271, 4
      %v1274 = vrot.slane %v217, 5
      %v1275 = vsel %vm1219, %v1273, %v1274
      %v1276 = vrot.slane %v1177, 5
      %v1277 = vrot.slane %v1276, 4
      %v1278 = vrot.slane %v194, 5
      %v1279 = vsel %vm1219, %v1277, %v1278
      %v1280 = vrot.slane %v1278, 4
      %v1281 = vrot.slane %v218, 5
      %v1282 = vsel %vm1219, %v1280, %v1281
      %v1283 = vrot.slane %v1178, 5
      %v1284 = vrot.slane %v1283, 4
      %v1285 = vrot.slane %v196, 5
      %v1286 = vsel %vm1219, %v1284, %v1285
      %v1287 = vrot.slane %v1285, 4
      %v1288 = vrot.slane %v219, 5
      %v1289 = vsel %vm1219, %v1287, %v1288
      %v1290 = vrot.slane %v1179, 5
      %v1291 = vrot.slane %v1290, 4
      %v1292 = vrot.slane %v198, 5
      %v1293 = vsel %vm1219, %v1291, %v1292
      %v1294 = vrot.slane %v1292, 4
      %v1295 = vrot.slane %v220, 5
      %v1296 = vsel %vm1219, %v1294, %v1295
      %v1297 = vrot.slane %v1180, 5
      %v1298 = vrot.slane %v1297, 4
      %v1299 = vrot.slane %v200, 5
      %v1300 = vsel %vm1219, %v1298, %v1299
      %v1301 = vrot.slane %v1299, 4
      %v1302 = vrot.slane %v221, 5
      %v1303 = vsel %vm1219, %v1301, %v1302
      %v1304 = vrot.slane %v1181, 5
      %v1305 = vrot.slane %v1304, 4
      %v1306 = vrot.slane %v202, 5
      %v1307 = vsel %vm1219, %v1305, %v1306
      %v1308 = vrot.slane %v1306, 4
      %v1309 = vrot.slane %v222, 5
      %v1310 = vsel %vm1219, %v1308, %v1309
      %v1311 = vrot.slane %v1182, 5
      %v1312 = vrot.slane %v1311, 4
      %v1313 = vrot.slane %v204, 5
      %v1314 = vsel %vm1219, %v1312, %v1313
      %v1315 = vrot.slane %v1313, 4
      %v1316 = vrot.slane %v223, 5
      %v1317 = vsel %vm1219, %v1315, %v1316
      %v1318 = vrot.slane %v1183, 5
      %v1319 = vrot.slane %v1318, 4
      %v1320 = vrot.slane %v206, 5
      %v1321 = vsel %vm1219, %v1319, %v1320
      %v1322 = vrot.slane %v1320, 4
      %v1323 = vrot.slane %v224, 5
      %v1324 = vsel %vm1219, %v1322, %v1323
      %v1325 = vrot.slane %v1184, 5
      %v1326 = vrot.slane %v1325, 4
      %v1327 = vrot.slane %v208, 5
      %v1328 = vsel %vm1219, %v1326, %v1327
      %v1329 = vrot.slane %v1327, 4
      %v1330 = vrot.slane %v225, 5
      %v1331 = vsel %vm1219, %v1329, %v1330
      %s1332 = scalar_lea.vmem %s1, 4
      %v1333 = vld [vmem:[%s1332] sm:$0x3]
      %v1334 = vunpack.c.l.b16 %v1223
      %v1335 = vunpack.c.l.b16 %v1226
      %v1336 = vunpack.c.l.b16 %v1230
      %v1337 = vunpack.c.l.b16 %v1233
      %v1338 = vunpack.c.l.b16 %v1237
      %v1339 = vunpack.c.l.b16 %v1240
      %v1340 = vunpack.c.l.b16 %v1244
      %v1341 = vunpack.c.l.b16 %v1247
      %v1342 = vunpack.c.l.b16 %v1251
      %v1343 = vunpack.c.l.b16 %v1254
      %v1344 = vunpack.c.l.b16 %v1258
      %v1345 = vunpack.c.l.b16 %v1261
      %v1346 = vunpack.c.l.b16 %v1265
      %v1347 = vunpack.c.l.b16 %v1268
      %v1348 = vunpack.c.l.b16 %v1272
      %v1349 = vunpack.c.l.b16 %v1275
      %v1350 = vunpack.c.l.b16 %v1279
      %v1351 = vunpack.c.l.b16 %v1282
      %v1352 = vunpack.c.l.b16 %v1286
      %v1353 = vunpack.c.l.b16 %v1289
      %v1354 = vunpack.c.l.b16 %v1293
      %v1355 = vunpack.c.l.b16 %v1296
      %v1356 = vunpack.c.l.b16 %v1300
      %v1357 = vunpack.c.l.b16 %v1303
      %v1358 = vunpack.c.l.b16 %v1307
      %v1359 = vunpack.c.l.b16 %v1310
      %v1360 = vunpack.c.l.b16 %v1314
      %v1361 = vunpack.c.l.b16 %v1317
      %v1362 = vunpack.c.l.b16 %v1321
      %v1363 = vunpack.c.l.b16 %v1324
      %v1364 = vunpack.c.l.b16 %v1328
      %v1365 = vunpack.c.l.b16 %v1331
      %v1366 = vpack.c.b16 %v1335, %v1334
      %v1367 = vpack.c.b16 %v1337, %v1336
      %v1368 = vpack.c.b16 %v1339, %v1338
      %v1369 = vpack.c.b16 %v1341, %v1340
      %v1370 = vpack.c.b16 %v1343, %v1342
      %v1371 = vpack.c.b16 %v1345, %v1344
      %v1372 = vpack.c.b16 %v1347, %v1346
      %v1373 = vpack.c.b16 %v1349, %v1348
      %v1374 = vpack.c.b16 %v1351, %v1350
      %v1375 = vpack.c.b16 %v1353, %v1352
      %v1376 = vpack.c.b16 %v1355, %v1354
      %v1377 = vpack.c.b16 %v1357, %v1356
      %v1378 = vpack.c.b16 %v1359, %v1358
      %v1379 = vpack.c.b16 %v1361, %v1360
      %v1380 = vpack.c.b16 %v1363, %v1362
      %v1381 = vpack.c.b16 %v1365, %v1364
      %v1383 = vsel %vm663, %v1366, 0
      %v1386 = vsel %vm663, %v1367, 0
      %v1389 = vsel %vm663, %v1368, 0
      %v1392 = vsel %vm663, %v1369, 0
      %v1395 = vsel %vm663, %v1370, 0
      %v1398 = vsel %vm663, %v1371, 0
      %v1401 = vsel %vm663, %v1372, 0
      %v1404 = vsel %vm663, %v1373, 0
      %v1407 = vsel %vm663, %v1374, 0
      %v1410 = vsel %vm663, %v1375, 0
      %v1413 = vsel %vm663, %v1376, 0
      %v1416 = vsel %vm663, %v1377, 0
      %v1419 = vsel %vm663, %v1378, 0
      %v1422 = vsel %vm663, %v1379, 0
      %v1425 = vsel %vm663, %v1380, 0
      %v1428 = vsel %vm663, %v1381, 0
      %v1431 = vsel %vm712, %v1333, 0
      %1433 = vmatprep.subr.bf16.mxu0 0
      %1434 = vmatpush1.bf16.msra.mxu0 %v1431
      %1435 = vmatprep.subr.bf16.mxu0 0
      %1436 = vmatpush1.bf16.msra.mxu0 0
      %1437 = vmatprep.subr.bf16.mxu0 0
      %1438 = vmatpush1.bf16.msra.mxu0 0
      %1439 = vmatprep.subr.bf16.mxu0 0
      %1440 = vmatpush1.bf16.msra.mxu0 0
      %1441 = vmatprep.subr.bf16.mxu0 0
      %1442 = vmatpush1.bf16.msra.mxu0 0
      %1443 = vmatprep.subr.bf16.mxu0 0
      %1444 = vmatpush1.bf16.msra.mxu0 0
      %1445 = vmatprep.subr.bf16.mxu0 0
      %1446 = vmatpush1.bf16.msra.mxu0 0
      %1447 = vmatprep.subr.bf16.mxu0 0
      %1448 = vmatpush1.bf16.msra.mxu0 0
      %1449 = vmatprep.subr.bf16.mxu0 0
      %1450 = vmatpush1.bf16.msra.mxu0 0
      %1451 = vmatprep.subr.bf16.mxu0 0
      %1452 = vmatpush1.bf16.msra.mxu0 0
      %1453 = vmatprep.subr.bf16.mxu0 0
      %1454 = vmatpush1.bf16.msra.mxu0 0
      %1455 = vmatprep.subr.bf16.mxu0 0
      %1456 = vmatpush1.bf16.msra.mxu0 0
      %1457 = vmatprep.subr.bf16.mxu0 0
      %1458 = vmatpush1.bf16.msra.mxu0 0
      %1459 = vmatprep.subr.bf16.mxu0 0
      %1460 = vmatpush1.bf16.msra.mxu0 0
      %1461 = vmatprep.subr.bf16.mxu0 0
      %1462 = vmatpush1.bf16.msra.mxu0 0
      %1463 = vmatprep.subr.bf16.mxu0 0
      %1464 = vmatpush1.bf16.msra.mxu0 0
      %1465 = vmatprep.mubr.bf16.mxu0 0
      %1466 = vmatmul.mubr.bf16.gmra.mrb[0].mxu0 %v1383
      %v1467 = vpop.f32.mrb[0].mxu0
      %v1468 = vadd.f32 0.0, %v1467
      %v1469 = vpop.f32.mrb[0].mxu0
      %v1470 = vpop.f32.mrb[0].mxu0
      %v1471 = vadd.f32 0.0, %v1470
      %v1472 = vpop.f32.mrb[0].mxu0
      %1473 = vmatprep.mubr.bf16.mxu0 0
      %1474 = vmatmul.mubr.bf16.gmra.mrb[0].mxu0 %v1386
      %v1475 = vpop.f32.mrb[0].mxu0
      %v1476 = vadd.f32 0.0, %v1475
      %v1477 = vpop.f32.mrb[0].mxu0
      %v1478 = vpop.f32.mrb[0].mxu0
      %v1479 = vadd.f32 0.0, %v1478
      %v1480 = vpop.f32.mrb[0].mxu0
      %1481 = vmatprep.mubr.bf16.mxu0 0
      %1482 = vmatmul.mubr.bf16.gmra.mrb[0].mxu0 %v1389
      %v1483 = vpop.f32.mrb[0].mxu0
      %v1484 = vadd.f32 0.0, %v1483
      %v1485 = vpop.f32.mrb[0].mxu0
      %v1486 = vpop.f32.mrb[0].mxu0
      %v1487 = vadd.f32 0.0, %v1486
      %v1488 = vpop.f32.mrb[0].mxu0
      %1489 = vmatprep.mubr.bf16.mxu0 0
      %1490 = vmatmul.mubr.bf16.gmra.mrb[0].mxu0 %v1392
      %v1491 = vpop.f32.mrb[0].mxu0
      %v1492 = vadd.f32 0.0, %v1491
      %v1493 = vpop.f32.mrb[0].mxu0
      %v1494 = vpop.f32.mrb[0].mxu0
      %v1495 = vadd.f32 0.0, %v1494
      %v1496 = vpop.f32.mrb[0].mxu0
      %1497 = vmatprep.mubr.bf16.mxu0 0
      %1498 = vmatmul.mubr.bf16.gmra.mrb[0].mxu0 %v1395
      %v1499 = vpop.f32.mrb[0].mxu0
      %v1500 = vadd.f32 0.0, %v1499
      %v1501 = vpop.f32.mrb[0].mxu0
      %v1502 = vpop.f32.mrb[0].mxu0
      %v1503 = vadd.f32 0.0, %v1502
      %v1504 = vpop.f32.mrb[0].mxu0
      %1505 = vmatprep.mubr.bf16.mxu0 0
      %1506 = vmatmul.mubr.bf16.gmra.mrb[0].mxu0 %v1398
      %v1507 = vpop.f32.mrb[0].mxu0
      %v1508 = vadd.f32 0.0, %v1507
      %v1509 = vpop.f32.mrb[0].mxu0
      %v1510 = vpop.f32.mrb[0].mxu0
      %v1511 = vadd.f32 0.0, %v1510
      %v1512 = vpop.f32.mrb[0].mxu0
      %1513 = vmatprep.mubr.bf16.mxu0 0
      %1514 = vmatmul.mubr.bf16.gmra.mrb[0].mxu0 %v1401
      %v1515 = vpop.f32.mrb[0].mxu0
      %v1516 = vadd.f32 0.0, %v1515
      %v1517 = vpop.f32.mrb[0].mxu0
      %v1518 = vpop.f32.mrb[0].mxu0
      %v1519 = vadd.f32 0.0, %v1518
      %v1520 = vpop.f32.mrb[0].mxu0
      %1521 = vmatprep.mubr.bf16.mxu0 0
      %1522 = vmatmul.mubr.bf16.gmra.mrb[0].mxu0 %v1404
      %v1523 = vpop.f32.mrb[0].mxu0
      %v1524 = vadd.f32 0.0, %v1523
      %v1525 = vpop.f32.mrb[0].mxu0
      %v1526 = vpop.f32.mrb[0].mxu0
      %v1527 = vadd.f32 0.0, %v1526
      %v1528 = vpop.f32.mrb[0].mxu0
      %1529 = vmatprep.mubr.bf16.mxu0 0
      %1530 = vmatmul.mubr.bf16.gmra.mrb[0].mxu0 %v1407
      %v1531 = vpop.f32.mrb[0].mxu0
      %v1532 = vadd.f32 0.0, %v1531
      %v1533 = vpop.f32.mrb[0].mxu0
      %v1534 = vpop.f32.mrb[0].mxu0
      %v1535 = vadd.f32 0.0, %v1534
      %v1536 = vpop.f32.mrb[0].mxu0
      %1537 = vmatprep.mubr.bf16.mxu0 0
      %1538 = vmatmul.mubr.bf16.gmra.mrb[0].mxu0 %v1410
      %v1539 = vpop.f32.mrb[0].mxu0
      %v1540 = vadd.f32 0.0, %v1539
      %v1541 = vpop.f32.mrb[0].mxu0
      %v1542 = vpop.f32.mrb[0].mxu0
      %v1543 = vadd.f32 0.0, %v1542
      %v1544 = vpop.f32.mrb[0].mxu0
      %1545 = vmatprep.mubr.bf16.mxu0 0
      %1546 = vmatmul.mubr.bf16.gmra.mrb[0].mxu0 %v1413
      %v1547 = vpop.f32.mrb[0].mxu0
      %v1548 = vadd.f32 0.0, %v1547
      %v1549 = vpop.f32.mrb[0].mxu0
      %v1550 = vpop.f32.mrb[0].mxu0
      %v1551 = vadd.f32 0.0, %v1550
      %v1552 = vpop.f32.mrb[0].mxu0
      %1553 = vmatprep.mubr.bf16.mxu0 0
      %1554 = vmatmul.mubr.bf16.gmra.mrb[0].mxu0 %v1416
      %v1555 = vpop.f32.mrb[0].mxu0
      %v1556 = vadd.f32 0.0, %v1555
      %v1557 = vpop.f32.mrb[0].mxu0
      %v1558 = vpop.f32.mrb[0].mxu0
      %v1559 = vadd.f32 0.0, %v1558
      %v1560 = vpop.f32.mrb[0].mxu0
      %1561 = vmatprep.mubr.bf16.mxu0 0
      %1562 = vmatmul.mubr.bf16.gmra.mrb[0].mxu0 %v1419
      %v1563 = vpop.f32.mrb[0].mxu0
      %v1564 = vadd.f32 0.0, %v1563
      %v1565 = vpop.f32.mrb[0].mxu0
      %v1566 = vpop.f32.mrb[0].mxu0
      %v1567 = vadd.f32 0.0, %v1566
      %v1568 = vpop.f32.mrb[0].mxu0
      %1569 = vmatprep.mubr.bf16.mxu0 0
      %1570 = vmatmul.mubr.bf16.gmra.mrb[0].mxu0 %v1422
      %v1571 = vpop.f32.mrb[0].mxu0
      %v1572 = vadd.f32 0.0, %v1571
      %v1573 = vpop.f32.mrb[0].mxu0
      %v1574 = vpop.f32.mrb[0].mxu0
      %v1575 = vadd.f32 0.0, %v1574
      %v1576 = vpop.f32.mrb[0].mxu0
      %1577 = vmatprep.mubr.bf16.mxu0 0
      %1578 = vmatmul.mubr.bf16.gmra.mrb[0].mxu0 %v1425
      %v1579 = vpop.f32.mrb[0].mxu0
      %v1580 = vadd.f32 0.0, %v1579
      %v1581 = vpop.f32.mrb[0].mxu0
      %v1582 = vpop.f32.mrb[0].mxu0
      %v1583 = vadd.f32 0.0, %v1582
      %v1584 = vpop.f32.mrb[0].mxu0
      %1585 = vmatprep.mubr.bf16.mxu0 0
      %1586 = vmatmul.mubr.bf16.gmra.mrb[0].mxu0 %v1428
      %v1587 = vpop.f32.mrb[0].mxu0
      %v1588 = vadd.f32 0.0, %v1587
      %v1589 = vpop.f32.mrb[0].mxu0
      %v1590 = vpop.f32.mrb[0].mxu0
      %v1591 = vadd.f32 0.0, %v1590
      %v1592 = vpop.f32.mrb[0].mxu0
      %1593 = vdwg.mxu0
      %v1594 = vadd.f32 %v1043, %v1468
      %v1595 = vadd.f32 %v1046, %v1471
      %v1596 = vadd.f32 %v1051, %v1476
      %v1597 = vadd.f32 %v1054, %v1479
      %v1598 = vadd.f32 %v1059, %v1484
      %v1599 = vadd.f32 %v1062, %v1487
      %v1600 = vadd.f32 %v1067, %v1492
      %v1601 = vadd.f32 %v1070, %v1495
      %v1602 = vadd.f32 %v1075, %v1500
      %v1603 = vadd.f32 %v1078, %v1503
      %v1604 = vadd.f32 %v1083, %v1508
      %v1605 = vadd.f32 %v1086, %v1511
      %v1606 = vadd.f32 %v1091, %v1516
      %v1607 = vadd.f32 %v1094, %v1519
      %v1608 = vadd.f32 %v1099, %v1524
      %v1609 = vadd.f32 %v1102, %v1527
      %v1610 = vadd.f32 %v1107, %v1532
      %v1611 = vadd.f32 %v1110, %v1535
      %v1612 = vadd.f32 %v1115, %v1540
      %v1613 = vadd.f32 %v1118, %v1543
      %v1614 = vadd.f32 %v1123, %v1548
      %v1615 = vadd.f32 %v1126, %v1551
      %v1616 = vadd.f32 %v1131, %v1556
      %v1617 = vadd.f32 %v1134, %v1559
      %v1618 = vadd.f32 %v1139, %v1564
      %v1619 = vadd.f32 %v1142, %v1567
      %v1620 = vadd.f32 %v1147, %v1572
      %v1621 = vadd.f32 %v1150, %v1575
      %v1622 = vadd.f32 %v1155, %v1580
      %v1623 = vadd.f32 %v1158, %v1583
      %v1624 = vadd.f32 %v1163, %v1588
      %v1625 = vadd.f32 %v1166, %v1591
      %s1626 = scalar_lea.vmem %s169, 12
      %v1627 = vld [vmem:[%s1626] sm:$0xf]
      %v1628 = vld [vmem:[%s1626 + $0x4] sm:$0xf]
      %v1629 = vld [vmem:[%s1626 + $0xc] sm:$0xf]
      %v1630 = vld [vmem:[%s1626 + $0x10] sm:$0xf]
      %v1631 = vld [vmem:[%s1626 + $0x18] sm:$0xf]
      %v1632 = vld [vmem:[%s1626 + $0x1c] sm:$0xf]
      %v1633 = vld [vmem:[%s1626 + $0x24] sm:$0xf]
      %v1634 = vld [vmem:[%s1626 + $0x28] sm:$0xf]
      %v1635 = vld [vmem:[%s1626 + $0x30] sm:$0xf]
      %v1636 = vld [vmem:[%s1626 + $0x34] sm:$0xf]
      %v1637 = vld [vmem:[%s1626 + $0x3c] sm:$0xf]
      %v1638 = vld [vmem:[%s1626 + $0x40] sm:$0xf]
      %v1639 = vld [vmem:[%s1626 + $0x48] sm:$0xf]
      %v1640 = vld [vmem:[%s1626 + $0x4c] sm:$0xf]
      %v1641 = vld [vmem:[%s1626 + $0x54] sm:$0xf]
      %v1642 = vld [vmem:[%s1626 + $0x58] sm:$0xf]
      %v1643 = vld [vmem:[%s1626 + $0x60] sm:$0xf]
      %v1644 = vld [vmem:[%s1626 + $0x64] sm:$0xf]
      %v1645 = vld [vmem:[%s1626 + $0x6c] sm:$0xf]
      %v1646 = vld [vmem:[%s1626 + $0x70] sm:$0xf]
      %v1647 = vld [vmem:[%s1626 + $0x78] sm:$0xf]
      %v1648 = vld [vmem:[%s1626 + $0x7c] sm:$0xf]
      %v1649 = vld [vmem:[%s1626 + $0x84] sm:$0xf]
      %v1650 = vld [vmem:[%s1626 + $0x88] sm:$0xf]
      %v1651 = vld [vmem:[%s1626 + $0x90] sm:$0xf]
      %v1652 = vld [vmem:[%s1626 + $0x94] sm:$0xf]
      %v1653 = vld [vmem:[%s1626 + $0x9c] sm:$0xf]
      %v1654 = vld [vmem:[%s1626 + $0xa0] sm:$0xf]
      %v1655 = vld [vmem:[%s1626 + $0xa8] sm:$0xf]
      %v1656 = vld [vmem:[%s1626 + $0xac] sm:$0xf]
      %v1657 = vld [vmem:[%s1626 + $0xb4] sm:$0xf]
      %v1658 = vld [vmem:[%s1626 + $0xb8] sm:$0xf]
      %s1659 = scalar_lea.vmem %s1, 6
      %v1660 = vld [vmem:[%s1659] sm:$0x3]
      %v1693 = vunpack.c.l.b16 %v1627
      %v1694 = vunpack.c.l.b16 %v1628
      %v1695 = vunpack.c.l.b16 %v1629
      %v1696 = vunpack.c.l.b16 %v1630
      %v1697 = vunpack.c.l.b16 %v1631
      %v1698 = vunpack.c.l.b16 %v1632
      %v1699 = vunpack.c.l.b16 %v1633
      %v1700 = vunpack.c.l.b16 %v1634
      %v1701 = vunpack.c.l.b16 %v1635
      %v1702 = vunpack.c.l.b16 %v1636
      %v1703 = vunpack.c.l.b16 %v1637
      %v1704 = vunpack.c.l.b16 %v1638
      %v1705 = vunpack.c.l.b16 %v1639
      %v1706 = vunpack.c.l.b16 %v1640
      %v1707 = vunpack.c.l.b16 %v1641
      %v1708 = vunpack.c.l.b16 %v1642
      %v1709 = vunpack.c.l.b16 %v1643
      %v1710 = vunpack.c.l.b16 %v1644
      %v1711 = vunpack.c.l.b16 %v1645
      %v1712 = vunpack.c.l.b16 %v1646
      %v1713 = vunpack.c.l.b16 %v1647
      %v1714 = vunpack.c.l.b16 %v1648
      %v1715 = vunpack.c.l.b16 %v1649
      %v1716 = vunpack.c.l.b16 %v1650
      %v1717 = vunpack.c.l.b16 %v1651
      %v1718 = vunpack.c.l.b16 %v1652
      %v1719 = vunpack.c.l.b16 %v1653
      %v1720 = vunpack.c.l.b16 %v1654
      %v1721 = vunpack.c.l.b16 %v1655
      %v1722 = vunpack.c.l.b16 %v1656
      %v1723 = vunpack.c.l.b16 %v1657
      %v1724 = vunpack.c.l.b16 %v1658
      %v1725 = vpack.c.b16 %v1694, %v1693
      %v1726 = vpack.c.b16 %v1696, %v1695
      %v1727 = vpack.c.b16 %v1698, %v1697
      %v1728 = vpack.c.b16 %v1700, %v1699
      %v1729 = vpack.c.b16 %v1702, %v1701
      %v1730 = vpack.c.b16 %v1704, %v1703
      %v1731 = vpack.c.b16 %v1706, %v1705
      %v1732 = vpack.c.b16 %v1708, %v1707
      %v1733 = vpack.c.b16 %v1710, %v1709
      %v1734 = vpack.c.b16 %v1712, %v1711
      %v1735 = vpack.c.b16 %v1714, %v1713
      %v1736 = vpack.c.b16 %v1716, %v1715
      %v1737 = vpack.c.b16 %v1718, %v1717
      %v1738 = vpack.c.b16 %v1720, %v1719
      %v1739 = vpack.c.b16 %v1722, %v1721
      %v1740 = vpack.c.b16 %v1724, %v1723
      %v1742 = vsel %vm663, %v1725, 0
      %v1745 = vsel %vm663, %v1726, 0
      %v1748 = vsel %vm663, %v1727, 0
      %v1751 = vsel %vm663, %v1728, 0
      %v1754 = vsel %vm663, %v1729, 0
      %v1757 = vsel %vm663, %v1730, 0
      %v1760 = vsel %vm663, %v1731, 0
      %v1763 = vsel %vm663, %v1732, 0
      %v1766 = vsel %vm663, %v1733, 0
      %v1769 = vsel %vm663, %v1734, 0
      %v1772 = vsel %vm663, %v1735, 0
      %v1775 = vsel %vm663, %v1736, 0
      %v1778 = vsel %vm663, %v1737, 0
      %v1781 = vsel %vm663, %v1738, 0
      %v1784 = vsel %vm663, %v1739, 0
      %v1787 = vsel %vm663, %v1740, 0
      %v1790 = vsel %vm712, %v1660, 0
      %1792 = vmatprep.subr.bf16.mxu0 0
      %1793 = vmatpush1.bf16.msra.mxu0 %v1790
      %1794 = vmatprep.subr.bf16.mxu0 0
      %1795 = vmatpush1.bf16.msra.mxu0 0
      %1796 = vmatprep.subr.bf16.mxu0 0
      %1797 = vmatpush1.bf16.msra.mxu0 0
      %1798 = vmatprep.subr.bf16.mxu0 0
      %1799 = vmatpush1.bf16.msra.mxu0 0
      %1800 = vmatprep.subr.bf16.mxu0 0
      %1801 = vmatpush1.bf16.msra.mxu0 0
      %1802 = vmatprep.subr.bf16.mxu0 0
      %1803 = vmatpush1.bf16.msra.mxu0 0
      %1804 = vmatprep.subr.bf16.mxu0 0
      %1805 = vmatpush1.bf16.msra.mxu0 0
      %1806 = vmatprep.subr.bf16.mxu0 0
      %1807 = vmatpush1.bf16.msra.mxu0 0
      %1808 = vmatprep.subr.bf16.mxu0 0
      %1809 = vmatpush1.bf16.msra.mxu0 0
      %1810 = vmatprep.subr.bf16.mxu0 0
      %1811 = vmatpush1.bf16.msra.mxu0 0
      %1812 = vmatprep.subr.bf16.mxu0 0
      %1813 = vmatpush1.bf16.msra.mxu0 0
      %1814 = vmatprep.subr.bf16.mxu0 0
      %1815 = vmatpush1.bf16.msra.mxu0 0
      %1816 = vmatprep.subr.bf16.mxu0 0
      %1817 = vmatpush1.bf16.msra.mxu0 0
      %1818 = vmatprep.subr.bf16.mxu0 0
      %1819 = vmatpush1.bf16.msra.mxu0 0
      %1820 = vmatprep.subr.bf16.mxu0 0
      %1821 = vmatpush1.bf16.msra.mxu0 0
      %1822 = vmatprep.subr.bf16.mxu0 0
      %1823 = vmatpush1.bf16.msra.mxu0 0
      %1824 = vmatprep.mubr.bf16.mxu0 0
      %1825 = vmatmul.mubr.bf16.gmra.mrb[0].mxu0 %v1742
      %v1826 = vpop.f32.mrb[0].mxu0
      %v1827 = vadd.f32 0.0, %v1826
      %v1828 = vpop.f32.mrb[0].mxu0
      %v1829 = vpop.f32.mrb[0].mxu0
      %v1830 = vadd.f32 0.0, %v1829
      %v1831 = vpop.f32.mrb[0].mxu0
      %1832 = vmatprep.mubr.bf16.mxu0 0
      %1833 = vmatmul.mubr.bf16.gmra.mrb[0].mxu0 %v1745
      %v1834 = vpop.f32.mrb[0].mxu0
      %v1835 = vadd.f32 0.0, %v1834
      %v1836 = vpop.f32.mrb[0].mxu0
      %v1837 = vpop.f32.mrb[0].mxu0
      %v1838 = vadd.f32 0.0, %v1837
      %v1839 = vpop.f32.mrb[0].mxu0
      %1840 = vmatprep.mubr.bf16.mxu0 0
      %1841 = vmatmul.mubr.bf16.gmra.mrb[0].mxu0 %v1748
      %v1842 = vpop.f32.mrb[0].mxu0
      %v1843 = vadd.f32 0.0, %v1842
      %v1844 = vpop.f32.mrb[0].mxu0
      %v1845 = vpop.f32.mrb[0].mxu0
      %v1846 = vadd.f32 0.0, %v1845
      %v1847 = vpop.f32.mrb[0].mxu0
      %1848 = vmatprep.mubr.bf16.mxu0 0
      %1849 = vmatmul.mubr.bf16.gmra.mrb[0].mxu0 %v1751
      %v1850 = vpop.f32.mrb[0].mxu0
      %v1851 = vadd.f32 0.0, %v1850
      %v1852 = vpop.f32.mrb[0].mxu0
      %v1853 = vpop.f32.mrb[0].mxu0
      %v1854 = vadd.f32 0.0, %v1853
      %v1855 = vpop.f32.mrb[0].mxu0
      %1856 = vmatprep.mubr.bf16.mxu0 0
      %1857 = vmatmul.mubr.bf16.gmra.mrb[0].mxu0 %v1754
      %v1858 = vpop.f32.mrb[0].mxu0
      %v1859 = vadd.f32 0.0, %v1858
      %v1860 = vpop.f32.mrb[0].mxu0
      %v1861 = vpop.f32.mrb[0].mxu0
      %v1862 = vadd.f32 0.0, %v1861
      %v1863 = vpop.f32.mrb[0].mxu0
      %1864 = vmatprep.mubr.bf16.mxu0 0
      %1865 = vmatmul.mubr.bf16.gmra.mrb[0].mxu0 %v1757
      %v1866 = vpop.f32.mrb[0].mxu0
      %v1867 = vadd.f32 0.0, %v1866
      %v1868 = vpop.f32.mrb[0].mxu0
      %v1869 = vpop.f32.mrb[0].mxu0
      %v1870 = vadd.f32 0.0, %v1869
      %v1871 = vpop.f32.mrb[0].mxu0
      %1872 = vmatprep.mubr.bf16.mxu0 0
      %1873 = vmatmul.mubr.bf16.gmra.mrb[0].mxu0 %v1760
      %v1874 = vpop.f32.mrb[0].mxu0
      %v1875 = vadd.f32 0.0, %v1874
      %v1876 = vpop.f32.mrb[0].mxu0
      %v1877 = vpop.f32.mrb[0].mxu0
      %v1878 = vadd.f32 0.0, %v1877
      %v1879 = vpop.f32.mrb[0].mxu0
      %1880 = vmatprep.mubr.bf16.mxu0 0
      %1881 = vmatmul.mubr.bf16.gmra.mrb[0].mxu0 %v1763
      %v1882 = vpop.f32.mrb[0].mxu0
      %v1883 = vadd.f32 0.0, %v1882
      %v1884 = vpop.f32.mrb[0].mxu0
      %v1885 = vpop.f32.mrb[0].mxu0
      %v1886 = vadd.f32 0.0, %v1885
      %v1887 = vpop.f32.mrb[0].mxu0
      %1888 = vmatprep.mubr.bf16.mxu0 0
      %1889 = vmatmul.mubr.bf16.gmra.mrb[0].mxu0 %v1766
      %v1890 = vpop.f32.mrb[0].mxu0
      %v1891 = vadd.f32 0.0, %v1890
      %v1892 = vpop.f32.mrb[0].mxu0
      %v1893 = vpop.f32.mrb[0].mxu0
      %v1894 = vadd.f32 0.0, %v1893
      %v1895 = vpop.f32.mrb[0].mxu0
      %1896 = vmatprep.mubr.bf16.mxu0 0
      %1897 = vmatmul.mubr.bf16.gmra.mrb[0].mxu0 %v1769
      %v1898 = vpop.f32.mrb[0].mxu0
      %v1899 = vadd.f32 0.0, %v1898
      %v1900 = vpop.f32.mrb[0].mxu0
      %v1901 = vpop.f32.mrb[0].mxu0
      %v1902 = vadd.f32 0.0, %v1901
      %v1903 = vpop.f32.mrb[0].mxu0
      %1904 = vmatprep.mubr.bf16.mxu0 0
      %1905 = vmatmul.mubr.bf16.gmra.mrb[0].mxu0 %v1772
      %v1906 = vpop.f32.mrb[0].mxu0
      %v1907 = vadd.f32 0.0, %v1906
      %v1908 = vpop.f32.mrb[0].mxu0
      %v1909 = vpop.f32.mrb[0].mxu0
      %v1910 = vadd.f32 0.0, %v1909
      %v1911 = vpop.f32.mrb[0].mxu0
      %1912 = vmatprep.mubr.bf16.mxu0 0
      %1913 = vmatmul.mubr.bf16.gmra.mrb[0].mxu0 %v1775
      %v1914 = vpop.f32.mrb[0].mxu0
      %v1915 = vadd.f32 0.0, %v1914
      %v1916 = vpop.f32.mrb[0].mxu0
      %v1917 = vpop.f32.mrb[0].mxu0
      %v1918 = vadd.f32 0.0, %v1917
      %v1919 = vpop.f32.mrb[0].mxu0
      %1920 = vmatprep.mubr.bf16.mxu0 0
      %1921 = vmatmul.mubr.bf16.gmra.mrb[0].mxu0 %v1778
      %v1922 = vpop.f32.mrb[0].mxu0
      %v1923 = vadd.f32 0.0, %v1922
      %v1924 = vpop.f32.mrb[0].mxu0
      %v1925 = vpop.f32.mrb[0].mxu0
      %v1926 = vadd.f32 0.0, %v1925
      %v1927 = vpop.f32.mrb[0].mxu0
      %1928 = vmatprep.mubr.bf16.mxu0 0
      %1929 = vmatmul.mubr.bf16.gmra.mrb[0].mxu0 %v1781
      %v1930 = vpop.f32.mrb[0].mxu0
      %v1931 = vadd.f32 0.0, %v1930
      %v1932 = vpop.f32.mrb[0].mxu0
      %v1933 = vpop.f32.mrb[0].mxu0
      %v1934 = vadd.f32 0.0, %v1933
      %v1935 = vpop.f32.mrb[0].mxu0
      %1936 = vmatprep.mubr.bf16.mxu0 0
      %1937 = vmatmul.mubr.bf16.gmra.mrb[0].mxu0 %v1784
      %v1938 = vpop.f32.mrb[0].mxu0
      %v1939 = vadd.f32 0.0, %v1938
      %v1940 = vpop.f32.mrb[0].mxu0
      %v1941 = vpop.f32.mrb[0].mxu0
      %v1942 = vadd.f32 0.0, %v1941
      %v1943 = vpop.f32.mrb[0].mxu0
      %1944 = vmatprep.mubr.bf16.mxu0 0
      %1945 = vmatmul.mubr.bf16.gmra.mrb[0].mxu0 %v1787
      %v1946 = vpop.f32.mrb[0].mxu0
      %v1947 = vadd.f32 0.0, %v1946
      %v1948 = vpop.f32.mrb[0].mxu0
      %v1949 = vpop.f32.mrb[0].mxu0
      %v1950 = vadd.f32 0.0, %v1949
      %v1951 = vpop.f32.mrb[0].mxu0
      %1952 = vdwg.mxu0
      %v1953 = vadd.f32 %v1594, %v1827
      %v1954 = vadd.f32 %v1595, %v1830
      %v1955 = vadd.f32 %v1596, %v1835
      %v1956 = vadd.f32 %v1597, %v1838
      %v1957 = vadd.f32 %v1598, %v1843
      %v1958 = vadd.f32 %v1599, %v1846
      %v1959 = vadd.f32 %v1600, %v1851
      %v1960 = vadd.f32 %v1601, %v1854
      %v1961 = vadd.f32 %v1602, %v1859
      %v1962 = vadd.f32 %v1603, %v1862
      %v1963 = vadd.f32 %v1604, %v1867
      %v1964 = vadd.f32 %v1605, %v1870
      %v1965 = vadd.f32 %v1606, %v1875
      %v1966 = vadd.f32 %v1607, %v1878
      %v1967 = vadd.f32 %v1608, %v1883
      %v1968 = vadd.f32 %v1609, %v1886
      %v1969 = vadd.f32 %v1610, %v1891
      %v1970 = vadd.f32 %v1611, %v1894
      %v1971 = vadd.f32 %v1612, %v1899
      %v1972 = vadd.f32 %v1613, %v1902
      %v1973 = vadd.f32 %v1614, %v1907
      %v1974 = vadd.f32 %v1615, %v1910
      %v1975 = vadd.f32 %v1616, %v1915
      %v1976 = vadd.f32 %v1617, %v1918
      %v1977 = vadd.f32 %v1618, %v1923
      %v1978 = vadd.f32 %v1619, %v1926
      %v1979 = vadd.f32 %v1620, %v1931
      %v1980 = vadd.f32 %v1621, %v1934
      %v1981 = vadd.f32 %v1622, %v1939
      %v1982 = vadd.f32 %v1623, %v1942
      %v1983 = vadd.f32 %v1624, %v1947
      %v1984 = vadd.f32 %v1625, %v1950
      %v1985 = vld [vmem:[%s1626] sm:$0xf]
      %v1986 = vld [vmem:[%s1626 + $0x4] sm:$0xf]
      %v1987 = vld [vmem:[%s1626 + $0x8] sm:$0x1]
      %v1988 = vld [vmem:[%s1626 + $0xc] sm:$0xf]
      %v1989 = vld [vmem:[%s1626 + $0x10] sm:$0xf]
      %v1990 = vld [vmem:[%s1626 + $0x14] sm:$0x1]
      %v1991 = vld [vmem:[%s1626 + $0x18] sm:$0xf]
      %v1992 = vld [vmem:[%s1626 + $0x1c] sm:$0xf]
      %v1993 = vld [vmem:[%s1626 + $0x20] sm:$0x1]
      %v1994 = vld [vmem:[%s1626 + $0x24] sm:$0xf]
      %v1995 = vld [vmem:[%s1626 + $0x28] sm:$0xf]
      %v1996 = vld [vmem:[%s1626 + $0x2c] sm:$0x1]
      %v1997 = vld [vmem:[%s1626 + $0x30] sm:$0xf]
      %v1998 = vld [vmem:[%s1626 + $0x34] sm:$0xf]
      %v1999 = vld [vmem:[%s1626 + $0x38] sm:$0x1]
      %v2000 = vld [vmem:[%s1626 + $0x3c] sm:$0xf]
      %v2001 = vld [vmem:[%s1626 + $0x40] sm:$0xf]
      %v2002 = vld [vmem:[%s1626 + $0x44] sm:$0x1]
      %v2003 = vld [vmem:[%s1626 + $0x48] sm:$0xf]
      %v2004 = vld [vmem:[%s1626 + $0x4c] sm:$0xf]
      %v2005 = vld [vmem:[%s1626 + $0x50] sm:$0x1]
      %v2006 = vld [vmem:[%s1626 + $0x54] sm:$0xf]
      %v2007 = vld [vmem:[%s1626 + $0x58] sm:$0xf]
      %v2008 = vld [vmem:[%s1626 + $0x5c] sm:$0x1]
      %v2009 = vld [vmem:[%s1626 + $0x60] sm:$0xf]
      %v2010 = vld [vmem:[%s1626 + $0x64] sm:$0xf]
      %v2011 = vld [vmem:[%s1626 + $0x68] sm:$0x1]
      %v2012 = vld [vmem:[%s1626 + $0x6c] sm:$0xf]
      %v2013 = vld [vmem:[%s1626 + $0x70] sm:$0xf]
      %v2014 = vld [vmem:[%s1626 + $0x74] sm:$0x1]
      %v2015 = vld [vmem:[%s1626 + $0x78] sm:$0xf]
      %v2016 = vld [vmem:[%s1626 + $0x7c] sm:$0xf]
      %v2017 = vld [vmem:[%s1626 + $0x80] sm:$0x1]
      %v2018 = vld [vmem:[%s1626 + $0x84] sm:$0xf]
      %v2019 = vld [vmem:[%s1626 + $0x88] sm:$0xf]
      %v2020 = vld [vmem:[%s1626 + $0x8c] sm:$0x1]
      %v2021 = vld [vmem:[%s1626 + $0x90] sm:$0xf]
      %v2022 = vld [vmem:[%s1626 + $0x94] sm:$0xf]
      %v2023 = vld [vmem:[%s1626 + $0x98] sm:$0x1]
      %v2024 = vld [vmem:[%s1626 + $0x9c] sm:$0xf]
      %v2025 = vld [vmem:[%s1626 + $0xa0] sm:$0xf]
      %v2026 = vld [vmem:[%s1626 + $0xa4] sm:$0x1]
      %v2027 = vld [vmem:[%s1626 + $0xa8] sm:$0xf]
      %v2028 = vld [vmem:[%s1626 + $0xac] sm:$0xf]
      %v2029 = vld [vmem:[%s1626 + $0xb0] sm:$0x1]
      %v2030 = vld [vmem:[%s1626 + $0xb4] sm:$0xf]
      %v2031 = vld [vmem:[%s1626 + $0xb8] sm:$0xf]
      %v2032 = vld [vmem:[%s1626 + $0xbc] sm:$0x1]
      %v2034 = vshrl.u32 %v1985, 16
      %v2036 = vrot.slane %v2034, 4
      %v2037 = vshll.u32 %v1985, 16
      %v2039 = vrot.slane %v2037, 5
      %v2040 = vor.u32 %v2036, %v2039
      %v2041 = vrot.slane %v2040, 4
      %v2043 = vshll.u32 %v1986, 16
      %v2045 = vrot.slane %v2043, 5
      %v2046 = vsel %vm228, %v2041, %v2045
      %v2047 = vshrl.u32 %v1986, 16
      %v2049 = vrot.slane %v2047, 4
      %v2050 = vor.u32 %v2049, %v2045
      %v2051 = vrot.slane %v2050, 4
      %v2053 = vshll.u32 %v1987, 16
      %v2055 = vrot.slane %v2053, 5
      %v2056 = vsel %vm228, %v2051, %v2055
      %v2058 = vshrl.u32 %v1988, 16
      %v2060 = vrot.slane %v2058, 4
      %v2061 = vshll.u32 %v1988, 16
      %v2063 = vrot.slane %v2061, 5
      %v2064 = vor.u32 %v2060, %v2063
      %v2065 = vrot.slane %v2064, 4
      %v2067 = vshll.u32 %v1989, 16
      %v2069 = vrot.slane %v2067, 5
      %v2070 = vsel %vm228, %v2065, %v2069
      %v2071 = vshrl.u32 %v1989, 16
      %v2073 = vrot.slane %v2071, 4
      %v2074 = vor.u32 %v2073, %v2069
      %v2075 = vrot.slane %v2074, 4
      %v2077 = vshll.u32 %v1990, 16
      %v2079 = vrot.slane %v2077, 5
      %v2080 = vsel %vm228, %v2075, %v2079
      %v2082 = vshrl.u32 %v1991, 16
      %v2084 = vrot.slane %v2082, 4
      %v2085 = vshll.u32 %v1991, 16
      %v2087 = vrot.slane %v2085, 5
      %v2088 = vor.u32 %v2084, %v2087
      %v2089 = vrot.slane %v2088, 4
      %v2091 = vshll.u32 %v1992, 16
      %v2093 = vrot.slane %v2091, 5
      %v2094 = vsel %vm228, %v2089, %v2093
      %v2095 = vshrl.u32 %v1992, 16
      %v2097 = vrot.slane %v2095, 4
      %v2098 = vor.u32 %v2097, %v2093
      %v2099 = vrot.slane %v2098, 4
      %v2101 = vshll.u32 %v1993, 16
      %v2103 = vrot.slane %v2101, 5
      %v2104 = vsel %vm228, %v2099, %v2103
      %v2106 = vshrl.u32 %v1994, 16
      %v2108 = vrot.slane %v2106, 4
      %v2109 = vshll.u32 %v1994, 16
      %v2111 = vrot.slane %v2109, 5
      %v2112 = vor.u32 %v2108, %v2111
      %v2113 = vrot.slane %v2112, 4
      %v2115 = vshll.u32 %v1995, 16
      %v2117 = vrot.slane %v2115, 5
      %v2118 = vsel %vm228, %v2113, %v2117
      %v2119 = vshrl.u32 %v1995, 16
      %v2121 = vrot.slane %v2119, 4
      %v2122 = vor.u32 %v2121, %v2117
      %v2123 = vrot.slane %v2122, 4
      %v2125 = vshll.u32 %v1996, 16
      %v2127 = vrot.slane %v2125, 5
      %v2128 = vsel %vm228, %v2123, %v2127
      %v2130 = vshrl.u32 %v1997, 16
      %v2132 = vrot.slane %v2130, 4
      %v2133 = vshll.u32 %v1997, 16
      %v2135 = vrot.slane %v2133, 5
      %v2136 = vor.u32 %v2132, %v2135
      %v2137 = vrot.slane %v2136, 4
      %v2139 = vshll.u32 %v1998, 16
      %v2141 = vrot.slane %v2139, 5
      %v2142 = vsel %vm228, %v2137, %v2141
      %v2143 = vshrl.u32 %v1998, 16
      %v2145 = vrot.slane %v2143, 4
      %v2146 = vor.u32 %v2145, %v2141
      %v2147 = vrot.slane %v2146, 4
      %v2149 = vshll.u32 %v1999, 16
      %v2151 = vrot.slane %v2149, 5
      %v2152 = vsel %vm228, %v2147, %v2151
      %v2154 = vshrl.u32 %v2000, 16
      %v2156 = vrot.slane %v2154, 4
      %v2157 = vshll.u32 %v2000, 16
      %v2159 = vrot.slane %v2157, 5
      %v2160 = vor.u32 %v2156, %v2159
      %v2161 = vrot.slane %v2160, 4
      %v2163 = vshll.u32 %v2001, 16
      %v2165 = vrot.slane %v2163, 5
      %v2166 = vsel %vm228, %v2161, %v2165
      %v2167 = vshrl.u32 %v2001, 16
      %v2169 = vrot.slane %v2167, 4
      %v2170 = vor.u32 %v2169, %v2165
      %v2171 = vrot.slane %v2170, 4
      %v2173 = vshll.u32 %v2002, 16
      %v2175 = vrot.slane %v2173, 5
      %v2176 = vsel %vm228, %v2171, %v2175
      %v2178 = vshrl.u32 %v2003, 16
      %v2180 = vrot.slane %v2178, 4
      %v2181 = vshll.u32 %v2003, 16
      %v2183 = vrot.slane %v2181, 5
      %v2184 = vor.u32 %v2180, %v2183
      %v2185 = vrot.slane %v2184, 4
      %v2187 = vshll.u32 %v2004, 16
      %v2189 = vrot.slane %v2187, 5
      %v2190 = vsel %vm228, %v2185, %v2189
      %v2191 = vshrl.u32 %v2004, 16
      %v2193 = vrot.slane %v2191, 4
      %v2194 = vor.u32 %v2193, %v2189
      %v2195 = vrot.slane %v2194, 4
      %v2197 = vshll.u32 %v2005, 16
      %v2199 = vrot.slane %v2197, 5
      %v2200 = vsel %vm228, %v2195, %v2199
      %v2202 = vshrl.u32 %v2006, 16
      %v2204 = vrot.slane %v2202, 4
      %v2205 = vshll.u32 %v2006, 16
      %v2207 = vrot.slane %v2205, 5
      %v2208 = vor.u32 %v2204, %v2207
      %v2209 = vrot.slane %v2208, 4
      %v2211 = vshll.u32 %v2007, 16
      %v2213 = vrot.slane %v2211, 5
      %v2214 = vsel %vm228, %v2209, %v2213
      %v2215 = vshrl.u32 %v2007, 16
      %v2217 = vrot.slane %v2215, 4
      %v2218 = vor.u32 %v2217, %v2213
      %v2219 = vrot.slane %v2218, 4
      %v2221 = vshll.u32 %v2008, 16
      %v2223 = vrot.slane %v2221, 5
      %v2224 = vsel %vm228, %v2219, %v2223
      %v2226 = vshrl.u32 %v2009, 16
      %v2228 = vrot.slane %v2226, 4
      %v2229 = vshll.u32 %v2009, 16
      %v2231 = vrot.slane %v2229, 5
      %v2232 = vor.u32 %v2228, %v2231
      %v2233 = vrot.slane %v2232, 4
      %v2235 = vshll.u32 %v2010, 16
      %v2237 = vrot.slane %v2235, 5
      %v2238 = vsel %vm228, %v2233, %v2237
      %v2239 = vshrl.u32 %v2010, 16
      %v2241 = vrot.slane %v2239, 4
      %v2242 = vor.u32 %v2241, %v2237
      %v2243 = vrot.slane %v2242, 4
      %v2245 = vshll.u32 %v2011, 16
      %v2247 = vrot.slane %v2245, 5
      %v2248 = vsel %vm228, %v2243, %v2247
      %v2250 = vshrl.u32 %v2012, 16
      %v2252 = vrot.slane %v2250, 4
      %v2253 = vshll.u32 %v2012, 16
      %v2255 = vrot.slane %v2253, 5
      %v2256 = vor.u32 %v2252, %v2255
      %v2257 = vrot.slane %v2256, 4
      %v2259 = vshll.u32 %v2013, 16
      %v2261 = vrot.slane %v2259, 5
      %v2262 = vsel %vm228, %v2257, %v2261
      %v2263 = vshrl.u32 %v2013, 16
      %v2265 = vrot.slane %v2263, 4
      %v2266 = vor.u32 %v2265, %v2261
      %v2267 = vrot.slane %v2266, 4
      %v2269 = vshll.u32 %v2014, 16
      %v2271 = vrot.slane %v2269, 5
      %v2272 = vsel %vm228, %v2267, %v2271
      %v2274 = vshrl.u32 %v2015, 16
      %v2276 = vrot.slane %v2274, 4
      %v2277 = vshll.u32 %v2015, 16
      %v2279 = vrot.slane %v2277, 5
      %v2280 = vor.u32 %v2276, %v2279
      %v2281 = vrot.slane %v2280, 4
      %v2283 = vshll.u32 %v2016, 16
      %v2285 = vrot.slane %v2283, 5
      %v2286 = vsel %vm228, %v2281, %v2285
      %v2287 = vshrl.u32 %v2016, 16
      %v2289 = vrot.slane %v2287, 4
      %v2290 = vor.u32 %v2289, %v2285
      %v2291 = vrot.slane %v2290, 4
      %v2293 = vshll.u32 %v2017, 16
      %v2295 = vrot.slane %v2293, 5
      %v2296 = vsel %vm228, %v2291, %v2295
      %v2298 = vshrl.u32 %v2018, 16
      %v2300 = vrot.slane %v2298, 4
      %v2301 = vshll.u32 %v2018, 16
      %v2303 = vrot.slane %v2301, 5
      %v2304 = vor.u32 %v2300, %v2303
      %v2305 = vrot.slane %v2304, 4
      %v2307 = vshll.u32 %v2019, 16
      %v2309 = vrot.slane %v2307, 5
      %v2310 = vsel %vm228, %v2305, %v2309
      %v2311 = vshrl.u32 %v2019, 16
      %v2313 = vrot.slane %v2311, 4
      %v2314 = vor.u32 %v2313, %v2309
      %v2315 = vrot.slane %v2314, 4
      %v2317 = vshll.u32 %v2020, 16
      %v2319 = vrot.slane %v2317, 5
      %v2320 = vsel %vm228, %v2315, %v2319
      %v2322 = vshrl.u32 %v2021, 16
      %v2324 = vrot.slane %v2322, 4
      %v2325 = vshll.u32 %v2021, 16
      %v2327 = vrot.slane %v2325, 5
      %v2328 = vor.u32 %v2324, %v2327
      %v2329 = vrot.slane %v2328, 4
      %v2331 = vshll.u32 %v2022, 16
      %v2333 = vrot.slane %v2331, 5
      %v2334 = vsel %vm228, %v2329, %v2333
      %v2335 = vshrl.u32 %v2022, 16
      %v2337 = vrot.slane %v2335, 4
      %v2338 = vor.u32 %v2337, %v2333
      %v2339 = vrot.slane %v2338, 4
      %v2341 = vshll.u32 %v2023, 16
      %v2343 = vrot.slane %v2341, 5
      %v2344 = vsel %vm228, %v2339, %v2343
      %v2346 = vshrl.u32 %v2024, 16
      %v2348 = vrot.slane %v2346, 4
      %v2349 = vshll.u32 %v2024, 16
      %v2351 = vrot.slane %v2349, 5
      %v2352 = vor.u32 %v2348, %v2351
      %v2353 = vrot.slane %v2352, 4
      %v2355 = vshll.u32 %v2025, 16
      %v2357 = vrot.slane %v2355, 5
      %v2358 = vsel %vm228, %v2353, %v2357
      %v2359 = vshrl.u32 %v2025, 16
      %v2361 = vrot.slane %v2359, 4
      %v2362 = vor.u32 %v2361, %v2357
      %v2363 = vrot.slane %v2362, 4
      %v2365 = vshll.u32 %v2026, 16
      %v2367 = vrot.slane %v2365, 5
      %v2368 = vsel %vm228, %v2363, %v2367
      %v2370 = vshrl.u32 %v2027, 16
      %v2372 = vrot.slane %v2370, 4
      %v2373 = vshll.u32 %v2027, 16
      %v2375 = vrot.slane %v2373, 5
      %v2376 = vor.u32 %v2372, %v2375
      %v2377 = vrot.slane %v2376, 4
      %v2379 = vshll.u32 %v2028, 16
      %v2381 = vrot.slane %v2379, 5
      %v2382 = vsel %vm228, %v2377, %v2381
      %v2383 = vshrl.u32 %v2028, 16
      %v2385 = vrot.slane %v2383, 4
      %v2386 = vor.u32 %v2385, %v2381
      %v2387 = vrot.slane %v2386, 4
      %v2389 = vshll.u32 %v2029, 16
      %v2391 = vrot.slane %v2389, 5
      %v2392 = vsel %vm228, %v2387, %v2391
      %v2394 = vshrl.u32 %v2030, 16
      %v2396 = vrot.slane %v2394, 4
      %v2397 = vshll.u32 %v2030, 16
      %v2399 = vrot.slane %v2397, 5
      %v2400 = vor.u32 %v2396, %v2399
      %v2401 = vrot.slane %v2400, 4
      %v2403 = vshll.u32 %v2031, 16
      %v2405 = vrot.slane %v2403, 5
      %v2406 = vsel %vm228, %v2401, %v2405
      %v2407 = vshrl.u32 %v2031, 16
      %v2409 = vrot.slane %v2407, 4
      %v2410 = vor.u32 %v2409, %v2405
      %v2411 = vrot.slane %v2410, 4
      %v2413 = vshll.u32 %v2032, 16
      %v2415 = vrot.slane %v2413, 5
      %v2416 = vsel %vm228, %v2411, %v2415
      %s2417 = scalar_lea.vmem %s1, 8
      %v2418 = vld [vmem:[%s2417] sm:$0x3]
      %v2419 = vunpack.c.l.b16 %v2046
      %v2420 = vunpack.c.l.b16 %v2056
      %v2421 = vunpack.c.l.b16 %v2070
      %v2422 = vunpack.c.l.b16 %v2080
      %v2423 = vunpack.c.l.b16 %v2094
      %v2424 = vunpack.c.l.b16 %v2104
      %v2425 = vunpack.c.l.b16 %v2118
      %v2426 = vunpack.c.l.b16 %v2128
      %v2427 = vunpack.c.l.b16 %v2142
      %v2428 = vunpack.c.l.b16 %v2152
      %v2429 = vunpack.c.l.b16 %v2166
      %v2430 = vunpack.c.l.b16 %v2176
      %v2431 = vunpack.c.l.b16 %v2190
      %v2432 = vunpack.c.l.b16 %v2200
      %v2433 = vunpack.c.l.b16 %v2214
      %v2434 = vunpack.c.l.b16 %v2224
      %v2435 = vunpack.c.l.b16 %v2238
      %v2436 = vunpack.c.l.b16 %v2248
      %v2437 = vunpack.c.l.b16 %v2262
      %v2438 = vunpack.c.l.b16 %v2272
      %v2439 = vunpack.c.l.b16 %v2286
      %v2440 = vunpack.c.l.b16 %v2296
      %v2441 = vunpack.c.l.b16 %v2310
      %v2442 = vunpack.c.l.b16 %v2320
      %v2443 = vunpack.c.l.b16 %v2334
      %v2444 = vunpack.c.l.b16 %v2344
      %v2445 = vunpack.c.l.b16 %v2358
      %v2446 = vunpack.c.l.b16 %v2368
      %v2447 = vunpack.c.l.b16 %v2382
      %v2448 = vunpack.c.l.b16 %v2392
      %v2449 = vunpack.c.l.b16 %v2406
      %v2450 = vunpack.c.l.b16 %v2416
      %v2451 = vpack.c.b16 %v2420, %v2419
      %v2452 = vpack.c.b16 %v2422, %v2421
      %v2453 = vpack.c.b16 %v2424, %v2423
      %v2454 = vpack.c.b16 %v2426, %v2425
      %v2455 = vpack.c.b16 %v2428, %v2427
      %v2456 = vpack.c.b16 %v2430, %v2429
      %v2457 = vpack.c.b16 %v2432, %v2431
      %v2458 = vpack.c.b16 %v2434, %v2433
      %v2459 = vpack.c.b16 %v2436, %v2435
      %v2460 = vpack.c.b16 %v2438, %v2437
      %v2461 = vpack.c.b16 %v2440, %v2439
      %v2462 = vpack.c.b16 %v2442, %v2441
      %v2463 = vpack.c.b16 %v2444, %v2443
      %v2464 = vpack.c.b16 %v2446, %v2445
      %v2465 = vpack.c.b16 %v2448, %v2447
      %v2466 = vpack.c.b16 %v2450, %v2449
      %v2468 = vsel %vm663, %v2451, 0
      %v2471 = vsel %vm663, %v2452, 0
      %v2474 = vsel %vm663, %v2453, 0
      %v2477 = vsel %vm663, %v2454, 0
      %v2480 = vsel %vm663, %v2455, 0
      %v2483 = vsel %vm663, %v2456, 0
      %v2486 = vsel %vm663, %v2457, 0
      %v2489 = vsel %vm663, %v2458, 0
      %v2492 = vsel %vm663, %v2459, 0
      %v2495 = vsel %vm663, %v2460, 0
      %v2498 = vsel %vm663, %v2461, 0
      %v2501 = vsel %vm663, %v2462, 0
      %v2504 = vsel %vm663, %v2463, 0
      %v2507 = vsel %vm663, %v2464, 0
      %v2510 = vsel %vm663, %v2465, 0
      %v2513 = vsel %vm663, %v2466, 0
      %v2516 = vsel %vm712, %v2418, 0
      %2518 = vmatprep.subr.bf16.mxu0 0
      %2519 = vmatpush1.bf16.msra.mxu0 %v2516
      %2520 = vmatprep.subr.bf16.mxu0 0
      %2521 = vmatpush1.bf16.msra.mxu0 0
      %2522 = vmatprep.subr.bf16.mxu0 0
      %2523 = vmatpush1.bf16.msra.mxu0 0
      %2524 = vmatprep.subr.bf16.mxu0 0
      %2525 = vmatpush1.bf16.msra.mxu0 0
      %2526 = vmatprep.subr.bf16.mxu0 0
      %2527 = vmatpush1.bf16.msra.mxu0 0
      %2528 = vmatprep.subr.bf16.mxu0 0
      %2529 = vmatpush1.bf16.msra.mxu0 0
      %2530 = vmatprep.subr.bf16.mxu0 0
      %2531 = vmatpush1.bf16.msra.mxu0 0
      %2532 = vmatprep.subr.bf16.mxu0 0
      %2533 = vmatpush1.bf16.msra.mxu0 0
      %2534 = vmatprep.subr.bf16.mxu0 0
      %2535 = vmatpush1.bf16.msra.mxu0 0
      %2536 = vmatprep.subr.bf16.mxu0 0
      %2537 = vmatpush1.bf16.msra.mxu0 0
      %2538 = vmatprep.subr.bf16.mxu0 0
      %2539 = vmatpush1.bf16.msra.mxu0 0
      %2540 = vmatprep.subr.bf16.mxu0 0
      %2541 = vmatpush1.bf16.msra.mxu0 0
      %2542 = vmatprep.subr.bf16.mxu0 0
      %2543 = vmatpush1.bf16.msra.mxu0 0
      %2544 = vmatprep.subr.bf16.mxu0 0
      %2545 = vmatpush1.bf16.msra.mxu0 0
      %2546 = vmatprep.subr.bf16.mxu0 0
      %2547 = vmatpush1.bf16.msra.mxu0 0
      %2548 = vmatprep.subr.bf16.mxu0 0
      %2549 = vmatpush1.bf16.msra.mxu0 0
      %2550 = vmatprep.mubr.bf16.mxu0 0
      %2551 = vmatmul.mubr.bf16.gmra.mrb[0].mxu0 %v2468
      %v2552 = vpop.f32.mrb[0].mxu0
      %v2553 = vadd.f32 0.0, %v2552
      %v2554 = vpop.f32.mrb[0].mxu0
      %v2555 = vpop.f32.mrb[0].mxu0
      %v2556 = vadd.f32 0.0, %v2555
      %v2557 = vpop.f32.mrb[0].mxu0
      %2558 = vmatprep.mubr.bf16.mxu0 0
      %2559 = vmatmul.mubr.bf16.gmra.mrb[0].mxu0 %v2471
      %v2560 = vpop.f32.mrb[0].mxu0
      %v2561 = vadd.f32 0.0, %v2560
      %v2562 = vpop.f32.mrb[0].mxu0
      %v2563 = vpop.f32.mrb[0].mxu0
      %v2564 = vadd.f32 0.0, %v2563
      %v2565 = vpop.f32.mrb[0].mxu0
      %2566 = vmatprep.mubr.bf16.mxu0 0
      %2567 = vmatmul.mubr.bf16.gmra.mrb[0].mxu0 %v2474
      %v2568 = vpop.f32.mrb[0].mxu0
      %v2569 = vadd.f32 0.0, %v2568
      %v2570 = vpop.f32.mrb[0].mxu0
      %v2571 = vpop.f32.mrb[0].mxu0
      %v2572 = vadd.f32 0.0, %v2571
      %v2573 = vpop.f32.mrb[0].mxu0
      %2574 = vmatprep.mubr.bf16.mxu0 0
      %2575 = vmatmul.mubr.bf16.gmra.mrb[0].mxu0 %v2477
      %v2576 = vpop.f32.mrb[0].mxu0
      %v2577 = vadd.f32 0.0, %v2576
      %v2578 = vpop.f32.mrb[0].mxu0
      %v2579 = vpop.f32.mrb[0].mxu0
      %v2580 = vadd.f32 0.0, %v2579
      %v2581 = vpop.f32.mrb[0].mxu0
      %2582 = vmatprep.mubr.bf16.mxu0 0
      %2583 = vmatmul.mubr.bf16.gmra.mrb[0].mxu0 %v2480
      %v2584 = vpop.f32.mrb[0].mxu0
      %v2585 = vadd.f32 0.0, %v2584
      %v2586 = vpop.f32.mrb[0].mxu0
      %v2587 = vpop.f32.mrb[0].mxu0
      %v2588 = vadd.f32 0.0, %v2587
      %v2589 = vpop.f32.mrb[0].mxu0
      %2590 = vmatprep.mubr.bf16.mxu0 0
      %2591 = vmatmul.mubr.bf16.gmra.mrb[0].mxu0 %v2483
      %v2592 = vpop.f32.mrb[0].mxu0
      %v2593 = vadd.f32 0.0, %v2592
      %v2594 = vpop.f32.mrb[0].mxu0
      %v2595 = vpop.f32.mrb[0].mxu0
      %v2596 = vadd.f32 0.0, %v2595
      %v2597 = vpop.f32.mrb[0].mxu0
      %2598 = vmatprep.mubr.bf16.mxu0 0
      %2599 = vmatmul.mubr.bf16.gmra.mrb[0].mxu0 %v2486
      %v2600 = vpop.f32.mrb[0].mxu0
      %v2601 = vadd.f32 0.0, %v2600
      %v2602 = vpop.f32.mrb[0].mxu0
      %v2603 = vpop.f32.mrb[0].mxu0
      %v2604 = vadd.f32 0.0, %v2603
      %v2605 = vpop.f32.mrb[0].mxu0
      %2606 = vmatprep.mubr.bf16.mxu0 0
      %2607 = vmatmul.mubr.bf16.gmra.mrb[0].mxu0 %v2489
      %v2608 = vpop.f32.mrb[0].mxu0
      %v2609 = vadd.f32 0.0, %v2608
      %v2610 = vpop.f32.mrb[0].mxu0
      %v2611 = vpop.f32.mrb[0].mxu0
      %v2612 = vadd.f32 0.0, %v2611
      %v2613 = vpop.f32.mrb[0].mxu0
      %2614 = vmatprep.mubr.bf16.mxu0 0
      %2615 = vmatmul.mubr.bf16.gmra.mrb[0].mxu0 %v2492
      %v2616 = vpop.f32.mrb[0].mxu0
      %v2617 = vadd.f32 0.0, %v2616
      %v2618 = vpop.f32.mrb[0].mxu0
      %v2619 = vpop.f32.mrb[0].mxu0
      %v2620 = vadd.f32 0.0, %v2619
      %v2621 = vpop.f32.mrb[0].mxu0
      %2622 = vmatprep.mubr.bf16.mxu0 0
      %2623 = vmatmul.mubr.bf16.gmra.mrb[0].mxu0 %v2495
      %v2624 = vpop.f32.mrb[0].mxu0
      %v2625 = vadd.f32 0.0, %v2624
      %v2626 = vpop.f32.mrb[0].mxu0
      %v2627 = vpop.f32.mrb[0].mxu0
      %v2628 = vadd.f32 0.0, %v2627
      %v2629 = vpop.f32.mrb[0].mxu0
      %2630 = vmatprep.mubr.bf16.mxu0 0
      %2631 = vmatmul.mubr.bf16.gmra.mrb[0].mxu0 %v2498
      %v2632 = vpop.f32.mrb[0].mxu0
      %v2633 = vadd.f32 0.0, %v2632
      %v2634 = vpop.f32.mrb[0].mxu0
      %v2635 = vpop.f32.mrb[0].mxu0
      %v2636 = vadd.f32 0.0, %v2635
      %v2637 = vpop.f32.mrb[0].mxu0
      %2638 = vmatprep.mubr.bf16.mxu0 0
      %2639 = vmatmul.mubr.bf16.gmra.mrb[0].mxu0 %v2501
      %v2640 = vpop.f32.mrb[0].mxu0
      %v2641 = vadd.f32 0.0, %v2640
      %v2642 = vpop.f32.mrb[0].mxu0
      %v2643 = vpop.f32.mrb[0].mxu0
      %v2644 = vadd.f32 0.0, %v2643
      %v2645 = vpop.f32.mrb[0].mxu0
      %2646 = vmatprep.mubr.bf16.mxu0 0
      %2647 = vmatmul.mubr.bf16.gmra.mrb[0].mxu0 %v2504
      %v2648 = vpop.f32.mrb[0].mxu0
      %v2649 = vadd.f32 0.0, %v2648
      %v2650 = vpop.f32.mrb[0].mxu0
      %v2651 = vpop.f32.mrb[0].mxu0
      %v2652 = vadd.f32 0.0, %v2651
      %v2653 = vpop.f32.mrb[0].mxu0
      %2654 = vmatprep.mubr.bf16.mxu0 0
      %2655 = vmatmul.mubr.bf16.gmra.mrb[0].mxu0 %v2507
      %v2656 = vpop.f32.mrb[0].mxu0
      %v2657 = vadd.f32 0.0, %v2656
      %v2658 = vpop.f32.mrb[0].mxu0
      %v2659 = vpop.f32.mrb[0].mxu0
      %v2660 = vadd.f32 0.0, %v2659
      %v2661 = vpop.f32.mrb[0].mxu0
      %2662 = vmatprep.mubr.bf16.mxu0 0
      %2663 = vmatmul.mubr.bf16.gmra.mrb[0].mxu0 %v2510
      %v2664 = vpop.f32.mrb[0].mxu0
      %v2665 = vadd.f32 0.0, %v2664
      %v2666 = vpop.f32.mrb[0].mxu0
      %v2667 = vpop.f32.mrb[0].mxu0
      %v2668 = vadd.f32 0.0, %v2667
      %v2669 = vpop.f32.mrb[0].mxu0
      %2670 = vmatprep.mubr.bf16.mxu0 0
      %2671 = vmatmul.mubr.bf16.gmra.mrb[0].mxu0 %v2513
      %v2672 = vpop.f32.mrb[0].mxu0
      %v2673 = vadd.f32 0.0, %v2672
      %v2674 = vpop.f32.mrb[0].mxu0
      %v2675 = vpop.f32.mrb[0].mxu0
      %v2676 = vadd.f32 0.0, %v2675
      %v2677 = vpop.f32.mrb[0].mxu0
      %2678 = vdwg.mxu0
      %v2679 = vadd.f32 %v1953, %v2553
      %v2680 = vadd.f32 %v1954, %v2556
      %v2681 = vadd.f32 %v1955, %v2561
      %v2682 = vadd.f32 %v1956, %v2564
      %v2683 = vadd.f32 %v1957, %v2569
      %v2684 = vadd.f32 %v1958, %v2572
      %v2685 = vadd.f32 %v1959, %v2577
      %v2686 = vadd.f32 %v1960, %v2580
      %v2687 = vadd.f32 %v1961, %v2585
      %v2688 = vadd.f32 %v1962, %v2588
      %v2689 = vadd.f32 %v1963, %v2593
      %v2690 = vadd.f32 %v1964, %v2596
      %v2691 = vadd.f32 %v1965, %v2601
      %v2692 = vadd.f32 %v1966, %v2604
      %v2693 = vadd.f32 %v1967, %v2609
      %v2694 = vadd.f32 %v1968, %v2612
      %v2695 = vadd.f32 %v1969, %v2617
      %v2696 = vadd.f32 %v1970, %v2620
      %v2697 = vadd.f32 %v1971, %v2625
      %v2698 = vadd.f32 %v1972, %v2628
      %v2699 = vadd.f32 %v1973, %v2633
      %v2700 = vadd.f32 %v1974, %v2636
      %v2701 = vadd.f32 %v1975, %v2641
      %v2702 = vadd.f32 %v1976, %v2644
      %v2703 = vadd.f32 %v1977, %v2649
      %v2704 = vadd.f32 %v1978, %v2652
      %v2705 = vadd.f32 %v1979, %v2657
      %v2706 = vadd.f32 %v1980, %v2660
      %v2707 = vadd.f32 %v1981, %v2665
      %v2708 = vadd.f32 %v1982, %v2668
      %v2709 = vadd.f32 %v1983, %v2673
      %v2710 = vadd.f32 %v1984, %v2676
      %v2711 = vld [vmem:[%s1626] sm:$0xe]
      %v2712 = vld [vmem:[%s1626 + $0xc] sm:$0xe]
      %v2713 = vld [vmem:[%s1626 + $0x18] sm:$0xe]
      %v2714 = vld [vmem:[%s1626 + $0x24] sm:$0xe]
      %v2715 = vld [vmem:[%s1626 + $0x30] sm:$0xe]
      %v2716 = vld [vmem:[%s1626 + $0x3c] sm:$0xe]
      %v2717 = vld [vmem:[%s1626 + $0x48] sm:$0xe]
      %v2718 = vld [vmem:[%s1626 + $0x54] sm:$0xe]
      %v2719 = vld [vmem:[%s1626 + $0x60] sm:$0xe]
      %v2720 = vld [vmem:[%s1626 + $0x6c] sm:$0xe]
      %v2721 = vld [vmem:[%s1626 + $0x78] sm:$0xe]
      %v2722 = vld [vmem:[%s1626 + $0x84] sm:$0xe]
      %v2723 = vld [vmem:[%s1626 + $0x90] sm:$0xe]
      %v2724 = vld [vmem:[%s1626 + $0x9c] sm:$0xe]
      %v2725 = vld [vmem:[%s1626 + $0xa8] sm:$0xe]
      %v2726 = vld [vmem:[%s1626 + $0xb4] sm:$0xe]
      %v2775 = vrot.slane %v2711, 5
      %v2776 = vrot.slane %v2775, 4
      %v2777 = vrot.slane %v1986, 5
      %v2778 = vsel %vm1219, %v2776, %v2777
      %v2779 = vrot.slane %v2777, 4
      %v2780 = vrot.slane %v1987, 5
      %v2781 = vsel %vm1219, %v2779, %v2780
      %v2782 = vrot.slane %v2712, 5
      %v2783 = vrot.slane %v2782, 4
      %v2784 = vrot.slane %v1989, 5
      %v2785 = vsel %vm1219, %v2783, %v2784
      %v2786 = vrot.slane %v2784, 4
      %v2787 = vrot.slane %v1990, 5
      %v2788 = vsel %vm1219, %v2786, %v2787
      %v2789 = vrot.slane %v2713, 5
      %v2790 = vrot.slane %v2789, 4
      %v2791 = vrot.slane %v1992, 5
      %v2792 = vsel %vm1219, %v2790, %v2791
      %v2793 = vrot.slane %v2791, 4
      %v2794 = vrot.slane %v1993, 5
      %v2795 = vsel %vm1219, %v2793, %v2794
      %v2796 = vrot.slane %v2714, 5
      %v2797 = vrot.slane %v2796, 4
      %v2798 = vrot.slane %v1995, 5
      %v2799 = vsel %vm1219, %v2797, %v2798
      %v2800 = vrot.slane %v2798, 4
      %v2801 = vrot.slane %v1996, 5
      %v2802 = vsel %vm1219, %v2800, %v2801
      %v2803 = vrot.slane %v2715, 5
      %v2804 = vrot.slane %v2803, 4
      %v2805 = vrot.slane %v1998, 5
      %v2806 = vsel %vm1219, %v2804, %v2805
      %v2807 = vrot.slane %v2805, 4
      %v2808 = vrot.slane %v1999, 5
      %v2809 = vsel %vm1219, %v2807, %v2808
      %v2810 = vrot.slane %v2716, 5
      %v2811 = vrot.slane %v2810, 4
      %v2812 = vrot.slane %v2001, 5
      %v2813 = vsel %vm1219, %v2811, %v2812
      %v2814 = vrot.slane %v2812, 4
      %v2815 = vrot.slane %v2002, 5
      %v2816 = vsel %vm1219, %v2814, %v2815
      %v2817 = vrot.slane %v2717, 5
      %v2818 = vrot.slane %v2817, 4
      %v2819 = vrot.slane %v2004, 5
      %v2820 = vsel %vm1219, %v2818, %v2819
      %v2821 = vrot.slane %v2819, 4
      %v2822 = vrot.slane %v2005, 5
      %v2823 = vsel %vm1219, %v2821, %v2822
      %v2824 = vrot.slane %v2718, 5
      %v2825 = vrot.slane %v2824, 4
      %v2826 = vrot.slane %v2007, 5
      %v2827 = vsel %vm1219, %v2825, %v2826
      %v2828 = vrot.slane %v2826, 4
      %v2829 = vrot.slane %v2008, 5
      %v2830 = vsel %vm1219, %v2828, %v2829
      %v2831 = vrot.slane %v2719, 5
      %v2832 = vrot.slane %v2831, 4
      %v2833 = vrot.slane %v2010, 5
      %v2834 = vsel %vm1219, %v2832, %v2833
      %v2835 = vrot.slane %v2833, 4
      %v2836 = vrot.slane %v2011, 5
      %v2837 = vsel %vm1219, %v2835, %v2836
      %v2838 = vrot.slane %v2720, 5
      %v2839 = vrot.slane %v2838, 4
      %v2840 = vrot.slane %v2013, 5
      %v2841 = vsel %vm1219, %v2839, %v2840
      %v2842 = vrot.slane %v2840, 4
      %v2843 = vrot.slane %v2014, 5
      %v2844 = vsel %vm1219, %v2842, %v2843
      %v2845 = vrot.slane %v2721, 5
      %v2846 = vrot.slane %v2845, 4
      %v2847 = vrot.slane %v2016, 5
      %v2848 = vsel %vm1219, %v2846, %v2847
      %v2849 = vrot.slane %v2847, 4
      %v2850 = vrot.slane %v2017, 5
      %v2851 = vsel %vm1219, %v2849, %v2850
      %v2852 = vrot.slane %v2722, 5
      %v2853 = vrot.slane %v2852, 4
      %v2854 = vrot.slane %v2019, 5
      %v2855 = vsel %vm1219, %v2853, %v2854
      %v2856 = vrot.slane %v2854, 4
      %v2857 = vrot.slane %v2020, 5
      %v2858 = vsel %vm1219, %v2856, %v2857
      %v2859 = vrot.slane %v2723, 5
      %v2860 = vrot.slane %v2859, 4
      %v2861 = vrot.slane %v2022, 5
      %v2862 = vsel %vm1219, %v2860, %v2861
      %v2863 = vrot.slane %v2861, 4
      %v2864 = vrot.slane %v2023, 5
      %v2865 = vsel %vm1219, %v2863, %v2864
      %v2866 = vrot.slane %v2724, 5
      %v2867 = vrot.slane %v2866, 4
      %v2868 = vrot.slane %v2025, 5
      %v2869 = vsel %vm1219, %v2867, %v2868
      %v2870 = vrot.slane %v2868, 4
      %v2871 = vrot.slane %v2026, 5
      %v2872 = vsel %vm1219, %v2870, %v2871
      %v2873 = vrot.slane %v2725, 5
      %v2874 = vrot.slane %v2873, 4
      %v2875 = vrot.slane %v2028, 5
      %v2876 = vsel %vm1219, %v2874, %v2875
      %v2877 = vrot.slane %v2875, 4
      %v2878 = vrot.slane %v2029, 5
      %v2879 = vsel %vm1219, %v2877, %v2878
      %v2880 = vrot.slane %v2726, 5
      %v2881 = vrot.slane %v2880, 4
      %v2882 = vrot.slane %v2031, 5
      %v2883 = vsel %vm1219, %v2881, %v2882
      %v2884 = vrot.slane %v2882, 4
      %v2885 = vrot.slane %v2032, 5
      %v2886 = vsel %vm1219, %v2884, %v2885
      %s2887 = scalar_lea.vmem %s1, 10
      %v2888 = vld [vmem:[%s2887] sm:$0x3]
      %v2889 = vunpack.c.l.b16 %v2778
      %v2890 = vunpack.c.l.b16 %v2781
      %v2891 = vunpack.c.l.b16 %v2785
      %v2892 = vunpack.c.l.b16 %v2788
      %v2893 = vunpack.c.l.b16 %v2792
      %v2894 = vunpack.c.l.b16 %v2795
      %v2895 = vunpack.c.l.b16 %v2799
      %v2896 = vunpack.c.l.b16 %v2802
      %v2897 = vunpack.c.l.b16 %v2806
      %v2898 = vunpack.c.l.b16 %v2809
      %v2899 = vunpack.c.l.b16 %v2813
      %v2900 = vunpack.c.l.b16 %v2816
      %v2901 = vunpack.c.l.b16 %v2820
      %v2902 = vunpack.c.l.b16 %v2823
      %v2903 = vunpack.c.l.b16 %v2827
      %v2904 = vunpack.c.l.b16 %v2830
      %v2905 = vunpack.c.l.b16 %v2834
      %v2906 = vunpack.c.l.b16 %v2837
      %v2907 = vunpack.c.l.b16 %v2841
      %v2908 = vunpack.c.l.b16 %v2844
      %v2909 = vunpack.c.l.b16 %v2848
      %v2910 = vunpack.c.l.b16 %v2851
      %v2911 = vunpack.c.l.b16 %v2855
      %v2912 = vunpack.c.l.b16 %v2858
      %v2913 = vunpack.c.l.b16 %v2862
      %v2914 = vunpack.c.l.b16 %v2865
      %v2915 = vunpack.c.l.b16 %v2869
      %v2916 = vunpack.c.l.b16 %v2872
      %v2917 = vunpack.c.l.b16 %v2876
      %v2918 = vunpack.c.l.b16 %v2879
      %v2919 = vunpack.c.l.b16 %v2883
      %v2920 = vunpack.c.l.b16 %v2886
      %v2921 = vpack.c.b16 %v2890, %v2889
      %v2922 = vpack.c.b16 %v2892, %v2891
      %v2923 = vpack.c.b16 %v2894, %v2893
      %v2924 = vpack.c.b16 %v2896, %v2895
      %v2925 = vpack.c.b16 %v2898, %v2897
      %v2926 = vpack.c.b16 %v2900, %v2899
      %v2927 = vpack.c.b16 %v2902, %v2901
      %v2928 = vpack.c.b16 %v2904, %v2903
      %v2929 = vpack.c.b16 %v2906, %v2905
      %v2930 = vpack.c.b16 %v2908, %v2907
      %v2931 = vpack.c.b16 %v2910, %v2909
      %v2932 = vpack.c.b16 %v2912, %v2911
      %v2933 = vpack.c.b16 %v2914, %v2913
      %v2934 = vpack.c.b16 %v2916, %v2915
      %v2935 = vpack.c.b16 %v2918, %v2917
      %v2936 = vpack.c.b16 %v2920, %v2919
      %v2938 = vsel %vm663, %v2921, 0
      %v2941 = vsel %vm663, %v2922, 0
      %v2944 = vsel %vm663, %v2923, 0
      %v2947 = vsel %vm663, %v2924, 0
      %v2950 = vsel %vm663, %v2925, 0
      %v2953 = vsel %vm663, %v2926, 0
      %v2956 = vsel %vm663, %v2927, 0
      %v2959 = vsel %vm663, %v2928, 0
      %v2962 = vsel %vm663, %v2929, 0
      %v2965 = vsel %vm663, %v2930, 0
      %v2968 = vsel %vm663, %v2931, 0
      %v2971 = vsel %vm663, %v2932, 0
      %v2974 = vsel %vm663, %v2933, 0
      %v2977 = vsel %vm663, %v2934, 0
      %v2980 = vsel %vm663, %v2935, 0
      %v2983 = vsel %vm663, %v2936, 0
      %v2986 = vsel %vm712, %v2888, 0
      %2988 = vmatprep.subr.bf16.mxu0 0
      %2989 = vmatpush1.bf16.msra.mxu0 %v2986
      %2990 = vmatprep.subr.bf16.mxu0 0
      %2991 = vmatpush1.bf16.msra.mxu0 0
      %2992 = vmatprep.subr.bf16.mxu0 0
      %2993 = vmatpush1.bf16.msra.mxu0 0
      %2994 = vmatprep.subr.bf16.mxu0 0
      %2995 = vmatpush1.bf16.msra.mxu0 0
      %2996 = vmatprep.subr.bf16.mxu0 0
      %2997 = vmatpush1.bf16.msra.mxu0 0
      %2998 = vmatprep.subr.bf16.mxu0 0
      %2999 = vmatpush1.bf16.msra.mxu0 0
      %3000 = vmatprep.subr.bf16.mxu0 0
      %3001 = vmatpush1.bf16.msra.mxu0 0
      %3002 = vmatprep.subr.bf16.mxu0 0
      %3003 = vmatpush1.bf16.msra.mxu0 0
      %3004 = vmatprep.subr.bf16.mxu0 0
      %3005 = vmatpush1.bf16.msra.mxu0 0
      %3006 = vmatprep.subr.bf16.mxu0 0
      %3007 = vmatpush1.bf16.msra.mxu0 0
      %3008 = vmatprep.subr.bf16.mxu0 0
      %3009 = vmatpush1.bf16.msra.mxu0 0
      %3010 = vmatprep.subr.bf16.mxu0 0
      %3011 = vmatpush1.bf16.msra.mxu0 0
      %3012 = vmatprep.subr.bf16.mxu0 0
      %3013 = vmatpush1.bf16.msra.mxu0 0
      %3014 = vmatprep.subr.bf16.mxu0 0
      %3015 = vmatpush1.bf16.msra.mxu0 0
      %3016 = vmatprep.subr.bf16.mxu0 0
      %3017 = vmatpush1.bf16.msra.mxu0 0
      %3018 = vmatprep.subr.bf16.mxu0 0
      %3019 = vmatpush1.bf16.msra.mxu0 0
      %3020 = vmatprep.mubr.bf16.mxu0 0
      %3021 = vmatmul.mubr.bf16.gmra.mrb[0].mxu0 %v2938
      %v3022 = vpop.f32.mrb[0].mxu0
      %v3023 = vadd.f32 0.0, %v3022
      %v3024 = vpop.f32.mrb[0].mxu0
      %v3025 = vpop.f32.mrb[0].mxu0
      %v3026 = vadd.f32 0.0, %v3025
      %v3027 = vpop.f32.mrb[0].mxu0
      %3028 = vmatprep.mubr.bf16.mxu0 0
      %3029 = vmatmul.mubr.bf16.gmra.mrb[0].mxu0 %v2941
      %v3030 = vpop.f32.mrb[0].mxu0
      %v3031 = vadd.f32 0.0, %v3030
      %v3032 = vpop.f32.mrb[0].mxu0
      %v3033 = vpop.f32.mrb[0].mxu0
      %v3034 = vadd.f32 0.0, %v3033
      %v3035 = vpop.f32.mrb[0].mxu0
      %3036 = vmatprep.mubr.bf16.mxu0 0
      %3037 = vmatmul.mubr.bf16.gmra.mrb[0].mxu0 %v2944
      %v3038 = vpop.f32.mrb[0].mxu0
      %v3039 = vadd.f32 0.0, %v3038
      %v3040 = vpop.f32.mrb[0].mxu0
      %v3041 = vpop.f32.mrb[0].mxu0
      %v3042 = vadd.f32 0.0, %v3041
      %v3043 = vpop.f32.mrb[0].mxu0
      %3044 = vmatprep.mubr.bf16.mxu0 0
      %3045 = vmatmul.mubr.bf16.gmra.mrb[0].mxu0 %v2947
      %v3046 = vpop.f32.mrb[0].mxu0
      %v3047 = vadd.f32 0.0, %v3046
      %v3048 = vpop.f32.mrb[0].mxu0
      %v3049 = vpop.f32.mrb[0].mxu0
      %v3050 = vadd.f32 0.0, %v3049
      %v3051 = vpop.f32.mrb[0].mxu0
      %3052 = vmatprep.mubr.bf16.mxu0 0
      %3053 = vmatmul.mubr.bf16.gmra.mrb[0].mxu0 %v2950
      %v3054 = vpop.f32.mrb[0].mxu0
      %v3055 = vadd.f32 0.0, %v3054
      %v3056 = vpop.f32.mrb[0].mxu0
      %v3057 = vpop.f32.mrb[0].mxu0
      %v3058 = vadd.f32 0.0, %v3057
      %v3059 = vpop.f32.mrb[0].mxu0
      %3060 = vmatprep.mubr.bf16.mxu0 0
      %3061 = vmatmul.mubr.bf16.gmra.mrb[0].mxu0 %v2953
      %v3062 = vpop.f32.mrb[0].mxu0
      %v3063 = vadd.f32 0.0, %v3062
      %v3064 = vpop.f32.mrb[0].mxu0
      %v3065 = vpop.f32.mrb[0].mxu0
      %v3066 = vadd.f32 0.0, %v3065
      %v3067 = vpop.f32.mrb[0].mxu0
      %3068 = vmatprep.mubr.bf16.mxu0 0
      %3069 = vmatmul.mubr.bf16.gmra.mrb[0].mxu0 %v2956
      %v3070 = vpop.f32.mrb[0].mxu0
      %v3071 = vadd.f32 0.0, %v3070
      %v3072 = vpop.f32.mrb[0].mxu0
      %v3073 = vpop.f32.mrb[0].mxu0
      %v3074 = vadd.f32 0.0, %v3073
      %v3075 = vpop.f32.mrb[0].mxu0
      %3076 = vmatprep.mubr.bf16.mxu0 0
      %3077 = vmatmul.mubr.bf16.gmra.mrb[0].mxu0 %v2959
      %v3078 = vpop.f32.mrb[0].mxu0
      %v3079 = vadd.f32 0.0, %v3078
      %v3080 = vpop.f32.mrb[0].mxu0
      %v3081 = vpop.f32.mrb[0].mxu0
      %v3082 = vadd.f32 0.0, %v3081
      %v3083 = vpop.f32.mrb[0].mxu0
      %3084 = vmatprep.mubr.bf16.mxu0 0
      %3085 = vmatmul.mubr.bf16.gmra.mrb[0].mxu0 %v2962
      %v3086 = vpop.f32.mrb[0].mxu0
      %v3087 = vadd.f32 0.0, %v3086
      %v3088 = vpop.f32.mrb[0].mxu0
      %v3089 = vpop.f32.mrb[0].mxu0
      %v3090 = vadd.f32 0.0, %v3089
      %v3091 = vpop.f32.mrb[0].mxu0
      %3092 = vmatprep.mubr.bf16.mxu0 0
      %3093 = vmatmul.mubr.bf16.gmra.mrb[0].mxu0 %v2965
      %v3094 = vpop.f32.mrb[0].mxu0
      %v3095 = vadd.f32 0.0, %v3094
      %v3096 = vpop.f32.mrb[0].mxu0
      %v3097 = vpop.f32.mrb[0].mxu0
      %v3098 = vadd.f32 0.0, %v3097
      %v3099 = vpop.f32.mrb[0].mxu0
      %3100 = vmatprep.mubr.bf16.mxu0 0
      %3101 = vmatmul.mubr.bf16.gmra.mrb[0].mxu0 %v2968
      %v3102 = vpop.f32.mrb[0].mxu0
      %v3103 = vadd.f32 0.0, %v3102
      %v3104 = vpop.f32.mrb[0].mxu0
      %v3105 = vpop.f32.mrb[0].mxu0
      %v3106 = vadd.f32 0.0, %v3105
      %v3107 = vpop.f32.mrb[0].mxu0
      %3108 = vmatprep.mubr.bf16.mxu0 0
      %3109 = vmatmul.mubr.bf16.gmra.mrb[0].mxu0 %v2971
      %v3110 = vpop.f32.mrb[0].mxu0
      %v3111 = vadd.f32 0.0, %v3110
      %v3112 = vpop.f32.mrb[0].mxu0
      %v3113 = vpop.f32.mrb[0].mxu0
      %v3114 = vadd.f32 0.0, %v3113
      %v3115 = vpop.f32.mrb[0].mxu0
      %3116 = vmatprep.mubr.bf16.mxu0 0
      %3117 = vmatmul.mubr.bf16.gmra.mrb[0].mxu0 %v2974
      %v3118 = vpop.f32.mrb[0].mxu0
      %v3119 = vadd.f32 0.0, %v3118
      %v3120 = vpop.f32.mrb[0].mxu0
      %v3121 = vpop.f32.mrb[0].mxu0
      %v3122 = vadd.f32 0.0, %v3121
      %v3123 = vpop.f32.mrb[0].mxu0
      %3124 = vmatprep.mubr.bf16.mxu0 0
      %3125 = vmatmul.mubr.bf16.gmra.mrb[0].mxu0 %v2977
      %v3126 = vpop.f32.mrb[0].mxu0
      %v3127 = vadd.f32 0.0, %v3126
      %v3128 = vpop.f32.mrb[0].mxu0
      %v3129 = vpop.f32.mrb[0].mxu0
      %v3130 = vadd.f32 0.0, %v3129
      %v3131 = vpop.f32.mrb[0].mxu0
      %3132 = vmatprep.mubr.bf16.mxu0 0
      %3133 = vmatmul.mubr.bf16.gmra.mrb[0].mxu0 %v2980
      %v3134 = vpop.f32.mrb[0].mxu0
      %v3135 = vadd.f32 0.0, %v3134
      %v3136 = vpop.f32.mrb[0].mxu0
      %v3137 = vpop.f32.mrb[0].mxu0
      %v3138 = vadd.f32 0.0, %v3137
      %v3139 = vpop.f32.mrb[0].mxu0
      %3140 = vmatprep.mubr.bf16.mxu0 0
      %3141 = vmatmul.mubr.bf16.gmra.mrb[0].mxu0 %v2983
      %v3142 = vpop.f32.mrb[0].mxu0
      %v3143 = vadd.f32 0.0, %v3142
      %v3144 = vpop.f32.mrb[0].mxu0
      %v3145 = vpop.f32.mrb[0].mxu0
      %v3146 = vadd.f32 0.0, %v3145
      %v3147 = vpop.f32.mrb[0].mxu0
      %3148 = vdwg.mxu0
      %v3149 = vadd.f32 %v2679, %v3023
      %v3150 = vadd.f32 %v2680, %v3026
      %v3151 = vadd.f32 %v2681, %v3031
      %v3152 = vadd.f32 %v2682, %v3034
      %v3153 = vadd.f32 %v2683, %v3039
      %v3154 = vadd.f32 %v2684, %v3042
      %v3155 = vadd.f32 %v2685, %v3047
      %v3156 = vadd.f32 %v2686, %v3050
      %v3157 = vadd.f32 %v2687, %v3055
      %v3158 = vadd.f32 %v2688, %v3058
      %v3159 = vadd.f32 %v2689, %v3063
      %v3160 = vadd.f32 %v2690, %v3066
      %v3161 = vadd.f32 %v2691, %v3071
      %v3162 = vadd.f32 %v2692, %v3074
      %v3163 = vadd.f32 %v2693, %v3079
      %v3164 = vadd.f32 %v2694, %v3082
      %v3165 = vadd.f32 %v2695, %v3087
      %v3166 = vadd.f32 %v2696, %v3090
      %v3167 = vadd.f32 %v2697, %v3095
      %v3168 = vadd.f32 %v2698, %v3098
      %v3169 = vadd.f32 %v2699, %v3103
      %v3170 = vadd.f32 %v2700, %v3106
      %v3171 = vadd.f32 %v2701, %v3111
      %v3172 = vadd.f32 %v2702, %v3114
      %v3173 = vadd.f32 %v2703, %v3119
      %v3174 = vadd.f32 %v2704, %v3122
      %v3175 = vadd.f32 %v2705, %v3127
      %v3176 = vadd.f32 %v2706, %v3130
      %v3177 = vadd.f32 %v2707, %v3135
      %v3178 = vadd.f32 %v2708, %v3138
      %v3179 = vadd.f32 %v2709, %v3143
      %v3180 = vadd.f32 %v2710, %v3146
      %s3181 = scalar_lea.vmem %s169, 24
      %v3182 = vld [vmem:[%s3181] sm:$0xf]
      %v3183 = vld [vmem:[%s3181 + $0x4] sm:$0xf]
      %v3184 = vld [vmem:[%s3181 + $0xc] sm:$0xf]
      %v3185 = vld [vmem:[%s3181 + $0x10] sm:$0xf]
      %v3186 = vld [vmem:[%s3181 + $0x18] sm:$0xf]
      %v3187 = vld [vmem:[%s3181 + $0x1c] sm:$0xf]
      %v3188 = vld [vmem:[%s3181 + $0x24] sm:$0xf]
      %v3189 = vld [vmem:[%s3181 + $0x28] sm:$0xf]
      %v3190 = vld [vmem:[%s3181 + $0x30] sm:$0xf]
      %v3191 = vld [vmem:[%s3181 + $0x34] sm:$0xf]
      %v3192 = vld [vmem:[%s3181 + $0x3c] sm:$0xf]
      %v3193 = vld [vmem:[%s3181 + $0x40] sm:$0xf]
      %v3194 = vld [vmem:[%s3181 + $0x48] sm:$0xf]
      %v3195 = vld [vmem:[%s3181 + $0x4c] sm:$0xf]
      %v3196 = vld [vmem:[%s3181 + $0x54] sm:$0xf]
      %v3197 = vld [vmem:[%s3181 + $0x58] sm:$0xf]
      %v3198 = vld [vmem:[%s3181 + $0x60] sm:$0xf]
      %v3199 = vld [vmem:[%s3181 + $0x64] sm:$0xf]
      %v3200 = vld [vmem:[%s3181 + $0x6c] sm:$0xf]
      %v3201 = vld [vmem:[%s3181 + $0x70] sm:$0xf]
      %v3202 = vld [vmem:[%s3181 + $0x78] sm:$0xf]
      %v3203 = vld [vmem:[%s3181 + $0x7c] sm:$0xf]
      %v3204 = vld [vmem:[%s3181 + $0x84] sm:$0xf]
      %v3205 = vld [vmem:[%s3181 + $0x88] sm:$0xf]
      %v3206 = vld [vmem:[%s3181 + $0x90] sm:$0xf]
      %v3207 = vld [vmem:[%s3181 + $0x94] sm:$0xf]
      %v3208 = vld [vmem:[%s3181 + $0x9c] sm:$0xf]
      %v3209 = vld [vmem:[%s3181 + $0xa0] sm:$0xf]
      %v3210 = vld [vmem:[%s3181 + $0xa8] sm:$0xf]
      %v3211 = vld [vmem:[%s3181 + $0xac] sm:$0xf]
      %v3212 = vld [vmem:[%s3181 + $0xb4] sm:$0xf]
      %v3213 = vld [vmem:[%s3181 + $0xb8] sm:$0xf]
      %s3214 = scalar_lea.vmem %s1, 12
      %v3215 = vld [vmem:[%s3214] sm:$0x3]
      %v3248 = vunpack.c.l.b16 %v3182
      %v3249 = vunpack.c.l.b16 %v3183
      %v3250 = vunpack.c.l.b16 %v3184
      %v3251 = vunpack.c.l.b16 %v3185
      %v3252 = vunpack.c.l.b16 %v3186
      %v3253 = vunpack.c.l.b16 %v3187
      %v3254 = vunpack.c.l.b16 %v3188
      %v3255 = vunpack.c.l.b16 %v3189
      %v3256 = vunpack.c.l.b16 %v3190
      %v3257 = vunpack.c.l.b16 %v3191
      %v3258 = vunpack.c.l.b16 %v3192
      %v3259 = vunpack.c.l.b16 %v3193
      %v3260 = vunpack.c.l.b16 %v3194
      %v3261 = vunpack.c.l.b16 %v3195
      %v3262 = vunpack.c.l.b16 %v3196
      %v3263 = vunpack.c.l.b16 %v3197
      %v3264 = vunpack.c.l.b16 %v3198
      %v3265 = vunpack.c.l.b16 %v3199
      %v3266 = vunpack.c.l.b16 %v3200
      %v3267 = vunpack.c.l.b16 %v3201
      %v3268 = vunpack.c.l.b16 %v3202
      %v3269 = vunpack.c.l.b16 %v3203
      %v3270 = vunpack.c.l.b16 %v3204
      %v3271 = vunpack.c.l.b16 %v3205
      %v3272 = vunpack.c.l.b16 %v3206
      %v3273 = vunpack.c.l.b16 %v3207
      %v3274 = vunpack.c.l.b16 %v3208
      %v3275 = vunpack.c.l.b16 %v3209
      %v3276 = vunpack.c.l.b16 %v3210
      %v3277 = vunpack.c.l.b16 %v3211
      %v3278 = vunpack.c.l.b16 %v3212
      %v3279 = vunpack.c.l.b16 %v3213
      %v3280 = vpack.c.b16 %v3249, %v3248
      %v3281 = vpack.c.b16 %v3251, %v3250
      %v3282 = vpack.c.b16 %v3253, %v3252
      %v3283 = vpack.c.b16 %v3255, %v3254
      %v3284 = vpack.c.b16 %v3257, %v3256
      %v3285 = vpack.c.b16 %v3259, %v3258
      %v3286 = vpack.c.b16 %v3261, %v3260
      %v3287 = vpack.c.b16 %v3263, %v3262
      %v3288 = vpack.c.b16 %v3265, %v3264
      %v3289 = vpack.c.b16 %v3267, %v3266
      %v3290 = vpack.c.b16 %v3269, %v3268
      %v3291 = vpack.c.b16 %v3271, %v3270
      %v3292 = vpack.c.b16 %v3273, %v3272
      %v3293 = vpack.c.b16 %v3275, %v3274
      %v3294 = vpack.c.b16 %v3277, %v3276
      %v3295 = vpack.c.b16 %v3279, %v3278
      %v3297 = vsel %vm663, %v3280, 0
      %v3300 = vsel %vm663, %v3281, 0
      %v3303 = vsel %vm663, %v3282, 0
      %v3306 = vsel %vm663, %v3283, 0
      %v3309 = vsel %vm663, %v3284, 0
      %v3312 = vsel %vm663, %v3285, 0
      %v3315 = vsel %vm663, %v3286, 0
      %v3318 = vsel %vm663, %v3287, 0
      %v3321 = vsel %vm663, %v3288, 0
      %v3324 = vsel %vm663, %v3289, 0
      %v3327 = vsel %vm663, %v3290, 0
      %v3330 = vsel %vm663, %v3291, 0
      %v3333 = vsel %vm663, %v3292, 0
      %v3336 = vsel %vm663, %v3293, 0
      %v3339 = vsel %vm663, %v3294, 0
      %v3342 = vsel %vm663, %v3295, 0
      %v3345 = vsel %vm712, %v3215, 0
      %3347 = vmatprep.subr.bf16.mxu0 0
      %3348 = vmatpush1.bf16.msra.mxu0 %v3345
      %3349 = vmatprep.subr.bf16.mxu0 0
      %3350 = vmatpush1.bf16.msra.mxu0 0
      %3351 = vmatprep.subr.bf16.mxu0 0
      %3352 = vmatpush1.bf16.msra.mxu0 0
      %3353 = vmatprep.subr.bf16.mxu0 0
      %3354 = vmatpush1.bf16.msra.mxu0 0
      %3355 = vmatprep.subr.bf16.mxu0 0
      %3356 = vmatpush1.bf16.msra.mxu0 0
      %3357 = vmatprep.subr.bf16.mxu0 0
      %3358 = vmatpush1.bf16.msra.mxu0 0
      %3359 = vmatprep.subr.bf16.mxu0 0
      %3360 = vmatpush1.bf16.msra.mxu0 0
      %3361 = vmatprep.subr.bf16.mxu0 0
      %3362 = vmatpush1.bf16.msra.mxu0 0
      %3363 = vmatprep.subr.bf16.mxu0 0
      %3364 = vmatpush1.bf16.msra.mxu0 0
      %3365 = vmatprep.subr.bf16.mxu0 0
      %3366 = vmatpush1.bf16.msra.mxu0 0
      %3367 = vmatprep.subr.bf16.mxu0 0
      %3368 = vmatpush1.bf16.msra.mxu0 0
      %3369 = vmatprep.subr.bf16.mxu0 0
      %3370 = vmatpush1.bf16.msra.mxu0 0
      %3371 = vmatprep.subr.bf16.mxu0 0
      %3372 = vmatpush1.bf16.msra.mxu0 0
      %3373 = vmatprep.subr.bf16.mxu0 0
      %3374 = vmatpush1.bf16.msra.mxu0 0
      %3375 = vmatprep.subr.bf16.mxu0 0
      %3376 = vmatpush1.bf16.msra.mxu0 0
      %3377 = vmatprep.subr.bf16.mxu0 0
      %3378 = vmatpush1.bf16.msra.mxu0 0
      %3379 = vmatprep.mubr.bf16.mxu0 0
      %3380 = vmatmul.mubr.bf16.gmra.mrb[0].mxu0 %v3297
      %v3381 = vpop.f32.mrb[0].mxu0
      %v3382 = vadd.f32 0.0, %v3381
      %v3383 = vpop.f32.mrb[0].mxu0
      %v3384 = vpop.f32.mrb[0].mxu0
      %v3385 = vadd.f32 0.0, %v3384
      %v3386 = vpop.f32.mrb[0].mxu0
      %3387 = vmatprep.mubr.bf16.mxu0 0
      %3388 = vmatmul.mubr.bf16.gmra.mrb[0].mxu0 %v3300
      %v3389 = vpop.f32.mrb[0].mxu0
      %v3390 = vadd.f32 0.0, %v3389
      %v3391 = vpop.f32.mrb[0].mxu0
      %v3392 = vpop.f32.mrb[0].mxu0
      %v3393 = vadd.f32 0.0, %v3392
      %v3394 = vpop.f32.mrb[0].mxu0
      %3395 = vmatprep.mubr.bf16.mxu0 0
      %3396 = vmatmul.mubr.bf16.gmra.mrb[0].mxu0 %v3303
      %v3397 = vpop.f32.mrb[0].mxu0
      %v3398 = vadd.f32 0.0, %v3397
      %v3399 = vpop.f32.mrb[0].mxu0
      %v3400 = vpop.f32.mrb[0].mxu0
      %v3401 = vadd.f32 0.0, %v3400
      %v3402 = vpop.f32.mrb[0].mxu0
      %3403 = vmatprep.mubr.bf16.mxu0 0
      %3404 = vmatmul.mubr.bf16.gmra.mrb[0].mxu0 %v3306
      %v3405 = vpop.f32.mrb[0].mxu0
      %v3406 = vadd.f32 0.0, %v3405
      %v3407 = vpop.f32.mrb[0].mxu0
      %v3408 = vpop.f32.mrb[0].mxu0
      %v3409 = vadd.f32 0.0, %v3408
      %v3410 = vpop.f32.mrb[0].mxu0
      %3411 = vmatprep.mubr.bf16.mxu0 0
      %3412 = vmatmul.mubr.bf16.gmra.mrb[0].mxu0 %v3309
      %v3413 = vpop.f32.mrb[0].mxu0
      %v3414 = vadd.f32 0.0, %v3413
      %v3415 = vpop.f32.mrb[0].mxu0
      %v3416 = vpop.f32.mrb[0].mxu0
      %v3417 = vadd.f32 0.0, %v3416
      %v3418 = vpop.f32.mrb[0].mxu0
      %3419 = vmatprep.mubr.bf16.mxu0 0
      %3420 = vmatmul.mubr.bf16.gmra.mrb[0].mxu0 %v3312
      %v3421 = vpop.f32.mrb[0].mxu0
      %v3422 = vadd.f32 0.0, %v3421
      %v3423 = vpop.f32.mrb[0].mxu0
      %v3424 = vpop.f32.mrb[0].mxu0
      %v3425 = vadd.f32 0.0, %v3424
      %v3426 = vpop.f32.mrb[0].mxu0
      %3427 = vmatprep.mubr.bf16.mxu0 0
      %3428 = vmatmul.mubr.bf16.gmra.mrb[0].mxu0 %v3315
      %v3429 = vpop.f32.mrb[0].mxu0
      %v3430 = vadd.f32 0.0, %v3429
      %v3431 = vpop.f32.mrb[0].mxu0
      %v3432 = vpop.f32.mrb[0].mxu0
      %v3433 = vadd.f32 0.0, %v3432
      %v3434 = vpop.f32.mrb[0].mxu0
      %3435 = vmatprep.mubr.bf16.mxu0 0
      %3436 = vmatmul.mubr.bf16.gmra.mrb[0].mxu0 %v3318
      %v3437 = vpop.f32.mrb[0].mxu0
      %v3438 = vadd.f32 0.0, %v3437
      %v3439 = vpop.f32.mrb[0].mxu0
      %v3440 = vpop.f32.mrb[0].mxu0
      %v3441 = vadd.f32 0.0, %v3440
      %v3442 = vpop.f32.mrb[0].mxu0
      %3443 = vmatprep.mubr.bf16.mxu0 0
      %3444 = vmatmul.mubr.bf16.gmra.mrb[0].mxu0 %v3321
      %v3445 = vpop.f32.mrb[0].mxu0
      %v3446 = vadd.f32 0.0, %v3445
      %v3447 = vpop.f32.mrb[0].mxu0
      %v3448 = vpop.f32.mrb[0].mxu0
      %v3449 = vadd.f32 0.0, %v3448
      %v3450 = vpop.f32.mrb[0].mxu0
      %3451 = vmatprep.mubr.bf16.mxu0 0
      %3452 = vmatmul.mubr.bf16.gmra.mrb[0].mxu0 %v3324
      %v3453 = vpop.f32.mrb[0].mxu0
      %v3454 = vadd.f32 0.0, %v3453
      %v3455 = vpop.f32.mrb[0].mxu0
      %v3456 = vpop.f32.mrb[0].mxu0
      %v3457 = vadd.f32 0.0, %v3456
      %v3458 = vpop.f32.mrb[0].mxu0
      %3459 = vmatprep.mubr.bf16.mxu0 0
      %3460 = vmatmul.mubr.bf16.gmra.mrb[0].mxu0 %v3327
      %v3461 = vpop.f32.mrb[0].mxu0
      %v3462 = vadd.f32 0.0, %v3461
      %v3463 = vpop.f32.mrb[0].mxu0
      %v3464 = vpop.f32.mrb[0].mxu0
      %v3465 = vadd.f32 0.0, %v3464
      %v3466 = vpop.f32.mrb[0].mxu0
      %3467 = vmatprep.mubr.bf16.mxu0 0
      %3468 = vmatmul.mubr.bf16.gmra.mrb[0].mxu0 %v3330
      %v3469 = vpop.f32.mrb[0].mxu0
      %v3470 = vadd.f32 0.0, %v3469
      %v3471 = vpop.f32.mrb[0].mxu0
      %v3472 = vpop.f32.mrb[0].mxu0
      %v3473 = vadd.f32 0.0, %v3472
      %v3474 = vpop.f32.mrb[0].mxu0
      %3475 = vmatprep.mubr.bf16.mxu0 0
      %3476 = vmatmul.mubr.bf16.gmra.mrb[0].mxu0 %v3333
      %v3477 = vpop.f32.mrb[0].mxu0
      %v3478 = vadd.f32 0.0, %v3477
      %v3479 = vpop.f32.mrb[0].mxu0
      %v3480 = vpop.f32.mrb[0].mxu0
      %v3481 = vadd.f32 0.0, %v3480
      %v3482 = vpop.f32.mrb[0].mxu0
      %3483 = vmatprep.mubr.bf16.mxu0 0
      %3484 = vmatmul.mubr.bf16.gmra.mrb[0].mxu0 %v3336
      %v3485 = vpop.f32.mrb[0].mxu0
      %v3486 = vadd.f32 0.0, %v3485
      %v3487 = vpop.f32.mrb[0].mxu0
      %v3488 = vpop.f32.mrb[0].mxu0
      %v3489 = vadd.f32 0.0, %v3488
      %v3490 = vpop.f32.mrb[0].mxu0
      %3491 = vmatprep.mubr.bf16.mxu0 0
      %3492 = vmatmul.mubr.bf16.gmra.mrb[0].mxu0 %v3339
      %v3493 = vpop.f32.mrb[0].mxu0
      %v3494 = vadd.f32 0.0, %v3493
      %v3495 = vpop.f32.mrb[0].mxu0
      %v3496 = vpop.f32.mrb[0].mxu0
      %v3497 = vadd.f32 0.0, %v3496
      %v3498 = vpop.f32.mrb[0].mxu0
      %3499 = vmatprep.mubr.bf16.mxu0 0
      %3500 = vmatmul.mubr.bf16.gmra.mrb[0].mxu0 %v3342
      %v3501 = vpop.f32.mrb[0].mxu0
      %v3502 = vadd.f32 0.0, %v3501
      %v3503 = vpop.f32.mrb[0].mxu0
      %v3504 = vpop.f32.mrb[0].mxu0
      %v3505 = vadd.f32 0.0, %v3504
      %v3506 = vpop.f32.mrb[0].mxu0
      %3507 = vdwg.mxu0
      %v3508 = vadd.f32 %v3149, %v3382
      %v3509 = vadd.f32 %v3150, %v3385
      %v3510 = vadd.f32 %v3151, %v3390
      %v3511 = vadd.f32 %v3152, %v3393
      %v3512 = vadd.f32 %v3153, %v3398
      %v3513 = vadd.f32 %v3154, %v3401
      %v3514 = vadd.f32 %v3155, %v3406
      %v3515 = vadd.f32 %v3156, %v3409
      %v3516 = vadd.f32 %v3157, %v3414
      %v3517 = vadd.f32 %v3158, %v3417
      %v3518 = vadd.f32 %v3159, %v3422
      %v3519 = vadd.f32 %v3160, %v3425
      %v3520 = vadd.f32 %v3161, %v3430
      %v3521 = vadd.f32 %v3162, %v3433
      %v3522 = vadd.f32 %v3163, %v3438
      %v3523 = vadd.f32 %v3164, %v3441
      %v3524 = vadd.f32 %v3165, %v3446
      %v3525 = vadd.f32 %v3166, %v3449
      %v3526 = vadd.f32 %v3167, %v3454
      %v3527 = vadd.f32 %v3168, %v3457
      %v3528 = vadd.f32 %v3169, %v3462
      %v3529 = vadd.f32 %v3170, %v3465
      %v3530 = vadd.f32 %v3171, %v3470
      %v3531 = vadd.f32 %v3172, %v3473
      %v3532 = vadd.f32 %v3173, %v3478
      %v3533 = vadd.f32 %v3174, %v3481
      %v3534 = vadd.f32 %v3175, %v3486
      %v3535 = vadd.f32 %v3176, %v3489
      %v3536 = vadd.f32 %v3177, %v3494
      %v3537 = vadd.f32 %v3178, %v3497
      %v3538 = vadd.f32 %v3179, %v3502
      %v3539 = vadd.f32 %v3180, %v3505
      %v3540 = vld [vmem:[%s3181] sm:$0xf]
      %v3541 = vld [vmem:[%s3181 + $0x4] sm:$0xf]
      %v3542 = vld [vmem:[%s3181 + $0x8] sm:$0x1]
      %v3543 = vld [vmem:[%s3181 + $0xc] sm:$0xf]
      %v3544 = vld [vmem:[%s3181 + $0x10] sm:$0xf]
      %v3545 = vld [vmem:[%s3181 + $0x14] sm:$0x1]
      %v3546 = vld [vmem:[%s3181 + $0x18] sm:$0xf]
      %v3547 = vld [vmem:[%s3181 + $0x1c] sm:$0xf]
      %v3548 = vld [vmem:[%s3181 + $0x20] sm:$0x1]
      %v3549 = vld [vmem:[%s3181 + $0x24] sm:$0xf]
      %v3550 = vld [vmem:[%s3181 + $0x28] sm:$0xf]
      %v3551 = vld [vmem:[%s3181 + $0x2c] sm:$0x1]
      %v3552 = vld [vmem:[%s3181 + $0x30] sm:$0xf]
      %v3553 = vld [vmem:[%s3181 + $0x34] sm:$0xf]
      %v3554 = vld [vmem:[%s3181 + $0x38] sm:$0x1]
      %v3555 = vld [vmem:[%s3181 + $0x3c] sm:$0xf]
      %v3556 = vld [vmem:[%s3181 + $0x40] sm:$0xf]
      %v3557 = vld [vmem:[%s3181 + $0x44] sm:$0x1]
      %v3558 = vld [vmem:[%s3181 + $0x48] sm:$0xf]
      %v3559 = vld [vmem:[%s3181 + $0x4c] sm:$0xf]
      %v3560 = vld [vmem:[%s3181 + $0x50] sm:$0x1]
      %v3561 = vld [vmem:[%s3181 + $0x54] sm:$0xf]
      %v3562 = vld [vmem:[%s3181 + $0x58] sm:$0xf]
      %v3563 = vld [vmem:[%s3181 + $0x5c] sm:$0x1]
      %v3564 = vld [vmem:[%s3181 + $0x60] sm:$0xf]
      %v3565 = vld [vmem:[%s3181 + $0x64] sm:$0xf]
      %v3566 = vld [vmem:[%s3181 + $0x68] sm:$0x1]
      %v3567 = vld [vmem:[%s3181 + $0x6c] sm:$0xf]
      %v3568 = vld [vmem:[%s3181 + $0x70] sm:$0xf]
      %v3569 = vld [vmem:[%s3181 + $0x74] sm:$0x1]
      %v3570 = vld [vmem:[%s3181 + $0x78] sm:$0xf]
      %v3571 = vld [vmem:[%s3181 + $0x7c] sm:$0xf]
      %v3572 = vld [vmem:[%s3181 + $0x80] sm:$0x1]
      %v3573 = vld [vmem:[%s3181 + $0x84] sm:$0xf]
      %v3574 = vld [vmem:[%s3181 + $0x88] sm:$0xf]
      %v3575 = vld [vmem:[%s3181 + $0x8c] sm:$0x1]
      %v3576 = vld [vmem:[%s3181 + $0x90] sm:$0xf]
      %v3577 = vld [vmem:[%s3181 + $0x94] sm:$0xf]
      %v3578 = vld [vmem:[%s3181 + $0x98] sm:$0x1]
      %v3579 = vld [vmem:[%s3181 + $0x9c] sm:$0xf]
      %v3580 = vld [vmem:[%s3181 + $0xa0] sm:$0xf]
      %v3581 = vld [vmem:[%s3181 + $0xa4] sm:$0x1]
      %v3582 = vld [vmem:[%s3181 + $0xa8] sm:$0xf]
      %v3583 = vld [vmem:[%s3181 + $0xac] sm:$0xf]
      %v3584 = vld [vmem:[%s3181 + $0xb0] sm:$0x1]
      %v3585 = vld [vmem:[%s3181 + $0xb4] sm:$0xf]
      %v3586 = vld [vmem:[%s3181 + $0xb8] sm:$0xf]
      %v3587 = vld [vmem:[%s3181 + $0xbc] sm:$0x1]
      %v3589 = vshrl.u32 %v3540, 16
      %v3591 = vrot.slane %v3589, 4
      %v3592 = vshll.u32 %v3540, 16
      %v3594 = vrot.slane %v3592, 5
      %v3595 = vor.u32 %v3591, %v3594
      %v3596 = vrot.slane %v3595, 4
      %v3598 = vshll.u32 %v3541, 16
      %v3600 = vrot.slane %v3598, 5
      %v3601 = vsel %vm228, %v3596, %v3600
      %v3602 = vshrl.u32 %v3541, 16
      %v3604 = vrot.slane %v3602, 4
      %v3605 = vor.u32 %v3604, %v3600
      %v3606 = vrot.slane %v3605, 4
      %v3608 = vshll.u32 %v3542, 16
      %v3610 = vrot.slane %v3608, 5
      %v3611 = vsel %vm228, %v3606, %v3610
      %v3613 = vshrl.u32 %v3543, 16
      %v3615 = vrot.slane %v3613, 4
      %v3616 = vshll.u32 %v3543, 16
      %v3618 = vrot.slane %v3616, 5
      %v3619 = vor.u32 %v3615, %v3618
      %v3620 = vrot.slane %v3619, 4
      %v3622 = vshll.u32 %v3544, 16
      %v3624 = vrot.slane %v3622, 5
      %v3625 = vsel %vm228, %v3620, %v3624
      %v3626 = vshrl.u32 %v3544, 16
      %v3628 = vrot.slane %v3626, 4
      %v3629 = vor.u32 %v3628, %v3624
      %v3630 = vrot.slane %v3629, 4
      %v3632 = vshll.u32 %v3545, 16
      %v3634 = vrot.slane %v3632, 5
      %v3635 = vsel %vm228, %v3630, %v3634
      %v3637 = vshrl.u32 %v3546, 16
      %v3639 = vrot.slane %v3637, 4
      %v3640 = vshll.u32 %v3546, 16
      %v3642 = vrot.slane %v3640, 5
      %v3643 = vor.u32 %v3639, %v3642
      %v3644 = vrot.slane %v3643, 4
      %v3646 = vshll.u32 %v3547, 16
      %v3648 = vrot.slane %v3646, 5
      %v3649 = vsel %vm228, %v3644, %v3648
      %v3650 = vshrl.u32 %v3547, 16
      %v3652 = vrot.slane %v3650, 4
      %v3653 = vor.u32 %v3652, %v3648
      %v3654 = vrot.slane %v3653, 4
      %v3656 = vshll.u32 %v3548, 16
      %v3658 = vrot.slane %v3656, 5
      %v3659 = vsel %vm228, %v3654, %v3658
      %v3661 = vshrl.u32 %v3549, 16
      %v3663 = vrot.slane %v3661, 4
      %v3664 = vshll.u32 %v3549, 16
      %v3666 = vrot.slane %v3664, 5
      %v3667 = vor.u32 %v3663, %v3666
      %v3668 = vrot.slane %v3667, 4
      %v3670 = vshll.u32 %v3550, 16
      %v3672 = vrot.slane %v3670, 5
      %v3673 = vsel %vm228, %v3668, %v3672
      %v3674 = vshrl.u32 %v3550, 16
      %v3676 = vrot.slane %v3674, 4
      %v3677 = vor.u32 %v3676, %v3672
      %v3678 = vrot.slane %v3677, 4
      %v3680 = vshll.u32 %v3551, 16
      %v3682 = vrot.slane %v3680, 5
      %v3683 = vsel %vm228, %v3678, %v3682
      %v3685 = vshrl.u32 %v3552, 16
      %v3687 = vrot.slane %v3685, 4
      %v3688 = vshll.u32 %v3552, 16
      %v3690 = vrot.slane %v3688, 5
      %v3691 = vor.u32 %v3687, %v3690
      %v3692 = vrot.slane %v3691, 4
      %v3694 = vshll.u32 %v3553, 16
      %v3696 = vrot.slane %v3694, 5
      %v3697 = vsel %vm228, %v3692, %v3696
      %v3698 = vshrl.u32 %v3553, 16
      %v3700 = vrot.slane %v3698, 4
      %v3701 = vor.u32 %v3700, %v3696
      %v3702 = vrot.slane %v3701, 4
      %v3704 = vshll.u32 %v3554, 16
      %v3706 = vrot.slane %v3704, 5
      %v3707 = vsel %vm228, %v3702, %v3706
      %v3709 = vshrl.u32 %v3555, 16
      %v3711 = vrot.slane %v3709, 4
      %v3712 = vshll.u32 %v3555, 16
      %v3714 = vrot.slane %v3712, 5
      %v3715 = vor.u32 %v3711, %v3714
      %v3716 = vrot.slane %v3715, 4
      %v3718 = vshll.u32 %v3556, 16
      %v3720 = vrot.slane %v3718, 5
      %v3721 = vsel %vm228, %v3716, %v3720
      %v3722 = vshrl.u32 %v3556, 16
      %v3724 = vrot.slane %v3722, 4
      %v3725 = vor.u32 %v3724, %v3720
      %v3726 = vrot.slane %v3725, 4
      %v3728 = vshll.u32 %v3557, 16
      %v3730 = vrot.slane %v3728, 5
      %v3731 = vsel %vm228, %v3726, %v3730
      %v3733 = vshrl.u32 %v3558, 16
      %v3735 = vrot.slane %v3733, 4
      %v3736 = vshll.u32 %v3558, 16
      %v3738 = vrot.slane %v3736, 5
      %v3739 = vor.u32 %v3735, %v3738
      %v3740 = vrot.slane %v3739, 4
      %v3742 = vshll.u32 %v3559, 16
      %v3744 = vrot.slane %v3742, 5
      %v3745 = vsel %vm228, %v3740, %v3744
      %v3746 = vshrl.u32 %v3559, 16
      %v3748 = vrot.slane %v3746, 4
      %v3749 = vor.u32 %v3748, %v3744
      %v3750 = vrot.slane %v3749, 4
      %v3752 = vshll.u32 %v3560, 16
      %v3754 = vrot.slane %v3752, 5
      %v3755 = vsel %vm228, %v3750, %v3754
      %v3757 = vshrl.u32 %v3561, 16
      %v3759 = vrot.slane %v3757, 4
      %v3760 = vshll.u32 %v3561, 16
      %v3762 = vrot.slane %v3760, 5
      %v3763 = vor.u32 %v3759, %v3762
      %v3764 = vrot.slane %v3763, 4
      %v3766 = vshll.u32 %v3562, 16
      %v3768 = vrot.slane %v3766, 5
      %v3769 = vsel %vm228, %v3764, %v3768
      %v3770 = vshrl.u32 %v3562, 16
      %v3772 = vrot.slane %v3770, 4
      %v3773 = vor.u32 %v3772, %v3768
      %v3774 = vrot.slane %v3773, 4
      %v3776 = vshll.u32 %v3563, 16
      %v3778 = vrot.slane %v3776, 5
      %v3779 = vsel %vm228, %v3774, %v3778
      %v3781 = vshrl.u32 %v3564, 16
      %v3783 = vrot.slane %v3781, 4
      %v3784 = vshll.u32 %v3564, 16
      %v3786 = vrot.slane %v3784, 5
      %v3787 = vor.u32 %v3783, %v3786
      %v3788 = vrot.slane %v3787, 4
      %v3790 = vshll.u32 %v3565, 16
      %v3792 = vrot.slane %v3790, 5
      %v3793 = vsel %vm228, %v3788, %v3792
      %v3794 = vshrl.u32 %v3565, 16
      %v3796 = vrot.slane %v3794, 4
      %v3797 = vor.u32 %v3796, %v3792
      %v3798 = vrot.slane %v3797, 4
      %v3800 = vshll.u32 %v3566, 16
      %v3802 = vrot.slane %v3800, 5
      %v3803 = vsel %vm228, %v3798, %v3802
      %v3805 = vshrl.u32 %v3567, 16
      %v3807 = vrot.slane %v3805, 4
      %v3808 = vshll.u32 %v3567, 16
      %v3810 = vrot.slane %v3808, 5
      %v3811 = vor.u32 %v3807, %v3810
      %v3812 = vrot.slane %v3811, 4
      %v3814 = vshll.u32 %v3568, 16
      %v3816 = vrot.slane %v3814, 5
      %v3817 = vsel %vm228, %v3812, %v3816
      %v3818 = vshrl.u32 %v3568, 16
      %v3820 = vrot.slane %v3818, 4
      %v3821 = vor.u32 %v3820, %v3816
      %v3822 = vrot.slane %v3821, 4
      %v3824 = vshll.u32 %v3569, 16
      %v3826 = vrot.slane %v3824, 5
      %v3827 = vsel %vm228, %v3822, %v3826
      %v3829 = vshrl.u32 %v3570, 16
      %v3831 = vrot.slane %v3829, 4
      %v3832 = vshll.u32 %v3570, 16
      %v3834 = vrot.slane %v3832, 5
      %v3835 = vor.u32 %v3831, %v3834
      %v3836 = vrot.slane %v3835, 4
      %v3838 = vshll.u32 %v3571, 16
      %v3840 = vrot.slane %v3838, 5
      %v3841 = vsel %vm228, %v3836, %v3840
      %v3842 = vshrl.u32 %v3571, 16
      %v3844 = vrot.slane %v3842, 4
      %v3845 = vor.u32 %v3844, %v3840
      %v3846 = vrot.slane %v3845, 4
      %v3848 = vshll.u32 %v3572, 16
      %v3850 = vrot.slane %v3848, 5
      %v3851 = vsel %vm228, %v3846, %v3850
      %v3853 = vshrl.u32 %v3573, 16
      %v3855 = vrot.slane %v3853, 4
      %v3856 = vshll.u32 %v3573, 16
      %v3858 = vrot.slane %v3856, 5
      %v3859 = vor.u32 %v3855, %v3858
      %v3860 = vrot.slane %v3859, 4
      %v3862 = vshll.u32 %v3574, 16
      %v3864 = vrot.slane %v3862, 5
      %v3865 = vsel %vm228, %v3860, %v3864
      %v3866 = vshrl.u32 %v3574, 16
      %v3868 = vrot.slane %v3866, 4
      %v3869 = vor.u32 %v3868, %v3864
      %v3870 = vrot.slane %v3869, 4
      %v3872 = vshll.u32 %v3575, 16
      %v3874 = vrot.slane %v3872, 5
      %v3875 = vsel %vm228, %v3870, %v3874
      %v3877 = vshrl.u32 %v3576, 16
      %v3879 = vrot.slane %v3877, 4
      %v3880 = vshll.u32 %v3576, 16
      %v3882 = vrot.slane %v3880, 5
      %v3883 = vor.u32 %v3879, %v3882
      %v3884 = vrot.slane %v3883, 4
      %v3886 = vshll.u32 %v3577, 16
      %v3888 = vrot.slane %v3886, 5
      %v3889 = vsel %vm228, %v3884, %v3888
      %v3890 = vshrl.u32 %v3577, 16
      %v3892 = vrot.slane %v3890, 4
      %v3893 = vor.u32 %v3892, %v3888
      %v3894 = vrot.slane %v3893, 4
      %v3896 = vshll.u32 %v3578, 16
      %v3898 = vrot.slane %v3896, 5
      %v3899 = vsel %vm228, %v3894, %v3898
      %v3901 = vshrl.u32 %v3579, 16
      %v3903 = vrot.slane %v3901, 4
      %v3904 = vshll.u32 %v3579, 16
      %v3906 = vrot.slane %v3904, 5
      %v3907 = vor.u32 %v3903, %v3906
      %v3908 = vrot.slane %v3907, 4
      %v3910 = vshll.u32 %v3580, 16
      %v3912 = vrot.slane %v3910, 5
      %v3913 = vsel %vm228, %v3908, %v3912
      %v3914 = vshrl.u32 %v3580, 16
      %v3916 = vrot.slane %v3914, 4
      %v3917 = vor.u32 %v3916, %v3912
      %v3918 = vrot.slane %v3917, 4
      %v3920 = vshll.u32 %v3581, 16
      %v3922 = vrot.slane %v3920, 5
      %v3923 = vsel %vm228, %v3918, %v3922
      %v3925 = vshrl.u32 %v3582, 16
      %v3927 = vrot.slane %v3925, 4
      %v3928 = vshll.u32 %v3582, 16
      %v3930 = vrot.slane %v3928, 5
      %v3931 = vor.u32 %v3927, %v3930
      %v3932 = vrot.slane %v3931, 4
      %v3934 = vshll.u32 %v3583, 16
      %v3936 = vrot.slane %v3934, 5
      %v3937 = vsel %vm228, %v3932, %v3936
      %v3938 = vshrl.u32 %v3583, 16
      %v3940 = vrot.slane %v3938, 4
      %v3941 = vor.u32 %v3940, %v3936
      %v3942 = vrot.slane %v3941, 4
      %v3944 = vshll.u32 %v3584, 16
      %v3946 = vrot.slane %v3944, 5
      %v3947 = vsel %vm228, %v3942, %v3946
      %v3949 = vshrl.u32 %v3585, 16
      %v3951 = vrot.slane %v3949, 4
      %v3952 = vshll.u32 %v3585, 16
      %v3954 = vrot.slane %v3952, 5
      %v3955 = vor.u32 %v3951, %v3954
      %v3956 = vrot.slane %v3955, 4
      %v3958 = vshll.u32 %v3586, 16
      %v3960 = vrot.slane %v3958, 5
      %v3961 = vsel %vm228, %v3956, %v3960
      %v3962 = vshrl.u32 %v3586, 16
      %v3964 = vrot.slane %v3962, 4
      %v3965 = vor.u32 %v3964, %v3960
      %v3966 = vrot.slane %v3965, 4
      %v3968 = vshll.u32 %v3587, 16
      %v3970 = vrot.slane %v3968, 5
      %v3971 = vsel %vm228, %v3966, %v3970
      %s3972 = scalar_lea.vmem %s1, 14
      %v3973 = vld [vmem:[%s3972] sm:$0x3]
      %v3974 = vunpack.c.l.b16 %v3601
      %v3975 = vunpack.c.l.b16 %v3611
      %v3976 = vunpack.c.l.b16 %v3625
      %v3977 = vunpack.c.l.b16 %v3635
      %v3978 = vunpack.c.l.b16 %v3649
      %v3979 = vunpack.c.l.b16 %v3659
      %v3980 = vunpack.c.l.b16 %v3673
      %v3981 = vunpack.c.l.b16 %v3683
      %v3982 = vunpack.c.l.b16 %v3697
      %v3983 = vunpack.c.l.b16 %v3707
      %v3984 = vunpack.c.l.b16 %v3721
      %v3985 = vunpack.c.l.b16 %v3731
      %v3986 = vunpack.c.l.b16 %v3745
      %v3987 = vunpack.c.l.b16 %v3755
      %v3988 = vunpack.c.l.b16 %v3769
      %v3989 = vunpack.c.l.b16 %v3779
      %v3990 = vunpack.c.l.b16 %v3793
      %v3991 = vunpack.c.l.b16 %v3803
      %v3992 = vunpack.c.l.b16 %v3817
      %v3993 = vunpack.c.l.b16 %v3827
      %v3994 = vunpack.c.l.b16 %v3841
      %v3995 = vunpack.c.l.b16 %v3851
      %v3996 = vunpack.c.l.b16 %v3865
      %v3997 = vunpack.c.l.b16 %v3875
      %v3998 = vunpack.c.l.b16 %v3889
      %v3999 = vunpack.c.l.b16 %v3899
      %v4000 = vunpack.c.l.b16 %v3913
      %v4001 = vunpack.c.l.b16 %v3923
      %v4002 = vunpack.c.l.b16 %v3937
      %v4003 = vunpack.c.l.b16 %v3947
      %v4004 = vunpack.c.l.b16 %v3961
      %v4005 = vunpack.c.l.b16 %v3971
      %v4006 = vpack.c.b16 %v3975, %v3974
      %v4007 = vpack.c.b16 %v3977, %v3976
      %v4008 = vpack.c.b16 %v3979, %v3978
      %v4009 = vpack.c.b16 %v3981, %v3980
      %v4010 = vpack.c.b16 %v3983, %v3982
      %v4011 = vpack.c.b16 %v3985, %v3984
      %v4012 = vpack.c.b16 %v3987, %v3986
      %v4013 = vpack.c.b16 %v3989, %v3988
      %v4014 = vpack.c.b16 %v3991, %v3990
      %v4015 = vpack.c.b16 %v3993, %v3992
      %v4016 = vpack.c.b16 %v3995, %v3994
      %v4017 = vpack.c.b16 %v3997, %v3996
      %v4018 = vpack.c.b16 %v3999, %v3998
      %v4019 = vpack.c.b16 %v4001, %v4000
      %v4020 = vpack.c.b16 %v4003, %v4002
      %v4021 = vpack.c.b16 %v4005, %v4004
      %v4023 = vsel %vm663, %v4006, 0
      %v4026 = vsel %vm663, %v4007, 0
      %v4029 = vsel %vm663, %v4008, 0
      %v4032 = vsel %vm663, %v4009, 0
      %v4035 = vsel %vm663, %v4010, 0
      %v4038 = vsel %vm663, %v4011, 0
      %v4041 = vsel %vm663, %v4012, 0
      %v4044 = vsel %vm663, %v4013, 0
      %v4047 = vsel %vm663, %v4014, 0
      %v4050 = vsel %vm663, %v4015, 0
      %v4053 = vsel %vm663, %v4016, 0
      %v4056 = vsel %vm663, %v4017, 0
      %v4059 = vsel %vm663, %v4018, 0
      %v4062 = vsel %vm663, %v4019, 0
      %v4065 = vsel %vm663, %v4020, 0
      %v4068 = vsel %vm663, %v4021, 0
      %v4071 = vsel %vm712, %v3973, 0
      %4073 = vmatprep.subr.bf16.mxu0 0
      %4074 = vmatpush1.bf16.msra.mxu0 %v4071
      %4075 = vmatprep.subr.bf16.mxu0 0
      %4076 = vmatpush1.bf16.msra.mxu0 0
      %4077 = vmatprep.subr.bf16.mxu0 0
      %4078 = vmatpush1.bf16.msra.mxu0 0
      %4079 = vmatprep.subr.bf16.mxu0 0
      %4080 = vmatpush1.bf16.msra.mxu0 0
      %4081 = vmatprep.subr.bf16.mxu0 0
      %4082 = vmatpush1.bf16.msra.mxu0 0
      %4083 = vmatprep.subr.bf16.mxu0 0
      %4084 = vmatpush1.bf16.msra.mxu0 0
      %4085 = vmatprep.subr.bf16.mxu0 0
      %4086 = vmatpush1.bf16.msra.mxu0 0
      %4087 = vmatprep.subr.bf16.mxu0 0
      %4088 = vmatpush1.bf16.msra.mxu0 0
      %4089 = vmatprep.subr.bf16.mxu0 0
      %4090 = vmatpush1.bf16.msra.mxu0 0
      %4091 = vmatprep.subr.bf16.mxu0 0
      %4092 = vmatpush1.bf16.msra.mxu0 0
      %4093 = vmatprep.subr.bf16.mxu0 0
      %4094 = vmatpush1.bf16.msra.mxu0 0
      %4095 = vmatprep.subr.bf16.mxu0 0
      %4096 = vmatpush1.bf16.msra.mxu0 0
      %4097 = vmatprep.subr.bf16.mxu0 0
      %4098 = vmatpush1.bf16.msra.mxu0 0
      %4099 = vmatprep.subr.bf16.mxu0 0
      %4100 = vmatpush1.bf16.msra.mxu0 0
      %4101 = vmatprep.subr.bf16.mxu0 0
      %4102 = vmatpush1.bf16.msra.mxu0 0
      %4103 = vmatprep.subr.bf16.mxu0 0
      %4104 = vmatpush1.bf16.msra.mxu0 0
      %4105 = vmatprep.mubr.bf16.mxu0 0
      %4106 = vmatmul.mubr.bf16.gmra.mrb[0].mxu0 %v4023
      %v4107 = vpop.f32.mrb[0].mxu0
      %v4108 = vadd.f32 0.0, %v4107
      %v4109 = vpop.f32.mrb[0].mxu0
      %v4110 = vpop.f32.mrb[0].mxu0
      %v4111 = vadd.f32 0.0, %v4110
      %v4112 = vpop.f32.mrb[0].mxu0
      %4113 = vmatprep.mubr.bf16.mxu0 0
      %4114 = vmatmul.mubr.bf16.gmra.mrb[0].mxu0 %v4026
      %v4115 = vpop.f32.mrb[0].mxu0
      %v4116 = vadd.f32 0.0, %v4115
      %v4117 = vpop.f32.mrb[0].mxu0
      %v4118 = vpop.f32.mrb[0].mxu0
      %v4119 = vadd.f32 0.0, %v4118
      %v4120 = vpop.f32.mrb[0].mxu0
      %4121 = vmatprep.mubr.bf16.mxu0 0
      %4122 = vmatmul.mubr.bf16.gmra.mrb[0].mxu0 %v4029
      %v4123 = vpop.f32.mrb[0].mxu0
      %v4124 = vadd.f32 0.0, %v4123
      %v4125 = vpop.f32.mrb[0].mxu0
      %v4126 = vpop.f32.mrb[0].mxu0
      %v4127 = vadd.f32 0.0, %v4126
      %v4128 = vpop.f32.mrb[0].mxu0
      %4129 = vmatprep.mubr.bf16.mxu0 0
      %4130 = vmatmul.mubr.bf16.gmra.mrb[0].mxu0 %v4032
      %v4131 = vpop.f32.mrb[0].mxu0
      %v4132 = vadd.f32 0.0, %v4131
      %v4133 = vpop.f32.mrb[0].mxu0
      %v4134 = vpop.f32.mrb[0].mxu0
      %v4135 = vadd.f32 0.0, %v4134
      %v4136 = vpop.f32.mrb[0].mxu0
      %4137 = vmatprep.mubr.bf16.mxu0 0
      %4138 = vmatmul.mubr.bf16.gmra.mrb[0].mxu0 %v4035
      %v4139 = vpop.f32.mrb[0].mxu0
      %v4140 = vadd.f32 0.0, %v4139
      %v4141 = vpop.f32.mrb[0].mxu0
      %v4142 = vpop.f32.mrb[0].mxu0
      %v4143 = vadd.f32 0.0, %v4142
      %v4144 = vpop.f32.mrb[0].mxu0
      %4145 = vmatprep.mubr.bf16.mxu0 0
      %4146 = vmatmul.mubr.bf16.gmra.mrb[0].mxu0 %v4038
      %v4147 = vpop.f32.mrb[0].mxu0
      %v4148 = vadd.f32 0.0, %v4147
      %v4149 = vpop.f32.mrb[0].mxu0
      %v4150 = vpop.f32.mrb[0].mxu0
      %v4151 = vadd.f32 0.0, %v4150
      %v4152 = vpop.f32.mrb[0].mxu0
      %4153 = vmatprep.mubr.bf16.mxu0 0
      %4154 = vmatmul.mubr.bf16.gmra.mrb[0].mxu0 %v4041
      %v4155 = vpop.f32.mrb[0].mxu0
      %v4156 = vadd.f32 0.0, %v4155
      %v4157 = vpop.f32.mrb[0].mxu0
      %v4158 = vpop.f32.mrb[0].mxu0
      %v4159 = vadd.f32 0.0, %v4158
      %v4160 = vpop.f32.mrb[0].mxu0
      %4161 = vmatprep.mubr.bf16.mxu0 0
      %4162 = vmatmul.mubr.bf16.gmra.mrb[0].mxu0 %v4044
      %v4163 = vpop.f32.mrb[0].mxu0
      %v4164 = vadd.f32 0.0, %v4163
      %v4165 = vpop.f32.mrb[0].mxu0
      %v4166 = vpop.f32.mrb[0].mxu0
      %v4167 = vadd.f32 0.0, %v4166
      %v4168 = vpop.f32.mrb[0].mxu0
      %4169 = vmatprep.mubr.bf16.mxu0 0
      %4170 = vmatmul.mubr.bf16.gmra.mrb[0].mxu0 %v4047
      %v4171 = vpop.f32.mrb[0].mxu0
      %v4172 = vadd.f32 0.0, %v4171
      %v4173 = vpop.f32.mrb[0].mxu0
      %v4174 = vpop.f32.mrb[0].mxu0
      %v4175 = vadd.f32 0.0, %v4174
      %v4176 = vpop.f32.mrb[0].mxu0
      %4177 = vmatprep.mubr.bf16.mxu0 0
      %4178 = vmatmul.mubr.bf16.gmra.mrb[0].mxu0 %v4050
      %v4179 = vpop.f32.mrb[0].mxu0
      %v4180 = vadd.f32 0.0, %v4179
      %v4181 = vpop.f32.mrb[0].mxu0
      %v4182 = vpop.f32.mrb[0].mxu0
      %v4183 = vadd.f32 0.0, %v4182
      %v4184 = vpop.f32.mrb[0].mxu0
      %4185 = vmatprep.mubr.bf16.mxu0 0
      %4186 = vmatmul.mubr.bf16.gmra.mrb[0].mxu0 %v4053
      %v4187 = vpop.f32.mrb[0].mxu0
      %v4188 = vadd.f32 0.0, %v4187
      %v4189 = vpop.f32.mrb[0].mxu0
      %v4190 = vpop.f32.mrb[0].mxu0
      %v4191 = vadd.f32 0.0, %v4190
      %v4192 = vpop.f32.mrb[0].mxu0
      %4193 = vmatprep.mubr.bf16.mxu0 0
      %4194 = vmatmul.mubr.bf16.gmra.mrb[0].mxu0 %v4056
      %v4195 = vpop.f32.mrb[0].mxu0
      %v4196 = vadd.f32 0.0, %v4195
      %v4197 = vpop.f32.mrb[0].mxu0
      %v4198 = vpop.f32.mrb[0].mxu0
      %v4199 = vadd.f32 0.0, %v4198
      %v4200 = vpop.f32.mrb[0].mxu0
      %4201 = vmatprep.mubr.bf16.mxu0 0
      %4202 = vmatmul.mubr.bf16.gmra.mrb[0].mxu0 %v4059
      %v4203 = vpop.f32.mrb[0].mxu0
      %v4204 = vadd.f32 0.0, %v4203
      %v4205 = vpop.f32.mrb[0].mxu0
      %v4206 = vpop.f32.mrb[0].mxu0
      %v4207 = vadd.f32 0.0, %v4206
      %v4208 = vpop.f32.mrb[0].mxu0
      %4209 = vmatprep.mubr.bf16.mxu0 0
      %4210 = vmatmul.mubr.bf16.gmra.mrb[0].mxu0 %v4062
      %v4211 = vpop.f32.mrb[0].mxu0
      %v4212 = vadd.f32 0.0, %v4211
      %v4213 = vpop.f32.mrb[0].mxu0
      %v4214 = vpop.f32.mrb[0].mxu0
      %v4215 = vadd.f32 0.0, %v4214
      %v4216 = vpop.f32.mrb[0].mxu0
      %4217 = vmatprep.mubr.bf16.mxu0 0
      %4218 = vmatmul.mubr.bf16.gmra.mrb[0].mxu0 %v4065
      %v4219 = vpop.f32.mrb[0].mxu0
      %v4220 = vadd.f32 0.0, %v4219
      %v4221 = vpop.f32.mrb[0].mxu0
      %v4222 = vpop.f32.mrb[0].mxu0
      %v4223 = vadd.f32 0.0, %v4222
      %v4224 = vpop.f32.mrb[0].mxu0
      %4225 = vmatprep.mubr.bf16.mxu0 0
      %4226 = vmatmul.mubr.bf16.gmra.mrb[0].mxu0 %v4068
      %v4227 = vpop.f32.mrb[0].mxu0
      %v4228 = vadd.f32 0.0, %v4227
      %v4229 = vpop.f32.mrb[0].mxu0
      %v4230 = vpop.f32.mrb[0].mxu0
      %v4231 = vadd.f32 0.0, %v4230
      %v4232 = vpop.f32.mrb[0].mxu0
      %4233 = vdwg.mxu0
      %v4234 = vadd.f32 %v3508, %v4108
      %v4235 = vadd.f32 %v3509, %v4111
      %v4236 = vadd.f32 %v3510, %v4116
      %v4237 = vadd.f32 %v3511, %v4119
      %v4238 = vadd.f32 %v3512, %v4124
      %v4239 = vadd.f32 %v3513, %v4127
      %v4240 = vadd.f32 %v3514, %v4132
      %v4241 = vadd.f32 %v3515, %v4135
      %v4242 = vadd.f32 %v3516, %v4140
      %v4243 = vadd.f32 %v3517, %v4143
      %v4244 = vadd.f32 %v3518, %v4148
      %v4245 = vadd.f32 %v3519, %v4151
      %v4246 = vadd.f32 %v3520, %v4156
      %v4247 = vadd.f32 %v3521, %v4159
      %v4248 = vadd.f32 %v3522, %v4164
      %v4249 = vadd.f32 %v3523, %v4167
      %v4250 = vadd.f32 %v3524, %v4172
      %v4251 = vadd.f32 %v3525, %v4175
      %v4252 = vadd.f32 %v3526, %v4180
      %v4253 = vadd.f32 %v3527, %v4183
      %v4254 = vadd.f32 %v3528, %v4188
      %v4255 = vadd.f32 %v3529, %v4191
      %v4256 = vadd.f32 %v3530, %v4196
      %v4257 = vadd.f32 %v3531, %v4199
      %v4258 = vadd.f32 %v3532, %v4204
      %v4259 = vadd.f32 %v3533, %v4207
      %v4260 = vadd.f32 %v3534, %v4212
      %v4261 = vadd.f32 %v3535, %v4215
      %v4262 = vadd.f32 %v3536, %v4220
      %v4263 = vadd.f32 %v3537, %v4223
      %v4264 = vadd.f32 %v3538, %v4228
      %v4265 = vadd.f32 %v3539, %v4231
      %v4266 = vld [vmem:[%s3181] sm:$0xe]
      %v4267 = vld [vmem:[%s3181 + $0xc] sm:$0xe]
      %v4268 = vld [vmem:[%s3181 + $0x18] sm:$0xe]
      %v4269 = vld [vmem:[%s3181 + $0x24] sm:$0xe]
      %v4270 = vld [vmem:[%s3181 + $0x30] sm:$0xe]
      %v4271 = vld [vmem:[%s3181 + $0x3c] sm:$0xe]
      %v4272 = vld [vmem:[%s3181 + $0x48] sm:$0xe]
      %v4273 = vld [vmem:[%s3181 + $0x54] sm:$0xe]
      %v4274 = vld [vmem:[%s3181 + $0x60] sm:$0xe]
      %v4275 = vld [vmem:[%s3181 + $0x6c] sm:$0xe]
      %v4276 = vld [vmem:[%s3181 + $0x78] sm:$0xe]
      %v4277 = vld [vmem:[%s3181 + $0x84] sm:$0xe]
      %v4278 = vld [vmem:[%s3181 + $0x90] sm:$0xe]
      %v4279 = vld [vmem:[%s3181 + $0x9c] sm:$0xe]
      %v4280 = vld [vmem:[%s3181 + $0xa8] sm:$0xe]
      %v4281 = vld [vmem:[%s3181 + $0xb4] sm:$0xe]
      %v4330 = vrot.slane %v4266, 5
      %v4331 = vrot.slane %v4330, 4
      %v4332 = vrot.slane %v3541, 5
      %v4333 = vsel %vm1219, %v4331, %v4332
      %v4334 = vrot.slane %v4332, 4
      %v4335 = vrot.slane %v3542, 5
      %v4336 = vsel %vm1219, %v4334, %v4335
      %v4337 = vrot.slane %v4267, 5
      %v4338 = vrot.slane %v4337, 4
      %v4339 = vrot.slane %v3544, 5
      %v4340 = vsel %vm1219, %v4338, %v4339
      %v4341 = vrot.slane %v4339, 4
      %v4342 = vrot.slane %v3545, 5
      %v4343 = vsel %vm1219, %v4341, %v4342
      %v4344 = vrot.slane %v4268, 5
      %v4345 = vrot.slane %v4344, 4
      %v4346 = vrot.slane %v3547, 5
      %v4347 = vsel %vm1219, %v4345, %v4346
      %v4348 = vrot.slane %v4346, 4
      %v4349 = vrot.slane %v3548, 5
      %v4350 = vsel %vm1219, %v4348, %v4349
      %v4351 = vrot.slane %v4269, 5
      %v4352 = vrot.slane %v4351, 4
      %v4353 = vrot.slane %v3550, 5
      %v4354 = vsel %vm1219, %v4352, %v4353
      %v4355 = vrot.slane %v4353, 4
      %v4356 = vrot.slane %v3551, 5
      %v4357 = vsel %vm1219, %v4355, %v4356
      %v4358 = vrot.slane %v4270, 5
      %v4359 = vrot.slane %v4358, 4
      %v4360 = vrot.slane %v3553, 5
      %v4361 = vsel %vm1219, %v4359, %v4360
      %v4362 = vrot.slane %v4360, 4
      %v4363 = vrot.slane %v3554, 5
      %v4364 = vsel %vm1219, %v4362, %v4363
      %v4365 = vrot.slane %v4271, 5
      %v4366 = vrot.slane %v4365, 4
      %v4367 = vrot.slane %v3556, 5
      %v4368 = vsel %vm1219, %v4366, %v4367
      %v4369 = vrot.slane %v4367, 4
      %v4370 = vrot.slane %v3557, 5
      %v4371 = vsel %vm1219, %v4369, %v4370
      %v4372 = vrot.slane %v4272, 5
      %v4373 = vrot.slane %v4372, 4
      %v4374 = vrot.slane %v3559, 5
      %v4375 = vsel %vm1219, %v4373, %v4374
      %v4376 = vrot.slane %v4374, 4
      %v4377 = vrot.slane %v3560, 5
      %v4378 = vsel %vm1219, %v4376, %v4377
      %v4379 = vrot.slane %v4273, 5
      %v4380 = vrot.slane %v4379, 4
      %v4381 = vrot.slane %v3562, 5
      %v4382 = vsel %vm1219, %v4380, %v4381
      %v4383 = vrot.slane %v4381, 4
      %v4384 = vrot.slane %v3563, 5
      %v4385 = vsel %vm1219, %v4383, %v4384
      %v4386 = vrot.slane %v4274, 5
      %v4387 = vrot.slane %v4386, 4
      %v4388 = vrot.slane %v3565, 5
      %v4389 = vsel %vm1219, %v4387, %v4388
      %v4390 = vrot.slane %v4388, 4
      %v4391 = vrot.slane %v3566, 5
      %v4392 = vsel %vm1219, %v4390, %v4391
      %v4393 = vrot.slane %v4275, 5
      %v4394 = vrot.slane %v4393, 4
      %v4395 = vrot.slane %v3568, 5
      %v4396 = vsel %vm1219, %v4394, %v4395
      %v4397 = vrot.slane %v4395, 4
      %v4398 = vrot.slane %v3569, 5
      %v4399 = vsel %vm1219, %v4397, %v4398
      %v4400 = vrot.slane %v4276, 5
      %v4401 = vrot.slane %v4400, 4
      %v4402 = vrot.slane %v3571, 5
      %v4403 = vsel %vm1219, %v4401, %v4402
      %v4404 = vrot.slane %v4402, 4
      %v4405 = vrot.slane %v3572, 5
      %v4406 = vsel %vm1219, %v4404, %v4405
      %v4407 = vrot.slane %v4277, 5
      %v4408 = vrot.slane %v4407, 4
      %v4409 = vrot.slane %v3574, 5
      %v4410 = vsel %vm1219, %v4408, %v4409
      %v4411 = vrot.slane %v4409, 4
      %v4412 = vrot.slane %v3575, 5
      %v4413 = vsel %vm1219, %v4411, %v4412
      %v4414 = vrot.slane %v4278, 5
      %v4415 = vrot.slane %v4414, 4
      %v4416 = vrot.slane %v3577, 5
      %v4417 = vsel %vm1219, %v4415, %v4416
      %v4418 = vrot.slane %v4416, 4
      %v4419 = vrot.slane %v3578, 5
      %v4420 = vsel %vm1219, %v4418, %v4419
      %v4421 = vrot.slane %v4279, 5
      %v4422 = vrot.slane %v4421, 4
      %v4423 = vrot.slane %v3580, 5
      %v4424 = vsel %vm1219, %v4422, %v4423
      %v4425 = vrot.slane %v4423, 4
      %v4426 = vrot.slane %v3581, 5
      %v4427 = vsel %vm1219, %v4425, %v4426
      %v4428 = vrot.slane %v4280, 5
      %v4429 = vrot.slane %v4428, 4
      %v4430 = vrot.slane %v3583, 5
      %v4431 = vsel %vm1219, %v4429, %v4430
      %v4432 = vrot.slane %v4430, 4
      %v4433 = vrot.slane %v3584, 5
      %v4434 = vsel %vm1219, %v4432, %v4433
      %v4435 = vrot.slane %v4281, 5
      %v4436 = vrot.slane %v4435, 4
      %v4437 = vrot.slane %v3586, 5
      %v4438 = vsel %vm1219, %v4436, %v4437
      %v4439 = vrot.slane %v4437, 4
      %v4440 = vrot.slane %v3587, 5
      %v4441 = vsel %vm1219, %v4439, %v4440
      %s4442 = scalar_lea.vmem %s1, 16
      %v4443 = vld [vmem:[%s4442] sm:$0x3]
      %v4444 = vunpack.c.l.b16 %v4333
      %v4445 = vunpack.c.l.b16 %v4336
      %v4446 = vunpack.c.l.b16 %v4340
      %v4447 = vunpack.c.l.b16 %v4343
      %v4448 = vunpack.c.l.b16 %v4347
      %v4449 = vunpack.c.l.b16 %v4350
      %v4450 = vunpack.c.l.b16 %v4354
      %v4451 = vunpack.c.l.b16 %v4357
      %v4452 = vunpack.c.l.b16 %v4361
      %v4453 = vunpack.c.l.b16 %v4364
      %v4454 = vunpack.c.l.b16 %v4368
      %v4455 = vunpack.c.l.b16 %v4371
      %v4456 = vunpack.c.l.b16 %v4375
      %v4457 = vunpack.c.l.b16 %v4378
      %v4458 = vunpack.c.l.b16 %v4382
      %v4459 = vunpack.c.l.b16 %v4385
      %v4460 = vunpack.c.l.b16 %v4389
      %v4461 = vunpack.c.l.b16 %v4392
      %v4462 = vunpack.c.l.b16 %v4396
      %v4463 = vunpack.c.l.b16 %v4399
      %v4464 = vunpack.c.l.b16 %v4403
      %v4465 = vunpack.c.l.b16 %v4406
      %v4466 = vunpack.c.l.b16 %v4410
      %v4467 = vunpack.c.l.b16 %v4413
      %v4468 = vunpack.c.l.b16 %v4417
      %v4469 = vunpack.c.l.b16 %v4420
      %v4470 = vunpack.c.l.b16 %v4424
      %v4471 = vunpack.c.l.b16 %v4427
      %v4472 = vunpack.c.l.b16 %v4431
      %v4473 = vunpack.c.l.b16 %v4434
      %v4474 = vunpack.c.l.b16 %v4438
      %v4475 = vunpack.c.l.b16 %v4441
      %v4476 = vpack.c.b16 %v4445, %v4444
      %v4477 = vpack.c.b16 %v4447, %v4446
      %v4478 = vpack.c.b16 %v4449, %v4448
      %v4479 = vpack.c.b16 %v4451, %v4450
      %v4480 = vpack.c.b16 %v4453, %v4452
      %v4481 = vpack.c.b16 %v4455, %v4454
      %v4482 = vpack.c.b16 %v4457, %v4456
      %v4483 = vpack.c.b16 %v4459, %v4458
      %v4484 = vpack.c.b16 %v4461, %v4460
      %v4485 = vpack.c.b16 %v4463, %v4462
      %v4486 = vpack.c.b16 %v4465, %v4464
      %v4487 = vpack.c.b16 %v4467, %v4466
      %v4488 = vpack.c.b16 %v4469, %v4468
      %v4489 = vpack.c.b16 %v4471, %v4470
      %v4490 = vpack.c.b16 %v4473, %v4472
      %v4491 = vpack.c.b16 %v4475, %v4474
      %v4493 = vsel %vm663, %v4476, 0
      %v4496 = vsel %vm663, %v4477, 0
      %v4499 = vsel %vm663, %v4478, 0
      %v4502 = vsel %vm663, %v4479, 0
      %v4505 = vsel %vm663, %v4480, 0
      %v4508 = vsel %vm663, %v4481, 0
      %v4511 = vsel %vm663, %v4482, 0
      %v4514 = vsel %vm663, %v4483, 0
      %v4517 = vsel %vm663, %v4484, 0
      %v4520 = vsel %vm663, %v4485, 0
      %v4523 = vsel %vm663, %v4486, 0
      %v4526 = vsel %vm663, %v4487, 0
      %v4529 = vsel %vm663, %v4488, 0
      %v4532 = vsel %vm663, %v4489, 0
      %v4535 = vsel %vm663, %v4490, 0
      %v4538 = vsel %vm663, %v4491, 0
      %v4541 = vsel %vm712, %v4443, 0
      %4543 = vmatprep.subr.bf16.mxu0 0
      %4544 = vmatpush1.bf16.msra.mxu0 %v4541
      %4545 = vmatprep.subr.bf16.mxu0 0
      %4546 = vmatpush1.bf16.msra.mxu0 0
      %4547 = vmatprep.subr.bf16.mxu0 0
      %4548 = vmatpush1.bf16.msra.mxu0 0
      %4549 = vmatprep.subr.bf16.mxu0 0
      %4550 = vmatpush1.bf16.msra.mxu0 0
      %4551 = vmatprep.subr.bf16.mxu0 0
      %4552 = vmatpush1.bf16.msra.mxu0 0
      %4553 = vmatprep.subr.bf16.mxu0 0
      %4554 = vmatpush1.bf16.msra.mxu0 0
      %4555 = vmatprep.subr.bf16.mxu0 0
      %4556 = vmatpush1.bf16.msra.mxu0 0
      %4557 = vmatprep.subr.bf16.mxu0 0
      %4558 = vmatpush1.bf16.msra.mxu0 0
      %4559 = vmatprep.subr.bf16.mxu0 0
      %4560 = vmatpush1.bf16.msra.mxu0 0
      %4561 = vmatprep.subr.bf16.mxu0 0
      %4562 = vmatpush1.bf16.msra.mxu0 0
      %4563 = vmatprep.subr.bf16.mxu0 0
      %4564 = vmatpush1.bf16.msra.mxu0 0
      %4565 = vmatprep.subr.bf16.mxu0 0
      %4566 = vmatpush1.bf16.msra.mxu0 0
      %4567 = vmatprep.subr.bf16.mxu0 0
      %4568 = vmatpush1.bf16.msra.mxu0 0
      %4569 = vmatprep.subr.bf16.mxu0 0
      %4570 = vmatpush1.bf16.msra.mxu0 0
      %4571 = vmatprep.subr.bf16.mxu0 0
      %4572 = vmatpush1.bf16.msra.mxu0 0
      %4573 = vmatprep.subr.bf16.mxu0 0
      %4574 = vmatpush1.bf16.msra.mxu0 0
      %4575 = vmatprep.mubr.bf16.mxu0 0
      %4576 = vmatmul.mubr.bf16.gmra.mrb[0].mxu0 %v4493
      %v4577 = vpop.f32.mrb[0].mxu0
      %v4578 = vadd.f32 0.0, %v4577
      %v4579 = vpop.f32.mrb[0].mxu0
      %v4580 = vpop.f32.mrb[0].mxu0
      %v4581 = vadd.f32 0.0, %v4580
      %v4582 = vpop.f32.mrb[0].mxu0
      %4583 = vmatprep.mubr.bf16.mxu0 0
      %4584 = vmatmul.mubr.bf16.gmra.mrb[0].mxu0 %v4496
      %v4585 = vpop.f32.mrb[0].mxu0
      %v4586 = vadd.f32 0.0, %v4585
      %v4587 = vpop.f32.mrb[0].mxu0
      %v4588 = vpop.f32.mrb[0].mxu0
      %v4589 = vadd.f32 0.0, %v4588
      %v4590 = vpop.f32.mrb[0].mxu0
      %4591 = vmatprep.mubr.bf16.mxu0 0
      %4592 = vmatmul.mubr.bf16.gmra.mrb[0].mxu0 %v4499
      %v4593 = vpop.f32.mrb[0].mxu0
      %v4594 = vadd.f32 0.0, %v4593
      %v4595 = vpop.f32.mrb[0].mxu0
      %v4596 = vpop.f32.mrb[0].mxu0
      %v4597 = vadd.f32 0.0, %v4596
      %v4598 = vpop.f32.mrb[0].mxu0
      %4599 = vmatprep.mubr.bf16.mxu0 0
      %4600 = vmatmul.mubr.bf16.gmra.mrb[0].mxu0 %v4502
      %v4601 = vpop.f32.mrb[0].mxu0
      %v4602 = vadd.f32 0.0, %v4601
      %v4603 = vpop.f32.mrb[0].mxu0
      %v4604 = vpop.f32.mrb[0].mxu0
      %v4605 = vadd.f32 0.0, %v4604
      %v4606 = vpop.f32.mrb[0].mxu0
      %4607 = vmatprep.mubr.bf16.mxu0 0
      %4608 = vmatmul.mubr.bf16.gmra.mrb[0].mxu0 %v4505
      %v4609 = vpop.f32.mrb[0].mxu0
      %v4610 = vadd.f32 0.0, %v4609
      %v4611 = vpop.f32.mrb[0].mxu0
      %v4612 = vpop.f32.mrb[0].mxu0
      %v4613 = vadd.f32 0.0, %v4612
      %v4614 = vpop.f32.mrb[0].mxu0
      %4615 = vmatprep.mubr.bf16.mxu0 0
      %4616 = vmatmul.mubr.bf16.gmra.mrb[0].mxu0 %v4508
      %v4617 = vpop.f32.mrb[0].mxu0
      %v4618 = vadd.f32 0.0, %v4617
      %v4619 = vpop.f32.mrb[0].mxu0
      %v4620 = vpop.f32.mrb[0].mxu0
      %v4621 = vadd.f32 0.0, %v4620
      %v4622 = vpop.f32.mrb[0].mxu0
      %4623 = vmatprep.mubr.bf16.mxu0 0
      %4624 = vmatmul.mubr.bf16.gmra.mrb[0].mxu0 %v4511
      %v4625 = vpop.f32.mrb[0].mxu0
      %v4626 = vadd.f32 0.0, %v4625
      %v4627 = vpop.f32.mrb[0].mxu0
      %v4628 = vpop.f32.mrb[0].mxu0
      %v4629 = vadd.f32 0.0, %v4628
      %v4630 = vpop.f32.mrb[0].mxu0
      %4631 = vmatprep.mubr.bf16.mxu0 0
      %4632 = vmatmul.mubr.bf16.gmra.mrb[0].mxu0 %v4514
      %v4633 = vpop.f32.mrb[0].mxu0
      %v4634 = vadd.f32 0.0, %v4633
      %v4635 = vpop.f32.mrb[0].mxu0
      %v4636 = vpop.f32.mrb[0].mxu0
      %v4637 = vadd.f32 0.0, %v4636
      %v4638 = vpop.f32.mrb[0].mxu0
      %4639 = vmatprep.mubr.bf16.mxu0 0
      %4640 = vmatmul.mubr.bf16.gmra.mrb[0].mxu0 %v4517
      %v4641 = vpop.f32.mrb[0].mxu0
      %v4642 = vadd.f32 0.0, %v4641
      %v4643 = vpop.f32.mrb[0].mxu0
      %v4644 = vpop.f32.mrb[0].mxu0
      %v4645 = vadd.f32 0.0, %v4644
      %v4646 = vpop.f32.mrb[0].mxu0
      %4647 = vmatprep.mubr.bf16.mxu0 0
      %4648 = vmatmul.mubr.bf16.gmra.mrb[0].mxu0 %v4520
      %v4649 = vpop.f32.mrb[0].mxu0
      %v4650 = vadd.f32 0.0, %v4649
      %v4651 = vpop.f32.mrb[0].mxu0
      %v4652 = vpop.f32.mrb[0].mxu0
      %v4653 = vadd.f32 0.0, %v4652
      %v4654 = vpop.f32.mrb[0].mxu0
      %4655 = vmatprep.mubr.bf16.mxu0 0
      %4656 = vmatmul.mubr.bf16.gmra.mrb[0].mxu0 %v4523
      %v4657 = vpop.f32.mrb[0].mxu0
      %v4658 = vadd.f32 0.0, %v4657
      %v4659 = vpop.f32.mrb[0].mxu0
      %v4660 = vpop.f32.mrb[0].mxu0
      %v4661 = vadd.f32 0.0, %v4660
      %v4662 = vpop.f32.mrb[0].mxu0
      %4663 = vmatprep.mubr.bf16.mxu0 0
      %4664 = vmatmul.mubr.bf16.gmra.mrb[0].mxu0 %v4526
      %v4665 = vpop.f32.mrb[0].mxu0
      %v4666 = vadd.f32 0.0, %v4665
      %v4667 = vpop.f32.mrb[0].mxu0
      %v4668 = vpop.f32.mrb[0].mxu0
      %v4669 = vadd.f32 0.0, %v4668
      %v4670 = vpop.f32.mrb[0].mxu0
      %4671 = vmatprep.mubr.bf16.mxu0 0
      %4672 = vmatmul.mubr.bf16.gmra.mrb[0].mxu0 %v4529
      %v4673 = vpop.f32.mrb[0].mxu0
      %v4674 = vadd.f32 0.0, %v4673
      %v4675 = vpop.f32.mrb[0].mxu0
      %v4676 = vpop.f32.mrb[0].mxu0
      %v4677 = vadd.f32 0.0, %v4676
      %v4678 = vpop.f32.mrb[0].mxu0
      %4679 = vmatprep.mubr.bf16.mxu0 0
      %4680 = vmatmul.mubr.bf16.gmra.mrb[0].mxu0 %v4532
      %v4681 = vpop.f32.mrb[0].mxu0
      %v4682 = vadd.f32 0.0, %v4681
      %v4683 = vpop.f32.mrb[0].mxu0
      %v4684 = vpop.f32.mrb[0].mxu0
      %v4685 = vadd.f32 0.0, %v4684
      %v4686 = vpop.f32.mrb[0].mxu0
      %4687 = vmatprep.mubr.bf16.mxu0 0
      %4688 = vmatmul.mubr.bf16.gmra.mrb[0].mxu0 %v4535
      %v4689 = vpop.f32.mrb[0].mxu0
      %v4690 = vadd.f32 0.0, %v4689
      %v4691 = vpop.f32.mrb[0].mxu0
      %v4692 = vpop.f32.mrb[0].mxu0
      %v4693 = vadd.f32 0.0, %v4692
      %v4694 = vpop.f32.mrb[0].mxu0
      %4695 = vmatprep.mubr.bf16.mxu0 0
      %4696 = vmatmul.mubr.bf16.gmra.mrb[0].mxu0 %v4538
      %v4697 = vpop.f32.mrb[0].mxu0
      %v4698 = vadd.f32 0.0, %v4697
      %v4699 = vpop.f32.mrb[0].mxu0
      %v4700 = vpop.f32.mrb[0].mxu0
      %v4701 = vadd.f32 0.0, %v4700
      %v4702 = vpop.f32.mrb[0].mxu0
      %4703 = vdwg.mxu0
      %v4704 = vadd.f32 %v4234, %v4578
      %v4705 = vadd.f32 %v4235, %v4581
      %v4706 = vadd.f32 %v4236, %v4586
      %v4707 = vadd.f32 %v4237, %v4589
      %v4708 = vadd.f32 %v4238, %v4594
      %v4709 = vadd.f32 %v4239, %v4597
      %v4710 = vadd.f32 %v4240, %v4602
      %v4711 = vadd.f32 %v4241, %v4605
      %v4712 = vadd.f32 %v4242, %v4610
      %v4713 = vadd.f32 %v4243, %v4613
      %v4714 = vadd.f32 %v4244, %v4618
      %v4715 = vadd.f32 %v4245, %v4621
      %v4716 = vadd.f32 %v4246, %v4626
      %v4717 = vadd.f32 %v4247, %v4629
      %v4718 = vadd.f32 %v4248, %v4634
      %v4719 = vadd.f32 %v4249, %v4637
      %v4720 = vadd.f32 %v4250, %v4642
      %v4721 = vadd.f32 %v4251, %v4645
      %v4722 = vadd.f32 %v4252, %v4650
      %v4723 = vadd.f32 %v4253, %v4653
      %v4724 = vadd.f32 %v4254, %v4658
      %v4725 = vadd.f32 %v4255, %v4661
      %v4726 = vadd.f32 %v4256, %v4666
      %v4727 = vadd.f32 %v4257, %v4669
      %v4728 = vadd.f32 %v4258, %v4674
      %v4729 = vadd.f32 %v4259, %v4677
      %v4730 = vadd.f32 %v4260, %v4682
      %v4731 = vadd.f32 %v4261, %v4685
      %v4732 = vadd.f32 %v4262, %v4690
      %v4733 = vadd.f32 %v4263, %v4693
      %v4734 = vadd.f32 %v4264, %v4698
      %v4735 = vadd.f32 %v4265, %v4701
      %vm4736 = vcmask 64512
      %v4737 = vsel %vm4736, %v4704, 0.0
      %v4738 = vsel %vm4736, %v4705, 0.0
      %v4739 = vadd.f32 %v4737, %v4738
      %v4740 = vsel %vm4736, %v4706, 0.0
      %v4741 = vadd.f32 %v4739, %v4740
      %v4742 = vsel %vm4736, %v4707, 0.0
      %v4743 = vadd.f32 %v4741, %v4742
      %v4744 = vsel %vm4736, %v4708, 0.0
      %v4745 = vadd.f32 %v4743, %v4744
      %v4746 = vsel %vm4736, %v4709, 0.0
      %v4747 = vadd.f32 %v4745, %v4746
      %v4748 = vsel %vm4736, %v4710, 0.0
      %v4749 = vadd.f32 %v4747, %v4748
      %v4750 = vsel %vm4736, %v4711, 0.0
      %v4751 = vadd.f32 %v4749, %v4750
      %v4752 = vsel %vm4736, %v4712, 0.0
      %v4753 = vadd.f32 %v4751, %v4752
      %v4754 = vsel %vm4736, %v4713, 0.0
      %v4755 = vadd.f32 %v4753, %v4754
      %v4756 = vsel %vm4736, %v4714, 0.0
      %v4757 = vadd.f32 %v4755, %v4756
      %v4758 = vsel %vm4736, %v4715, 0.0
      %v4759 = vadd.f32 %v4757, %v4758
      %v4760 = vsel %vm4736, %v4716, 0.0
      %v4761 = vadd.f32 %v4759, %v4760
      %v4762 = vsel %vm4736, %v4717, 0.0
      %v4763 = vadd.f32 %v4761, %v4762
      %v4764 = vsel %vm4736, %v4718, 0.0
      %v4765 = vadd.f32 %v4763, %v4764
      %v4766 = vsel %vm4736, %v4719, 0.0
      %v4767 = vadd.f32 %v4765, %v4766
      %v4768 = vsel %vm4736, %v4720, 0.0
      %v4769 = vadd.f32 %v4767, %v4768
      %v4770 = vsel %vm4736, %v4721, 0.0
      %v4771 = vadd.f32 %v4769, %v4770
      %v4772 = vsel %vm4736, %v4722, 0.0
      %v4773 = vadd.f32 %v4771, %v4772
      %v4774 = vsel %vm4736, %v4723, 0.0
      %v4775 = vadd.f32 %v4773, %v4774
      %v4776 = vsel %vm4736, %v4724, 0.0
      %v4777 = vadd.f32 %v4775, %v4776
      %v4778 = vsel %vm4736, %v4725, 0.0
      %v4779 = vadd.f32 %v4777, %v4778
      %v4780 = vsel %vm4736, %v4726, 0.0
      %v4781 = vadd.f32 %v4779, %v4780
      %v4782 = vsel %vm4736, %v4727, 0.0
      %v4783 = vadd.f32 %v4781, %v4782
      %v4784 = vsel %vm4736, %v4728, 0.0
      %v4785 = vadd.f32 %v4783, %v4784
      %v4786 = vsel %vm4736, %v4729, 0.0
      %v4787 = vadd.f32 %v4785, %v4786
      %v4788 = vsel %vm4736, %v4730, 0.0
      %v4789 = vadd.f32 %v4787, %v4788
      %v4790 = vsel %vm4736, %v4731, 0.0
      %v4791 = vadd.f32 %v4789, %v4790
      %v4792 = vsel %vm4736, %v4732, 0.0
      %v4793 = vadd.f32 %v4791, %v4792
      %v4794 = vsel %vm4736, %v4733, 0.0
      %v4795 = vadd.f32 %v4793, %v4794
      %v4796 = vsel %vm4736, %v4734, 0.0
      %v4797 = vadd.f32 %v4795, %v4796
      %v4798 = vsel %vm4736, %v4735, 0.0
      %v4799 = vadd.f32 %v4797, %v4798
      %v4800 = vrot.slane %v4799, 4
      %v4801 = vadd.f32 %v4799, %v4800
      %v4802 = vrot.slane %v4801, 2
      %v4803 = vadd.f32 %v4801, %v4802
      %v4804 = vrot.slane %v4803, 1
      %v4805 = vadd.f32 %v4803, %v4804
      %v4806 = vmul.f32 %v4805, 0.00390625
      %v4807 = vsub.f32 %v4704, %v4806
      %v4808 = vsub.f32 %v4705, %v4806
      %v4809 = vsub.f32 %v4706, %v4806
      %v4810 = vsub.f32 %v4707, %v4806
      %v4811 = vsub.f32 %v4708, %v4806
      %v4812 = vsub.f32 %v4709, %v4806
      %v4813 = vsub.f32 %v4710, %v4806
      %v4814 = vsub.f32 %v4711, %v4806
      %v4815 = vsub.f32 %v4712, %v4806
      %v4816 = vsub.f32 %v4713, %v4806
      %v4817 = vsub.f32 %v4714, %v4806
      %v4818 = vsub.f32 %v4715, %v4806
      %v4819 = vsub.f32 %v4716, %v4806
      %v4820 = vsub.f32 %v4717, %v4806
      %v4821 = vsub.f32 %v4718, %v4806
      %v4822 = vsub.f32 %v4719, %v4806
      %v4823 = vsub.f32 %v4720, %v4806
      %v4824 = vsub.f32 %v4721, %v4806
      %v4825 = vsub.f32 %v4722, %v4806
      %v4826 = vsub.f32 %v4723, %v4806
      %v4827 = vsub.f32 %v4724, %v4806
      %v4828 = vsub.f32 %v4725, %v4806
      %v4829 = vsub.f32 %v4726, %v4806
      %v4830 = vsub.f32 %v4727, %v4806
      %v4831 = vsub.f32 %v4728, %v4806
      %v4832 = vsub.f32 %v4729, %v4806
      %v4833 = vsub.f32 %v4730, %v4806
      %v4834 = vsub.f32 %v4731, %v4806
      %v4835 = vsub.f32 %v4732, %v4806
      %v4836 = vsub.f32 %v4733, %v4806
      %v4837 = vsub.f32 %v4734, %v4806
      %v4838 = vsub.f32 %v4735, %v4806
      %vm4839 = vcmask 57344
      %4840 = vst.msk [vmem:[%s172] sm:$0x1] %vm4839, %v4805
      %v4841 = vmul.f32 %v4807, %v4807
      %v4842 = vmul.f32 %v4808, %v4808
      %v4843 = vmul.f32 %v4809, %v4809
      %v4844 = vmul.f32 %v4810, %v4810
      %v4845 = vmul.f32 %v4811, %v4811
      %v4846 = vmul.f32 %v4812, %v4812
      %v4847 = vmul.f32 %v4813, %v4813
      %v4848 = vmul.f32 %v4814, %v4814
      %v4849 = vmul.f32 %v4815, %v4815
      %v4850 = vmul.f32 %v4816, %v4816
      %v4851 = vmul.f32 %v4817, %v4817
      %v4852 = vmul.f32 %v4818, %v4818
      %v4853 = vmul.f32 %v4819, %v4819
      %v4854 = vmul.f32 %v4820, %v4820
      %v4855 = vmul.f32 %v4821, %v4821
      %v4856 = vmul.f32 %v4822, %v4822
      %v4857 = vmul.f32 %v4823, %v4823
      %v4858 = vmul.f32 %v4824, %v4824
      %v4859 = vmul.f32 %v4825, %v4825
      %v4860 = vmul.f32 %v4826, %v4826
      %v4861 = vmul.f32 %v4827, %v4827
      %v4862 = vmul.f32 %v4828, %v4828
      %v4863 = vmul.f32 %v4829, %v4829
      %v4864 = vmul.f32 %v4830, %v4830
      %v4865 = vmul.f32 %v4831, %v4831
      %v4866 = vmul.f32 %v4832, %v4832
      %v4867 = vmul.f32 %v4833, %v4833
      %v4868 = vmul.f32 %v4834, %v4834
      %v4869 = vmul.f32 %v4835, %v4835
      %v4870 = vmul.f32 %v4836, %v4836
      %v4871 = vmul.f32 %v4837, %v4837
      %v4872 = vmul.f32 %v4838, %v4838
      %v4873 = vsel %vm4736, %v4841, 0.0
      %v4874 = vsel %vm4736, %v4842, 0.0
      %v4875 = vadd.f32 %v4873, %v4874
      %v4876 = vsel %vm4736, %v4843, 0.0
      %v4877 = vadd.f32 %v4875, %v4876
      %v4878 = vsel %vm4736, %v4844, 0.0
      %v4879 = vadd.f32 %v4877, %v4878
      %v4880 = vsel %vm4736, %v4845, 0.0
      %v4881 = vadd.f32 %v4879, %v4880
      %v4882 = vsel %vm4736, %v4846, 0.0
      %v4883 = vadd.f32 %v4881, %v4882
      %v4884 = vsel %vm4736, %v4847, 0.0
      %v4885 = vadd.f32 %v4883, %v4884
      %v4886 = vsel %vm4736, %v4848, 0.0
      %v4887 = vadd.f32 %v4885, %v4886
      %v4888 = vsel %vm4736, %v4849, 0.0
      %v4889 = vadd.f32 %v4887, %v4888
      %v4890 = vsel %vm4736, %v4850, 0.0
      %v4891 = vadd.f32 %v4889, %v4890
      %v4892 = vsel %vm4736, %v4851, 0.0
      %v4893 = vadd.f32 %v4891, %v4892
      %v4894 = vsel %vm4736, %v4852, 0.0
      %v4895 = vadd.f32 %v4893, %v4894
      %v4896 = vsel %vm4736, %v4853, 0.0
      %v4897 = vadd.f32 %v4895, %v4896
      %v4898 = vsel %vm4736, %v4854, 0.0
      %v4899 = vadd.f32 %v4897, %v4898
      %v4900 = vsel %vm4736, %v4855, 0.0
      %v4901 = vadd.f32 %v4899, %v4900
      %v4902 = vsel %vm4736, %v4856, 0.0
      %v4903 = vadd.f32 %v4901, %v4902
      %v4904 = vsel %vm4736, %v4857, 0.0
      %v4905 = vadd.f32 %v4903, %v4904
      %v4906 = vsel %vm4736, %v4858, 0.0
      %v4907 = vadd.f32 %v4905, %v4906
      %v4908 = vsel %vm4736, %v4859, 0.0
      %v4909 = vadd.f32 %v4907, %v4908
      %v4910 = vsel %vm4736, %v4860, 0.0
      %v4911 = vadd.f32 %v4909, %v4910
      %v4912 = vsel %vm4736, %v4861, 0.0
      %v4913 = vadd.f32 %v4911, %v4912
      %v4914 = vsel %vm4736, %v4862, 0.0
      %v4915 = vadd.f32 %v4913, %v4914
      %v4916 = vsel %vm4736, %v4863, 0.0
      %v4917 = vadd.f32 %v4915, %v4916
      %v4918 = vsel %vm4736, %v4864, 0.0
      %v4919 = vadd.f32 %v4917, %v4918
      %v4920 = vsel %vm4736, %v4865, 0.0
      %v4921 = vadd.f32 %v4919, %v4920
      %v4922 = vsel %vm4736, %v4866, 0.0
      %v4923 = vadd.f32 %v4921, %v4922
      %v4924 = vsel %vm4736, %v4867, 0.0
      %v4925 = vadd.f32 %v4923, %v4924
      %v4926 = vsel %vm4736, %v4868, 0.0
      %v4927 = vadd.f32 %v4925, %v4926
      %v4928 = vsel %vm4736, %v4869, 0.0
      %v4929 = vadd.f32 %v4927, %v4928
      %v4930 = vsel %vm4736, %v4870, 0.0
      %v4931 = vadd.f32 %v4929, %v4930
      %v4932 = vsel %vm4736, %v4871, 0.0
      %v4933 = vadd.f32 %v4931, %v4932
      %v4934 = vsel %vm4736, %v4872, 0.0
      %v4935 = vadd.f32 %v4933, %v4934
      %v4936 = vrot.slane %v4935, 4
      %v4937 = vadd.f32 %v4935, %v4936
      %v4938 = vrot.slane %v4937, 2
      %v4939 = vadd.f32 %v4937, %v4938
      %v4940 = vrot.slane %v4939, 1
      %v4941 = vadd.f32 %v4939, %v4940
      %4942 = vst.msk [vmem:[%s175] sm:$0x1] %vm4839, %v4941
      %p4943 = scmp.lt.s32.totalorder %s15, 1
      %s4944 = scalar_select %p4943, %s15, 1
      %s4945 = scalar_lea.vmem %s2, %s4944
      %p4946 = scmp.lt.s32.totalorder %s15, 1
      %s4947 = scalar_select %p4946, %s15, 1
      %s4948 = scalar_lea.vmem %s3, %s4947
      // Predicated region
      $region29: #{conv_layer_2d.2} parent=27 // pred_check
        %p4949 = pneg %p80
      $region30: #{conv_layer_2d.2} parent=27 // pred_check_branch
        %4951 = sbr.rel (%p4949) target = $region32
      $region31: #{conv_layer_2d.2} parent=27 // pred_region
        _
      $region32: #{conv_layer_2d.2} parent=27 // pred_fallthru
        _
      // Predicated region
      $region33: #{conv_layer_2d.2} parent=27 // pred_check
        %p4952 = pneg %p106
      $region34: #{conv_layer_2d.2} parent=27 // pred_check_branch
        %4954 = sbr.rel (%p4952) target = $region36
      $region35: #{conv_layer_2d.2} parent=27 // pred_region
        _
      $region36: #{conv_layer_2d.2} parent=27 // pred_fallthru
        _
    $region28: #{conv_layer_2d.2} parent=5 // pred_fallthru
      _
    %p4955 = scmp.le.s32.totalorder 2, %s10
    // Predicated region
    $region37: #{conv_layer_2d.2} parent=5 // pred_check
      %p4956 = pneg %p4955
    $region38: #{conv_layer_2d.2} parent=5 // pred_check_branch
      %4958 = sbr.rel (%p4956) target = $region40
    $region39: #{conv_layer_2d.2} parent=5 // pred_region
      %s4959 = ssub.s32 %s10, 2
      // Predicated region
      $region41: #{conv_layer_2d.2} parent=39 // pred_check
        %p4960 = pneg %p86
      $region42: #{conv_layer_2d.2} parent=39 // pred_check_branch
        %4962 = sbr.rel (%p4960) target = $region44
      $region43: #{conv_layer_2d.2} parent=39 // pred_region
        %p4963 = scmp.lt.s32.totalorder %s16, 1
        %s4964 = scalar_select %p4963, %s16, 1
        %s4965 = scalar_lea.vmem %s2, %s4964
      $region44: #{conv_layer_2d.2} parent=39 // pred_fallthru
        _
      // Predicated region
      $region45: #{conv_layer_2d.2} parent=39 // pred_check
        %p4966 = pneg %p112
      $region46: #{conv_layer_2d.2} parent=39 // pred_check_branch
        %4968 = sbr.rel (%p4966) target = $region48
      $region47: #{conv_layer_2d.2} parent=39 // pred_region
        %p4969 = scmp.lt.s32.totalorder %s16, 1
        %s4970 = scalar_select %p4969, %s16, 1
        %s4971 = scalar_lea.vmem %s3, %s4970
      $region48: #{conv_layer_2d.2} parent=39 // pred_fallthru
        _
    $region40: #{conv_layer_2d.2} parent=5 // pred_fallthru
      _
  $region6: #{conv_layer_2d.2} parent=0 // loop_footer
    %s14 = sadd.s32 1, %s10
  $region7: #{conv_layer_2d.2} parent=0 // loop_footer_branch
    %9 = sbr.rel target = $region3
  $region8: #{conv_layer_2d.2} parent=0 // loop_exit
    _

// kernel: conv_layer_2d.3
$region0: #{conv_layer_2d.3}
  #allocation0 [shape = 'u32[]', space=smem, size = 0x4, offset = 0x4, fixed_abs, tag = 'smem constant byte address 0x4 - core index']
  #allocation1 [shape = 'u32[144,128]{1,0:T(1,128)}', space=vmem, size = 0x12000, scoped, tag = 'internal scratch']
  %s0 = inlined_call_operand.vmem [shape: bf16[2,18,18,4], index: 0, kind: input, shape index: {}]
  %s1 = inlined_call_operand.vmem [shape: bf16[9,4,8], index: 1, kind: input, shape index: {}]
  %s2 = inlined_call_operand.vmem [shape: f32[1,8], index: 2, kind: input, shape index: {}]
  %s3 = inlined_call_operand.vmem [shape: f32[1,8], index: 3, kind: input, shape index: {}]
  %s4 = inlined_call_operand.vmem [shape: f32[2,8,256], index: 4, kind: output, shape index: {}]
  %s5 = sld [smem:[#allocation0]]
  $region49: #{conv_layer_2d.3} parent=0
    _
  %s7 = ssub.s32 1, %s5
  %s8 = scalar_select 0, %s7, %s5
  loop: start=0, step=1, limit=4
  $region2: #{conv_layer_2d.3} parent=0 // loop_pre_header
    _
  $region3: #{conv_layer_2d.3} parent=0 // loop_header
    %s10 = sphi 0, %s14
    %p11 = scmp.ge.s32.totalorder %s10, 4
    %s20 = sphi 0, %s22
    %s23 = sphi 0, %s20
    %s24 = sphi 0, %s23
    %s40 = sphi 0, %s24
    %s44 = sphi 0, %s44
    %s46 = sphi 0, %s44
    %s47 = sphi 0, %s46
    %s61 = sphi 0, %s47
    %s65 = sphi 0, %s65
    %s67 = sphi 0, %s65
    %s68 = sphi 0, %s67
    %s82 = sphi 0, %s68
    %s86 = sphi 0, %s86
    %s88 = sphi 0, %s86
    %s89 = sphi 0, %s88
    %s103 = sphi 0, %s89
    %s109 = sphi 0, %s111
    %s112 = sphi 0, %s109
    %s113 = sphi 0, %s112
    %s129 = sphi 0, %s113
  $region4: #{conv_layer_2d.3} parent=0 // loop_header_branch
    %13 = sbr.rel (%p11) target = $region8
  $region5: #{conv_layer_2d.3} parent=0 // loop_body
    %s15 = ssub.s32 %s10, 1
    %s16 = ssub.s32 %s10, 2
    %s17 = sadd.s32 %s10, 1
    %s18 = ssub.s32 %s10, %s17
    %p19 = scmp.eq.s32.totalorder %s18, 0
    %s21 = sadd.s32 %s20, 1
    %s22 = scalar_select %p19, %s20, %s21
    %p25 = pneg %p19
    %p26 = scmp.eq.s32.totalorder %s10, 1
    %p27 = por %p25, %p26
    %p28 = scmp.ne.s32.totalorder %s20, %s23
    %p29 = scmp.eq.s32.totalorder %s10, 0
    %p30 = por %p28, %p29
    %p31 = scmp.ne.s32.totalorder %s20, %s23
    %p32 = scmp.eq.s32.totalorder %s15, 1
    %p33 = por %p31, %p32
    %p34 = scmp.ne.s32.totalorder %s23, %s24
    %p35 = scmp.eq.s32.totalorder %s15, 0
    %p36 = por %p34, %p35
    %p37 = scmp.ne.s32.totalorder %s23, %s24
    %p38 = scmp.eq.s32.totalorder %s16, 1
    %p39 = por %p37, %p38
    %p41 = scmp.ne.s32.totalorder %s24, %s40
    %p42 = scmp.eq.s32.totalorder %s16, 0
    %p43 = por %p41, %p42
    %s45 = sadd.s32 %s44, 1
    %p48 = scmp.eq.s32.totalorder %s10, 1
    %p49 = scmp.ne.s32.totalorder %s44, %s46
    %p50 = scmp.eq.s32.totalorder %s10, 0
    %p51 = por %p49, %p50
    %p52 = scmp.ne.s32.totalorder %s44, %s46
    %p53 = scmp.eq.s32.totalorder %s15, 1
    %p54 = por %p52, %p53
    %p55 = scmp.ne.s32.totalorder %s46, %s47
    %p56 = scmp.eq.s32.totalorder %s15, 0
    %p57 = por %p55, %p56
    %p58 = scmp.ne.s32.totalorder %s46, %s47
    %p59 = scmp.eq.s32.totalorder %s16, 1
    %p60 = por %p58, %p59
    %p62 = scmp.ne.s32.totalorder %s47, %s61
    %p63 = scmp.eq.s32.totalorder %s16, 0
    %p64 = por %p62, %p63
    %s66 = sadd.s32 %s65, 1
    %p69 = scmp.eq.s32.totalorder %s10, 1
    %p70 = scmp.ne.s32.totalorder %s65, %s67
    %p71 = scmp.eq.s32.totalorder %s10, 0
    %p72 = por %p70, %p71
    %p73 = scmp.ne.s32.totalorder %s65, %s67
    %p74 = scmp.eq.s32.totalorder %s15, 1
    %p75 = por %p73, %p74
    %p76 = scmp.ne.s32.totalorder %s67, %s68
    %p77 = scmp.eq.s32.totalorder %s15, 0
    %p78 = por %p76, %p77
    %p79 = scmp.ne.s32.totalorder %s67, %s68
    %p80 = scmp.eq.s32.totalorder %s16, 1
    %p81 = por %p79, %p80
    %p83 = scmp.ne.s32.totalorder %s68, %s82
    %p84 = scmp.eq.s32.totalorder %s16, 0
    %p85 = por %p83, %p84
    %s87 = sadd.s32 %s86, 1
    %p90 = scmp.eq.s32.totalorder %s10, 1
    %p91 = scmp.ne.s32.totalorder %s86, %s88
    %p92 = scmp.eq.s32.totalorder %s10, 0
    %p93 = por %p91, %p92
    %p94 = scmp.ne.s32.totalorder %s86, %s88
    %p95 = scmp.eq.s32.totalorder %s15, 1
    %p96 = por %p94, %p95
    %p97 = scmp.ne.s32.totalorder %s88, %s89
    %p98 = scmp.eq.s32.totalorder %s15, 0
    %p99 = por %p97, %p98
    %p100 = scmp.ne.s32.totalorder %s88, %s89
    %p101 = scmp.eq.s32.totalorder %s16, 1
    %p102 = por %p100, %p101
    %p104 = scmp.ne.s32.totalorder %s89, %s103
    %p105 = scmp.eq.s32.totalorder %s16, 0
    %p106 = por %p104, %p105
    %s107 = ssub.s32 %s10, %s17
    %p108 = scmp.eq.s32.totalorder %s107, 0
    %s110 = sadd.s32 %s109, 1
    %s111 = scalar_select %p108, %s109, %s110
    %p114 = pneg %p108
    %p115 = scmp.eq.s32.totalorder %s10, 1
    %p116 = por %p114, %p115
    %p117 = scmp.ne.s32.totalorder %s109, %s112
    %p118 = scmp.eq.s32.totalorder %s10, 0
    %p119 = por %p117, %p118
    %p120 = scmp.ne.s32.totalorder %s109, %s112
    %p121 = scmp.eq.s32.totalorder %s15, 1
    %p122 = por %p120, %p121
    %p123 = scmp.ne.s32.totalorder %s112, %s113
    %p124 = scmp.eq.s32.totalorder %s15, 0
    %p125 = por %p123, %p124
    %p126 = scmp.ne.s32.totalorder %s112, %s113
    %p127 = scmp.eq.s32.totalorder %s16, 1
    %p128 = por %p126, %p127
    %p130 = scmp.ne.s32.totalorder %s113, %s129
    %p131 = scmp.eq.s32.totalorder %s16, 0
    %p132 = por %p130, %p131
    %p133 = scmp.le.s32.totalorder 1, %s10
    %p134 = scmp.lt.s32.totalorder %s10, 3
    %p135 = pnand %p133, %p134
    %p136 = pneg %p135
    // Predicated region
    $region9: #{conv_layer_2d.3} parent=5 // pred_check
      _
    $region10: #{conv_layer_2d.3} parent=5 // pred_check_branch
      %138 = sbr.rel (%p135) target = $region12
    $region11: #{conv_layer_2d.3} parent=5 // pred_region
      %s139 = ssub.s32 %s10, 1
      // Predicated region
      $region13: #{conv_layer_2d.3} parent=11 // pred_check
        %p140 = pneg %p57
      $region14: #{conv_layer_2d.3} parent=11 // pred_check_branch
        %142 = sbr.rel (%p140) target = $region16
      $region15: #{conv_layer_2d.3} parent=11 // pred_region
        _
      $region16: #{conv_layer_2d.3} parent=11 // pred_fallthru
        _
      // Predicated region
      $region17: #{conv_layer_2d.3} parent=11 // pred_check
        %p143 = pneg %p78
      $region18: #{conv_layer_2d.3} parent=11 // pred_check_branch
        %145 = sbr.rel (%p143) target = $region20
      $region19: #{conv_layer_2d.3} parent=11 // pred_region
        _
      $region20: #{conv_layer_2d.3} parent=11 // pred_fallthru
        _
      // Predicated region
      $region21: #{conv_layer_2d.3} parent=11 // pred_check
        %p146 = pneg %p99
      $region22: #{conv_layer_2d.3} parent=11 // pred_check_branch
        %148 = sbr.rel (%p146) target = $region24
      $region23: #{conv_layer_2d.3} parent=11 // pred_region
        _
      $region24: #{conv_layer_2d.3} parent=11 // pred_fallthru
        _
    $region12: #{conv_layer_2d.3} parent=5 // pred_fallthru
      _
    %p149 = scmp.lt.s32.totalorder %s10, 2
    // Predicated region
    $region25: #{conv_layer_2d.3} parent=5 // pred_check
      %p150 = pneg %p149
    $region26: #{conv_layer_2d.3} parent=5 // pred_check_branch
      %152 = sbr.rel (%p150) target = $region28
    $region27: #{conv_layer_2d.3} parent=5 // pred_region
      // Predicated region
      $region29: #{conv_layer_2d.3} parent=27 // pred_check
        %p153 = pneg %p30
      $region30: #{conv_layer_2d.3} parent=27 // pred_check_branch
        %155 = sbr.rel (%p153) target = $region32
      $region31: #{conv_layer_2d.3} parent=27 // pred_region
        %p156 = scmp.lt.s32.totalorder %s10, 1
        %s157 = scalar_select %p156, %s10, 1
        %s158 = smul.addr %s157, 54
        %s159 = smul.addr %s158, 4
        %s160 = scalar_lea.vmem %s0, %s159
      $region32: #{conv_layer_2d.3} parent=27 // pred_fallthru
        _
    $region28: #{conv_layer_2d.3} parent=5 // pred_fallthru
      _
    %p161 = scmp.le.s32.totalorder 1, %s10
    %p162 = scmp.lt.s32.totalorder %s10, 3
    %p163 = pnand %p161, %p162
    %p164 = pneg %p163
    // Predicated region
    $region33: #{conv_layer_2d.3} parent=5 // pred_check
      _
    $region34: #{conv_layer_2d.3} parent=5 // pred_check_branch
      %166 = sbr.rel (%p163) target = $region36
    $region35: #{conv_layer_2d.3} parent=5 // pred_region
      %s167 = ssub.s32 %s10, 1
      %p168 = scmp.lt.s32.totalorder %s15, 1
      %s169 = scalar_select %p168, %s15, 1
      %s170 = smul.addr %s169, 54
      %s171 = smul.addr %s170, 4
      %s172 = scalar_lea.vmem %s0, %s171
      %p173 = pneg %p36
      %p174 = pneg %p33
      %p175 = pneg %p57
      %p176 = pneg %p54
      %p177 = pneg %p78
      %p178 = pneg %p75
      %p179 = pneg %p99
      %p180 = pneg %p96
      %p181 = pneg %p125
      %p182 = pneg %p122
      %p183 = scmp.lt.s32.totalorder %s15, 1
      %s184 = scalar_select %p183, %s15, 1
      %s185 = smul.addr %s184, 2
      %s186 = smul.addr %s185, 8
      %s187 = scalar_lea.vmem %s4, %s186
      %p188 = scmp.lt.s32.totalorder %s15, 1
      %s189 = scalar_select %p188, %s15, 1
      %s190 = smul.addr %s189, 54
      %s191 = smul.addr %s190, 4
      %s192 = scalar_lea.vmem %s0, %s191
      %p193 = scmp.lt.s32.totalorder %s15, 1
      %s194 = scalar_select %p193, %s15, 1
      %s195 = smul.addr %s194, 2
      %s196 = smul.addr %s195, 8
      %s197 = scalar_lea.vmem %s4, %s196
      %v199 = vld [vmem:[%s192] sm:$0xf]
      %v200 = vld [vmem:[%s192 + $0x4] sm:$0xf]
      %v201 = vld [vmem:[%s192 + $0xc] sm:$0xf]
      %v202 = vld [vmem:[%s192 + $0x10] sm:$0xf]
      %v203 = vld [vmem:[%s192 + $0x18] sm:$0xf]
      %v204 = vld [vmem:[%s192 + $0x1c] sm:$0xf]
      %v205 = vld [vmem:[%s192 + $0x24] sm:$0xf]
      %v206 = vld [vmem:[%s192 + $0x28] sm:$0xf]
      %v207 = vld [vmem:[%s192 + $0x30] sm:$0xf]
      %v208 = vld [vmem:[%s192 + $0x34] sm:$0xf]
      %v209 = vld [vmem:[%s192 + $0x3c] sm:$0xf]
      %v210 = vld [vmem:[%s192 + $0x40] sm:$0xf]
      %v211 = vld [vmem:[%s192 + $0x48] sm:$0xf]
      %v212 = vld [vmem:[%s192 + $0x4c] sm:$0xf]
      %v213 = vld [vmem:[%s192 + $0x54] sm:$0xf]
      %v214 = vld [vmem:[%s192 + $0x58] sm:$0xf]
      %v215 = vld [vmem:[%s192 + $0x60] sm:$0xf]
      %v216 = vld [vmem:[%s192 + $0x64] sm:$0xf]
      %v217 = vld [vmem:[%s192 + $0x6c] sm:$0xf]
      %v218 = vld [vmem:[%s192 + $0x70] sm:$0xf]
      %v219 = vld [vmem:[%s192 + $0x78] sm:$0xf]
      %v220 = vld [vmem:[%s192 + $0x7c] sm:$0xf]
      %v221 = vld [vmem:[%s192 + $0x84] sm:$0xf]
      %v222 = vld [vmem:[%s192 + $0x88] sm:$0xf]
      %v223 = vld [vmem:[%s192 + $0x90] sm:$0xf]
      %v224 = vld [vmem:[%s192 + $0x94] sm:$0xf]
      %v225 = vld [vmem:[%s192 + $0x9c] sm:$0xf]
      %v226 = vld [vmem:[%s192 + $0xa0] sm:$0xf]
      %v227 = vld [vmem:[%s192 + $0xa8] sm:$0xf]
      %v228 = vld [vmem:[%s192 + $0xac] sm:$0xf]
      %v229 = vld [vmem:[%s192 + $0xb4] sm:$0xf]
      %v230 = vld [vmem:[%s192 + $0xb8] sm:$0xf]
      %v231 = vld [vmem:[%s1] sm:$0x3]
      %v232 = vld [vmem:[%s192 + $0x8] sm:$0x1]
      %v233 = vld [vmem:[%s192 + $0x14] sm:$0x1]
      %v234 = vld [vmem:[%s192 + $0x20] sm:$0x1]
      %v235 = vld [vmem:[%s192 + $0x2c] sm:$0x1]
      %v236 = vld [vmem:[%s192 + $0x38] sm:$0x1]
      %v237 = vld [vmem:[%s192 + $0x44] sm:$0x1]
      %v238 = vld [vmem:[%s192 + $0x50] sm:$0x1]
      %v239 = vld [vmem:[%s192 + $0x5c] sm:$0x1]
      %v240 = vld [vmem:[%s192 + $0x68] sm:$0x1]
      %v241 = vld [vmem:[%s192 + $0x74] sm:$0x1]
      %v242 = vld [vmem:[%s192 + $0x80] sm:$0x1]
      %v243 = vld [vmem:[%s192 + $0x8c] sm:$0x1]
      %v244 = vld [vmem:[%s192 + $0x98] sm:$0x1]
      %v245 = vld [vmem:[%s192 + $0xa4] sm:$0x1]
      %v246 = vld [vmem:[%s192 + $0xb0] sm:$0x1]
      %v247 = vld [vmem:[%s192 + $0xbc] sm:$0x1]
      %vm248 = vsmask.f32 3328
      %vm249 = vsmask.f32 7440
      %vm250 = vmor %vm248, %vm249
      %v252 = vshrl.u32 %v199, 16
      %v254 = vrot.slane %v252, 4
      %v255 = vshll.u32 %v199, 16
      %v257 = vrot.slane %v255, 5
      %v258 = vor.u32 %v254, %v257
      %v259 = vrot.slane %v258, 4
      %v261 = vshll.u32 %v200, 16
      %v263 = vrot.slane %v261, 5
      %v264 = vsel %vm250, %v259, %v263
      %v265 = vshrl.u32 %v200, 16
      %v267 = vrot.slane %v265, 4
      %v268 = vor.u32 %v267, %v263
      %v269 = vrot.slane %v268, 4
      %v271 = vshll.u32 %v232, 16
      %v273 = vrot.slane %v271, 5
      %v274 = vsel %vm250, %v269, %v273
      %v276 = vshrl.u32 %v201, 16
      %v278 = vrot.slane %v276, 4
      %v279 = vshll.u32 %v201, 16
      %v281 = vrot.slane %v279, 5
      %v282 = vor.u32 %v278, %v281
      %v283 = vrot.slane %v282, 4
      %v285 = vshll.u32 %v202, 16
      %v287 = vrot.slane %v285, 5
      %v288 = vsel %vm250, %v283, %v287
      %v289 = vshrl.u32 %v202, 16
      %v291 = vrot.slane %v289, 4
      %v292 = vor.u32 %v291, %v287
      %v293 = vrot.slane %v292, 4
      %v295 = vshll.u32 %v233, 16
      %v297 = vrot.slane %v295, 5
      %v298 = vsel %vm250, %v293, %v297
      %v300 = vshrl.u32 %v203, 16
      %v302 = vrot.slane %v300, 4
      %v303 = vshll.u32 %v203, 16
      %v305 = vrot.slane %v303, 5
      %v306 = vor.u32 %v302, %v305
      %v307 = vrot.slane %v306, 4
      %v309 = vshll.u32 %v204, 16
      %v311 = vrot.slane %v309, 5
      %v312 = vsel %vm250, %v307, %v311
      %v313 = vshrl.u32 %v204, 16
      %v315 = vrot.slane %v313, 4
      %v316 = vor.u32 %v315, %v311
      %v317 = vrot.slane %v316, 4
      %v319 = vshll.u32 %v234, 16
      %v321 = vrot.slane %v319, 5
      %v322 = vsel %vm250, %v317, %v321
      %v324 = vshrl.u32 %v205, 16
      %v326 = vrot.slane %v324, 4
      %v327 = vshll.u32 %v205, 16
      %v329 = vrot.slane %v327, 5
      %v330 = vor.u32 %v326, %v329
      %v331 = vrot.slane %v330, 4
      %v333 = vshll.u32 %v206, 16
      %v335 = vrot.slane %v333, 5
      %v336 = vsel %vm250, %v331, %v335
      %v337 = vshrl.u32 %v206, 16
      %v339 = vrot.slane %v337, 4
      %v340 = vor.u32 %v339, %v335
      %v341 = vrot.slane %v340, 4
      %v343 = vshll.u32 %v235, 16
      %v345 = vrot.slane %v343, 5
      %v346 = vsel %vm250, %v341, %v345
      %v348 = vshrl.u32 %v207, 16
      %v350 = vrot.slane %v348, 4
      %v351 = vshll.u32 %v207, 16
      %v353 = vrot.slane %v351, 5
      %v354 = vor.u32 %v350, %v353
      %v355 = vrot.slane %v354, 4
      %v357 = vshll.u32 %v208, 16
      %v359 = vrot.slane %v357, 5
      %v360 = vsel %vm250, %v355, %v359
      %v361 = vshrl.u32 %v208, 16
      %v363 = vrot.slane %v361, 4
      %v364 = vor.u32 %v363, %v359
      %v365 = vrot.slane %v364, 4
      %v367 = vshll.u32 %v236, 16
      %v369 = vrot.slane %v367, 5
      %v370 = vsel %vm250, %v365, %v369
      %v372 = vshrl.u32 %v209, 16
      %v374 = vrot.slane %v372, 4
      %v375 = vshll.u32 %v209, 16
      %v377 = vrot.slane %v375, 5
      %v378 = vor.u32 %v374, %v377
      %v379 = vrot.slane %v378, 4
      %v381 = vshll.u32 %v210, 16
      %v383 = vrot.slane %v381, 5
      %v384 = vsel %vm250, %v379, %v383
      %v385 = vshrl.u32 %v210, 16
      %v387 = vrot.slane %v385, 4
      %v388 = vor.u32 %v387, %v383
      %v389 = vrot.slane %v388, 4
      %v391 = vshll.u32 %v237, 16
      %v393 = vrot.slane %v391, 5
      %v394 = vsel %vm250, %v389, %v393
      %v396 = vshrl.u32 %v211, 16
      %v398 = vrot.slane %v396, 4
      %v399 = vshll.u32 %v211, 16
      %v401 = vrot.slane %v399, 5
      %v402 = vor.u32 %v398, %v401
      %v403 = vrot.slane %v402, 4
      %v405 = vshll.u32 %v212, 16
      %v407 = vrot.slane %v405, 5
      %v408 = vsel %vm250, %v403, %v407
      %v409 = vshrl.u32 %v212, 16
      %v411 = vrot.slane %v409, 4
      %v412 = vor.u32 %v411, %v407
      %v413 = vrot.slane %v412, 4
      %v415 = vshll.u32 %v238, 16
      %v417 = vrot.slane %v415, 5
      %v418 = vsel %vm250, %v413, %v417
      %v420 = vshrl.u32 %v213, 16
      %v422 = vrot.slane %v420, 4
      %v423 = vshll.u32 %v213, 16
      %v425 = vrot.slane %v423, 5
      %v426 = vor.u32 %v422, %v425
      %v427 = vrot.slane %v426, 4
      %v429 = vshll.u32 %v214, 16
      %v431 = vrot.slane %v429, 5
      %v432 = vsel %vm250, %v427, %v431
      %v433 = vshrl.u32 %v214, 16
      %v435 = vrot.slane %v433, 4
      %v436 = vor.u32 %v435, %v431
      %v437 = vrot.slane %v436, 4
      %v439 = vshll.u32 %v239, 16
      %v441 = vrot.slane %v439, 5
      %v442 = vsel %vm250, %v437, %v441
      %v444 = vshrl.u32 %v215, 16
      %v446 = vrot.slane %v444, 4
      %v447 = vshll.u32 %v215, 16
      %v449 = vrot.slane %v447, 5
      %v450 = vor.u32 %v446, %v449
      %v451 = vrot.slane %v450, 4
      %v453 = vshll.u32 %v216, 16
      %v455 = vrot.slane %v453, 5
      %v456 = vsel %vm250, %v451, %v455
      %v457 = vshrl.u32 %v216, 16
      %v459 = vrot.slane %v457, 4
      %v460 = vor.u32 %v459, %v455
      %v461 = vrot.slane %v460, 4
      %v463 = vshll.u32 %v240, 16
      %v465 = vrot.slane %v463, 5
      %v466 = vsel %vm250, %v461, %v465
      %v468 = vshrl.u32 %v217, 16
      %v470 = vrot.slane %v468, 4
      %v471 = vshll.u32 %v217, 16
      %v473 = vrot.slane %v471, 5
      %v474 = vor.u32 %v470, %v473
      %v475 = vrot.slane %v474, 4
      %v477 = vshll.u32 %v218, 16
      %v479 = vrot.slane %v477, 5
      %v480 = vsel %vm250, %v475, %v479
      %v481 = vshrl.u32 %v218, 16
      %v483 = vrot.slane %v481, 4
      %v484 = vor.u32 %v483, %v479
      %v485 = vrot.slane %v484, 4
      %v487 = vshll.u32 %v241, 16
      %v489 = vrot.slane %v487, 5
      %v490 = vsel %vm250, %v485, %v489
      %v492 = vshrl.u32 %v219, 16
      %v494 = vrot.slane %v492, 4
      %v495 = vshll.u32 %v219, 16
      %v497 = vrot.slane %v495, 5
      %v498 = vor.u32 %v494, %v497
      %v499 = vrot.slane %v498, 4
      %v501 = vshll.u32 %v220, 16
      %v503 = vrot.slane %v501, 5
      %v504 = vsel %vm250, %v499, %v503
      %v505 = vshrl.u32 %v220, 16
      %v507 = vrot.slane %v505, 4
      %v508 = vor.u32 %v507, %v503
      %v509 = vrot.slane %v508, 4
      %v511 = vshll.u32 %v242, 16
      %v513 = vrot.slane %v511, 5
      %v514 = vsel %vm250, %v509, %v513
      %v516 = vshrl.u32 %v221, 16
      %v518 = vrot.slane %v516, 4
      %v519 = vshll.u32 %v221, 16
      %v521 = vrot.slane %v519, 5
      %v522 = vor.u32 %v518, %v521
      %v523 = vrot.slane %v522, 4
      %v525 = vshll.u32 %v222, 16
      %v527 = vrot.slane %v525, 5
      %v528 = vsel %vm250, %v523, %v527
      %v529 = vshrl.u32 %v222, 16
      %v531 = vrot.slane %v529, 4
      %v532 = vor.u32 %v531, %v527
      %v533 = vrot.slane %v532, 4
      %v535 = vshll.u32 %v243, 16
      %v537 = vrot.slane %v535, 5
      %v538 = vsel %vm250, %v533, %v537
      %v540 = vshrl.u32 %v223, 16
      %v542 = vrot.slane %v540, 4
      %v543 = vshll.u32 %v223, 16
      %v545 = vrot.slane %v543, 5
      %v546 = vor.u32 %v542, %v545
      %v547 = vrot.slane %v546, 4
      %v549 = vshll.u32 %v224, 16
      %v551 = vrot.slane %v549, 5
      %v552 = vsel %vm250, %v547, %v551
      %v553 = vshrl.u32 %v224, 16
      %v555 = vrot.slane %v553, 4
      %v556 = vor.u32 %v555, %v551
      %v557 = vrot.slane %v556, 4
      %v559 = vshll.u32 %v244, 16
      %v561 = vrot.slane %v559, 5
      %v562 = vsel %vm250, %v557, %v561
      %v564 = vshrl.u32 %v225, 16
      %v566 = vrot.slane %v564, 4
      %v567 = vshll.u32 %v225, 16
      %v569 = vrot.slane %v567, 5
      %v570 = vor.u32 %v566, %v569
      %v571 = vrot.slane %v570, 4
      %v573 = vshll.u32 %v226, 16
      %v575 = vrot.slane %v573, 5
      %v576 = vsel %vm250, %v571, %v575
      %v577 = vshrl.u32 %v226, 16
      %v579 = vrot.slane %v577, 4
      %v580 = vor.u32 %v579, %v575
      %v581 = vrot.slane %v580, 4
      %v583 = vshll.u32 %v245, 16
      %v585 = vrot.slane %v583, 5
      %v586 = vsel %vm250, %v581, %v585
      %v588 = vshrl.u32 %v227, 16
      %v590 = vrot.slane %v588, 4
      %v591 = vshll.u32 %v227, 16
      %v593 = vrot.slane %v591, 5
      %v594 = vor.u32 %v590, %v593
      %v595 = vrot.slane %v594, 4
      %v597 = vshll.u32 %v228, 16
      %v599 = vrot.slane %v597, 5
      %v600 = vsel %vm250, %v595, %v599
      %v601 = vshrl.u32 %v228, 16
      %v603 = vrot.slane %v601, 4
      %v604 = vor.u32 %v603, %v599
      %v605 = vrot.slane %v604, 4
      %v607 = vshll.u32 %v246, 16
      %v609 = vrot.slane %v607, 5
      %v610 = vsel %vm250, %v605, %v609
      %v612 = vshrl.u32 %v229, 16
      %v614 = vrot.slane %v612, 4
      %v615 = vshll.u32 %v229, 16
      %v617 = vrot.slane %v615, 5
      %v618 = vor.u32 %v614, %v617
      %v619 = vrot.slane %v618, 4
      %v621 = vshll.u32 %v230, 16
      %v623 = vrot.slane %v621, 5
      %v624 = vsel %vm250, %v619, %v623
      %v625 = vshrl.u32 %v230, 16
      %v627 = vrot.slane %v625, 4
      %v628 = vor.u32 %v627, %v623
      %v629 = vrot.slane %v628, 4
      %v631 = vshll.u32 %v247, 16
      %v633 = vrot.slane %v631, 5
      %v634 = vsel %vm250, %v629, %v633
      %s635 = scalar_lea.vmem %s1, 2
      %v636 = vld [vmem:[%s635] sm:$0x3]
      %v637 = vunpack.c.l.b16 %v264
      %v638 = vunpack.c.l.b16 %v274
      %v639 = vunpack.c.l.b16 %v288
      %v640 = vunpack.c.l.b16 %v298
      %v641 = vunpack.c.l.b16 %v312
      %v642 = vunpack.c.l.b16 %v322
      %v643 = vunpack.c.l.b16 %v336
      %v644 = vunpack.c.l.b16 %v346
      %v645 = vunpack.c.l.b16 %v360
      %v646 = vunpack.c.l.b16 %v370
      %v647 = vunpack.c.l.b16 %v384
      %v648 = vunpack.c.l.b16 %v394
      %v649 = vunpack.c.l.b16 %v408
      %v650 = vunpack.c.l.b16 %v418
      %v651 = vunpack.c.l.b16 %v432
      %v652 = vunpack.c.l.b16 %v442
      %v653 = vunpack.c.l.b16 %v456
      %v654 = vunpack.c.l.b16 %v466
      %v655 = vunpack.c.l.b16 %v480
      %v656 = vunpack.c.l.b16 %v490
      %v657 = vunpack.c.l.b16 %v504
      %v658 = vunpack.c.l.b16 %v514
      %v659 = vunpack.c.l.b16 %v528
      %v660 = vunpack.c.l.b16 %v538
      %v661 = vunpack.c.l.b16 %v552
      %v662 = vunpack.c.l.b16 %v562
      %v663 = vunpack.c.l.b16 %v576
      %v664 = vunpack.c.l.b16 %v586
      %v665 = vunpack.c.l.b16 %v600
      %v666 = vunpack.c.l.b16 %v610
      %v667 = vunpack.c.l.b16 %v624
      %v668 = vunpack.c.l.b16 %v634
      %v669 = vpack.c.b16 %v638, %v637
      %v670 = vpack.c.b16 %v640, %v639
      %v671 = vpack.c.b16 %v642, %v641
      %v672 = vpack.c.b16 %v644, %v643
      %v673 = vpack.c.b16 %v646, %v645
      %v674 = vpack.c.b16 %v648, %v647
      %v675 = vpack.c.b16 %v650, %v649
      %v676 = vpack.c.b16 %v652, %v651
      %v677 = vpack.c.b16 %v654, %v653
      %v678 = vpack.c.b16 %v656, %v655
      %v679 = vpack.c.b16 %v658, %v657
      %v680 = vpack.c.b16 %v660, %v659
      %v681 = vpack.c.b16 %v662, %v661
      %v682 = vpack.c.b16 %v664, %v663
      %v683 = vpack.c.b16 %v666, %v665
      %v684 = vpack.c.b16 %v668, %v667
      %vm685 = vcmask 31744
      %v687 = vsel %vm685, %v669, 0
      %v690 = vsel %vm685, %v670, 0
      %v693 = vsel %vm685, %v671, 0
      %v696 = vsel %vm685, %v672, 0
      %v699 = vsel %vm685, %v673, 0
      %v702 = vsel %vm685, %v674, 0
      %v705 = vsel %vm685, %v675, 0
      %v708 = vsel %vm685, %v676, 0
      %v711 = vsel %vm685, %v677, 0
      %v714 = vsel %vm685, %v678, 0
      %v717 = vsel %vm685, %v679, 0
      %v720 = vsel %vm685, %v680, 0
      %v723 = vsel %vm685, %v681, 0
      %v726 = vsel %vm685, %v682, 0
      %v729 = vsel %vm685, %v683, 0
      %v732 = vsel %vm685, %v684, 0
      %vm734 = vcmask 1041408
      %v736 = vsel %vm734, %v636, 0
      %738 = vmatprep.subr.bf16.mxu0 0
      %739 = vmatpush1.bf16.msra.mxu0 %v736
      %740 = vmatprep.subr.bf16.mxu0 0
      %741 = vmatpush1.bf16.msra.mxu0 0
      %742 = vmatprep.subr.bf16.mxu0 0
      %743 = vmatpush1.bf16.msra.mxu0 0
      %744 = vmatprep.subr.bf16.mxu0 0
      %745 = vmatpush1.bf16.msra.mxu0 0
      %746 = vmatprep.subr.bf16.mxu0 0
      %747 = vmatpush1.bf16.msra.mxu0 0
      %748 = vmatprep.subr.bf16.mxu0 0
      %749 = vmatpush1.bf16.msra.mxu0 0
      %750 = vmatprep.subr.bf16.mxu0 0
      %751 = vmatpush1.bf16.msra.mxu0 0
      %752 = vmatprep.subr.bf16.mxu0 0
      %753 = vmatpush1.bf16.msra.mxu0 0
      %754 = vmatprep.subr.bf16.mxu0 0
      %755 = vmatpush1.bf16.msra.mxu0 0
      %756 = vmatprep.subr.bf16.mxu0 0
      %757 = vmatpush1.bf16.msra.mxu0 0
      %758 = vmatprep.subr.bf16.mxu0 0
      %759 = vmatpush1.bf16.msra.mxu0 0
      %760 = vmatprep.subr.bf16.mxu0 0
      %761 = vmatpush1.bf16.msra.mxu0 0
      %762 = vmatprep.subr.bf16.mxu0 0
      %763 = vmatpush1.bf16.msra.mxu0 0
      %764 = vmatprep.subr.bf16.mxu0 0
      %765 = vmatpush1.bf16.msra.mxu0 0
      %766 = vmatprep.subr.bf16.mxu0 0
      %767 = vmatpush1.bf16.msra.mxu0 0
      %768 = vmatprep.subr.bf16.mxu0 0
      %769 = vmatpush1.bf16.msra.mxu0 0
      %770 = vmatprep.mubr.bf16.mxu0 0
      %771 = vmatmul.mubr.bf16.gmra.mrb[0].mxu0 %v687
      %v772 = vpop.f32.mrb[0].mxu0
      %v773 = vadd.f32 0.0, %v772
      %v774 = vpop.f32.mrb[0].mxu0
      %v775 = vpop.f32.mrb[0].mxu0
      %v776 = vadd.f32 0.0, %v775
      %v777 = vpop.f32.mrb[0].mxu0
      %778 = vmatprep.mubr.bf16.mxu0 0
      %779 = vmatmul.mubr.bf16.gmra.mrb[0].mxu0 %v690
      %v780 = vpop.f32.mrb[0].mxu0
      %v781 = vadd.f32 0.0, %v780
      %v782 = vpop.f32.mrb[0].mxu0
      %v783 = vpop.f32.mrb[0].mxu0
      %v784 = vadd.f32 0.0, %v783
      %v785 = vpop.f32.mrb[0].mxu0
      %786 = vmatprep.mubr.bf16.mxu0 0
      %787 = vmatmul.mubr.bf16.gmra.mrb[0].mxu0 %v693
      %v788 = vpop.f32.mrb[0].mxu0
      %v789 = vadd.f32 0.0, %v788
      %v790 = vpop.f32.mrb[0].mxu0
      %v791 = vpop.f32.mrb[0].mxu0
      %v792 = vadd.f32 0.0, %v791
      %v793 = vpop.f32.mrb[0].mxu0
      %794 = vmatprep.mubr.bf16.mxu0 0
      %795 = vmatmul.mubr.bf16.gmra.mrb[0].mxu0 %v696
      %v796 = vpop.f32.mrb[0].mxu0
      %v797 = vadd.f32 0.0, %v796
      %v798 = vpop.f32.mrb[0].mxu0
      %v799 = vpop.f32.mrb[0].mxu0
      %v800 = vadd.f32 0.0, %v799
      %v801 = vpop.f32.mrb[0].mxu0
      %802 = vmatprep.mubr.bf16.mxu0 0
      %803 = vmatmul.mubr.bf16.gmra.mrb[0].mxu0 %v699
      %v804 = vpop.f32.mrb[0].mxu0
      %v805 = vadd.f32 0.0, %v804
      %v806 = vpop.f32.mrb[0].mxu0
      %v807 = vpop.f32.mrb[0].mxu0
      %v808 = vadd.f32 0.0, %v807
      %v809 = vpop.f32.mrb[0].mxu0
      %810 = vmatprep.mubr.bf16.mxu0 0
      %811 = vmatmul.mubr.bf16.gmra.mrb[0].mxu0 %v702
      %v812 = vpop.f32.mrb[0].mxu0
      %v813 = vadd.f32 0.0, %v812
      %v814 = vpop.f32.mrb[0].mxu0
      %v815 = vpop.f32.mrb[0].mxu0
      %v816 = vadd.f32 0.0, %v815
      %v817 = vpop.f32.mrb[0].mxu0
      %818 = vmatprep.mubr.bf16.mxu0 0
      %819 = vmatmul.mubr.bf16.gmra.mrb[0].mxu0 %v705
      %v820 = vpop.f32.mrb[0].mxu0
      %v821 = vadd.f32 0.0, %v820
      %v822 = vpop.f32.mrb[0].mxu0
      %v823 = vpop.f32.mrb[0].mxu0
      %v824 = vadd.f32 0.0, %v823
      %v825 = vpop.f32.mrb[0].mxu0
      %826 = vmatprep.mubr.bf16.mxu0 0
      %827 = vmatmul.mubr.bf16.gmra.mrb[0].mxu0 %v708
      %v828 = vpop.f32.mrb[0].mxu0
      %v829 = vadd.f32 0.0, %v828
      %v830 = vpop.f32.mrb[0].mxu0
      %v831 = vpop.f32.mrb[0].mxu0
      %v832 = vadd.f32 0.0, %v831
      %v833 = vpop.f32.mrb[0].mxu0
      %834 = vmatprep.mubr.bf16.mxu0 0
      %835 = vmatmul.mubr.bf16.gmra.mrb[0].mxu0 %v711
      %v836 = vpop.f32.mrb[0].mxu0
      %v837 = vadd.f32 0.0, %v836
      %v838 = vpop.f32.mrb[0].mxu0
      %v839 = vpop.f32.mrb[0].mxu0
      %v840 = vadd.f32 0.0, %v839
      %v841 = vpop.f32.mrb[0].mxu0
      %842 = vmatprep.mubr.bf16.mxu0 0
      %843 = vmatmul.mubr.bf16.gmra.mrb[0].mxu0 %v714
      %v844 = vpop.f32.mrb[0].mxu0
      %v845 = vadd.f32 0.0, %v844
      %v846 = vpop.f32.mrb[0].mxu0
      %v847 = vpop.f32.mrb[0].mxu0
      %v848 = vadd.f32 0.0, %v847
      %v849 = vpop.f32.mrb[0].mxu0
      %850 = vmatprep.mubr.bf16.mxu0 0
      %851 = vmatmul.mubr.bf16.gmra.mrb[0].mxu0 %v717
      %v852 = vpop.f32.mrb[0].mxu0
      %v853 = vadd.f32 0.0, %v852
      %v854 = vpop.f32.mrb[0].mxu0
      %v855 = vpop.f32.mrb[0].mxu0
      %v856 = vadd.f32 0.0, %v855
      %v857 = vpop.f32.mrb[0].mxu0
      %858 = vmatprep.mubr.bf16.mxu0 0
      %859 = vmatmul.mubr.bf16.gmra.mrb[0].mxu0 %v720
      %v860 = vpop.f32.mrb[0].mxu0
      %v861 = vadd.f32 0.0, %v860
      %v862 = vpop.f32.mrb[0].mxu0
      %v863 = vpop.f32.mrb[0].mxu0
      %v864 = vadd.f32 0.0, %v863
      %v865 = vpop.f32.mrb[0].mxu0
      %866 = vmatprep.mubr.bf16.mxu0 0
      %867 = vmatmul.mubr.bf16.gmra.mrb[0].mxu0 %v723
      %v868 = vpop.f32.mrb[0].mxu0
      %v869 = vadd.f32 0.0, %v868
      %v870 = vpop.f32.mrb[0].mxu0
      %v871 = vpop.f32.mrb[0].mxu0
      %v872 = vadd.f32 0.0, %v871
      %v873 = vpop.f32.mrb[0].mxu0
      %874 = vmatprep.mubr.bf16.mxu0 0
      %875 = vmatmul.mubr.bf16.gmra.mrb[0].mxu0 %v726
      %v876 = vpop.f32.mrb[0].mxu0
      %v877 = vadd.f32 0.0, %v876
      %v878 = vpop.f32.mrb[0].mxu0
      %v879 = vpop.f32.mrb[0].mxu0
      %v880 = vadd.f32 0.0, %v879
      %v881 = vpop.f32.mrb[0].mxu0
      %882 = vmatprep.mubr.bf16.mxu0 0
      %883 = vmatmul.mubr.bf16.gmra.mrb[0].mxu0 %v729
      %v884 = vpop.f32.mrb[0].mxu0
      %v885 = vadd.f32 0.0, %v884
      %v886 = vpop.f32.mrb[0].mxu0
      %v887 = vpop.f32.mrb[0].mxu0
      %v888 = vadd.f32 0.0, %v887
      %v889 = vpop.f32.mrb[0].mxu0
      %890 = vmatprep.mubr.bf16.mxu0 0
      %891 = vmatmul.mubr.bf16.gmra.mrb[0].mxu0 %v732
      %v892 = vpop.f32.mrb[0].mxu0
      %v893 = vadd.f32 0.0, %v892
      %v894 = vpop.f32.mrb[0].mxu0
      %v895 = vpop.f32.mrb[0].mxu0
      %v896 = vadd.f32 0.0, %v895
      %v897 = vpop.f32.mrb[0].mxu0
      %898 = vdwg.mxu0
      %v931 = vunpack.c.l.b16 %v199
      %v932 = vunpack.c.l.b16 %v200
      %v933 = vunpack.c.l.b16 %v201
      %v934 = vunpack.c.l.b16 %v202
      %v935 = vunpack.c.l.b16 %v203
      %v936 = vunpack.c.l.b16 %v204
      %v937 = vunpack.c.l.b16 %v205
      %v938 = vunpack.c.l.b16 %v206
      %v939 = vunpack.c.l.b16 %v207
      %v940 = vunpack.c.l.b16 %v208
      %v941 = vunpack.c.l.b16 %v209
      %v942 = vunpack.c.l.b16 %v210
      %v943 = vunpack.c.l.b16 %v211
      %v944 = vunpack.c.l.b16 %v212
      %v945 = vunpack.c.l.b16 %v213
      %v946 = vunpack.c.l.b16 %v214
      %v947 = vunpack.c.l.b16 %v215
      %v948 = vunpack.c.l.b16 %v216
      %v949 = vunpack.c.l.b16 %v217
      %v950 = vunpack.c.l.b16 %v218
      %v951 = vunpack.c.l.b16 %v219
      %v952 = vunpack.c.l.b16 %v220
      %v953 = vunpack.c.l.b16 %v221
      %v954 = vunpack.c.l.b16 %v222
      %v955 = vunpack.c.l.b16 %v223
      %v956 = vunpack.c.l.b16 %v224
      %v957 = vunpack.c.l.b16 %v225
      %v958 = vunpack.c.l.b16 %v226
      %v959 = vunpack.c.l.b16 %v227
      %v960 = vunpack.c.l.b16 %v228
      %v961 = vunpack.c.l.b16 %v229
      %v962 = vunpack.c.l.b16 %v230
      %v963 = vpack.c.b16 %v932, %v931
      %v964 = vpack.c.b16 %v934, %v933
      %v965 = vpack.c.b16 %v936, %v935
      %v966 = vpack.c.b16 %v938, %v937
      %v967 = vpack.c.b16 %v940, %v939
      %v968 = vpack.c.b16 %v942, %v941
      %v969 = vpack.c.b16 %v944, %v943
      %v970 = vpack.c.b16 %v946, %v945
      %v971 = vpack.c.b16 %v948, %v947
      %v972 = vpack.c.b16 %v950, %v949
      %v973 = vpack.c.b16 %v952, %v951
      %v974 = vpack.c.b16 %v954, %v953
      %v975 = vpack.c.b16 %v956, %v955
      %v976 = vpack.c.b16 %v958, %v957
      %v977 = vpack.c.b16 %v960, %v959
      %v978 = vpack.c.b16 %v962, %v961
      %v980 = vsel %vm685, %v963, 0
      %v983 = vsel %vm685, %v964, 0
      %v986 = vsel %vm685, %v965, 0
      %v989 = vsel %vm685, %v966, 0
      %v992 = vsel %vm685, %v967, 0
      %v995 = vsel %vm685, %v968, 0
      %v998 = vsel %vm685, %v969, 0
      %v1001 = vsel %vm685, %v970, 0
      %v1004 = vsel %vm685, %v971, 0
      %v1007 = vsel %vm685, %v972, 0
      %v1010 = vsel %vm685, %v973, 0
      %v1013 = vsel %vm685, %v974, 0
      %v1016 = vsel %vm685, %v975, 0
      %v1019 = vsel %vm685, %v976, 0
      %v1022 = vsel %vm685, %v977, 0
      %v1025 = vsel %vm685, %v978, 0
      %v1028 = vsel %vm734, %v231, 0
      %1030 = vmatprep.subr.bf16.mxu0 0
      %1031 = vmatpush1.bf16.msra.mxu0 %v1028
      %1032 = vmatprep.subr.bf16.mxu0 0
      %1033 = vmatpush1.bf16.msra.mxu0 0
      %1034 = vmatprep.subr.bf16.mxu0 0
      %1035 = vmatpush1.bf16.msra.mxu0 0
      %1036 = vmatprep.subr.bf16.mxu0 0
      %1037 = vmatpush1.bf16.msra.mxu0 0
      %1038 = vmatprep.subr.bf16.mxu0 0
      %1039 = vmatpush1.bf16.msra.mxu0 0
      %1040 = vmatprep.subr.bf16.mxu0 0
      %1041 = vmatpush1.bf16.msra.mxu0 0
      %1042 = vmatprep.subr.bf16.mxu0 0
      %1043 = vmatpush1.bf16.msra.mxu0 0
      %1044 = vmatprep.subr.bf16.mxu0 0
      %1045 = vmatpush1.bf16.msra.mxu0 0
      %1046 = vmatprep.subr.bf16.mxu0 0
      %1047 = vmatpush1.bf16.msra.mxu0 0
      %1048 = vmatprep.subr.bf16.mxu0 0
      %1049 = vmatpush1.bf16.msra.mxu0 0
      %1050 = vmatprep.subr.bf16.mxu0 0
      %1051 = vmatpush1.bf16.msra.mxu0 0
      %1052 = vmatprep.subr.bf16.mxu0 0
      %1053 = vmatpush1.bf16.msra.mxu0 0
      %1054 = vmatprep.subr.bf16.mxu0 0
      %1055 = vmatpush1.bf16.msra.mxu0 0
      %1056 = vmatprep.subr.bf16.mxu0 0
      %1057 = vmatpush1.bf16.msra.mxu0 0
      %1058 = vmatprep.subr.bf16.mxu0 0
      %1059 = vmatpush1.bf16.msra.mxu0 0
      %1060 = vmatprep.subr.bf16.mxu0 0
      %1061 = vmatpush1.bf16.msra.mxu0 0
      %1062 = vmatprep.mubr.bf16.mxu0 0
      %1063 = vmatmul.mubr.bf16.gmra.mrb[0].mxu0 %v980
      %v1064 = vpop.f32.mrb[0].mxu0
      %v1065 = vadd.f32 %v773, %v1064
      %v1066 = vpop.f32.mrb[0].mxu0
      %v1067 = vpop.f32.mrb[0].mxu0
      %v1068 = vadd.f32 %v776, %v1067
      %v1069 = vpop.f32.mrb[0].mxu0
      %1070 = vmatprep.mubr.bf16.mxu0 0
      %1071 = vmatmul.mubr.bf16.gmra.mrb[0].mxu0 %v983
      %v1072 = vpop.f32.mrb[0].mxu0
      %v1073 = vadd.f32 %v781, %v1072
      %v1074 = vpop.f32.mrb[0].mxu0
      %v1075 = vpop.f32.mrb[0].mxu0
      %v1076 = vadd.f32 %v784, %v1075
      %v1077 = vpop.f32.mrb[0].mxu0
      %1078 = vmatprep.mubr.bf16.mxu0 0
      %1079 = vmatmul.mubr.bf16.gmra.mrb[0].mxu0 %v986
      %v1080 = vpop.f32.mrb[0].mxu0
      %v1081 = vadd.f32 %v789, %v1080
      %v1082 = vpop.f32.mrb[0].mxu0
      %v1083 = vpop.f32.mrb[0].mxu0
      %v1084 = vadd.f32 %v792, %v1083
      %v1085 = vpop.f32.mrb[0].mxu0
      %1086 = vmatprep.mubr.bf16.mxu0 0
      %1087 = vmatmul.mubr.bf16.gmra.mrb[0].mxu0 %v989
      %v1088 = vpop.f32.mrb[0].mxu0
      %v1089 = vadd.f32 %v797, %v1088
      %v1090 = vpop.f32.mrb[0].mxu0
      %v1091 = vpop.f32.mrb[0].mxu0
      %v1092 = vadd.f32 %v800, %v1091
      %v1093 = vpop.f32.mrb[0].mxu0
      %1094 = vmatprep.mubr.bf16.mxu0 0
      %1095 = vmatmul.mubr.bf16.gmra.mrb[0].mxu0 %v992
      %v1096 = vpop.f32.mrb[0].mxu0
      %v1097 = vadd.f32 %v805, %v1096
      %v1098 = vpop.f32.mrb[0].mxu0
      %v1099 = vpop.f32.mrb[0].mxu0
      %v1100 = vadd.f32 %v808, %v1099
      %v1101 = vpop.f32.mrb[0].mxu0
      %1102 = vmatprep.mubr.bf16.mxu0 0
      %1103 = vmatmul.mubr.bf16.gmra.mrb[0].mxu0 %v995
      %v1104 = vpop.f32.mrb[0].mxu0
      %v1105 = vadd.f32 %v813, %v1104
      %v1106 = vpop.f32.mrb[0].mxu0
      %v1107 = vpop.f32.mrb[0].mxu0
      %v1108 = vadd.f32 %v816, %v1107
      %v1109 = vpop.f32.mrb[0].mxu0
      %1110 = vmatprep.mubr.bf16.mxu0 0
      %1111 = vmatmul.mubr.bf16.gmra.mrb[0].mxu0 %v998
      %v1112 = vpop.f32.mrb[0].mxu0
      %v1113 = vadd.f32 %v821, %v1112
      %v1114 = vpop.f32.mrb[0].mxu0
      %v1115 = vpop.f32.mrb[0].mxu0
      %v1116 = vadd.f32 %v824, %v1115
      %v1117 = vpop.f32.mrb[0].mxu0
      %1118 = vmatprep.mubr.bf16.mxu0 0
      %1119 = vmatmul.mubr.bf16.gmra.mrb[0].mxu0 %v1001
      %v1120 = vpop.f32.mrb[0].mxu0
      %v1121 = vadd.f32 %v829, %v1120
      %v1122 = vpop.f32.mrb[0].mxu0
      %v1123 = vpop.f32.mrb[0].mxu0
      %v1124 = vadd.f32 %v832, %v1123
      %v1125 = vpop.f32.mrb[0].mxu0
      %1126 = vmatprep.mubr.bf16.mxu0 0
      %1127 = vmatmul.mubr.bf16.gmra.mrb[0].mxu0 %v1004
      %v1128 = vpop.f32.mrb[0].mxu0
      %v1129 = vadd.f32 %v837, %v1128
      %v1130 = vpop.f32.mrb[0].mxu0
      %v1131 = vpop.f32.mrb[0].mxu0
      %v1132 = vadd.f32 %v840, %v1131
      %v1133 = vpop.f32.mrb[0].mxu0
      %1134 = vmatprep.mubr.bf16.mxu0 0
      %1135 = vmatmul.mubr.bf16.gmra.mrb[0].mxu0 %v1007
      %v1136 = vpop.f32.mrb[0].mxu0
      %v1137 = vadd.f32 %v845, %v1136
      %v1138 = vpop.f32.mrb[0].mxu0
      %v1139 = vpop.f32.mrb[0].mxu0
      %v1140 = vadd.f32 %v848, %v1139
      %v1141 = vpop.f32.mrb[0].mxu0
      %1142 = vmatprep.mubr.bf16.mxu0 0
      %1143 = vmatmul.mubr.bf16.gmra.mrb[0].mxu0 %v1010
      %v1144 = vpop.f32.mrb[0].mxu0
      %v1145 = vadd.f32 %v853, %v1144
      %v1146 = vpop.f32.mrb[0].mxu0
      %v1147 = vpop.f32.mrb[0].mxu0
      %v1148 = vadd.f32 %v856, %v1147
      %v1149 = vpop.f32.mrb[0].mxu0
      %1150 = vmatprep.mubr.bf16.mxu0 0
      %1151 = vmatmul.mubr.bf16.gmra.mrb[0].mxu0 %v1013
      %v1152 = vpop.f32.mrb[0].mxu0
      %v1153 = vadd.f32 %v861, %v1152
      %v1154 = vpop.f32.mrb[0].mxu0
      %v1155 = vpop.f32.mrb[0].mxu0
      %v1156 = vadd.f32 %v864, %v1155
      %v1157 = vpop.f32.mrb[0].mxu0
      %1158 = vmatprep.mubr.bf16.mxu0 0
      %1159 = vmatmul.mubr.bf16.gmra.mrb[0].mxu0 %v1016
      %v1160 = vpop.f32.mrb[0].mxu0
      %v1161 = vadd.f32 %v869, %v1160
      %v1162 = vpop.f32.mrb[0].mxu0
      %v1163 = vpop.f32.mrb[0].mxu0
      %v1164 = vadd.f32 %v872, %v1163
      %v1165 = vpop.f32.mrb[0].mxu0
      %1166 = vmatprep.mubr.bf16.mxu0 0
      %1167 = vmatmul.mubr.bf16.gmra.mrb[0].mxu0 %v1019
      %v1168 = vpop.f32.mrb[0].mxu0
      %v1169 = vadd.f32 %v877, %v1168
      %v1170 = vpop.f32.mrb[0].mxu0
      %v1171 = vpop.f32.mrb[0].mxu0
      %v1172 = vadd.f32 %v880, %v1171
      %v1173 = vpop.f32.mrb[0].mxu0
      %1174 = vmatprep.mubr.bf16.mxu0 0
      %1175 = vmatmul.mubr.bf16.gmra.mrb[0].mxu0 %v1022
      %v1176 = vpop.f32.mrb[0].mxu0
      %v1177 = vadd.f32 %v885, %v1176
      %v1178 = vpop.f32.mrb[0].mxu0
      %v1179 = vpop.f32.mrb[0].mxu0
      %v1180 = vadd.f32 %v888, %v1179
      %v1181 = vpop.f32.mrb[0].mxu0
      %1182 = vmatprep.mubr.bf16.mxu0 0
      %1183 = vmatmul.mubr.bf16.gmra.mrb[0].mxu0 %v1025
      %v1184 = vpop.f32.mrb[0].mxu0
      %v1185 = vadd.f32 %v893, %v1184
      %v1186 = vpop.f32.mrb[0].mxu0
      %v1187 = vpop.f32.mrb[0].mxu0
      %v1188 = vadd.f32 %v896, %v1187
      %v1189 = vpop.f32.mrb[0].mxu0
      %1190 = vdwg.mxu0
      %v1191 = vld [vmem:[%s192] sm:$0xe]
      %v1192 = vld [vmem:[%s192 + $0xc] sm:$0xe]
      %v1193 = vld [vmem:[%s192 + $0x18] sm:$0xe]
      %v1194 = vld [vmem:[%s192 + $0x24] sm:$0xe]
      %v1195 = vld [vmem:[%s192 + $0x30] sm:$0xe]
      %v1196 = vld [vmem:[%s192 + $0x3c] sm:$0xe]
      %v1197 = vld [vmem:[%s192 + $0x48] sm:$0xe]
      %v1198 = vld [vmem:[%s192 + $0x54] sm:$0xe]
      %v1199 = vld [vmem:[%s192 + $0x60] sm:$0xe]
      %v1200 = vld [vmem:[%s192 + $0x6c] sm:$0xe]
      %v1201 = vld [vmem:[%s192 + $0x78] sm:$0xe]
      %v1202 = vld [vmem:[%s192 + $0x84] sm:$0xe]
      %v1203 = vld [vmem:[%s192 + $0x90] sm:$0xe]
      %v1204 = vld [vmem:[%s192 + $0x9c] sm:$0xe]
      %v1205 = vld [vmem:[%s192 + $0xa8] sm:$0xe]
      %v1206 = vld [vmem:[%s192 + $0xb4] sm:$0xe]
      %vm1239 = vcmask 1042432
      %vm1240 = vcmask 1046532
      %vm1241 = vmor %vm1239, %vm1240
      %v1242 = vrot.slane %v1191, 5
      %v1243 = vrot.slane %v1242, 4
      %v1244 = vrot.slane %v200, 5
      %v1245 = vsel %vm1241, %v1243, %v1244
      %v1246 = vrot.slane %v1244, 4
      %v1247 = vrot.slane %v232, 5
      %v1248 = vsel %vm1241, %v1246, %v1247
      %v1249 = vrot.slane %v1192, 5
      %v1250 = vrot.slane %v1249, 4
      %v1251 = vrot.slane %v202, 5
      %v1252 = vsel %vm1241, %v1250, %v1251
      %v1253 = vrot.slane %v1251, 4
      %v1254 = vrot.slane %v233, 5
      %v1255 = vsel %vm1241, %v1253, %v1254
      %v1256 = vrot.slane %v1193, 5
      %v1257 = vrot.slane %v1256, 4
      %v1258 = vrot.slane %v204, 5
      %v1259 = vsel %vm1241, %v1257, %v1258
      %v1260 = vrot.slane %v1258, 4
      %v1261 = vrot.slane %v234, 5
      %v1262 = vsel %vm1241, %v1260, %v1261
      %v1263 = vrot.slane %v1194, 5
      %v1264 = vrot.slane %v1263, 4
      %v1265 = vrot.slane %v206, 5
      %v1266 = vsel %vm1241, %v1264, %v1265
      %v1267 = vrot.slane %v1265, 4
      %v1268 = vrot.slane %v235, 5
      %v1269 = vsel %vm1241, %v1267, %v1268
      %v1270 = vrot.slane %v1195, 5
      %v1271 = vrot.slane %v1270, 4
      %v1272 = vrot.slane %v208, 5
      %v1273 = vsel %vm1241, %v1271, %v1272
      %v1274 = vrot.slane %v1272, 4
      %v1275 = vrot.slane %v236, 5
      %v1276 = vsel %vm1241, %v1274, %v1275
      %v1277 = vrot.slane %v1196, 5
      %v1278 = vrot.slane %v1277, 4
      %v1279 = vrot.slane %v210, 5
      %v1280 = vsel %vm1241, %v1278, %v1279
      %v1281 = vrot.slane %v1279, 4
      %v1282 = vrot.slane %v237, 5
      %v1283 = vsel %vm1241, %v1281, %v1282
      %v1284 = vrot.slane %v1197, 5
      %v1285 = vrot.slane %v1284, 4
      %v1286 = vrot.slane %v212, 5
      %v1287 = vsel %vm1241, %v1285, %v1286
      %v1288 = vrot.slane %v1286, 4
      %v1289 = vrot.slane %v238, 5
      %v1290 = vsel %vm1241, %v1288, %v1289
      %v1291 = vrot.slane %v1198, 5
      %v1292 = vrot.slane %v1291, 4
      %v1293 = vrot.slane %v214, 5
      %v1294 = vsel %vm1241, %v1292, %v1293
      %v1295 = vrot.slane %v1293, 4
      %v1296 = vrot.slane %v239, 5
      %v1297 = vsel %vm1241, %v1295, %v1296
      %v1298 = vrot.slane %v1199, 5
      %v1299 = vrot.slane %v1298, 4
      %v1300 = vrot.slane %v216, 5
      %v1301 = vsel %vm1241, %v1299, %v1300
      %v1302 = vrot.slane %v1300, 4
      %v1303 = vrot.slane %v240, 5
      %v1304 = vsel %vm1241, %v1302, %v1303
      %v1305 = vrot.slane %v1200, 5
      %v1306 = vrot.slane %v1305, 4
      %v1307 = vrot.slane %v218, 5
      %v1308 = vsel %vm1241, %v1306, %v1307
      %v1309 = vrot.slane %v1307, 4
      %v1310 = vrot.slane %v241, 5
      %v1311 = vsel %vm1241, %v1309, %v1310
      %v1312 = vrot.slane %v1201, 5
      %v1313 = vrot.slane %v1312, 4
      %v1314 = vrot.slane %v220, 5
      %v1315 = vsel %vm1241, %v1313, %v1314
      %v1316 = vrot.slane %v1314, 4
      %v1317 = vrot.slane %v242, 5
      %v1318 = vsel %vm1241, %v1316, %v1317
      %v1319 = vrot.slane %v1202, 5
      %v1320 = vrot.slane %v1319, 4
      %v1321 = vrot.slane %v222, 5
      %v1322 = vsel %vm1241, %v1320, %v1321
      %v1323 = vrot.slane %v1321, 4
      %v1324 = vrot.slane %v243, 5
      %v1325 = vsel %vm1241, %v1323, %v1324
      %v1326 = vrot.slane %v1203, 5
      %v1327 = vrot.slane %v1326, 4
      %v1328 = vrot.slane %v224, 5
      %v1329 = vsel %vm1241, %v1327, %v1328
      %v1330 = vrot.slane %v1328, 4
      %v1331 = vrot.slane %v244, 5
      %v1332 = vsel %vm1241, %v1330, %v1331
      %v1333 = vrot.slane %v1204, 5
      %v1334 = vrot.slane %v1333, 4
      %v1335 = vrot.slane %v226, 5
      %v1336 = vsel %vm1241, %v1334, %v1335
      %v1337 = vrot.slane %v1335, 4
      %v1338 = vrot.slane %v245, 5
      %v1339 = vsel %vm1241, %v1337, %v1338
      %v1340 = vrot.slane %v1205, 5
      %v1341 = vrot.slane %v1340, 4
      %v1342 = vrot.slane %v228, 5
      %v1343 = vsel %vm1241, %v1341, %v1342
      %v1344 = vrot.slane %v1342, 4
      %v1345 = vrot.slane %v246, 5
      %v1346 = vsel %vm1241, %v1344, %v1345
      %v1347 = vrot.slane %v1206, 5
      %v1348 = vrot.slane %v1347, 4
      %v1349 = vrot.slane %v230, 5
      %v1350 = vsel %vm1241, %v1348, %v1349
      %v1351 = vrot.slane %v1349, 4
      %v1352 = vrot.slane %v247, 5
      %v1353 = vsel %vm1241, %v1351, %v1352
      %s1354 = scalar_lea.vmem %s1, 4
      %v1355 = vld [vmem:[%s1354] sm:$0x3]
      %v1356 = vunpack.c.l.b16 %v1245
      %v1357 = vunpack.c.l.b16 %v1248
      %v1358 = vunpack.c.l.b16 %v1252
      %v1359 = vunpack.c.l.b16 %v1255
      %v1360 = vunpack.c.l.b16 %v1259
      %v1361 = vunpack.c.l.b16 %v1262
      %v1362 = vunpack.c.l.b16 %v1266
      %v1363 = vunpack.c.l.b16 %v1269
      %v1364 = vunpack.c.l.b16 %v1273
      %v1365 = vunpack.c.l.b16 %v1276
      %v1366 = vunpack.c.l.b16 %v1280
      %v1367 = vunpack.c.l.b16 %v1283
      %v1368 = vunpack.c.l.b16 %v1287
      %v1369 = vunpack.c.l.b16 %v1290
      %v1370 = vunpack.c.l.b16 %v1294
      %v1371 = vunpack.c.l.b16 %v1297
      %v1372 = vunpack.c.l.b16 %v1301
      %v1373 = vunpack.c.l.b16 %v1304
      %v1374 = vunpack.c.l.b16 %v1308
      %v1375 = vunpack.c.l.b16 %v1311
      %v1376 = vunpack.c.l.b16 %v1315
      %v1377 = vunpack.c.l.b16 %v1318
      %v1378 = vunpack.c.l.b16 %v1322
      %v1379 = vunpack.c.l.b16 %v1325
      %v1380 = vunpack.c.l.b16 %v1329
      %v1381 = vunpack.c.l.b16 %v1332
      %v1382 = vunpack.c.l.b16 %v1336
      %v1383 = vunpack.c.l.b16 %v1339
      %v1384 = vunpack.c.l.b16 %v1343
      %v1385 = vunpack.c.l.b16 %v1346
      %v1386 = vunpack.c.l.b16 %v1350
      %v1387 = vunpack.c.l.b16 %v1353
      %v1388 = vpack.c.b16 %v1357, %v1356
      %v1389 = vpack.c.b16 %v1359, %v1358
      %v1390 = vpack.c.b16 %v1361, %v1360
      %v1391 = vpack.c.b16 %v1363, %v1362
      %v1392 = vpack.c.b16 %v1365, %v1364
      %v1393 = vpack.c.b16 %v1367, %v1366
      %v1394 = vpack.c.b16 %v1369, %v1368
      %v1395 = vpack.c.b16 %v1371, %v1370
      %v1396 = vpack.c.b16 %v1373, %v1372
      %v1397 = vpack.c.b16 %v1375, %v1374
      %v1398 = vpack.c.b16 %v1377, %v1376
      %v1399 = vpack.c.b16 %v1379, %v1378
      %v1400 = vpack.c.b16 %v1381, %v1380
      %v1401 = vpack.c.b16 %v1383, %v1382
      %v1402 = vpack.c.b16 %v1385, %v1384
      %v1403 = vpack.c.b16 %v1387, %v1386
      %v1405 = vsel %vm685, %v1388, 0
      %v1408 = vsel %vm685, %v1389, 0
      %v1411 = vsel %vm685, %v1390, 0
      %v1414 = vsel %vm685, %v1391, 0
      %v1417 = vsel %vm685, %v1392, 0
      %v1420 = vsel %vm685, %v1393, 0
      %v1423 = vsel %vm685, %v1394, 0
      %v1426 = vsel %vm685, %v1395, 0
      %v1429 = vsel %vm685, %v1396, 0
      %v1432 = vsel %vm685, %v1397, 0
      %v1435 = vsel %vm685, %v1398, 0
      %v1438 = vsel %vm685, %v1399, 0
      %v1441 = vsel %vm685, %v1400, 0
      %v1444 = vsel %vm685, %v1401, 0
      %v1447 = vsel %vm685, %v1402, 0
      %v1450 = vsel %vm685, %v1403, 0
      %v1453 = vsel %vm734, %v1355, 0
      %1455 = vmatprep.subr.bf16.mxu0 0
      %1456 = vmatpush1.bf16.msra.mxu0 %v1453
      %1457 = vmatprep.subr.bf16.mxu0 0
      %1458 = vmatpush1.bf16.msra.mxu0 0
      %1459 = vmatprep.subr.bf16.mxu0 0
      %1460 = vmatpush1.bf16.msra.mxu0 0
      %1461 = vmatprep.subr.bf16.mxu0 0
      %1462 = vmatpush1.bf16.msra.mxu0 0
      %1463 = vmatprep.subr.bf16.mxu0 0
      %1464 = vmatpush1.bf16.msra.mxu0 0
      %1465 = vmatprep.subr.bf16.mxu0 0
      %1466 = vmatpush1.bf16.msra.mxu0 0
      %1467 = vmatprep.subr.bf16.mxu0 0
      %1468 = vmatpush1.bf16.msra.mxu0 0
      %1469 = vmatprep.subr.bf16.mxu0 0
      %1470 = vmatpush1.bf16.msra.mxu0 0
      %1471 = vmatprep.subr.bf16.mxu0 0
      %1472 = vmatpush1.bf16.msra.mxu0 0
      %1473 = vmatprep.subr.bf16.mxu0 0
      %1474 = vmatpush1.bf16.msra.mxu0 0
      %1475 = vmatprep.subr.bf16.mxu0 0
      %1476 = vmatpush1.bf16.msra.mxu0 0
      %1477 = vmatprep.subr.bf16.mxu0 0
      %1478 = vmatpush1.bf16.msra.mxu0 0
      %1479 = vmatprep.subr.bf16.mxu0 0
      %1480 = vmatpush1.bf16.msra.mxu0 0
      %1481 = vmatprep.subr.bf16.mxu0 0
      %1482 = vmatpush1.bf16.msra.mxu0 0
      %1483 = vmatprep.subr.bf16.mxu0 0
      %1484 = vmatpush1.bf16.msra.mxu0 0
      %1485 = vmatprep.subr.bf16.mxu0 0
      %1486 = vmatpush1.bf16.msra.mxu0 0
      %1487 = vmatprep.mubr.bf16.mxu0 0
      %1488 = vmatmul.mubr.bf16.gmra.mrb[0].mxu0 %v1405
      %v1489 = vpop.f32.mrb[0].mxu0
      %v1490 = vadd.f32 0.0, %v1489
      %v1491 = vpop.f32.mrb[0].mxu0
      %v1492 = vpop.f32.mrb[0].mxu0
      %v1493 = vadd.f32 0.0, %v1492
      %v1494 = vpop.f32.mrb[0].mxu0
      %1495 = vmatprep.mubr.bf16.mxu0 0
      %1496 = vmatmul.mubr.bf16.gmra.mrb[0].mxu0 %v1408
      %v1497 = vpop.f32.mrb[0].mxu0
      %v1498 = vadd.f32 0.0, %v1497
      %v1499 = vpop.f32.mrb[0].mxu0
      %v1500 = vpop.f32.mrb[0].mxu0
      %v1501 = vadd.f32 0.0, %v1500
      %v1502 = vpop.f32.mrb[0].mxu0
      %1503 = vmatprep.mubr.bf16.mxu0 0
      %1504 = vmatmul.mubr.bf16.gmra.mrb[0].mxu0 %v1411
      %v1505 = vpop.f32.mrb[0].mxu0
      %v1506 = vadd.f32 0.0, %v1505
      %v1507 = vpop.f32.mrb[0].mxu0
      %v1508 = vpop.f32.mrb[0].mxu0
      %v1509 = vadd.f32 0.0, %v1508
      %v1510 = vpop.f32.mrb[0].mxu0
      %1511 = vmatprep.mubr.bf16.mxu0 0
      %1512 = vmatmul.mubr.bf16.gmra.mrb[0].mxu0 %v1414
      %v1513 = vpop.f32.mrb[0].mxu0
      %v1514 = vadd.f32 0.0, %v1513
      %v1515 = vpop.f32.mrb[0].mxu0
      %v1516 = vpop.f32.mrb[0].mxu0
      %v1517 = vadd.f32 0.0, %v1516
      %v1518 = vpop.f32.mrb[0].mxu0
      %1519 = vmatprep.mubr.bf16.mxu0 0
      %1520 = vmatmul.mubr.bf16.gmra.mrb[0].mxu0 %v1417
      %v1521 = vpop.f32.mrb[0].mxu0
      %v1522 = vadd.f32 0.0, %v1521
      %v1523 = vpop.f32.mrb[0].mxu0
      %v1524 = vpop.f32.mrb[0].mxu0
      %v1525 = vadd.f32 0.0, %v1524
      %v1526 = vpop.f32.mrb[0].mxu0
      %1527 = vmatprep.mubr.bf16.mxu0 0
      %1528 = vmatmul.mubr.bf16.gmra.mrb[0].mxu0 %v1420
      %v1529 = vpop.f32.mrb[0].mxu0
      %v1530 = vadd.f32 0.0, %v1529
      %v1531 = vpop.f32.mrb[0].mxu0
      %v1532 = vpop.f32.mrb[0].mxu0
      %v1533 = vadd.f32 0.0, %v1532
      %v1534 = vpop.f32.mrb[0].mxu0
      %1535 = vmatprep.mubr.bf16.mxu0 0
      %1536 = vmatmul.mubr.bf16.gmra.mrb[0].mxu0 %v1423
      %v1537 = vpop.f32.mrb[0].mxu0
      %v1538 = vadd.f32 0.0, %v1537
      %v1539 = vpop.f32.mrb[0].mxu0
      %v1540 = vpop.f32.mrb[0].mxu0
      %v1541 = vadd.f32 0.0, %v1540
      %v1542 = vpop.f32.mrb[0].mxu0
      %1543 = vmatprep.mubr.bf16.mxu0 0
      %1544 = vmatmul.mubr.bf16.gmra.mrb[0].mxu0 %v1426
      %v1545 = vpop.f32.mrb[0].mxu0
      %v1546 = vadd.f32 0.0, %v1545
      %v1547 = vpop.f32.mrb[0].mxu0
      %v1548 = vpop.f32.mrb[0].mxu0
      %v1549 = vadd.f32 0.0, %v1548
      %v1550 = vpop.f32.mrb[0].mxu0
      %1551 = vmatprep.mubr.bf16.mxu0 0
      %1552 = vmatmul.mubr.bf16.gmra.mrb[0].mxu0 %v1429
      %v1553 = vpop.f32.mrb[0].mxu0
      %v1554 = vadd.f32 0.0, %v1553
      %v1555 = vpop.f32.mrb[0].mxu0
      %v1556 = vpop.f32.mrb[0].mxu0
      %v1557 = vadd.f32 0.0, %v1556
      %v1558 = vpop.f32.mrb[0].mxu0
      %1559 = vmatprep.mubr.bf16.mxu0 0
      %1560 = vmatmul.mubr.bf16.gmra.mrb[0].mxu0 %v1432
      %v1561 = vpop.f32.mrb[0].mxu0
      %v1562 = vadd.f32 0.0, %v1561
      %v1563 = vpop.f32.mrb[0].mxu0
      %v1564 = vpop.f32.mrb[0].mxu0
      %v1565 = vadd.f32 0.0, %v1564
      %v1566 = vpop.f32.mrb[0].mxu0
      %1567 = vmatprep.mubr.bf16.mxu0 0
      %1568 = vmatmul.mubr.bf16.gmra.mrb[0].mxu0 %v1435
      %v1569 = vpop.f32.mrb[0].mxu0
      %v1570 = vadd.f32 0.0, %v1569
      %v1571 = vpop.f32.mrb[0].mxu0
      %v1572 = vpop.f32.mrb[0].mxu0
      %v1573 = vadd.f32 0.0, %v1572
      %v1574 = vpop.f32.mrb[0].mxu0
      %1575 = vmatprep.mubr.bf16.mxu0 0
      %1576 = vmatmul.mubr.bf16.gmra.mrb[0].mxu0 %v1438
      %v1577 = vpop.f32.mrb[0].mxu0
      %v1578 = vadd.f32 0.0, %v1577
      %v1579 = vpop.f32.mrb[0].mxu0
      %v1580 = vpop.f32.mrb[0].mxu0
      %v1581 = vadd.f32 0.0, %v1580
      %v1582 = vpop.f32.mrb[0].mxu0
      %1583 = vmatprep.mubr.bf16.mxu0 0
      %1584 = vmatmul.mubr.bf16.gmra.mrb[0].mxu0 %v1441
      %v1585 = vpop.f32.mrb[0].mxu0
      %v1586 = vadd.f32 0.0, %v1585
      %v1587 = vpop.f32.mrb[0].mxu0
      %v1588 = vpop.f32.mrb[0].mxu0
      %v1589 = vadd.f32 0.0, %v1588
      %v1590 = vpop.f32.mrb[0].mxu0
      %1591 = vmatprep.mubr.bf16.mxu0 0
      %1592 = vmatmul.mubr.bf16.gmra.mrb[0].mxu0 %v1444
      %v1593 = vpop.f32.mrb[0].mxu0
      %v1594 = vadd.f32 0.0, %v1593
      %v1595 = vpop.f32.mrb[0].mxu0
      %v1596 = vpop.f32.mrb[0].mxu0
      %v1597 = vadd.f32 0.0, %v1596
      %v1598 = vpop.f32.mrb[0].mxu0
      %1599 = vmatprep.mubr.bf16.mxu0 0
      %1600 = vmatmul.mubr.bf16.gmra.mrb[0].mxu0 %v1447
      %v1601 = vpop.f32.mrb[0].mxu0
      %v1602 = vadd.f32 0.0, %v1601
      %v1603 = vpop.f32.mrb[0].mxu0
      %v1604 = vpop.f32.mrb[0].mxu0
      %v1605 = vadd.f32 0.0, %v1604
      %v1606 = vpop.f32.mrb[0].mxu0
      %1607 = vmatprep.mubr.bf16.mxu0 0
      %1608 = vmatmul.mubr.bf16.gmra.mrb[0].mxu0 %v1450
      %v1609 = vpop.f32.mrb[0].mxu0
      %v1610 = vadd.f32 0.0, %v1609
      %v1611 = vpop.f32.mrb[0].mxu0
      %v1612 = vpop.f32.mrb[0].mxu0
      %v1613 = vadd.f32 0.0, %v1612
      %v1614 = vpop.f32.mrb[0].mxu0
      %1615 = vdwg.mxu0
      %v1616 = vadd.f32 %v1065, %v1490
      %v1617 = vadd.f32 %v1068, %v1493
      %v1618 = vadd.f32 %v1073, %v1498
      %v1619 = vadd.f32 %v1076, %v1501
      %v1620 = vadd.f32 %v1081, %v1506
      %v1621 = vadd.f32 %v1084, %v1509
      %v1622 = vadd.f32 %v1089, %v1514
      %v1623 = vadd.f32 %v1092, %v1517
      %v1624 = vadd.f32 %v1097, %v1522
      %v1625 = vadd.f32 %v1100, %v1525
      %v1626 = vadd.f32 %v1105, %v1530
      %v1627 = vadd.f32 %v1108, %v1533
      %v1628 = vadd.f32 %v1113, %v1538
      %v1629 = vadd.f32 %v1116, %v1541
      %v1630 = vadd.f32 %v1121, %v1546
      %v1631 = vadd.f32 %v1124, %v1549
      %v1632 = vadd.f32 %v1129, %v1554
      %v1633 = vadd.f32 %v1132, %v1557
      %v1634 = vadd.f32 %v1137, %v1562
      %v1635 = vadd.f32 %v1140, %v1565
      %v1636 = vadd.f32 %v1145, %v1570
      %v1637 = vadd.f32 %v1148, %v1573
      %v1638 = vadd.f32 %v1153, %v1578
      %v1639 = vadd.f32 %v1156, %v1581
      %v1640 = vadd.f32 %v1161, %v1586
      %v1641 = vadd.f32 %v1164, %v1589
      %v1642 = vadd.f32 %v1169, %v1594
      %v1643 = vadd.f32 %v1172, %v1597
      %v1644 = vadd.f32 %v1177, %v1602
      %v1645 = vadd.f32 %v1180, %v1605
      %v1646 = vadd.f32 %v1185, %v1610
      %v1647 = vadd.f32 %v1188, %v1613
      %s1648 = scalar_lea.vmem %s192, 12
      %v1649 = vld [vmem:[%s1648] sm:$0xf]
      %v1650 = vld [vmem:[%s1648 + $0x4] sm:$0xf]
      %v1651 = vld [vmem:[%s1648 + $0xc] sm:$0xf]
      %v1652 = vld [vmem:[%s1648 + $0x10] sm:$0xf]
      %v1653 = vld [vmem:[%s1648 + $0x18] sm:$0xf]
      %v1654 = vld [vmem:[%s1648 + $0x1c] sm:$0xf]
      %v1655 = vld [vmem:[%s1648 + $0x24] sm:$0xf]
      %v1656 = vld [vmem:[%s1648 + $0x28] sm:$0xf]
      %v1657 = vld [vmem:[%s1648 + $0x30] sm:$0xf]
      %v1658 = vld [vmem:[%s1648 + $0x34] sm:$0xf]
      %v1659 = vld [vmem:[%s1648 + $0x3c] sm:$0xf]
      %v1660 = vld [vmem:[%s1648 + $0x40] sm:$0xf]
      %v1661 = vld [vmem:[%s1648 + $0x48] sm:$0xf]
      %v1662 = vld [vmem:[%s1648 + $0x4c] sm:$0xf]
      %v1663 = vld [vmem:[%s1648 + $0x54] sm:$0xf]
      %v1664 = vld [vmem:[%s1648 + $0x58] sm:$0xf]
      %v1665 = vld [vmem:[%s1648 + $0x60] sm:$0xf]
      %v1666 = vld [vmem:[%s1648 + $0x64] sm:$0xf]
      %v1667 = vld [vmem:[%s1648 + $0x6c] sm:$0xf]
      %v1668 = vld [vmem:[%s1648 + $0x70] sm:$0xf]
      %v1669 = vld [vmem:[%s1648 + $0x78] sm:$0xf]
      %v1670 = vld [vmem:[%s1648 + $0x7c] sm:$0xf]
      %v1671 = vld [vmem:[%s1648 + $0x84] sm:$0xf]
      %v1672 = vld [vmem:[%s1648 + $0x88] sm:$0xf]
      %v1673 = vld [vmem:[%s1648 + $0x90] sm:$0xf]
      %v1674 = vld [vmem:[%s1648 + $0x94] sm:$0xf]
      %v1675 = vld [vmem:[%s1648 + $0x9c] sm:$0xf]
      %v1676 = vld [vmem:[%s1648 + $0xa0] sm:$0xf]
      %v1677 = vld [vmem:[%s1648 + $0xa8] sm:$0xf]
      %v1678 = vld [vmem:[%s1648 + $0xac] sm:$0xf]
      %v1679 = vld [vmem:[%s1648 + $0xb4] sm:$0xf]
      %v1680 = vld [vmem:[%s1648 + $0xb8] sm:$0xf]
      %s1681 = scalar_lea.vmem %s1, 6
      %v1682 = vld [vmem:[%s1681] sm:$0x3]
      %v1715 = vunpack.c.l.b16 %v1649
      %v1716 = vunpack.c.l.b16 %v1650
      %v1717 = vunpack.c.l.b16 %v1651
      %v1718 = vunpack.c.l.b16 %v1652
      %v1719 = vunpack.c.l.b16 %v1653
      %v1720 = vunpack.c.l.b16 %v1654
      %v1721 = vunpack.c.l.b16 %v1655
      %v1722 = vunpack.c.l.b16 %v1656
      %v1723 = vunpack.c.l.b16 %v1657
      %v1724 = vunpack.c.l.b16 %v1658
      %v1725 = vunpack.c.l.b16 %v1659
      %v1726 = vunpack.c.l.b16 %v1660
      %v1727 = vunpack.c.l.b16 %v1661
      %v1728 = vunpack.c.l.b16 %v1662
      %v1729 = vunpack.c.l.b16 %v1663
      %v1730 = vunpack.c.l.b16 %v1664
      %v1731 = vunpack.c.l.b16 %v1665
      %v1732 = vunpack.c.l.b16 %v1666
      %v1733 = vunpack.c.l.b16 %v1667
      %v1734 = vunpack.c.l.b16 %v1668
      %v1735 = vunpack.c.l.b16 %v1669
      %v1736 = vunpack.c.l.b16 %v1670
      %v1737 = vunpack.c.l.b16 %v1671
      %v1738 = vunpack.c.l.b16 %v1672
      %v1739 = vunpack.c.l.b16 %v1673
      %v1740 = vunpack.c.l.b16 %v1674
      %v1741 = vunpack.c.l.b16 %v1675
      %v1742 = vunpack.c.l.b16 %v1676
      %v1743 = vunpack.c.l.b16 %v1677
      %v1744 = vunpack.c.l.b16 %v1678
      %v1745 = vunpack.c.l.b16 %v1679
      %v1746 = vunpack.c.l.b16 %v1680
      %v1747 = vpack.c.b16 %v1716, %v1715
      %v1748 = vpack.c.b16 %v1718, %v1717
      %v1749 = vpack.c.b16 %v1720, %v1719
      %v1750 = vpack.c.b16 %v1722, %v1721
      %v1751 = vpack.c.b16 %v1724, %v1723
      %v1752 = vpack.c.b16 %v1726, %v1725
      %v1753 = vpack.c.b16 %v1728, %v1727
      %v1754 = vpack.c.b16 %v1730, %v1729
      %v1755 = vpack.c.b16 %v1732, %v1731
      %v1756 = vpack.c.b16 %v1734, %v1733
      %v1757 = vpack.c.b16 %v1736, %v1735
      %v1758 = vpack.c.b16 %v1738, %v1737
      %v1759 = vpack.c.b16 %v1740, %v1739
      %v1760 = vpack.c.b16 %v1742, %v1741
      %v1761 = vpack.c.b16 %v1744, %v1743
      %v1762 = vpack.c.b16 %v1746, %v1745
      %v1764 = vsel %vm685, %v1747, 0
      %v1767 = vsel %vm685, %v1748, 0
      %v1770 = vsel %vm685, %v1749, 0
      %v1773 = vsel %vm685, %v1750, 0
      %v1776 = vsel %vm685, %v1751, 0
      %v1779 = vsel %vm685, %v1752, 0
      %v1782 = vsel %vm685, %v1753, 0
      %v1785 = vsel %vm685, %v1754, 0
      %v1788 = vsel %vm685, %v1755, 0
      %v1791 = vsel %vm685, %v1756, 0
      %v1794 = vsel %vm685, %v1757, 0
      %v1797 = vsel %vm685, %v1758, 0
      %v1800 = vsel %vm685, %v1759, 0
      %v1803 = vsel %vm685, %v1760, 0
      %v1806 = vsel %vm685, %v1761, 0
      %v1809 = vsel %vm685, %v1762, 0
      %v1812 = vsel %vm734, %v1682, 0
      %1814 = vmatprep.subr.bf16.mxu0 0
      %1815 = vmatpush1.bf16.msra.mxu0 %v1812
      %1816 = vmatprep.subr.bf16.mxu0 0
      %1817 = vmatpush1.bf16.msra.mxu0 0
      %1818 = vmatprep.subr.bf16.mxu0 0
      %1819 = vmatpush1.bf16.msra.mxu0 0
      %1820 = vmatprep.subr.bf16.mxu0 0
      %1821 = vmatpush1.bf16.msra.mxu0 0
      %1822 = vmatprep.subr.bf16.mxu0 0
      %1823 = vmatpush1.bf16.msra.mxu0 0
      %1824 = vmatprep.subr.bf16.mxu0 0
      %1825 = vmatpush1.bf16.msra.mxu0 0
      %1826 = vmatprep.subr.bf16.mxu0 0
      %1827 = vmatpush1.bf16.msra.mxu0 0
      %1828 = vmatprep.subr.bf16.mxu0 0
      %1829 = vmatpush1.bf16.msra.mxu0 0
      %1830 = vmatprep.subr.bf16.mxu0 0
      %1831 = vmatpush1.bf16.msra.mxu0 0
      %1832 = vmatprep.subr.bf16.mxu0 0
      %1833 = vmatpush1.bf16.msra.mxu0 0
      %1834 = vmatprep.subr.bf16.mxu0 0
      %1835 = vmatpush1.bf16.msra.mxu0 0
      %1836 = vmatprep.subr.bf16.mxu0 0
      %1837 = vmatpush1.bf16.msra.mxu0 0
      %1838 = vmatprep.subr.bf16.mxu0 0
      %1839 = vmatpush1.bf16.msra.mxu0 0
      %1840 = vmatprep.subr.bf16.mxu0 0
      %1841 = vmatpush1.bf16.msra.mxu0 0
      %1842 = vmatprep.subr.bf16.mxu0 0
      %1843 = vmatpush1.bf16.msra.mxu0 0
      %1844 = vmatprep.subr.bf16.mxu0 0
      %1845 = vmatpush1.bf16.msra.mxu0 0
      %1846 = vmatprep.mubr.bf16.mxu0 0
      %1847 = vmatmul.mubr.bf16.gmra.mrb[0].mxu0 %v1764
      %v1848 = vpop.f32.mrb[0].mxu0
      %v1849 = vadd.f32 0.0, %v1848
      %v1850 = vpop.f32.mrb[0].mxu0
      %v1851 = vpop.f32.mrb[0].mxu0
      %v1852 = vadd.f32 0.0, %v1851
      %v1853 = vpop.f32.mrb[0].mxu0
      %1854 = vmatprep.mubr.bf16.mxu0 0
      %1855 = vmatmul.mubr.bf16.gmra.mrb[0].mxu0 %v1767
      %v1856 = vpop.f32.mrb[0].mxu0
      %v1857 = vadd.f32 0.0, %v1856
      %v1858 = vpop.f32.mrb[0].mxu0
      %v1859 = vpop.f32.mrb[0].mxu0
      %v1860 = vadd.f32 0.0, %v1859
      %v1861 = vpop.f32.mrb[0].mxu0
      %1862 = vmatprep.mubr.bf16.mxu0 0
      %1863 = vmatmul.mubr.bf16.gmra.mrb[0].mxu0 %v1770
      %v1864 = vpop.f32.mrb[0].mxu0
      %v1865 = vadd.f32 0.0, %v1864
      %v1866 = vpop.f32.mrb[0].mxu0
      %v1867 = vpop.f32.mrb[0].mxu0
      %v1868 = vadd.f32 0.0, %v1867
      %v1869 = vpop.f32.mrb[0].mxu0
      %1870 = vmatprep.mubr.bf16.mxu0 0
      %1871 = vmatmul.mubr.bf16.gmra.mrb[0].mxu0 %v1773
      %v1872 = vpop.f32.mrb[0].mxu0
      %v1873 = vadd.f32 0.0, %v1872
      %v1874 = vpop.f32.mrb[0].mxu0
      %v1875 = vpop.f32.mrb[0].mxu0
      %v1876 = vadd.f32 0.0, %v1875
      %v1877 = vpop.f32.mrb[0].mxu0
      %1878 = vmatprep.mubr.bf16.mxu0 0
      %1879 = vmatmul.mubr.bf16.gmra.mrb[0].mxu0 %v1776
      %v1880 = vpop.f32.mrb[0].mxu0
      %v1881 = vadd.f32 0.0, %v1880
      %v1882 = vpop.f32.mrb[0].mxu0
      %v1883 = vpop.f32.mrb[0].mxu0
      %v1884 = vadd.f32 0.0, %v1883
      %v1885 = vpop.f32.mrb[0].mxu0
      %1886 = vmatprep.mubr.bf16.mxu0 0
      %1887 = vmatmul.mubr.bf16.gmra.mrb[0].mxu0 %v1779
      %v1888 = vpop.f32.mrb[0].mxu0
      %v1889 = vadd.f32 0.0, %v1888
      %v1890 = vpop.f32.mrb[0].mxu0
      %v1891 = vpop.f32.mrb[0].mxu0
      %v1892 = vadd.f32 0.0, %v1891
      %v1893 = vpop.f32.mrb[0].mxu0
      %1894 = vmatprep.mubr.bf16.mxu0 0
      %1895 = vmatmul.mubr.bf16.gmra.mrb[0].mxu0 %v1782
      %v1896 = vpop.f32.mrb[0].mxu0
      %v1897 = vadd.f32 0.0, %v1896
      %v1898 = vpop.f32.mrb[0].mxu0
      %v1899 = vpop.f32.mrb[0].mxu0
      %v1900 = vadd.f32 0.0, %v1899
      %v1901 = vpop.f32.mrb[0].mxu0
      %1902 = vmatprep.mubr.bf16.mxu0 0
      %1903 = vmatmul.mubr.bf16.gmra.mrb[0].mxu0 %v1785
      %v1904 = vpop.f32.mrb[0].mxu0
      %v1905 = vadd.f32 0.0, %v1904
      %v1906 = vpop.f32.mrb[0].mxu0
      %v1907 = vpop.f32.mrb[0].mxu0
      %v1908 = vadd.f32 0.0, %v1907
      %v1909 = vpop.f32.mrb[0].mxu0
      %1910 = vmatprep.mubr.bf16.mxu0 0
      %1911 = vmatmul.mubr.bf16.gmra.mrb[0].mxu0 %v1788
      %v1912 = vpop.f32.mrb[0].mxu0
      %v1913 = vadd.f32 0.0, %v1912
      %v1914 = vpop.f32.mrb[0].mxu0
      %v1915 = vpop.f32.mrb[0].mxu0
      %v1916 = vadd.f32 0.0, %v1915
      %v1917 = vpop.f32.mrb[0].mxu0
      %1918 = vmatprep.mubr.bf16.mxu0 0
      %1919 = vmatmul.mubr.bf16.gmra.mrb[0].mxu0 %v1791
      %v1920 = vpop.f32.mrb[0].mxu0
      %v1921 = vadd.f32 0.0, %v1920
      %v1922 = vpop.f32.mrb[0].mxu0
      %v1923 = vpop.f32.mrb[0].mxu0
      %v1924 = vadd.f32 0.0, %v1923
      %v1925 = vpop.f32.mrb[0].mxu0
      %1926 = vmatprep.mubr.bf16.mxu0 0
      %1927 = vmatmul.mubr.bf16.gmra.mrb[0].mxu0 %v1794
      %v1928 = vpop.f32.mrb[0].mxu0
      %v1929 = vadd.f32 0.0, %v1928
      %v1930 = vpop.f32.mrb[0].mxu0
      %v1931 = vpop.f32.mrb[0].mxu0
      %v1932 = vadd.f32 0.0, %v1931
      %v1933 = vpop.f32.mrb[0].mxu0
      %1934 = vmatprep.mubr.bf16.mxu0 0
      %1935 = vmatmul.mubr.bf16.gmra.mrb[0].mxu0 %v1797
      %v1936 = vpop.f32.mrb[0].mxu0
      %v1937 = vadd.f32 0.0, %v1936
      %v1938 = vpop.f32.mrb[0].mxu0
      %v1939 = vpop.f32.mrb[0].mxu0
      %v1940 = vadd.f32 0.0, %v1939
      %v1941 = vpop.f32.mrb[0].mxu0
      %1942 = vmatprep.mubr.bf16.mxu0 0
      %1943 = vmatmul.mubr.bf16.gmra.mrb[0].mxu0 %v1800
      %v1944 = vpop.f32.mrb[0].mxu0
      %v1945 = vadd.f32 0.0, %v1944
      %v1946 = vpop.f32.mrb[0].mxu0
      %v1947 = vpop.f32.mrb[0].mxu0
      %v1948 = vadd.f32 0.0, %v1947
      %v1949 = vpop.f32.mrb[0].mxu0
      %1950 = vmatprep.mubr.bf16.mxu0 0
      %1951 = vmatmul.mubr.bf16.gmra.mrb[0].mxu0 %v1803
      %v1952 = vpop.f32.mrb[0].mxu0
      %v1953 = vadd.f32 0.0, %v1952
      %v1954 = vpop.f32.mrb[0].mxu0
      %v1955 = vpop.f32.mrb[0].mxu0
      %v1956 = vadd.f32 0.0, %v1955
      %v1957 = vpop.f32.mrb[0].mxu0
      %1958 = vmatprep.mubr.bf16.mxu0 0
      %1959 = vmatmul.mubr.bf16.gmra.mrb[0].mxu0 %v1806
      %v1960 = vpop.f32.mrb[0].mxu0
      %v1961 = vadd.f32 0.0, %v1960
      %v1962 = vpop.f32.mrb[0].mxu0
      %v1963 = vpop.f32.mrb[0].mxu0
      %v1964 = vadd.f32 0.0, %v1963
      %v1965 = vpop.f32.mrb[0].mxu0
      %1966 = vmatprep.mubr.bf16.mxu0 0
      %1967 = vmatmul.mubr.bf16.gmra.mrb[0].mxu0 %v1809
      %v1968 = vpop.f32.mrb[0].mxu0
      %v1969 = vadd.f32 0.0, %v1968
      %v1970 = vpop.f32.mrb[0].mxu0
      %v1971 = vpop.f32.mrb[0].mxu0
      %v1972 = vadd.f32 0.0, %v1971
      %v1973 = vpop.f32.mrb[0].mxu0
      %1974 = vdwg.mxu0
      %v1975 = vadd.f32 %v1616, %v1849
      %v1976 = vadd.f32 %v1617, %v1852
      %v1977 = vadd.f32 %v1618, %v1857
      %v1978 = vadd.f32 %v1619, %v1860
      %v1979 = vadd.f32 %v1620, %v1865
      %v1980 = vadd.f32 %v1621, %v1868
      %v1981 = vadd.f32 %v1622, %v1873
      %v1982 = vadd.f32 %v1623, %v1876
      %v1983 = vadd.f32 %v1624, %v1881
      %v1984 = vadd.f32 %v1625, %v1884
      %v1985 = vadd.f32 %v1626, %v1889
      %v1986 = vadd.f32 %v1627, %v1892
      %v1987 = vadd.f32 %v1628, %v1897
      %v1988 = vadd.f32 %v1629, %v1900
      %v1989 = vadd.f32 %v1630, %v1905
      %v1990 = vadd.f32 %v1631, %v1908
      %v1991 = vadd.f32 %v1632, %v1913
      %v1992 = vadd.f32 %v1633, %v1916
      %v1993 = vadd.f32 %v1634, %v1921
      %v1994 = vadd.f32 %v1635, %v1924
      %v1995 = vadd.f32 %v1636, %v1929
      %v1996 = vadd.f32 %v1637, %v1932
      %v1997 = vadd.f32 %v1638, %v1937
      %v1998 = vadd.f32 %v1639, %v1940
      %v1999 = vadd.f32 %v1640, %v1945
      %v2000 = vadd.f32 %v1641, %v1948
      %v2001 = vadd.f32 %v1642, %v1953
      %v2002 = vadd.f32 %v1643, %v1956
      %v2003 = vadd.f32 %v1644, %v1961
      %v2004 = vadd.f32 %v1645, %v1964
      %v2005 = vadd.f32 %v1646, %v1969
      %v2006 = vadd.f32 %v1647, %v1972
      %v2007 = vld [vmem:[%s1648] sm:$0xf]
      %v2008 = vld [vmem:[%s1648 + $0x4] sm:$0xf]
      %v2009 = vld [vmem:[%s1648 + $0x8] sm:$0x1]
      %v2010 = vld [vmem:[%s1648 + $0xc] sm:$0xf]
      %v2011 = vld [vmem:[%s1648 + $0x10] sm:$0xf]
      %v2012 = vld [vmem:[%s1648 + $0x14] sm:$0x1]
      %v2013 = vld [vmem:[%s1648 + $0x18] sm:$0xf]
      %v2014 = vld [vmem:[%s1648 + $0x1c] sm:$0xf]
      %v2015 = vld [vmem:[%s1648 + $0x20] sm:$0x1]
      %v2016 = vld [vmem:[%s1648 + $0x24] sm:$0xf]
      %v2017 = vld [vmem:[%s1648 + $0x28] sm:$0xf]
      %v2018 = vld [vmem:[%s1648 + $0x2c] sm:$0x1]
      %v2019 = vld [vmem:[%s1648 + $0x30] sm:$0xf]
      %v2020 = vld [vmem:[%s1648 + $0x34] sm:$0xf]
      %v2021 = vld [vmem:[%s1648 + $0x38] sm:$0x1]
      %v2022 = vld [vmem:[%s1648 + $0x3c] sm:$0xf]
      %v2023 = vld [vmem:[%s1648 + $0x40] sm:$0xf]
      %v2024 = vld [vmem:[%s1648 + $0x44] sm:$0x1]
      %v2025 = vld [vmem:[%s1648 + $0x48] sm:$0xf]
      %v2026 = vld [vmem:[%s1648 + $0x4c] sm:$0xf]
      %v2027 = vld [vmem:[%s1648 + $0x50] sm:$0x1]
      %v2028 = vld [vmem:[%s1648 + $0x54] sm:$0xf]
      %v2029 = vld [vmem:[%s1648 + $0x58] sm:$0xf]
      %v2030 = vld [vmem:[%s1648 + $0x5c] sm:$0x1]
      %v2031 = vld [vmem:[%s1648 + $0x60] sm:$0xf]
      %v2032 = vld [vmem:[%s1648 + $0x64] sm:$0xf]
      %v2033 = vld [vmem:[%s1648 + $0x68] sm:$0x1]
      %v2034 = vld [vmem:[%s1648 + $0x6c] sm:$0xf]
      %v2035 = vld [vmem:[%s1648 + $0x70] sm:$0xf]
      %v2036 = vld [vmem:[%s1648 + $0x74] sm:$0x1]
      %v2037 = vld [vmem:[%s1648 + $0x78] sm:$0xf]
      %v2038 = vld [vmem:[%s1648 + $0x7c] sm:$0xf]
      %v2039 = vld [vmem:[%s1648 + $0x80] sm:$0x1]
      %v2040 = vld [vmem:[%s1648 + $0x84] sm:$0xf]
      %v2041 = vld [vmem:[%s1648 + $0x88] sm:$0xf]
      %v2042 = vld [vmem:[%s1648 + $0x8c] sm:$0x1]
      %v2043 = vld [vmem:[%s1648 + $0x90] sm:$0xf]
      %v2044 = vld [vmem:[%s1648 + $0x94] sm:$0xf]
      %v2045 = vld [vmem:[%s1648 + $0x98] sm:$0x1]
      %v2046 = vld [vmem:[%s1648 + $0x9c] sm:$0xf]
      %v2047 = vld [vmem:[%s1648 + $0xa0] sm:$0xf]
      %v2048 = vld [vmem:[%s1648 + $0xa4] sm:$0x1]
      %v2049 = vld [vmem:[%s1648 + $0xa8] sm:$0xf]
      %v2050 = vld [vmem:[%s1648 + $0xac] sm:$0xf]
      %v2051 = vld [vmem:[%s1648 + $0xb0] sm:$0x1]
      %v2052 = vld [vmem:[%s1648 + $0xb4] sm:$0xf]
      %v2053 = vld [vmem:[%s1648 + $0xb8] sm:$0xf]
      %v2054 = vld [vmem:[%s1648 + $0xbc] sm:$0x1]
      %v2056 = vshrl.u32 %v2007, 16
      %v2058 = vrot.slane %v2056, 4
      %v2059 = vshll.u32 %v2007, 16
      %v2061 = vrot.slane %v2059, 5
      %v2062 = vor.u32 %v2058, %v2061
      %v2063 = vrot.slane %v2062, 4
      %v2065 = vshll.u32 %v2008, 16
      %v2067 = vrot.slane %v2065, 5
      %v2068 = vsel %vm250, %v2063, %v2067
      %v2069 = vshrl.u32 %v2008, 16
      %v2071 = vrot.slane %v2069, 4
      %v2072 = vor.u32 %v2071, %v2067
      %v2073 = vrot.slane %v2072, 4
      %v2075 = vshll.u32 %v2009, 16
      %v2077 = vrot.slane %v2075, 5
      %v2078 = vsel %vm250, %v2073, %v2077
      %v2080 = vshrl.u32 %v2010, 16
      %v2082 = vrot.slane %v2080, 4
      %v2083 = vshll.u32 %v2010, 16
      %v2085 = vrot.slane %v2083, 5
      %v2086 = vor.u32 %v2082, %v2085
      %v2087 = vrot.slane %v2086, 4
      %v2089 = vshll.u32 %v2011, 16
      %v2091 = vrot.slane %v2089, 5
      %v2092 = vsel %vm250, %v2087, %v2091
      %v2093 = vshrl.u32 %v2011, 16
      %v2095 = vrot.slane %v2093, 4
      %v2096 = vor.u32 %v2095, %v2091
      %v2097 = vrot.slane %v2096, 4
      %v2099 = vshll.u32 %v2012, 16
      %v2101 = vrot.slane %v2099, 5
      %v2102 = vsel %vm250, %v2097, %v2101
      %v2104 = vshrl.u32 %v2013, 16
      %v2106 = vrot.slane %v2104, 4
      %v2107 = vshll.u32 %v2013, 16
      %v2109 = vrot.slane %v2107, 5
      %v2110 = vor.u32 %v2106, %v2109
      %v2111 = vrot.slane %v2110, 4
      %v2113 = vshll.u32 %v2014, 16
      %v2115 = vrot.slane %v2113, 5
      %v2116 = vsel %vm250, %v2111, %v2115
      %v2117 = vshrl.u32 %v2014, 16
      %v2119 = vrot.slane %v2117, 4
      %v2120 = vor.u32 %v2119, %v2115
      %v2121 = vrot.slane %v2120, 4
      %v2123 = vshll.u32 %v2015, 16
      %v2125 = vrot.slane %v2123, 5
      %v2126 = vsel %vm250, %v2121, %v2125
      %v2128 = vshrl.u32 %v2016, 16
      %v2130 = vrot.slane %v2128, 4
      %v2131 = vshll.u32 %v2016, 16
      %v2133 = vrot.slane %v2131, 5
      %v2134 = vor.u32 %v2130, %v2133
      %v2135 = vrot.slane %v2134, 4
      %v2137 = vshll.u32 %v2017, 16
      %v2139 = vrot.slane %v2137, 5
      %v2140 = vsel %vm250, %v2135, %v2139
      %v2141 = vshrl.u32 %v2017, 16
      %v2143 = vrot.slane %v2141, 4
      %v2144 = vor.u32 %v2143, %v2139
      %v2145 = vrot.slane %v2144, 4
      %v2147 = vshll.u32 %v2018, 16
      %v2149 = vrot.slane %v2147, 5
      %v2150 = vsel %vm250, %v2145, %v2149
      %v2152 = vshrl.u32 %v2019, 16
      %v2154 = vrot.slane %v2152, 4
      %v2155 = vshll.u32 %v2019, 16
      %v2157 = vrot.slane %v2155, 5
      %v2158 = vor.u32 %v2154, %v2157
      %v2159 = vrot.slane %v2158, 4
      %v2161 = vshll.u32 %v2020, 16
      %v2163 = vrot.slane %v2161, 5
      %v2164 = vsel %vm250, %v2159, %v2163
      %v2165 = vshrl.u32 %v2020, 16
      %v2167 = vrot.slane %v2165, 4
      %v2168 = vor.u32 %v2167, %v2163
      %v2169 = vrot.slane %v2168, 4
      %v2171 = vshll.u32 %v2021, 16
      %v2173 = vrot.slane %v2171, 5
      %v2174 = vsel %vm250, %v2169, %v2173
      %v2176 = vshrl.u32 %v2022, 16
      %v2178 = vrot.slane %v2176, 4
      %v2179 = vshll.u32 %v2022, 16
      %v2181 = vrot.slane %v2179, 5
      %v2182 = vor.u32 %v2178, %v2181
      %v2183 = vrot.slane %v2182, 4
      %v2185 = vshll.u32 %v2023, 16
      %v2187 = vrot.slane %v2185, 5
      %v2188 = vsel %vm250, %v2183, %v2187
      %v2189 = vshrl.u32 %v2023, 16
      %v2191 = vrot.slane %v2189, 4
      %v2192 = vor.u32 %v2191, %v2187
      %v2193 = vrot.slane %v2192, 4
      %v2195 = vshll.u32 %v2024, 16
      %v2197 = vrot.slane %v2195, 5
      %v2198 = vsel %vm250, %v2193, %v2197
      %v2200 = vshrl.u32 %v2025, 16
      %v2202 = vrot.slane %v2200, 4
      %v2203 = vshll.u32 %v2025, 16
      %v2205 = vrot.slane %v2203, 5
      %v2206 = vor.u32 %v2202, %v2205
      %v2207 = vrot.slane %v2206, 4
      %v2209 = vshll.u32 %v2026, 16
      %v2211 = vrot.slane %v2209, 5
      %v2212 = vsel %vm250, %v2207, %v2211
      %v2213 = vshrl.u32 %v2026, 16
      %v2215 = vrot.slane %v2213, 4
      %v2216 = vor.u32 %v2215, %v2211
      %v2217 = vrot.slane %v2216, 4
      %v2219 = vshll.u32 %v2027, 16
      %v2221 = vrot.slane %v2219, 5
      %v2222 = vsel %vm250, %v2217, %v2221
      %v2224 = vshrl.u32 %v2028, 16
      %v2226 = vrot.slane %v2224, 4
      %v2227 = vshll.u32 %v2028, 16
      %v2229 = vrot.slane %v2227, 5
      %v2230 = vor.u32 %v2226, %v2229
      %v2231 = vrot.slane %v2230, 4
      %v2233 = vshll.u32 %v2029, 16
      %v2235 = vrot.slane %v2233, 5
      %v2236 = vsel %vm250, %v2231, %v2235
      %v2237 = vshrl.u32 %v2029, 16
      %v2239 = vrot.slane %v2237, 4
      %v2240 = vor.u32 %v2239, %v2235
      %v2241 = vrot.slane %v2240, 4
      %v2243 = vshll.u32 %v2030, 16
      %v2245 = vrot.slane %v2243, 5
      %v2246 = vsel %vm250, %v2241, %v2245
      %v2248 = vshrl.u32 %v2031, 16
      %v2250 = vrot.slane %v2248, 4
      %v2251 = vshll.u32 %v2031, 16
      %v2253 = vrot.slane %v2251, 5
      %v2254 = vor.u32 %v2250, %v2253
      %v2255 = vrot.slane %v2254, 4
      %v2257 = vshll.u32 %v2032, 16
      %v2259 = vrot.slane %v2257, 5
      %v2260 = vsel %vm250, %v2255, %v2259
      %v2261 = vshrl.u32 %v2032, 16
      %v2263 = vrot.slane %v2261, 4
      %v2264 = vor.u32 %v2263, %v2259
      %v2265 = vrot.slane %v2264, 4
      %v2267 = vshll.u32 %v2033, 16
      %v2269 = vrot.slane %v2267, 5
      %v2270 = vsel %vm250, %v2265, %v2269
      %v2272 = vshrl.u32 %v2034, 16
      %v2274 = vrot.slane %v2272, 4
      %v2275 = vshll.u32 %v2034, 16
      %v2277 = vrot.slane %v2275, 5
      %v2278 = vor.u32 %v2274, %v2277
      %v2279 = vrot.slane %v2278, 4
      %v2281 = vshll.u32 %v2035, 16
      %v2283 = vrot.slane %v2281, 5
      %v2284 = vsel %vm250, %v2279, %v2283
      %v2285 = vshrl.u32 %v2035, 16
      %v2287 = vrot.slane %v2285, 4
      %v2288 = vor.u32 %v2287, %v2283
      %v2289 = vrot.slane %v2288, 4
      %v2291 = vshll.u32 %v2036, 16
      %v2293 = vrot.slane %v2291, 5
      %v2294 = vsel %vm250, %v2289, %v2293
      %v2296 = vshrl.u32 %v2037, 16
      %v2298 = vrot.slane %v2296, 4
      %v2299 = vshll.u32 %v2037, 16
      %v2301 = vrot.slane %v2299, 5
      %v2302 = vor.u32 %v2298, %v2301
      %v2303 = vrot.slane %v2302, 4
      %v2305 = vshll.u32 %v2038, 16
      %v2307 = vrot.slane %v2305, 5
      %v2308 = vsel %vm250, %v2303, %v2307
      %v2309 = vshrl.u32 %v2038, 16
      %v2311 = vrot.slane %v2309, 4
      %v2312 = vor.u32 %v2311, %v2307
      %v2313 = vrot.slane %v2312, 4
      %v2315 = vshll.u32 %v2039, 16
      %v2317 = vrot.slane %v2315, 5
      %v2318 = vsel %vm250, %v2313, %v2317
      %v2320 = vshrl.u32 %v2040, 16
      %v2322 = vrot.slane %v2320, 4
      %v2323 = vshll.u32 %v2040, 16
      %v2325 = vrot.slane %v2323, 5
      %v2326 = vor.u32 %v2322, %v2325
      %v2327 = vrot.slane %v2326, 4
      %v2329 = vshll.u32 %v2041, 16
      %v2331 = vrot.slane %v2329, 5
      %v2332 = vsel %vm250, %v2327, %v2331
      %v2333 = vshrl.u32 %v2041, 16
      %v2335 = vrot.slane %v2333, 4
      %v2336 = vor.u32 %v2335, %v2331
      %v2337 = vrot.slane %v2336, 4
      %v2339 = vshll.u32 %v2042, 16
      %v2341 = vrot.slane %v2339, 5
      %v2342 = vsel %vm250, %v2337, %v2341
      %v2344 = vshrl.u32 %v2043, 16
      %v2346 = vrot.slane %v2344, 4
      %v2347 = vshll.u32 %v2043, 16
      %v2349 = vrot.slane %v2347, 5
      %v2350 = vor.u32 %v2346, %v2349
      %v2351 = vrot.slane %v2350, 4
      %v2353 = vshll.u32 %v2044, 16
      %v2355 = vrot.slane %v2353, 5
      %v2356 = vsel %vm250, %v2351, %v2355
      %v2357 = vshrl.u32 %v2044, 16
      %v2359 = vrot.slane %v2357, 4
      %v2360 = vor.u32 %v2359, %v2355
      %v2361 = vrot.slane %v2360, 4
      %v2363 = vshll.u32 %v2045, 16
      %v2365 = vrot.slane %v2363, 5
      %v2366 = vsel %vm250, %v2361, %v2365
      %v2368 = vshrl.u32 %v2046, 16
      %v2370 = vrot.slane %v2368, 4
      %v2371 = vshll.u32 %v2046, 16
      %v2373 = vrot.slane %v2371, 5
      %v2374 = vor.u32 %v2370, %v2373
      %v2375 = vrot.slane %v2374, 4
      %v2377 = vshll.u32 %v2047, 16
      %v2379 = vrot.slane %v2377, 5
      %v2380 = vsel %vm250, %v2375, %v2379
      %v2381 = vshrl.u32 %v2047, 16
      %v2383 = vrot.slane %v2381, 4
      %v2384 = vor.u32 %v2383, %v2379
      %v2385 = vrot.slane %v2384, 4
      %v2387 = vshll.u32 %v2048, 16
      %v2389 = vrot.slane %v2387, 5
      %v2390 = vsel %vm250, %v2385, %v2389
      %v2392 = vshrl.u32 %v2049, 16
      %v2394 = vrot.slane %v2392, 4
      %v2395 = vshll.u32 %v2049, 16
      %v2397 = vrot.slane %v2395, 5
      %v2398 = vor.u32 %v2394, %v2397
      %v2399 = vrot.slane %v2398, 4
      %v2401 = vshll.u32 %v2050, 16
      %v2403 = vrot.slane %v2401, 5
      %v2404 = vsel %vm250, %v2399, %v2403
      %v2405 = vshrl.u32 %v2050, 16
      %v2407 = vrot.slane %v2405, 4
      %v2408 = vor.u32 %v2407, %v2403
      %v2409 = vrot.slane %v2408, 4
      %v2411 = vshll.u32 %v2051, 16
      %v2413 = vrot.slane %v2411, 5
      %v2414 = vsel %vm250, %v2409, %v2413
      %v2416 = vshrl.u32 %v2052, 16
      %v2418 = vrot.slane %v2416, 4
      %v2419 = vshll.u32 %v2052, 16
      %v2421 = vrot.slane %v2419, 5
      %v2422 = vor.u32 %v2418, %v2421
      %v2423 = vrot.slane %v2422, 4
      %v2425 = vshll.u32 %v2053, 16
      %v2427 = vrot.slane %v2425, 5
      %v2428 = vsel %vm250, %v2423, %v2427
      %v2429 = vshrl.u32 %v2053, 16
      %v2431 = vrot.slane %v2429, 4
      %v2432 = vor.u32 %v2431, %v2427
      %v2433 = vrot.slane %v2432, 4
      %v2435 = vshll.u32 %v2054, 16
      %v2437 = vrot.slane %v2435, 5
      %v2438 = vsel %vm250, %v2433, %v2437
      %s2439 = scalar_lea.vmem %s1, 8
      %v2440 = vld [vmem:[%s2439] sm:$0x3]
      %v2441 = vunpack.c.l.b16 %v2068
      %v2442 = vunpack.c.l.b16 %v2078
      %v2443 = vunpack.c.l.b16 %v2092
      %v2444 = vunpack.c.l.b16 %v2102
      %v2445 = vunpack.c.l.b16 %v2116
      %v2446 = vunpack.c.l.b16 %v2126
      %v2447 = vunpack.c.l.b16 %v2140
      %v2448 = vunpack.c.l.b16 %v2150
      %v2449 = vunpack.c.l.b16 %v2164
      %v2450 = vunpack.c.l.b16 %v2174
      %v2451 = vunpack.c.l.b16 %v2188
      %v2452 = vunpack.c.l.b16 %v2198
      %v2453 = vunpack.c.l.b16 %v2212
      %v2454 = vunpack.c.l.b16 %v2222
      %v2455 = vunpack.c.l.b16 %v2236
      %v2456 = vunpack.c.l.b16 %v2246
      %v2457 = vunpack.c.l.b16 %v2260
      %v2458 = vunpack.c.l.b16 %v2270
      %v2459 = vunpack.c.l.b16 %v2284
      %v2460 = vunpack.c.l.b16 %v2294
      %v2461 = vunpack.c.l.b16 %v2308
      %v2462 = vunpack.c.l.b16 %v2318
      %v2463 = vunpack.c.l.b16 %v2332
      %v2464 = vunpack.c.l.b16 %v2342
      %v2465 = vunpack.c.l.b16 %v2356
      %v2466 = vunpack.c.l.b16 %v2366
      %v2467 = vunpack.c.l.b16 %v2380
      %v2468 = vunpack.c.l.b16 %v2390
      %v2469 = vunpack.c.l.b16 %v2404
      %v2470 = vunpack.c.l.b16 %v2414
      %v2471 = vunpack.c.l.b16 %v2428
      %v2472 = vunpack.c.l.b16 %v2438
      %v2473 = vpack.c.b16 %v2442, %v2441
      %v2474 = vpack.c.b16 %v2444, %v2443
      %v2475 = vpack.c.b16 %v2446, %v2445
      %v2476 = vpack.c.b16 %v2448, %v2447
      %v2477 = vpack.c.b16 %v2450, %v2449
      %v2478 = vpack.c.b16 %v2452, %v2451
      %v2479 = vpack.c.b16 %v2454, %v2453
      %v2480 = vpack.c.b16 %v2456, %v2455
      %v2481 = vpack.c.b16 %v2458, %v2457
      %v2482 = vpack.c.b16 %v2460, %v2459
      %v2483 = vpack.c.b16 %v2462, %v2461
      %v2484 = vpack.c.b16 %v2464, %v2463
      %v2485 = vpack.c.b16 %v2466, %v2465
      %v2486 = vpack.c.b16 %v2468, %v2467
      %v2487 = vpack.c.b16 %v2470, %v2469
      %v2488 = vpack.c.b16 %v2472, %v2471
      %v2490 = vsel %vm685, %v2473, 0
      %v2493 = vsel %vm685, %v2474, 0
      %v2496 = vsel %vm685, %v2475, 0
      %v2499 = vsel %vm685, %v2476, 0
      %v2502 = vsel %vm685, %v2477, 0
      %v2505 = vsel %vm685, %v2478, 0
      %v2508 = vsel %vm685, %v2479, 0
      %v2511 = vsel %vm685, %v2480, 0
      %v2514 = vsel %vm685, %v2481, 0
      %v2517 = vsel %vm685, %v2482, 0
      %v2520 = vsel %vm685, %v2483, 0
      %v2523 = vsel %vm685, %v2484, 0
      %v2526 = vsel %vm685, %v2485, 0
      %v2529 = vsel %vm685, %v2486, 0
      %v2532 = vsel %vm685, %v2487, 0
      %v2535 = vsel %vm685, %v2488, 0
      %v2538 = vsel %vm734, %v2440, 0
      %2540 = vmatprep.subr.bf16.mxu0 0
      %2541 = vmatpush1.bf16.msra.mxu0 %v2538
      %2542 = vmatprep.subr.bf16.mxu0 0
      %2543 = vmatpush1.bf16.msra.mxu0 0
      %2544 = vmatprep.subr.bf16.mxu0 0
      %2545 = vmatpush1.bf16.msra.mxu0 0
      %2546 = vmatprep.subr.bf16.mxu0 0
      %2547 = vmatpush1.bf16.msra.mxu0 0
      %2548 = vmatprep.subr.bf16.mxu0 0
      %2549 = vmatpush1.bf16.msra.mxu0 0
      %2550 = vmatprep.subr.bf16.mxu0 0
      %2551 = vmatpush1.bf16.msra.mxu0 0
      %2552 = vmatprep.subr.bf16.mxu0 0
      %2553 = vmatpush1.bf16.msra.mxu0 0
      %2554 = vmatprep.subr.bf16.mxu0 0
      %2555 = vmatpush1.bf16.msra.mxu0 0
      %2556 = vmatprep.subr.bf16.mxu0 0
      %2557 = vmatpush1.bf16.msra.mxu0 0
      %2558 = vmatprep.subr.bf16.mxu0 0
      %2559 = vmatpush1.bf16.msra.mxu0 0
      %2560 = vmatprep.subr.bf16.mxu0 0
      %2561 = vmatpush1.bf16.msra.mxu0 0
      %2562 = vmatprep.subr.bf16.mxu0 0
      %2563 = vmatpush1.bf16.msra.mxu0 0
      %2564 = vmatprep.subr.bf16.mxu0 0
      %2565 = vmatpush1.bf16.msra.mxu0 0
      %2566 = vmatprep.subr.bf16.mxu0 0
      %2567 = vmatpush1.bf16.msra.mxu0 0
      %2568 = vmatprep.subr.bf16.mxu0 0
      %2569 = vmatpush1.bf16.msra.mxu0 0
      %2570 = vmatprep.subr.bf16.mxu0 0
      %2571 = vmatpush1.bf16.msra.mxu0 0
      %2572 = vmatprep.mubr.bf16.mxu0 0
      %2573 = vmatmul.mubr.bf16.gmra.mrb[0].mxu0 %v2490
      %v2574 = vpop.f32.mrb[0].mxu0
      %v2575 = vadd.f32 0.0, %v2574
      %v2576 = vpop.f32.mrb[0].mxu0
      %v2577 = vpop.f32.mrb[0].mxu0
      %v2578 = vadd.f32 0.0, %v2577
      %v2579 = vpop.f32.mrb[0].mxu0
      %2580 = vmatprep.mubr.bf16.mxu0 0
      %2581 = vmatmul.mubr.bf16.gmra.mrb[0].mxu0 %v2493
      %v2582 = vpop.f32.mrb[0].mxu0
      %v2583 = vadd.f32 0.0, %v2582
      %v2584 = vpop.f32.mrb[0].mxu0
      %v2585 = vpop.f32.mrb[0].mxu0
      %v2586 = vadd.f32 0.0, %v2585
      %v2587 = vpop.f32.mrb[0].mxu0
      %2588 = vmatprep.mubr.bf16.mxu0 0
      %2589 = vmatmul.mubr.bf16.gmra.mrb[0].mxu0 %v2496
      %v2590 = vpop.f32.mrb[0].mxu0
      %v2591 = vadd.f32 0.0, %v2590
      %v2592 = vpop.f32.mrb[0].mxu0
      %v2593 = vpop.f32.mrb[0].mxu0
      %v2594 = vadd.f32 0.0, %v2593
      %v2595 = vpop.f32.mrb[0].mxu0
      %2596 = vmatprep.mubr.bf16.mxu0 0
      %2597 = vmatmul.mubr.bf16.gmra.mrb[0].mxu0 %v2499
      %v2598 = vpop.f32.mrb[0].mxu0
      %v2599 = vadd.f32 0.0, %v2598
      %v2600 = vpop.f32.mrb[0].mxu0
      %v2601 = vpop.f32.mrb[0].mxu0
      %v2602 = vadd.f32 0.0, %v2601
      %v2603 = vpop.f32.mrb[0].mxu0
      %2604 = vmatprep.mubr.bf16.mxu0 0
      %2605 = vmatmul.mubr.bf16.gmra.mrb[0].mxu0 %v2502
      %v2606 = vpop.f32.mrb[0].mxu0
      %v2607 = vadd.f32 0.0, %v2606
      %v2608 = vpop.f32.mrb[0].mxu0
      %v2609 = vpop.f32.mrb[0].mxu0
      %v2610 = vadd.f32 0.0, %v2609
      %v2611 = vpop.f32.mrb[0].mxu0
      %2612 = vmatprep.mubr.bf16.mxu0 0
      %2613 = vmatmul.mubr.bf16.gmra.mrb[0].mxu0 %v2505
      %v2614 = vpop.f32.mrb[0].mxu0
      %v2615 = vadd.f32 0.0, %v2614
      %v2616 = vpop.f32.mrb[0].mxu0
      %v2617 = vpop.f32.mrb[0].mxu0
      %v2618 = vadd.f32 0.0, %v2617
      %v2619 = vpop.f32.mrb[0].mxu0
      %2620 = vmatprep.mubr.bf16.mxu0 0
      %2621 = vmatmul.mubr.bf16.gmra.mrb[0].mxu0 %v2508
      %v2622 = vpop.f32.mrb[0].mxu0
      %v2623 = vadd.f32 0.0, %v2622
      %v2624 = vpop.f32.mrb[0].mxu0
      %v2625 = vpop.f32.mrb[0].mxu0
      %v2626 = vadd.f32 0.0, %v2625
      %v2627 = vpop.f32.mrb[0].mxu0
      %2628 = vmatprep.mubr.bf16.mxu0 0
      %2629 = vmatmul.mubr.bf16.gmra.mrb[0].mxu0 %v2511
      %v2630 = vpop.f32.mrb[0].mxu0
      %v2631 = vadd.f32 0.0, %v2630
      %v2632 = vpop.f32.mrb[0].mxu0
      %v2633 = vpop.f32.mrb[0].mxu0
      %v2634 = vadd.f32 0.0, %v2633
      %v2635 = vpop.f32.mrb[0].mxu0
      %2636 = vmatprep.mubr.bf16.mxu0 0
      %2637 = vmatmul.mubr.bf16.gmra.mrb[0].mxu0 %v2514
      %v2638 = vpop.f32.mrb[0].mxu0
      %v2639 = vadd.f32 0.0, %v2638
      %v2640 = vpop.f32.mrb[0].mxu0
      %v2641 = vpop.f32.mrb[0].mxu0
      %v2642 = vadd.f32 0.0, %v2641
      %v2643 = vpop.f32.mrb[0].mxu0
      %2644 = vmatprep.mubr.bf16.mxu0 0
      %2645 = vmatmul.mubr.bf16.gmra.mrb[0].mxu0 %v2517
      %v2646 = vpop.f32.mrb[0].mxu0
      %v2647 = vadd.f32 0.0, %v2646
      %v2648 = vpop.f32.mrb[0].mxu0
      %v2649 = vpop.f32.mrb[0].mxu0
      %v2650 = vadd.f32 0.0, %v2649
      %v2651 = vpop.f32.mrb[0].mxu0
      %2652 = vmatprep.mubr.bf16.mxu0 0
      %2653 = vmatmul.mubr.bf16.gmra.mrb[0].mxu0 %v2520
      %v2654 = vpop.f32.mrb[0].mxu0
      %v2655 = vadd.f32 0.0, %v2654
      %v2656 = vpop.f32.mrb[0].mxu0
      %v2657 = vpop.f32.mrb[0].mxu0
      %v2658 = vadd.f32 0.0, %v2657
      %v2659 = vpop.f32.mrb[0].mxu0
      %2660 = vmatprep.mubr.bf16.mxu0 0
      %2661 = vmatmul.mubr.bf16.gmra.mrb[0].mxu0 %v2523
      %v2662 = vpop.f32.mrb[0].mxu0
      %v2663 = vadd.f32 0.0, %v2662
      %v2664 = vpop.f32.mrb[0].mxu0
      %v2665 = vpop.f32.mrb[0].mxu0
      %v2666 = vadd.f32 0.0, %v2665
      %v2667 = vpop.f32.mrb[0].mxu0
      %2668 = vmatprep.mubr.bf16.mxu0 0
      %2669 = vmatmul.mubr.bf16.gmra.mrb[0].mxu0 %v2526
      %v2670 = vpop.f32.mrb[0].mxu0
      %v2671 = vadd.f32 0.0, %v2670
      %v2672 = vpop.f32.mrb[0].mxu0
      %v2673 = vpop.f32.mrb[0].mxu0
      %v2674 = vadd.f32 0.0, %v2673
      %v2675 = vpop.f32.mrb[0].mxu0
      %2676 = vmatprep.mubr.bf16.mxu0 0
      %2677 = vmatmul.mubr.bf16.gmra.mrb[0].mxu0 %v2529
      %v2678 = vpop.f32.mrb[0].mxu0
      %v2679 = vadd.f32 0.0, %v2678
      %v2680 = vpop.f32.mrb[0].mxu0
      %v2681 = vpop.f32.mrb[0].mxu0
      %v2682 = vadd.f32 0.0, %v2681
      %v2683 = vpop.f32.mrb[0].mxu0
      %2684 = vmatprep.mubr.bf16.mxu0 0
      %2685 = vmatmul.mubr.bf16.gmra.mrb[0].mxu0 %v2532
      %v2686 = vpop.f32.mrb[0].mxu0
      %v2687 = vadd.f32 0.0, %v2686
      %v2688 = vpop.f32.mrb[0].mxu0
      %v2689 = vpop.f32.mrb[0].mxu0
      %v2690 = vadd.f32 0.0, %v2689
      %v2691 = vpop.f32.mrb[0].mxu0
      %2692 = vmatprep.mubr.bf16.mxu0 0
      %2693 = vmatmul.mubr.bf16.gmra.mrb[0].mxu0 %v2535
      %v2694 = vpop.f32.mrb[0].mxu0
      %v2695 = vadd.f32 0.0, %v2694
      %v2696 = vpop.f32.mrb[0].mxu0
      %v2697 = vpop.f32.mrb[0].mxu0
      %v2698 = vadd.f32 0.0, %v2697
      %v2699 = vpop.f32.mrb[0].mxu0
      %2700 = vdwg.mxu0
      %v2701 = vadd.f32 %v1975, %v2575
      %v2702 = vadd.f32 %v1976, %v2578
      %v2703 = vadd.f32 %v1977, %v2583
      %v2704 = vadd.f32 %v1978, %v2586
      %v2705 = vadd.f32 %v1979, %v2591
      %v2706 = vadd.f32 %v1980, %v2594
      %v2707 = vadd.f32 %v1981, %v2599
      %v2708 = vadd.f32 %v1982, %v2602
      %v2709 = vadd.f32 %v1983, %v2607
      %v2710 = vadd.f32 %v1984, %v2610
      %v2711 = vadd.f32 %v1985, %v2615
      %v2712 = vadd.f32 %v1986, %v2618
      %v2713 = vadd.f32 %v1987, %v2623
      %v2714 = vadd.f32 %v1988, %v2626
      %v2715 = vadd.f32 %v1989, %v2631
      %v2716 = vadd.f32 %v1990, %v2634
      %v2717 = vadd.f32 %v1991, %v2639
      %v2718 = vadd.f32 %v1992, %v2642
      %v2719 = vadd.f32 %v1993, %v2647
      %v2720 = vadd.f32 %v1994, %v2650
      %v2721 = vadd.f32 %v1995, %v2655
      %v2722 = vadd.f32 %v1996, %v2658
      %v2723 = vadd.f32 %v1997, %v2663
      %v2724 = vadd.f32 %v1998, %v2666
      %v2725 = vadd.f32 %v1999, %v2671
      %v2726 = vadd.f32 %v2000, %v2674
      %v2727 = vadd.f32 %v2001, %v2679
      %v2728 = vadd.f32 %v2002, %v2682
      %v2729 = vadd.f32 %v2003, %v2687
      %v2730 = vadd.f32 %v2004, %v2690
      %v2731 = vadd.f32 %v2005, %v2695
      %v2732 = vadd.f32 %v2006, %v2698
      %v2733 = vld [vmem:[%s1648] sm:$0xe]
      %v2734 = vld [vmem:[%s1648 + $0xc] sm:$0xe]
      %v2735 = vld [vmem:[%s1648 + $0x18] sm:$0xe]
      %v2736 = vld [vmem:[%s1648 + $0x24] sm:$0xe]
      %v2737 = vld [vmem:[%s1648 + $0x30] sm:$0xe]
      %v2738 = vld [vmem:[%s1648 + $0x3c] sm:$0xe]
      %v2739 = vld [vmem:[%s1648 + $0x48] sm:$0xe]
      %v2740 = vld [vmem:[%s1648 + $0x54] sm:$0xe]
      %v2741 = vld [vmem:[%s1648 + $0x60] sm:$0xe]
      %v2742 = vld [vmem:[%s1648 + $0x6c] sm:$0xe]
      %v2743 = vld [vmem:[%s1648 + $0x78] sm:$0xe]
      %v2744 = vld [vmem:[%s1648 + $0x84] sm:$0xe]
      %v2745 = vld [vmem:[%s1648 + $0x90] sm:$0xe]
      %v2746 = vld [vmem:[%s1648 + $0x9c] sm:$0xe]
      %v2747 = vld [vmem:[%s1648 + $0xa8] sm:$0xe]
      %v2748 = vld [vmem:[%s1648 + $0xb4] sm:$0xe]
      %v2797 = vrot.slane %v2733, 5
      %v2798 = vrot.slane %v2797, 4
      %v2799 = vrot.slane %v2008, 5
      %v2800 = vsel %vm1241, %v2798, %v2799
      %v2801 = vrot.slane %v2799, 4
      %v2802 = vrot.slane %v2009, 5
      %v2803 = vsel %vm1241, %v2801, %v2802
      %v2804 = vrot.slane %v2734, 5
      %v2805 = vrot.slane %v2804, 4
      %v2806 = vrot.slane %v2011, 5
      %v2807 = vsel %vm1241, %v2805, %v2806
      %v2808 = vrot.slane %v2806, 4
      %v2809 = vrot.slane %v2012, 5
      %v2810 = vsel %vm1241, %v2808, %v2809
      %v2811 = vrot.slane %v2735, 5
      %v2812 = vrot.slane %v2811, 4
      %v2813 = vrot.slane %v2014, 5
      %v2814 = vsel %vm1241, %v2812, %v2813
      %v2815 = vrot.slane %v2813, 4
      %v2816 = vrot.slane %v2015, 5
      %v2817 = vsel %vm1241, %v2815, %v2816
      %v2818 = vrot.slane %v2736, 5
      %v2819 = vrot.slane %v2818, 4
      %v2820 = vrot.slane %v2017, 5
      %v2821 = vsel %vm1241, %v2819, %v2820
      %v2822 = vrot.slane %v2820, 4
      %v2823 = vrot.slane %v2018, 5
      %v2824 = vsel %vm1241, %v2822, %v2823
      %v2825 = vrot.slane %v2737, 5
      %v2826 = vrot.slane %v2825, 4
      %v2827 = vrot.slane %v2020, 5
      %v2828 = vsel %vm1241, %v2826, %v2827
      %v2829 = vrot.slane %v2827, 4
      %v2830 = vrot.slane %v2021, 5
      %v2831 = vsel %vm1241, %v2829, %v2830
      %v2832 = vrot.slane %v2738, 5
      %v2833 = vrot.slane %v2832, 4
      %v2834 = vrot.slane %v2023, 5
      %v2835 = vsel %vm1241, %v2833, %v2834
      %v2836 = vrot.slane %v2834, 4
      %v2837 = vrot.slane %v2024, 5
      %v2838 = vsel %vm1241, %v2836, %v2837
      %v2839 = vrot.slane %v2739, 5
      %v2840 = vrot.slane %v2839, 4
      %v2841 = vrot.slane %v2026, 5
      %v2842 = vsel %vm1241, %v2840, %v2841
      %v2843 = vrot.slane %v2841, 4
      %v2844 = vrot.slane %v2027, 5
      %v2845 = vsel %vm1241, %v2843, %v2844
      %v2846 = vrot.slane %v2740, 5
      %v2847 = vrot.slane %v2846, 4
      %v2848 = vrot.slane %v2029, 5
      %v2849 = vsel %vm1241, %v2847, %v2848
      %v2850 = vrot.slane %v2848, 4
      %v2851 = vrot.slane %v2030, 5
      %v2852 = vsel %vm1241, %v2850, %v2851
      %v2853 = vrot.slane %v2741, 5
      %v2854 = vrot.slane %v2853, 4
      %v2855 = vrot.slane %v2032, 5
      %v2856 = vsel %vm1241, %v2854, %v2855
      %v2857 = vrot.slane %v2855, 4
      %v2858 = vrot.slane %v2033, 5
      %v2859 = vsel %vm1241, %v2857, %v2858
      %v2860 = vrot.slane %v2742, 5
      %v2861 = vrot.slane %v2860, 4
      %v2862 = vrot.slane %v2035, 5
      %v2863 = vsel %vm1241, %v2861, %v2862
      %v2864 = vrot.slane %v2862, 4
      %v2865 = vrot.slane %v2036, 5
      %v2866 = vsel %vm1241, %v2864, %v2865
      %v2867 = vrot.slane %v2743, 5
      %v2868 = vrot.slane %v2867, 4
      %v2869 = vrot.slane %v2038, 5
      %v2870 = vsel %vm1241, %v2868, %v2869
      %v2871 = vrot.slane %v2869, 4
      %v2872 = vrot.slane %v2039, 5
      %v2873 = vsel %vm1241, %v2871, %v2872
      %v2874 = vrot.slane %v2744, 5
      %v2875 = vrot.slane %v2874, 4
      %v2876 = vrot.slane %v2041, 5
      %v2877 = vsel %vm1241, %v2875, %v2876
      %v2878 = vrot.slane %v2876, 4
      %v2879 = vrot.slane %v2042, 5
      %v2880 = vsel %vm1241, %v2878, %v2879
      %v2881 = vrot.slane %v2745, 5
      %v2882 = vrot.slane %v2881, 4
      %v2883 = vrot.slane %v2044, 5
      %v2884 = vsel %vm1241, %v2882, %v2883
      %v2885 = vrot.slane %v2883, 4
      %v2886 = vrot.slane %v2045, 5
      %v2887 = vsel %vm1241, %v2885, %v2886
      %v2888 = vrot.slane %v2746, 5
      %v2889 = vrot.slane %v2888, 4
      %v2890 = vrot.slane %v2047, 5
      %v2891 = vsel %vm1241, %v2889, %v2890
      %v2892 = vrot.slane %v2890, 4
      %v2893 = vrot.slane %v2048, 5
      %v2894 = vsel %vm1241, %v2892, %v2893
      %v2895 = vrot.slane %v2747, 5
      %v2896 = vrot.slane %v2895, 4
      %v2897 = vrot.slane %v2050, 5
      %v2898 = vsel %vm1241, %v2896, %v2897
      %v2899 = vrot.slane %v2897, 4
      %v2900 = vrot.slane %v2051, 5
      %v2901 = vsel %vm1241, %v2899, %v2900
      %v2902 = vrot.slane %v2748, 5
      %v2903 = vrot.slane %v2902, 4
      %v2904 = vrot.slane %v2053, 5
      %v2905 = vsel %vm1241, %v2903, %v2904
      %v2906 = vrot.slane %v2904, 4
      %v2907 = vrot.slane %v2054, 5
      %v2908 = vsel %vm1241, %v2906, %v2907
      %s2909 = scalar_lea.vmem %s1, 10
      %v2910 = vld [vmem:[%s2909] sm:$0x3]
      %v2911 = vunpack.c.l.b16 %v2800
      %v2912 = vunpack.c.l.b16 %v2803
      %v2913 = vunpack.c.l.b16 %v2807
      %v2914 = vunpack.c.l.b16 %v2810
      %v2915 = vunpack.c.l.b16 %v2814
      %v2916 = vunpack.c.l.b16 %v2817
      %v2917 = vunpack.c.l.b16 %v2821
      %v2918 = vunpack.c.l.b16 %v2824
      %v2919 = vunpack.c.l.b16 %v2828
      %v2920 = vunpack.c.l.b16 %v2831
      %v2921 = vunpack.c.l.b16 %v2835
      %v2922 = vunpack.c.l.b16 %v2838
      %v2923 = vunpack.c.l.b16 %v2842
      %v2924 = vunpack.c.l.b16 %v2845
      %v2925 = vunpack.c.l.b16 %v2849
      %v2926 = vunpack.c.l.b16 %v2852
      %v2927 = vunpack.c.l.b16 %v2856
      %v2928 = vunpack.c.l.b16 %v2859
      %v2929 = vunpack.c.l.b16 %v2863
      %v2930 = vunpack.c.l.b16 %v2866
      %v2931 = vunpack.c.l.b16 %v2870
      %v2932 = vunpack.c.l.b16 %v2873
      %v2933 = vunpack.c.l.b16 %v2877
      %v2934 = vunpack.c.l.b16 %v2880
      %v2935 = vunpack.c.l.b16 %v2884
      %v2936 = vunpack.c.l.b16 %v2887
      %v2937 = vunpack.c.l.b16 %v2891
      %v2938 = vunpack.c.l.b16 %v2894
      %v2939 = vunpack.c.l.b16 %v2898
      %v2940 = vunpack.c.l.b16 %v2901
      %v2941 = vunpack.c.l.b16 %v2905
      %v2942 = vunpack.c.l.b16 %v2908
      %v2943 = vpack.c.b16 %v2912, %v2911
      %v2944 = vpack.c.b16 %v2914, %v2913
      %v2945 = vpack.c.b16 %v2916, %v2915
      %v2946 = vpack.c.b16 %v2918, %v2917
      %v2947 = vpack.c.b16 %v2920, %v2919
      %v2948 = vpack.c.b16 %v2922, %v2921
      %v2949 = vpack.c.b16 %v2924, %v2923
      %v2950 = vpack.c.b16 %v2926, %v2925
      %v2951 = vpack.c.b16 %v2928, %v2927
      %v2952 = vpack.c.b16 %v2930, %v2929
      %v2953 = vpack.c.b16 %v2932, %v2931
      %v2954 = vpack.c.b16 %v2934, %v2933
      %v2955 = vpack.c.b16 %v2936, %v2935
      %v2956 = vpack.c.b16 %v2938, %v2937
      %v2957 = vpack.c.b16 %v2940, %v2939
      %v2958 = vpack.c.b16 %v2942, %v2941
      %v2960 = vsel %vm685, %v2943, 0
      %v2963 = vsel %vm685, %v2944, 0
      %v2966 = vsel %vm685, %v2945, 0
      %v2969 = vsel %vm685, %v2946, 0
      %v2972 = vsel %vm685, %v2947, 0
      %v2975 = vsel %vm685, %v2948, 0
      %v2978 = vsel %vm685, %v2949, 0
      %v2981 = vsel %vm685, %v2950, 0
      %v2984 = vsel %vm685, %v2951, 0
      %v2987 = vsel %vm685, %v2952, 0
      %v2990 = vsel %vm685, %v2953, 0
      %v2993 = vsel %vm685, %v2954, 0
      %v2996 = vsel %vm685, %v2955, 0
      %v2999 = vsel %vm685, %v2956, 0
      %v3002 = vsel %vm685, %v2957, 0
      %v3005 = vsel %vm685, %v2958, 0
      %v3008 = vsel %vm734, %v2910, 0
      %3010 = vmatprep.subr.bf16.mxu0 0
      %3011 = vmatpush1.bf16.msra.mxu0 %v3008
      %3012 = vmatprep.subr.bf16.mxu0 0
      %3013 = vmatpush1.bf16.msra.mxu0 0
      %3014 = vmatprep.subr.bf16.mxu0 0
      %3015 = vmatpush1.bf16.msra.mxu0 0
      %3016 = vmatprep.subr.bf16.mxu0 0
      %3017 = vmatpush1.bf16.msra.mxu0 0
      %3018 = vmatprep.subr.bf16.mxu0 0
      %3019 = vmatpush1.bf16.msra.mxu0 0
      %3020 = vmatprep.subr.bf16.mxu0 0
      %3021 = vmatpush1.bf16.msra.mxu0 0
      %3022 = vmatprep.subr.bf16.mxu0 0
      %3023 = vmatpush1.bf16.msra.mxu0 0
      %3024 = vmatprep.subr.bf16.mxu0 0
      %3025 = vmatpush1.bf16.msra.mxu0 0
      %3026 = vmatprep.subr.bf16.mxu0 0
      %3027 = vmatpush1.bf16.msra.mxu0 0
      %3028 = vmatprep.subr.bf16.mxu0 0
      %3029 = vmatpush1.bf16.msra.mxu0 0
      %3030 = vmatprep.subr.bf16.mxu0 0
      %3031 = vmatpush1.bf16.msra.mxu0 0
      %3032 = vmatprep.subr.bf16.mxu0 0
      %3033 = vmatpush1.bf16.msra.mxu0 0
      %3034 = vmatprep.subr.bf16.mxu0 0
      %3035 = vmatpush1.bf16.msra.mxu0 0
      %3036 = vmatprep.subr.bf16.mxu0 0
      %3037 = vmatpush1.bf16.msra.mxu0 0
      %3038 = vmatprep.subr.bf16.mxu0 0
      %3039 = vmatpush1.bf16.msra.mxu0 0
      %3040 = vmatprep.subr.bf16.mxu0 0
      %3041 = vmatpush1.bf16.msra.mxu0 0
      %3042 = vmatprep.mubr.bf16.mxu0 0
      %3043 = vmatmul.mubr.bf16.gmra.mrb[0].mxu0 %v2960
      %v3044 = vpop.f32.mrb[0].mxu0
      %v3045 = vadd.f32 0.0, %v3044
      %v3046 = vpop.f32.mrb[0].mxu0
      %v3047 = vpop.f32.mrb[0].mxu0
      %v3048 = vadd.f32 0.0, %v3047
      %v3049 = vpop.f32.mrb[0].mxu0
      %3050 = vmatprep.mubr.bf16.mxu0 0
      %3051 = vmatmul.mubr.bf16.gmra.mrb[0].mxu0 %v2963
      %v3052 = vpop.f32.mrb[0].mxu0
      %v3053 = vadd.f32 0.0, %v3052
      %v3054 = vpop.f32.mrb[0].mxu0
      %v3055 = vpop.f32.mrb[0].mxu0
      %v3056 = vadd.f32 0.0, %v3055
      %v3057 = vpop.f32.mrb[0].mxu0
      %3058 = vmatprep.mubr.bf16.mxu0 0
      %3059 = vmatmul.mubr.bf16.gmra.mrb[0].mxu0 %v2966
      %v3060 = vpop.f32.mrb[0].mxu0
      %v3061 = vadd.f32 0.0, %v3060
      %v3062 = vpop.f32.mrb[0].mxu0
      %v3063 = vpop.f32.mrb[0].mxu0
      %v3064 = vadd.f32 0.0, %v3063
      %v3065 = vpop.f32.mrb[0].mxu0
      %3066 = vmatprep.mubr.bf16.mxu0 0
      %3067 = vmatmul.mubr.bf16.gmra.mrb[0].mxu0 %v2969
      %v3068 = vpop.f32.mrb[0].mxu0
      %v3069 = vadd.f32 0.0, %v3068
      %v3070 = vpop.f32.mrb[0].mxu0
      %v3071 = vpop.f32.mrb[0].mxu0
      %v3072 = vadd.f32 0.0, %v3071
      %v3073 = vpop.f32.mrb[0].mxu0
      %3074 = vmatprep.mubr.bf16.mxu0 0
      %3075 = vmatmul.mubr.bf16.gmra.mrb[0].mxu0 %v2972
      %v3076 = vpop.f32.mrb[0].mxu0
      %v3077 = vadd.f32 0.0, %v3076
      %v3078 = vpop.f32.mrb[0].mxu0
      %v3079 = vpop.f32.mrb[0].mxu0
      %v3080 = vadd.f32 0.0, %v3079
      %v3081 = vpop.f32.mrb[0].mxu0
      %3082 = vmatprep.mubr.bf16.mxu0 0
      %3083 = vmatmul.mubr.bf16.gmra.mrb[0].mxu0 %v2975
      %v3084 = vpop.f32.mrb[0].mxu0
      %v3085 = vadd.f32 0.0, %v3084
      %v3086 = vpop.f32.mrb[0].mxu0
      %v3087 = vpop.f32.mrb[0].mxu0
      %v3088 = vadd.f32 0.0, %v3087
      %v3089 = vpop.f32.mrb[0].mxu0
      %3090 = vmatprep.mubr.bf16.mxu0 0
      %3091 = vmatmul.mubr.bf16.gmra.mrb[0].mxu0 %v2978
      %v3092 = vpop.f32.mrb[0].mxu0
      %v3093 = vadd.f32 0.0, %v3092
      %v3094 = vpop.f32.mrb[0].mxu0
      %v3095 = vpop.f32.mrb[0].mxu0
      %v3096 = vadd.f32 0.0, %v3095
      %v3097 = vpop.f32.mrb[0].mxu0
      %3098 = vmatprep.mubr.bf16.mxu0 0
      %3099 = vmatmul.mubr.bf16.gmra.mrb[0].mxu0 %v2981
      %v3100 = vpop.f32.mrb[0].mxu0
      %v3101 = vadd.f32 0.0, %v3100
      %v3102 = vpop.f32.mrb[0].mxu0
      %v3103 = vpop.f32.mrb[0].mxu0
      %v3104 = vadd.f32 0.0, %v3103
      %v3105 = vpop.f32.mrb[0].mxu0
      %3106 = vmatprep.mubr.bf16.mxu0 0
      %3107 = vmatmul.mubr.bf16.gmra.mrb[0].mxu0 %v2984
      %v3108 = vpop.f32.mrb[0].mxu0
      %v3109 = vadd.f32 0.0, %v3108
      %v3110 = vpop.f32.mrb[0].mxu0
      %v3111 = vpop.f32.mrb[0].mxu0
      %v3112 = vadd.f32 0.0, %v3111
      %v3113 = vpop.f32.mrb[0].mxu0
      %3114 = vmatprep.mubr.bf16.mxu0 0
      %3115 = vmatmul.mubr.bf16.gmra.mrb[0].mxu0 %v2987
      %v3116 = vpop.f32.mrb[0].mxu0
      %v3117 = vadd.f32 0.0, %v3116
      %v3118 = vpop.f32.mrb[0].mxu0
      %v3119 = vpop.f32.mrb[0].mxu0
      %v3120 = vadd.f32 0.0, %v3119
      %v3121 = vpop.f32.mrb[0].mxu0
      %3122 = vmatprep.mubr.bf16.mxu0 0
      %3123 = vmatmul.mubr.bf16.gmra.mrb[0].mxu0 %v2990
      %v3124 = vpop.f32.mrb[0].mxu0
      %v3125 = vadd.f32 0.0, %v3124
      %v3126 = vpop.f32.mrb[0].mxu0
      %v3127 = vpop.f32.mrb[0].mxu0
      %v3128 = vadd.f32 0.0, %v3127
      %v3129 = vpop.f32.mrb[0].mxu0
      %3130 = vmatprep.mubr.bf16.mxu0 0
      %3131 = vmatmul.mubr.bf16.gmra.mrb[0].mxu0 %v2993
      %v3132 = vpop.f32.mrb[0].mxu0
      %v3133 = vadd.f32 0.0, %v3132
      %v3134 = vpop.f32.mrb[0].mxu0
      %v3135 = vpop.f32.mrb[0].mxu0
      %v3136 = vadd.f32 0.0, %v3135
      %v3137 = vpop.f32.mrb[0].mxu0
      %3138 = vmatprep.mubr.bf16.mxu0 0
      %3139 = vmatmul.mubr.bf16.gmra.mrb[0].mxu0 %v2996
      %v3140 = vpop.f32.mrb[0].mxu0
      %v3141 = vadd.f32 0.0, %v3140
      %v3142 = vpop.f32.mrb[0].mxu0
      %v3143 = vpop.f32.mrb[0].mxu0
      %v3144 = vadd.f32 0.0, %v3143
      %v3145 = vpop.f32.mrb[0].mxu0
      %3146 = vmatprep.mubr.bf16.mxu0 0
      %3147 = vmatmul.mubr.bf16.gmra.mrb[0].mxu0 %v2999
      %v3148 = vpop.f32.mrb[0].mxu0
      %v3149 = vadd.f32 0.0, %v3148
      %v3150 = vpop.f32.mrb[0].mxu0
      %v3151 = vpop.f32.mrb[0].mxu0
      %v3152 = vadd.f32 0.0, %v3151
      %v3153 = vpop.f32.mrb[0].mxu0
      %3154 = vmatprep.mubr.bf16.mxu0 0
      %3155 = vmatmul.mubr.bf16.gmra.mrb[0].mxu0 %v3002
      %v3156 = vpop.f32.mrb[0].mxu0
      %v3157 = vadd.f32 0.0, %v3156
      %v3158 = vpop.f32.mrb[0].mxu0
      %v3159 = vpop.f32.mrb[0].mxu0
      %v3160 = vadd.f32 0.0, %v3159
      %v3161 = vpop.f32.mrb[0].mxu0
      %3162 = vmatprep.mubr.bf16.mxu0 0
      %3163 = vmatmul.mubr.bf16.gmra.mrb[0].mxu0 %v3005
      %v3164 = vpop.f32.mrb[0].mxu0
      %v3165 = vadd.f32 0.0, %v3164
      %v3166 = vpop.f32.mrb[0].mxu0
      %v3167 = vpop.f32.mrb[0].mxu0
      %v3168 = vadd.f32 0.0, %v3167
      %v3169 = vpop.f32.mrb[0].mxu0
      %3170 = vdwg.mxu0
      %v3171 = vadd.f32 %v2701, %v3045
      %v3172 = vadd.f32 %v2702, %v3048
      %v3173 = vadd.f32 %v2703, %v3053
      %v3174 = vadd.f32 %v2704, %v3056
      %v3175 = vadd.f32 %v2705, %v3061
      %v3176 = vadd.f32 %v2706, %v3064
      %v3177 = vadd.f32 %v2707, %v3069
      %v3178 = vadd.f32 %v2708, %v3072
      %v3179 = vadd.f32 %v2709, %v3077
      %v3180 = vadd.f32 %v2710, %v3080
      %v3181 = vadd.f32 %v2711, %v3085
      %v3182 = vadd.f32 %v2712, %v3088
      %v3183 = vadd.f32 %v2713, %v3093
      %v3184 = vadd.f32 %v2714, %v3096
      %v3185 = vadd.f32 %v2715, %v3101
      %v3186 = vadd.f32 %v2716, %v3104
      %v3187 = vadd.f32 %v2717, %v3109
      %v3188 = vadd.f32 %v2718, %v3112
      %v3189 = vadd.f32 %v2719, %v3117
      %v3190 = vadd.f32 %v2720, %v3120
      %v3191 = vadd.f32 %v2721, %v3125
      %v3192 = vadd.f32 %v2722, %v3128
      %v3193 = vadd.f32 %v2723, %v3133
      %v3194 = vadd.f32 %v2724, %v3136
      %v3195 = vadd.f32 %v2725, %v3141
      %v3196 = vadd.f32 %v2726, %v3144
      %v3197 = vadd.f32 %v2727, %v3149
      %v3198 = vadd.f32 %v2728, %v3152
      %v3199 = vadd.f32 %v2729, %v3157
      %v3200 = vadd.f32 %v2730, %v3160
      %v3201 = vadd.f32 %v2731, %v3165
      %v3202 = vadd.f32 %v2732, %v3168
      %s3203 = scalar_lea.vmem %s192, 24
      %v3204 = vld [vmem:[%s3203] sm:$0xf]
      %v3205 = vld [vmem:[%s3203 + $0x4] sm:$0xf]
      %v3206 = vld [vmem:[%s3203 + $0xc] sm:$0xf]
      %v3207 = vld [vmem:[%s3203 + $0x10] sm:$0xf]
      %v3208 = vld [vmem:[%s3203 + $0x18] sm:$0xf]
      %v3209 = vld [vmem:[%s3203 + $0x1c] sm:$0xf]
      %v3210 = vld [vmem:[%s3203 + $0x24] sm:$0xf]
      %v3211 = vld [vmem:[%s3203 + $0x28] sm:$0xf]
      %v3212 = vld [vmem:[%s3203 + $0x30] sm:$0xf]
      %v3213 = vld [vmem:[%s3203 + $0x34] sm:$0xf]
      %v3214 = vld [vmem:[%s3203 + $0x3c] sm:$0xf]
      %v3215 = vld [vmem:[%s3203 + $0x40] sm:$0xf]
      %v3216 = vld [vmem:[%s3203 + $0x48] sm:$0xf]
      %v3217 = vld [vmem:[%s3203 + $0x4c] sm:$0xf]
      %v3218 = vld [vmem:[%s3203 + $0x54] sm:$0xf]
      %v3219 = vld [vmem:[%s3203 + $0x58] sm:$0xf]
      %v3220 = vld [vmem:[%s3203 + $0x60] sm:$0xf]
      %v3221 = vld [vmem:[%s3203 + $0x64] sm:$0xf]
      %v3222 = vld [vmem:[%s3203 + $0x6c] sm:$0xf]
      %v3223 = vld [vmem:[%s3203 + $0x70] sm:$0xf]
      %v3224 = vld [vmem:[%s3203 + $0x78] sm:$0xf]
      %v3225 = vld [vmem:[%s3203 + $0x7c] sm:$0xf]
      %v3226 = vld [vmem:[%s3203 + $0x84] sm:$0xf]
      %v3227 = vld [vmem:[%s3203 + $0x88] sm:$0xf]
      %v3228 = vld [vmem:[%s3203 + $0x90] sm:$0xf]
      %v3229 = vld [vmem:[%s3203 + $0x94] sm:$0xf]
      %v3230 = vld [vmem:[%s3203 + $0x9c] sm:$0xf]
      %v3231 = vld [vmem:[%s3203 + $0xa0] sm:$0xf]
      %v3232 = vld [vmem:[%s3203 + $0xa8] sm:$0xf]
      %v3233 = vld [vmem:[%s3203 + $0xac] sm:$0xf]
      %v3234 = vld [vmem:[%s3203 + $0xb4] sm:$0xf]
      %v3235 = vld [vmem:[%s3203 + $0xb8] sm:$0xf]
      %s3236 = scalar_lea.vmem %s1, 12
      %v3237 = vld [vmem:[%s3236] sm:$0x3]
      %v3270 = vunpack.c.l.b16 %v3204
      %v3271 = vunpack.c.l.b16 %v3205
      %v3272 = vunpack.c.l.b16 %v3206
      %v3273 = vunpack.c.l.b16 %v3207
      %v3274 = vunpack.c.l.b16 %v3208
      %v3275 = vunpack.c.l.b16 %v3209
      %v3276 = vunpack.c.l.b16 %v3210
      %v3277 = vunpack.c.l.b16 %v3211
      %v3278 = vunpack.c.l.b16 %v3212
      %v3279 = vunpack.c.l.b16 %v3213
      %v3280 = vunpack.c.l.b16 %v3214
      %v3281 = vunpack.c.l.b16 %v3215
      %v3282 = vunpack.c.l.b16 %v3216
      %v3283 = vunpack.c.l.b16 %v3217
      %v3284 = vunpack.c.l.b16 %v3218
      %v3285 = vunpack.c.l.b16 %v3219
      %v3286 = vunpack.c.l.b16 %v3220
      %v3287 = vunpack.c.l.b16 %v3221
      %v3288 = vunpack.c.l.b16 %v3222
      %v3289 = vunpack.c.l.b16 %v3223
      %v3290 = vunpack.c.l.b16 %v3224
      %v3291 = vunpack.c.l.b16 %v3225
      %v3292 = vunpack.c.l.b16 %v3226
      %v3293 = vunpack.c.l.b16 %v3227
      %v3294 = vunpack.c.l.b16 %v3228
      %v3295 = vunpack.c.l.b16 %v3229
      %v3296 = vunpack.c.l.b16 %v3230
      %v3297 = vunpack.c.l.b16 %v3231
      %v3298 = vunpack.c.l.b16 %v3232
      %v3299 = vunpack.c.l.b16 %v3233
      %v3300 = vunpack.c.l.b16 %v3234
      %v3301 = vunpack.c.l.b16 %v3235
      %v3302 = vpack.c.b16 %v3271, %v3270
      %v3303 = vpack.c.b16 %v3273, %v3272
      %v3304 = vpack.c.b16 %v3275, %v3274
      %v3305 = vpack.c.b16 %v3277, %v3276
      %v3306 = vpack.c.b16 %v3279, %v3278
      %v3307 = vpack.c.b16 %v3281, %v3280
      %v3308 = vpack.c.b16 %v3283, %v3282
      %v3309 = vpack.c.b16 %v3285, %v3284
      %v3310 = vpack.c.b16 %v3287, %v3286
      %v3311 = vpack.c.b16 %v3289, %v3288
      %v3312 = vpack.c.b16 %v3291, %v3290
      %v3313 = vpack.c.b16 %v3293, %v3292
      %v3314 = vpack.c.b16 %v3295, %v3294
      %v3315 = vpack.c.b16 %v3297, %v3296
      %v3316 = vpack.c.b16 %v3299, %v3298
      %v3317 = vpack.c.b16 %v3301, %v3300
      %v3319 = vsel %vm685, %v3302, 0
      %v3322 = vsel %vm685, %v3303, 0
      %v3325 = vsel %vm685, %v3304, 0
      %v3328 = vsel %vm685, %v3305, 0
      %v3331 = vsel %vm685, %v3306, 0
      %v3334 = vsel %vm685, %v3307, 0
      %v3337 = vsel %vm685, %v3308, 0
      %v3340 = vsel %vm685, %v3309, 0
      %v3343 = vsel %vm685, %v3310, 0
      %v3346 = vsel %vm685, %v3311, 0
      %v3349 = vsel %vm685, %v3312, 0
      %v3352 = vsel %vm685, %v3313, 0
      %v3355 = vsel %vm685, %v3314, 0
      %v3358 = vsel %vm685, %v3315, 0
      %v3361 = vsel %vm685, %v3316, 0
      %v3364 = vsel %vm685, %v3317, 0
      %v3367 = vsel %vm734, %v3237, 0
      %3369 = vmatprep.subr.bf16.mxu0 0
      %3370 = vmatpush1.bf16.msra.mxu0 %v3367
      %3371 = vmatprep.subr.bf16.mxu0 0
      %3372 = vmatpush1.bf16.msra.mxu0 0
      %3373 = vmatprep.subr.bf16.mxu0 0
      %3374 = vmatpush1.bf16.msra.mxu0 0
      %3375 = vmatprep.subr.bf16.mxu0 0
      %3376 = vmatpush1.bf16.msra.mxu0 0
      %3377 = vmatprep.subr.bf16.mxu0 0
      %3378 = vmatpush1.bf16.msra.mxu0 0
      %3379 = vmatprep.subr.bf16.mxu0 0
      %3380 = vmatpush1.bf16.msra.mxu0 0
      %3381 = vmatprep.subr.bf16.mxu0 0
      %3382 = vmatpush1.bf16.msra.mxu0 0
      %3383 = vmatprep.subr.bf16.mxu0 0
      %3384 = vmatpush1.bf16.msra.mxu0 0
      %3385 = vmatprep.subr.bf16.mxu0 0
      %3386 = vmatpush1.bf16.msra.mxu0 0
      %3387 = vmatprep.subr.bf16.mxu0 0
      %3388 = vmatpush1.bf16.msra.mxu0 0
      %3389 = vmatprep.subr.bf16.mxu0 0
      %3390 = vmatpush1.bf16.msra.mxu0 0
      %3391 = vmatprep.subr.bf16.mxu0 0
      %3392 = vmatpush1.bf16.msra.mxu0 0
      %3393 = vmatprep.subr.bf16.mxu0 0
      %3394 = vmatpush1.bf16.msra.mxu0 0
      %3395 = vmatprep.subr.bf16.mxu0 0
      %3396 = vmatpush1.bf16.msra.mxu0 0
      %3397 = vmatprep.subr.bf16.mxu0 0
      %3398 = vmatpush1.bf16.msra.mxu0 0
      %3399 = vmatprep.subr.bf16.mxu0 0
      %3400 = vmatpush1.bf16.msra.mxu0 0
      %3401 = vmatprep.mubr.bf16.mxu0 0
      %3402 = vmatmul.mubr.bf16.gmra.mrb[0].mxu0 %v3319
      %v3403 = vpop.f32.mrb[0].mxu0
      %v3404 = vadd.f32 0.0, %v3403
      %v3405 = vpop.f32.mrb[0].mxu0
      %v3406 = vpop.f32.mrb[0].mxu0
      %v3407 = vadd.f32 0.0, %v3406
      %v3408 = vpop.f32.mrb[0].mxu0
      %3409 = vmatprep.mubr.bf16.mxu0 0
      %3410 = vmatmul.mubr.bf16.gmra.mrb[0].mxu0 %v3322
      %v3411 = vpop.f32.mrb[0].mxu0
      %v3412 = vadd.f32 0.0, %v3411
      %v3413 = vpop.f32.mrb[0].mxu0
      %v3414 = vpop.f32.mrb[0].mxu0
      %v3415 = vadd.f32 0.0, %v3414
      %v3416 = vpop.f32.mrb[0].mxu0
      %3417 = vmatprep.mubr.bf16.mxu0 0
      %3418 = vmatmul.mubr.bf16.gmra.mrb[0].mxu0 %v3325
      %v3419 = vpop.f32.mrb[0].mxu0
      %v3420 = vadd.f32 0.0, %v3419
      %v3421 = vpop.f32.mrb[0].mxu0
      %v3422 = vpop.f32.mrb[0].mxu0
      %v3423 = vadd.f32 0.0, %v3422
      %v3424 = vpop.f32.mrb[0].mxu0
      %3425 = vmatprep.mubr.bf16.mxu0 0
      %3426 = vmatmul.mubr.bf16.gmra.mrb[0].mxu0 %v3328
      %v3427 = vpop.f32.mrb[0].mxu0
      %v3428 = vadd.f32 0.0, %v3427
      %v3429 = vpop.f32.mrb[0].mxu0
      %v3430 = vpop.f32.mrb[0].mxu0
      %v3431 = vadd.f32 0.0, %v3430
      %v3432 = vpop.f32.mrb[0].mxu0
      %3433 = vmatprep.mubr.bf16.mxu0 0
      %3434 = vmatmul.mubr.bf16.gmra.mrb[0].mxu0 %v3331
      %v3435 = vpop.f32.mrb[0].mxu0
      %v3436 = vadd.f32 0.0, %v3435
      %v3437 = vpop.f32.mrb[0].mxu0
      %v3438 = vpop.f32.mrb[0].mxu0
      %v3439 = vadd.f32 0.0, %v3438
      %v3440 = vpop.f32.mrb[0].mxu0
      %3441 = vmatprep.mubr.bf16.mxu0 0
      %3442 = vmatmul.mubr.bf16.gmra.mrb[0].mxu0 %v3334
      %v3443 = vpop.f32.mrb[0].mxu0
      %v3444 = vadd.f32 0.0, %v3443
      %v3445 = vpop.f32.mrb[0].mxu0
      %v3446 = vpop.f32.mrb[0].mxu0
      %v3447 = vadd.f32 0.0, %v3446
      %v3448 = vpop.f32.mrb[0].mxu0
      %3449 = vmatprep.mubr.bf16.mxu0 0
      %3450 = vmatmul.mubr.bf16.gmra.mrb[0].mxu0 %v3337
      %v3451 = vpop.f32.mrb[0].mxu0
      %v3452 = vadd.f32 0.0, %v3451
      %v3453 = vpop.f32.mrb[0].mxu0
      %v3454 = vpop.f32.mrb[0].mxu0
      %v3455 = vadd.f32 0.0, %v3454
      %v3456 = vpop.f32.mrb[0].mxu0
      %3457 = vmatprep.mubr.bf16.mxu0 0
      %3458 = vmatmul.mubr.bf16.gmra.mrb[0].mxu0 %v3340
      %v3459 = vpop.f32.mrb[0].mxu0
      %v3460 = vadd.f32 0.0, %v3459
      %v3461 = vpop.f32.mrb[0].mxu0
      %v3462 = vpop.f32.mrb[0].mxu0
      %v3463 = vadd.f32 0.0, %v3462
      %v3464 = vpop.f32.mrb[0].mxu0
      %3465 = vmatprep.mubr.bf16.mxu0 0
      %3466 = vmatmul.mubr.bf16.gmra.mrb[0].mxu0 %v3343
      %v3467 = vpop.f32.mrb[0].mxu0
      %v3468 = vadd.f32 0.0, %v3467
      %v3469 = vpop.f32.mrb[0].mxu0
      %v3470 = vpop.f32.mrb[0].mxu0
      %v3471 = vadd.f32 0.0, %v3470
      %v3472 = vpop.f32.mrb[0].mxu0
      %3473 = vmatprep.mubr.bf16.mxu0 0
      %3474 = vmatmul.mubr.bf16.gmra.mrb[0].mxu0 %v3346
      %v3475 = vpop.f32.mrb[0].mxu0
      %v3476 = vadd.f32 0.0, %v3475
      %v3477 = vpop.f32.mrb[0].mxu0
      %v3478 = vpop.f32.mrb[0].mxu0
      %v3479 = vadd.f32 0.0, %v3478
      %v3480 = vpop.f32.mrb[0].mxu0
      %3481 = vmatprep.mubr.bf16.mxu0 0
      %3482 = vmatmul.mubr.bf16.gmra.mrb[0].mxu0 %v3349
      %v3483 = vpop.f32.mrb[0].mxu0
      %v3484 = vadd.f32 0.0, %v3483
      %v3485 = vpop.f32.mrb[0].mxu0
      %v3486 = vpop.f32.mrb[0].mxu0
      %v3487 = vadd.f32 0.0, %v3486
      %v3488 = vpop.f32.mrb[0].mxu0
      %3489 = vmatprep.mubr.bf16.mxu0 0
      %3490 = vmatmul.mubr.bf16.gmra.mrb[0].mxu0 %v3352
      %v3491 = vpop.f32.mrb[0].mxu0
      %v3492 = vadd.f32 0.0, %v3491
      %v3493 = vpop.f32.mrb[0].mxu0
      %v3494 = vpop.f32.mrb[0].mxu0
      %v3495 = vadd.f32 0.0, %v3494
      %v3496 = vpop.f32.mrb[0].mxu0
      %3497 = vmatprep.mubr.bf16.mxu0 0
      %3498 = vmatmul.mubr.bf16.gmra.mrb[0].mxu0 %v3355
      %v3499 = vpop.f32.mrb[0].mxu0
      %v3500 = vadd.f32 0.0, %v3499
      %v3501 = vpop.f32.mrb[0].mxu0
      %v3502 = vpop.f32.mrb[0].mxu0
      %v3503 = vadd.f32 0.0, %v3502
      %v3504 = vpop.f32.mrb[0].mxu0
      %3505 = vmatprep.mubr.bf16.mxu0 0
      %3506 = vmatmul.mubr.bf16.gmra.mrb[0].mxu0 %v3358
      %v3507 = vpop.f32.mrb[0].mxu0
      %v3508 = vadd.f32 0.0, %v3507
      %v3509 = vpop.f32.mrb[0].mxu0
      %v3510 = vpop.f32.mrb[0].mxu0
      %v3511 = vadd.f32 0.0, %v3510
      %v3512 = vpop.f32.mrb[0].mxu0
      %3513 = vmatprep.mubr.bf16.mxu0 0
      %3514 = vmatmul.mubr.bf16.gmra.mrb[0].mxu0 %v3361
      %v3515 = vpop.f32.mrb[0].mxu0
      %v3516 = vadd.f32 0.0, %v3515
      %v3517 = vpop.f32.mrb[0].mxu0
      %v3518 = vpop.f32.mrb[0].mxu0
      %v3519 = vadd.f32 0.0, %v3518
      %v3520 = vpop.f32.mrb[0].mxu0
      %3521 = vmatprep.mubr.bf16.mxu0 0
      %3522 = vmatmul.mubr.bf16.gmra.mrb[0].mxu0 %v3364
      %v3523 = vpop.f32.mrb[0].mxu0
      %v3524 = vadd.f32 0.0, %v3523
      %v3525 = vpop.f32.mrb[0].mxu0
      %v3526 = vpop.f32.mrb[0].mxu0
      %v3527 = vadd.f32 0.0, %v3526
      %v3528 = vpop.f32.mrb[0].mxu0
      %3529 = vdwg.mxu0
      %v3530 = vadd.f32 %v3171, %v3404
      %v3531 = vadd.f32 %v3172, %v3407
      %v3532 = vadd.f32 %v3173, %v3412
      %v3533 = vadd.f32 %v3174, %v3415
      %v3534 = vadd.f32 %v3175, %v3420
      %v3535 = vadd.f32 %v3176, %v3423
      %v3536 = vadd.f32 %v3177, %v3428
      %v3537 = vadd.f32 %v3178, %v3431
      %v3538 = vadd.f32 %v3179, %v3436
      %v3539 = vadd.f32 %v3180, %v3439
      %v3540 = vadd.f32 %v3181, %v3444
      %v3541 = vadd.f32 %v3182, %v3447
      %v3542 = vadd.f32 %v3183, %v3452
      %v3543 = vadd.f32 %v3184, %v3455
      %v3544 = vadd.f32 %v3185, %v3460
      %v3545 = vadd.f32 %v3186, %v3463
      %v3546 = vadd.f32 %v3187, %v3468
      %v3547 = vadd.f32 %v3188, %v3471
      %v3548 = vadd.f32 %v3189, %v3476
      %v3549 = vadd.f32 %v3190, %v3479
      %v3550 = vadd.f32 %v3191, %v3484
      %v3551 = vadd.f32 %v3192, %v3487
      %v3552 = vadd.f32 %v3193, %v3492
      %v3553 = vadd.f32 %v3194, %v3495
      %v3554 = vadd.f32 %v3195, %v3500
      %v3555 = vadd.f32 %v3196, %v3503
      %v3556 = vadd.f32 %v3197, %v3508
      %v3557 = vadd.f32 %v3198, %v3511
      %v3558 = vadd.f32 %v3199, %v3516
      %v3559 = vadd.f32 %v3200, %v3519
      %v3560 = vadd.f32 %v3201, %v3524
      %v3561 = vadd.f32 %v3202, %v3527
      %v3562 = vld [vmem:[%s3203] sm:$0xf]
      %v3563 = vld [vmem:[%s3203 + $0x4] sm:$0xf]
      %v3564 = vld [vmem:[%s3203 + $0x8] sm:$0x1]
      %v3565 = vld [vmem:[%s3203 + $0xc] sm:$0xf]
      %v3566 = vld [vmem:[%s3203 + $0x10] sm:$0xf]
      %v3567 = vld [vmem:[%s3203 + $0x14] sm:$0x1]
      %v3568 = vld [vmem:[%s3203 + $0x18] sm:$0xf]
      %v3569 = vld [vmem:[%s3203 + $0x1c] sm:$0xf]
      %v3570 = vld [vmem:[%s3203 + $0x20] sm:$0x1]
      %v3571 = vld [vmem:[%s3203 + $0x24] sm:$0xf]
      %v3572 = vld [vmem:[%s3203 + $0x28] sm:$0xf]
      %v3573 = vld [vmem:[%s3203 + $0x2c] sm:$0x1]
      %v3574 = vld [vmem:[%s3203 + $0x30] sm:$0xf]
      %v3575 = vld [vmem:[%s3203 + $0x34] sm:$0xf]
      %v3576 = vld [vmem:[%s3203 + $0x38] sm:$0x1]
      %v3577 = vld [vmem:[%s3203 + $0x3c] sm:$0xf]
      %v3578 = vld [vmem:[%s3203 + $0x40] sm:$0xf]
      %v3579 = vld [vmem:[%s3203 + $0x44] sm:$0x1]
      %v3580 = vld [vmem:[%s3203 + $0x48] sm:$0xf]
      %v3581 = vld [vmem:[%s3203 + $0x4c] sm:$0xf]
      %v3582 = vld [vmem:[%s3203 + $0x50] sm:$0x1]
      %v3583 = vld [vmem:[%s3203 + $0x54] sm:$0xf]
      %v3584 = vld [vmem:[%s3203 + $0x58] sm:$0xf]
      %v3585 = vld [vmem:[%s3203 + $0x5c] sm:$0x1]
      %v3586 = vld [vmem:[%s3203 + $0x60] sm:$0xf]
      %v3587 = vld [vmem:[%s3203 + $0x64] sm:$0xf]
      %v3588 = vld [vmem:[%s3203 + $0x68] sm:$0x1]
      %v3589 = vld [vmem:[%s3203 + $0x6c] sm:$0xf]
      %v3590 = vld [vmem:[%s3203 + $0x70] sm:$0xf]
      %v3591 = vld [vmem:[%s3203 + $0x74] sm:$0x1]
      %v3592 = vld [vmem:[%s3203 + $0x78] sm:$0xf]
      %v3593 = vld [vmem:[%s3203 + $0x7c] sm:$0xf]
      %v3594 = vld [vmem:[%s3203 + $0x80] sm:$0x1]
      %v3595 = vld [vmem:[%s3203 + $0x84] sm:$0xf]
      %v3596 = vld [vmem:[%s3203 + $0x88] sm:$0xf]
      %v3597 = vld [vmem:[%s3203 + $0x8c] sm:$0x1]
      %v3598 = vld [vmem:[%s3203 + $0x90] sm:$0xf]
      %v3599 = vld [vmem:[%s3203 + $0x94] sm:$0xf]
      %v3600 = vld [vmem:[%s3203 + $0x98] sm:$0x1]
      %v3601 = vld [vmem:[%s3203 + $0x9c] sm:$0xf]
      %v3602 = vld [vmem:[%s3203 + $0xa0] sm:$0xf]
      %v3603 = vld [vmem:[%s3203 + $0xa4] sm:$0x1]
      %v3604 = vld [vmem:[%s3203 + $0xa8] sm:$0xf]
      %v3605 = vld [vmem:[%s3203 + $0xac] sm:$0xf]
      %v3606 = vld [vmem:[%s3203 + $0xb0] sm:$0x1]
      %v3607 = vld [vmem:[%s3203 + $0xb4] sm:$0xf]
      %v3608 = vld [vmem:[%s3203 + $0xb8] sm:$0xf]
      %v3609 = vld [vmem:[%s3203 + $0xbc] sm:$0x1]
      %v3611 = vshrl.u32 %v3562, 16
      %v3613 = vrot.slane %v3611, 4
      %v3614 = vshll.u32 %v3562, 16
      %v3616 = vrot.slane %v3614, 5
      %v3617 = vor.u32 %v3613, %v3616
      %v3618 = vrot.slane %v3617, 4
      %v3620 = vshll.u32 %v3563, 16
      %v3622 = vrot.slane %v3620, 5
      %v3623 = vsel %vm250, %v3618, %v3622
      %v3624 = vshrl.u32 %v3563, 16
      %v3626 = vrot.slane %v3624, 4
      %v3627 = vor.u32 %v3626, %v3622
      %v3628 = vrot.slane %v3627, 4
      %v3630 = vshll.u32 %v3564, 16
      %v3632 = vrot.slane %v3630, 5
      %v3633 = vsel %vm250, %v3628, %v3632
      %v3635 = vshrl.u32 %v3565, 16
      %v3637 = vrot.slane %v3635, 4
      %v3638 = vshll.u32 %v3565, 16
      %v3640 = vrot.slane %v3638, 5
      %v3641 = vor.u32 %v3637, %v3640
      %v3642 = vrot.slane %v3641, 4
      %v3644 = vshll.u32 %v3566, 16
      %v3646 = vrot.slane %v3644, 5
      %v3647 = vsel %vm250, %v3642, %v3646
      %v3648 = vshrl.u32 %v3566, 16
      %v3650 = vrot.slane %v3648, 4
      %v3651 = vor.u32 %v3650, %v3646
      %v3652 = vrot.slane %v3651, 4
      %v3654 = vshll.u32 %v3567, 16
      %v3656 = vrot.slane %v3654, 5
      %v3657 = vsel %vm250, %v3652, %v3656
      %v3659 = vshrl.u32 %v3568, 16
      %v3661 = vrot.slane %v3659, 4
      %v3662 = vshll.u32 %v3568, 16
      %v3664 = vrot.slane %v3662, 5
      %v3665 = vor.u32 %v3661, %v3664
      %v3666 = vrot.slane %v3665, 4
      %v3668 = vshll.u32 %v3569, 16
      %v3670 = vrot.slane %v3668, 5
      %v3671 = vsel %vm250, %v3666, %v3670
      %v3672 = vshrl.u32 %v3569, 16
      %v3674 = vrot.slane %v3672, 4
      %v3675 = vor.u32 %v3674, %v3670
      %v3676 = vrot.slane %v3675, 4
      %v3678 = vshll.u32 %v3570, 16
      %v3680 = vrot.slane %v3678, 5
      %v3681 = vsel %vm250, %v3676, %v3680
      %v3683 = vshrl.u32 %v3571, 16
      %v3685 = vrot.slane %v3683, 4
      %v3686 = vshll.u32 %v3571, 16
      %v3688 = vrot.slane %v3686, 5
      %v3689 = vor.u32 %v3685, %v3688
      %v3690 = vrot.slane %v3689, 4
      %v3692 = vshll.u32 %v3572, 16
      %v3694 = vrot.slane %v3692, 5
      %v3695 = vsel %vm250, %v3690, %v3694
      %v3696 = vshrl.u32 %v3572, 16
      %v3698 = vrot.slane %v3696, 4
      %v3699 = vor.u32 %v3698, %v3694
      %v3700 = vrot.slane %v3699, 4
      %v3702 = vshll.u32 %v3573, 16
      %v3704 = vrot.slane %v3702, 5
      %v3705 = vsel %vm250, %v3700, %v3704
      %v3707 = vshrl.u32 %v3574, 16
      %v3709 = vrot.slane %v3707, 4
      %v3710 = vshll.u32 %v3574, 16
      %v3712 = vrot.slane %v3710, 5
      %v3713 = vor.u32 %v3709, %v3712
      %v3714 = vrot.slane %v3713, 4
      %v3716 = vshll.u32 %v3575, 16
      %v3718 = vrot.slane %v3716, 5
      %v3719 = vsel %vm250, %v3714, %v3718
      %v3720 = vshrl.u32 %v3575, 16
      %v3722 = vrot.slane %v3720, 4
      %v3723 = vor.u32 %v3722, %v3718
      %v3724 = vrot.slane %v3723, 4
      %v3726 = vshll.u32 %v3576, 16
      %v3728 = vrot.slane %v3726, 5
      %v3729 = vsel %vm250, %v3724, %v3728
      %v3731 = vshrl.u32 %v3577, 16
      %v3733 = vrot.slane %v3731, 4
      %v3734 = vshll.u32 %v3577, 16
      %v3736 = vrot.slane %v3734, 5
      %v3737 = vor.u32 %v3733, %v3736
      %v3738 = vrot.slane %v3737, 4
      %v3740 = vshll.u32 %v3578, 16
      %v3742 = vrot.slane %v3740, 5
      %v3743 = vsel %vm250, %v3738, %v3742
      %v3744 = vshrl.u32 %v3578, 16
      %v3746 = vrot.slane %v3744, 4
      %v3747 = vor.u32 %v3746, %v3742
      %v3748 = vrot.slane %v3747, 4
      %v3750 = vshll.u32 %v3579, 16
      %v3752 = vrot.slane %v3750, 5
      %v3753 = vsel %vm250, %v3748, %v3752
      %v3755 = vshrl.u32 %v3580, 16
      %v3757 = vrot.slane %v3755, 4
      %v3758 = vshll.u32 %v3580, 16
      %v3760 = vrot.slane %v3758, 5
      %v3761 = vor.u32 %v3757, %v3760
      %v3762 = vrot.slane %v3761, 4
      %v3764 = vshll.u32 %v3581, 16
      %v3766 = vrot.slane %v3764, 5
      %v3767 = vsel %vm250, %v3762, %v3766
      %v3768 = vshrl.u32 %v3581, 16
      %v3770 = vrot.slane %v3768, 4
      %v3771 = vor.u32 %v3770, %v3766
      %v3772 = vrot.slane %v3771, 4
      %v3774 = vshll.u32 %v3582, 16
      %v3776 = vrot.slane %v3774, 5
      %v3777 = vsel %vm250, %v3772, %v3776
      %v3779 = vshrl.u32 %v3583, 16
      %v3781 = vrot.slane %v3779, 4
      %v3782 = vshll.u32 %v3583, 16
      %v3784 = vrot.slane %v3782, 5
      %v3785 = vor.u32 %v3781, %v3784
      %v3786 = vrot.slane %v3785, 4
      %v3788 = vshll.u32 %v3584, 16
      %v3790 = vrot.slane %v3788, 5
      %v3791 = vsel %vm250, %v3786, %v3790
      %v3792 = vshrl.u32 %v3584, 16
      %v3794 = vrot.slane %v3792, 4
      %v3795 = vor.u32 %v3794, %v3790
      %v3796 = vrot.slane %v3795, 4
      %v3798 = vshll.u32 %v3585, 16
      %v3800 = vrot.slane %v3798, 5
      %v3801 = vsel %vm250, %v3796, %v3800
      %v3803 = vshrl.u32 %v3586, 16
      %v3805 = vrot.slane %v3803, 4
      %v3806 = vshll.u32 %v3586, 16
      %v3808 = vrot.slane %v3806, 5
      %v3809 = vor.u32 %v3805, %v3808
      %v3810 = vrot.slane %v3809, 4
      %v3812 = vshll.u32 %v3587, 16
      %v3814 = vrot.slane %v3812, 5
      %v3815 = vsel %vm250, %v3810, %v3814
      %v3816 = vshrl.u32 %v3587, 16
      %v3818 = vrot.slane %v3816, 4
      %v3819 = vor.u32 %v3818, %v3814
      %v3820 = vrot.slane %v3819, 4
      %v3822 = vshll.u32 %v3588, 16
      %v3824 = vrot.slane %v3822, 5
      %v3825 = vsel %vm250, %v3820, %v3824
      %v3827 = vshrl.u32 %v3589, 16
      %v3829 = vrot.slane %v3827, 4
      %v3830 = vshll.u32 %v3589, 16
      %v3832 = vrot.slane %v3830, 5
      %v3833 = vor.u32 %v3829, %v3832
      %v3834 = vrot.slane %v3833, 4
      %v3836 = vshll.u32 %v3590, 16
      %v3838 = vrot.slane %v3836, 5
      %v3839 = vsel %vm250, %v3834, %v3838
      %v3840 = vshrl.u32 %v3590, 16
      %v3842 = vrot.slane %v3840, 4
      %v3843 = vor.u32 %v3842, %v3838
      %v3844 = vrot.slane %v3843, 4
      %v3846 = vshll.u32 %v3591, 16
      %v3848 = vrot.slane %v3846, 5
      %v3849 = vsel %vm250, %v3844, %v3848
      %v3851 = vshrl.u32 %v3592, 16
      %v3853 = vrot.slane %v3851, 4
      %v3854 = vshll.u32 %v3592, 16
      %v3856 = vrot.slane %v3854, 5
      %v3857 = vor.u32 %v3853, %v3856
      %v3858 = vrot.slane %v3857, 4
      %v3860 = vshll.u32 %v3593, 16
      %v3862 = vrot.slane %v3860, 5
      %v3863 = vsel %vm250, %v3858, %v3862
      %v3864 = vshrl.u32 %v3593, 16
      %v3866 = vrot.slane %v3864, 4
      %v3867 = vor.u32 %v3866, %v3862
      %v3868 = vrot.slane %v3867, 4
      %v3870 = vshll.u32 %v3594, 16
      %v3872 = vrot.slane %v3870, 5
      %v3873 = vsel %vm250, %v3868, %v3872
      %v3875 = vshrl.u32 %v3595, 16
      %v3877 = vrot.slane %v3875, 4
      %v3878 = vshll.u32 %v3595, 16
      %v3880 = vrot.slane %v3878, 5
      %v3881 = vor.u32 %v3877, %v3880
      %v3882 = vrot.slane %v3881, 4
      %v3884 = vshll.u32 %v3596, 16
      %v3886 = vrot.slane %v3884, 5
      %v3887 = vsel %vm250, %v3882, %v3886
      %v3888 = vshrl.u32 %v3596, 16
      %v3890 = vrot.slane %v3888, 4
      %v3891 = vor.u32 %v3890, %v3886
      %v3892 = vrot.slane %v3891, 4
      %v3894 = vshll.u32 %v3597, 16
      %v3896 = vrot.slane %v3894, 5
      %v3897 = vsel %vm250, %v3892, %v3896
      %v3899 = vshrl.u32 %v3598, 16
      %v3901 = vrot.slane %v3899, 4
      %v3902 = vshll.u32 %v3598, 16
      %v3904 = vrot.slane %v3902, 5
      %v3905 = vor.u32 %v3901, %v3904
      %v3906 = vrot.slane %v3905, 4
      %v3908 = vshll.u32 %v3599, 16
      %v3910 = vrot.slane %v3908, 5
      %v3911 = vsel %vm250, %v3906, %v3910
      %v3912 = vshrl.u32 %v3599, 16
      %v3914 = vrot.slane %v3912, 4
      %v3915 = vor.u32 %v3914, %v3910
      %v3916 = vrot.slane %v3915, 4
      %v3918 = vshll.u32 %v3600, 16
      %v3920 = vrot.slane %v3918, 5
      %v3921 = vsel %vm250, %v3916, %v3920
      %v3923 = vshrl.u32 %v3601, 16
      %v3925 = vrot.slane %v3923, 4
      %v3926 = vshll.u32 %v3601, 16
      %v3928 = vrot.slane %v3926, 5
      %v3929 = vor.u32 %v3925, %v3928
      %v3930 = vrot.slane %v3929, 4
      %v3932 = vshll.u32 %v3602, 16
      %v3934 = vrot.slane %v3932, 5
      %v3935 = vsel %vm250, %v3930, %v3934
      %v3936 = vshrl.u32 %v3602, 16
      %v3938 = vrot.slane %v3936, 4
      %v3939 = vor.u32 %v3938, %v3934
      %v3940 = vrot.slane %v3939, 4
      %v3942 = vshll.u32 %v3603, 16
      %v3944 = vrot.slane %v3942, 5
      %v3945 = vsel %vm250, %v3940, %v3944
      %v3947 = vshrl.u32 %v3604, 16
      %v3949 = vrot.slane %v3947, 4
      %v3950 = vshll.u32 %v3604, 16
      %v3952 = vrot.slane %v3950, 5
      %v3953 = vor.u32 %v3949, %v3952
      %v3954 = vrot.slane %v3953, 4
      %v3956 = vshll.u32 %v3605, 16
      %v3958 = vrot.slane %v3956, 5
      %v3959 = vsel %vm250, %v3954, %v3958
      %v3960 = vshrl.u32 %v3605, 16
      %v3962 = vrot.slane %v3960, 4
      %v3963 = vor.u32 %v3962, %v3958
      %v3964 = vrot.slane %v3963, 4
      %v3966 = vshll.u32 %v3606, 16
      %v3968 = vrot.slane %v3966, 5
      %v3969 = vsel %vm250, %v3964, %v3968
      %v3971 = vshrl.u32 %v3607, 16
      %v3973 = vrot.slane %v3971, 4
      %v3974 = vshll.u32 %v3607, 16
      %v3976 = vrot.slane %v3974, 5
      %v3977 = vor.u32 %v3973, %v3976
      %v3978 = vrot.slane %v3977, 4
      %v3980 = vshll.u32 %v3608, 16
      %v3982 = vrot.slane %v3980, 5
      %v3983 = vsel %vm250, %v3978, %v3982
      %v3984 = vshrl.u32 %v3608, 16
      %v3986 = vrot.slane %v3984, 4
      %v3987 = vor.u32 %v3986, %v3982
      %v3988 = vrot.slane %v3987, 4
      %v3990 = vshll.u32 %v3609, 16
      %v3992 = vrot.slane %v3990, 5
      %v3993 = vsel %vm250, %v3988, %v3992
      %s3994 = scalar_lea.vmem %s1, 14
      %v3995 = vld [vmem:[%s3994] sm:$0x3]
      %v3996 = vunpack.c.l.b16 %v3623
      %v3997 = vunpack.c.l.b16 %v3633
      %v3998 = vunpack.c.l.b16 %v3647
      %v3999 = vunpack.c.l.b16 %v3657
      %v4000 = vunpack.c.l.b16 %v3671
      %v4001 = vunpack.c.l.b16 %v3681
      %v4002 = vunpack.c.l.b16 %v3695
      %v4003 = vunpack.c.l.b16 %v3705
      %v4004 = vunpack.c.l.b16 %v3719
      %v4005 = vunpack.c.l.b16 %v3729
      %v4006 = vunpack.c.l.b16 %v3743
      %v4007 = vunpack.c.l.b16 %v3753
      %v4008 = vunpack.c.l.b16 %v3767
      %v4009 = vunpack.c.l.b16 %v3777
      %v4010 = vunpack.c.l.b16 %v3791
      %v4011 = vunpack.c.l.b16 %v3801
      %v4012 = vunpack.c.l.b16 %v3815
      %v4013 = vunpack.c.l.b16 %v3825
      %v4014 = vunpack.c.l.b16 %v3839
      %v4015 = vunpack.c.l.b16 %v3849
      %v4016 = vunpack.c.l.b16 %v3863
      %v4017 = vunpack.c.l.b16 %v3873
      %v4018 = vunpack.c.l.b16 %v3887
      %v4019 = vunpack.c.l.b16 %v3897
      %v4020 = vunpack.c.l.b16 %v3911
      %v4021 = vunpack.c.l.b16 %v3921
      %v4022 = vunpack.c.l.b16 %v3935
      %v4023 = vunpack.c.l.b16 %v3945
      %v4024 = vunpack.c.l.b16 %v3959
      %v4025 = vunpack.c.l.b16 %v3969
      %v4026 = vunpack.c.l.b16 %v3983
      %v4027 = vunpack.c.l.b16 %v3993
      %v4028 = vpack.c.b16 %v3997, %v3996
      %v4029 = vpack.c.b16 %v3999, %v3998
      %v4030 = vpack.c.b16 %v4001, %v4000
      %v4031 = vpack.c.b16 %v4003, %v4002
      %v4032 = vpack.c.b16 %v4005, %v4004
      %v4033 = vpack.c.b16 %v4007, %v4006
      %v4034 = vpack.c.b16 %v4009, %v4008
      %v4035 = vpack.c.b16 %v4011, %v4010
      %v4036 = vpack.c.b16 %v4013, %v4012
      %v4037 = vpack.c.b16 %v4015, %v4014
      %v4038 = vpack.c.b16 %v4017, %v4016
      %v4039 = vpack.c.b16 %v4019, %v4018
      %v4040 = vpack.c.b16 %v4021, %v4020
      %v4041 = vpack.c.b16 %v4023, %v4022
      %v4042 = vpack.c.b16 %v4025, %v4024
      %v4043 = vpack.c.b16 %v4027, %v4026
      %v4045 = vsel %vm685, %v4028, 0
      %v4048 = vsel %vm685, %v4029, 0
      %v4051 = vsel %vm685, %v4030, 0
      %v4054 = vsel %vm685, %v4031, 0
      %v4057 = vsel %vm685, %v4032, 0
      %v4060 = vsel %vm685, %v4033, 0
      %v4063 = vsel %vm685, %v4034, 0
      %v4066 = vsel %vm685, %v4035, 0
      %v4069 = vsel %vm685, %v4036, 0
      %v4072 = vsel %vm685, %v4037, 0
      %v4075 = vsel %vm685, %v4038, 0
      %v4078 = vsel %vm685, %v4039, 0
      %v4081 = vsel %vm685, %v4040, 0
      %v4084 = vsel %vm685, %v4041, 0
      %v4087 = vsel %vm685, %v4042, 0
      %v4090 = vsel %vm685, %v4043, 0
      %v4093 = vsel %vm734, %v3995, 0
      %4095 = vmatprep.subr.bf16.mxu0 0
      %4096 = vmatpush1.bf16.msra.mxu0 %v4093
      %4097 = vmatprep.subr.bf16.mxu0 0
      %4098 = vmatpush1.bf16.msra.mxu0 0
      %4099 = vmatprep.subr.bf16.mxu0 0
      %4100 = vmatpush1.bf16.msra.mxu0 0
      %4101 = vmatprep.subr.bf16.mxu0 0
      %4102 = vmatpush1.bf16.msra.mxu0 0
      %4103 = vmatprep.subr.bf16.mxu0 0
      %4104 = vmatpush1.bf16.msra.mxu0 0
      %4105 = vmatprep.subr.bf16.mxu0 0
      %4106 = vmatpush1.bf16.msra.mxu0 0
      %4107 = vmatprep.subr.bf16.mxu0 0
      %4108 = vmatpush1.bf16.msra.mxu0 0
      %4109 = vmatprep.subr.bf16.mxu0 0
      %4110 = vmatpush1.bf16.msra.mxu0 0
      %4111 = vmatprep.subr.bf16.mxu0 0
      %4112 = vmatpush1.bf16.msra.mxu0 0
      %4113 = vmatprep.subr.bf16.mxu0 0
      %4114 = vmatpush1.bf16.msra.mxu0 0
      %4115 = vmatprep.subr.bf16.mxu0 0
      %4116 = vmatpush1.bf16.msra.mxu0 0
      %4117 = vmatprep.subr.bf16.mxu0 0
      %4118 = vmatpush1.bf16.msra.mxu0 0
      %4119 = vmatprep.subr.bf16.mxu0 0
      %4120 = vmatpush1.bf16.msra.mxu0 0
      %4121 = vmatprep.subr.bf16.mxu0 0
      %4122 = vmatpush1.bf16.msra.mxu0 0
      %4123 = vmatprep.subr.bf16.mxu0 0
      %4124 = vmatpush1.bf16.msra.mxu0 0
      %4125 = vmatprep.subr.bf16.mxu0 0
      %4126 = vmatpush1.bf16.msra.mxu0 0
      %4127 = vmatprep.mubr.bf16.mxu0 0
      %4128 = vmatmul.mubr.bf16.gmra.mrb[0].mxu0 %v4045
      %v4129 = vpop.f32.mrb[0].mxu0
      %v4130 = vadd.f32 0.0, %v4129
      %v4131 = vpop.f32.mrb[0].mxu0
      %v4132 = vpop.f32.mrb[0].mxu0
      %v4133 = vadd.f32 0.0, %v4132
      %v4134 = vpop.f32.mrb[0].mxu0
      %4135 = vmatprep.mubr.bf16.mxu0 0
      %4136 = vmatmul.mubr.bf16.gmra.mrb[0].mxu0 %v4048
      %v4137 = vpop.f32.mrb[0].mxu0
      %v4138 = vadd.f32 0.0, %v4137
      %v4139 = vpop.f32.mrb[0].mxu0
      %v4140 = vpop.f32.mrb[0].mxu0
      %v4141 = vadd.f32 0.0, %v4140
      %v4142 = vpop.f32.mrb[0].mxu0
      %4143 = vmatprep.mubr.bf16.mxu0 0
      %4144 = vmatmul.mubr.bf16.gmra.mrb[0].mxu0 %v4051
      %v4145 = vpop.f32.mrb[0].mxu0
      %v4146 = vadd.f32 0.0, %v4145
      %v4147 = vpop.f32.mrb[0].mxu0
      %v4148 = vpop.f32.mrb[0].mxu0
      %v4149 = vadd.f32 0.0, %v4148
      %v4150 = vpop.f32.mrb[0].mxu0
      %4151 = vmatprep.mubr.bf16.mxu0 0
      %4152 = vmatmul.mubr.bf16.gmra.mrb[0].mxu0 %v4054
      %v4153 = vpop.f32.mrb[0].mxu0
      %v4154 = vadd.f32 0.0, %v4153
      %v4155 = vpop.f32.mrb[0].mxu0
      %v4156 = vpop.f32.mrb[0].mxu0
      %v4157 = vadd.f32 0.0, %v4156
      %v4158 = vpop.f32.mrb[0].mxu0
      %4159 = vmatprep.mubr.bf16.mxu0 0
      %4160 = vmatmul.mubr.bf16.gmra.mrb[0].mxu0 %v4057
      %v4161 = vpop.f32.mrb[0].mxu0
      %v4162 = vadd.f32 0.0, %v4161
      %v4163 = vpop.f32.mrb[0].mxu0
      %v4164 = vpop.f32.mrb[0].mxu0
      %v4165 = vadd.f32 0.0, %v4164
      %v4166 = vpop.f32.mrb[0].mxu0
      %4167 = vmatprep.mubr.bf16.mxu0 0
      %4168 = vmatmul.mubr.bf16.gmra.mrb[0].mxu0 %v4060
      %v4169 = vpop.f32.mrb[0].mxu0
      %v4170 = vadd.f32 0.0, %v4169
      %v4171 = vpop.f32.mrb[0].mxu0
      %v4172 = vpop.f32.mrb[0].mxu0
      %v4173 = vadd.f32 0.0, %v4172
      %v4174 = vpop.f32.mrb[0].mxu0
      %4175 = vmatprep.mubr.bf16.mxu0 0
      %4176 = vmatmul.mubr.bf16.gmra.mrb[0].mxu0 %v4063
      %v4177 = vpop.f32.mrb[0].mxu0
      %v4178 = vadd.f32 0.0, %v4177
      %v4179 = vpop.f32.mrb[0].mxu0
      %v4180 = vpop.f32.mrb[0].mxu0
      %v4181 = vadd.f32 0.0, %v4180
      %v4182 = vpop.f32.mrb[0].mxu0
      %4183 = vmatprep.mubr.bf16.mxu0 0
      %4184 = vmatmul.mubr.bf16.gmra.mrb[0].mxu0 %v4066
      %v4185 = vpop.f32.mrb[0].mxu0
      %v4186 = vadd.f32 0.0, %v4185
      %v4187 = vpop.f32.mrb[0].mxu0
      %v4188 = vpop.f32.mrb[0].mxu0
      %v4189 = vadd.f32 0.0, %v4188
      %v4190 = vpop.f32.mrb[0].mxu0
      %4191 = vmatprep.mubr.bf16.mxu0 0
      %4192 = vmatmul.mubr.bf16.gmra.mrb[0].mxu0 %v4069
      %v4193 = vpop.f32.mrb[0].mxu0
      %v4194 = vadd.f32 0.0, %v4193
      %v4195 = vpop.f32.mrb[0].mxu0
      %v4196 = vpop.f32.mrb[0].mxu0
      %v4197 = vadd.f32 0.0, %v4196
      %v4198 = vpop.f32.mrb[0].mxu0
      %4199 = vmatprep.mubr.bf16.mxu0 0
      %4200 = vmatmul.mubr.bf16.gmra.mrb[0].mxu0 %v4072
      %v4201 = vpop.f32.mrb[0].mxu0
      %v4202 = vadd.f32 0.0, %v4201
      %v4203 = vpop.f32.mrb[0].mxu0
      %v4204 = vpop.f32.mrb[0].mxu0
      %v4205 = vadd.f32 0.0, %v4204
      %v4206 = vpop.f32.mrb[0].mxu0
      %4207 = vmatprep.mubr.bf16.mxu0 0
      %4208 = vmatmul.mubr.bf16.gmra.mrb[0].mxu0 %v4075
      %v4209 = vpop.f32.mrb[0].mxu0
      %v4210 = vadd.f32 0.0, %v4209
      %v4211 = vpop.f32.mrb[0].mxu0
      %v4212 = vpop.f32.mrb[0].mxu0
      %v4213 = vadd.f32 0.0, %v4212
      %v4214 = vpop.f32.mrb[0].mxu0
      %4215 = vmatprep.mubr.bf16.mxu0 0
      %4216 = vmatmul.mubr.bf16.gmra.mrb[0].mxu0 %v4078
      %v4217 = vpop.f32.mrb[0].mxu0
      %v4218 = vadd.f32 0.0, %v4217
      %v4219 = vpop.f32.mrb[0].mxu0
      %v4220 = vpop.f32.mrb[0].mxu0
      %v4221 = vadd.f32 0.0, %v4220
      %v4222 = vpop.f32.mrb[0].mxu0
      %4223 = vmatprep.mubr.bf16.mxu0 0
      %4224 = vmatmul.mubr.bf16.gmra.mrb[0].mxu0 %v4081
      %v4225 = vpop.f32.mrb[0].mxu0
      %v4226 = vadd.f32 0.0, %v4225
      %v4227 = vpop.f32.mrb[0].mxu0
      %v4228 = vpop.f32.mrb[0].mxu0
      %v4229 = vadd.f32 0.0, %v4228
      %v4230 = vpop.f32.mrb[0].mxu0
      %4231 = vmatprep.mubr.bf16.mxu0 0
      %4232 = vmatmul.mubr.bf16.gmra.mrb[0].mxu0 %v4084
      %v4233 = vpop.f32.mrb[0].mxu0
      %v4234 = vadd.f32 0.0, %v4233
      %v4235 = vpop.f32.mrb[0].mxu0
      %v4236 = vpop.f32.mrb[0].mxu0
      %v4237 = vadd.f32 0.0, %v4236
      %v4238 = vpop.f32.mrb[0].mxu0
      %4239 = vmatprep.mubr.bf16.mxu0 0
      %4240 = vmatmul.mubr.bf16.gmra.mrb[0].mxu0 %v4087
      %v4241 = vpop.f32.mrb[0].mxu0
      %v4242 = vadd.f32 0.0, %v4241
      %v4243 = vpop.f32.mrb[0].mxu0
      %v4244 = vpop.f32.mrb[0].mxu0
      %v4245 = vadd.f32 0.0, %v4244
      %v4246 = vpop.f32.mrb[0].mxu0
      %4247 = vmatprep.mubr.bf16.mxu0 0
      %4248 = vmatmul.mubr.bf16.gmra.mrb[0].mxu0 %v4090
      %v4249 = vpop.f32.mrb[0].mxu0
      %v4250 = vadd.f32 0.0, %v4249
      %v4251 = vpop.f32.mrb[0].mxu0
      %v4252 = vpop.f32.mrb[0].mxu0
      %v4253 = vadd.f32 0.0, %v4252
      %v4254 = vpop.f32.mrb[0].mxu0
      %4255 = vdwg.mxu0
      %v4256 = vadd.f32 %v3530, %v4130
      %v4257 = vadd.f32 %v3531, %v4133
      %v4258 = vadd.f32 %v3532, %v4138
      %v4259 = vadd.f32 %v3533, %v4141
      %v4260 = vadd.f32 %v3534, %v4146
      %v4261 = vadd.f32 %v3535, %v4149
      %v4262 = vadd.f32 %v3536, %v4154
      %v4263 = vadd.f32 %v3537, %v4157
      %v4264 = vadd.f32 %v3538, %v4162
      %v4265 = vadd.f32 %v3539, %v4165
      %v4266 = vadd.f32 %v3540, %v4170
      %v4267 = vadd.f32 %v3541, %v4173
      %v4268 = vadd.f32 %v3542, %v4178
      %v4269 = vadd.f32 %v3543, %v4181
      %v4270 = vadd.f32 %v3544, %v4186
      %v4271 = vadd.f32 %v3545, %v4189
      %v4272 = vadd.f32 %v3546, %v4194
      %v4273 = vadd.f32 %v3547, %v4197
      %v4274 = vadd.f32 %v3548, %v4202
      %v4275 = vadd.f32 %v3549, %v4205
      %v4276 = vadd.f32 %v3550, %v4210
      %v4277 = vadd.f32 %v3551, %v4213
      %v4278 = vadd.f32 %v3552, %v4218
      %v4279 = vadd.f32 %v3553, %v4221
      %v4280 = vadd.f32 %v3554, %v4226
      %v4281 = vadd.f32 %v3555, %v4229
      %v4282 = vadd.f32 %v3556, %v4234
      %v4283 = vadd.f32 %v3557, %v4237
      %v4284 = vadd.f32 %v3558, %v4242
      %v4285 = vadd.f32 %v3559, %v4245
      %v4286 = vadd.f32 %v3560, %v4250
      %v4287 = vadd.f32 %v3561, %v4253
      %v4288 = vld [vmem:[%s3203] sm:$0xe]
      %v4289 = vld [vmem:[%s3203 + $0xc] sm:$0xe]
      %v4290 = vld [vmem:[%s3203 + $0x18] sm:$0xe]
      %v4291 = vld [vmem:[%s3203 + $0x24] sm:$0xe]
      %v4292 = vld [vmem:[%s3203 + $0x30] sm:$0xe]
      %v4293 = vld [vmem:[%s3203 + $0x3c] sm:$0xe]
      %v4294 = vld [vmem:[%s3203 + $0x48] sm:$0xe]
      %v4295 = vld [vmem:[%s3203 + $0x54] sm:$0xe]
      %v4296 = vld [vmem:[%s3203 + $0x60] sm:$0xe]
      %v4297 = vld [vmem:[%s3203 + $0x6c] sm:$0xe]
      %v4298 = vld [vmem:[%s3203 + $0x78] sm:$0xe]
      %v4299 = vld [vmem:[%s3203 + $0x84] sm:$0xe]
      %v4300 = vld [vmem:[%s3203 + $0x90] sm:$0xe]
      %v4301 = vld [vmem:[%s3203 + $0x9c] sm:$0xe]
      %v4302 = vld [vmem:[%s3203 + $0xa8] sm:$0xe]
      %v4303 = vld [vmem:[%s3203 + $0xb4] sm:$0xe]
      %v4352 = vrot.slane %v4288, 5
      %v4353 = vrot.slane %v4352, 4
      %v4354 = vrot.slane %v3563, 5
      %v4355 = vsel %vm1241, %v4353, %v4354
      %v4356 = vrot.slane %v4354, 4
      %v4357 = vrot.slane %v3564, 5
      %v4358 = vsel %vm1241, %v4356, %v4357
      %v4359 = vrot.slane %v4289, 5
      %v4360 = vrot.slane %v4359, 4
      %v4361 = vrot.slane %v3566, 5
      %v4362 = vsel %vm1241, %v4360, %v4361
      %v4363 = vrot.slane %v4361, 4
      %v4364 = vrot.slane %v3567, 5
      %v4365 = vsel %vm1241, %v4363, %v4364
      %v4366 = vrot.slane %v4290, 5
      %v4367 = vrot.slane %v4366, 4
      %v4368 = vrot.slane %v3569, 5
      %v4369 = vsel %vm1241, %v4367, %v4368
      %v4370 = vrot.slane %v4368, 4
      %v4371 = vrot.slane %v3570, 5
      %v4372 = vsel %vm1241, %v4370, %v4371
      %v4373 = vrot.slane %v4291, 5
      %v4374 = vrot.slane %v4373, 4
      %v4375 = vrot.slane %v3572, 5
      %v4376 = vsel %vm1241, %v4374, %v4375
      %v4377 = vrot.slane %v4375, 4
      %v4378 = vrot.slane %v3573, 5
      %v4379 = vsel %vm1241, %v4377, %v4378
      %v4380 = vrot.slane %v4292, 5
      %v4381 = vrot.slane %v4380, 4
      %v4382 = vrot.slane %v3575, 5
      %v4383 = vsel %vm1241, %v4381, %v4382
      %v4384 = vrot.slane %v4382, 4
      %v4385 = vrot.slane %v3576, 5
      %v4386 = vsel %vm1241, %v4384, %v4385
      %v4387 = vrot.slane %v4293, 5
      %v4388 = vrot.slane %v4387, 4
      %v4389 = vrot.slane %v3578, 5
      %v4390 = vsel %vm1241, %v4388, %v4389
      %v4391 = vrot.slane %v4389, 4
      %v4392 = vrot.slane %v3579, 5
      %v4393 = vsel %vm1241, %v4391, %v4392
      %v4394 = vrot.slane %v4294, 5
      %v4395 = vrot.slane %v4394, 4
      %v4396 = vrot.slane %v3581, 5
      %v4397 = vsel %vm1241, %v4395, %v4396
      %v4398 = vrot.slane %v4396, 4
      %v4399 = vrot.slane %v3582, 5
      %v4400 = vsel %vm1241, %v4398, %v4399
      %v4401 = vrot.slane %v4295, 5
      %v4402 = vrot.slane %v4401, 4
      %v4403 = vrot.slane %v3584, 5
      %v4404 = vsel %vm1241, %v4402, %v4403
      %v4405 = vrot.slane %v4403, 4
      %v4406 = vrot.slane %v3585, 5
      %v4407 = vsel %vm1241, %v4405, %v4406
      %v4408 = vrot.slane %v4296, 5
      %v4409 = vrot.slane %v4408, 4
      %v4410 = vrot.slane %v3587, 5
      %v4411 = vsel %vm1241, %v4409, %v4410
      %v4412 = vrot.slane %v4410, 4
      %v4413 = vrot.slane %v3588, 5
      %v4414 = vsel %vm1241, %v4412, %v4413
      %v4415 = vrot.slane %v4297, 5
      %v4416 = vrot.slane %v4415, 4
      %v4417 = vrot.slane %v3590, 5
      %v4418 = vsel %vm1241, %v4416, %v4417
      %v4419 = vrot.slane %v4417, 4
      %v4420 = vrot.slane %v3591, 5
      %v4421 = vsel %vm1241, %v4419, %v4420
      %v4422 = vrot.slane %v4298, 5
      %v4423 = vrot.slane %v4422, 4
      %v4424 = vrot.slane %v3593, 5
      %v4425 = vsel %vm1241, %v4423, %v4424
      %v4426 = vrot.slane %v4424, 4
      %v4427 = vrot.slane %v3594, 5
      %v4428 = vsel %vm1241, %v4426, %v4427
      %v4429 = vrot.slane %v4299, 5
      %v4430 = vrot.slane %v4429, 4
      %v4431 = vrot.slane %v3596, 5
      %v4432 = vsel %vm1241, %v4430, %v4431
      %v4433 = vrot.slane %v4431, 4
      %v4434 = vrot.slane %v3597, 5
      %v4435 = vsel %vm1241, %v4433, %v4434
      %v4436 = vrot.slane %v4300, 5
      %v4437 = vrot.slane %v4436, 4
      %v4438 = vrot.slane %v3599, 5
      %v4439 = vsel %vm1241, %v4437, %v4438
      %v4440 = vrot.slane %v4438, 4
      %v4441 = vrot.slane %v3600, 5
      %v4442 = vsel %vm1241, %v4440, %v4441
      %v4443 = vrot.slane %v4301, 5
      %v4444 = vrot.slane %v4443, 4
      %v4445 = vrot.slane %v3602, 5
      %v4446 = vsel %vm1241, %v4444, %v4445
      %v4447 = vrot.slane %v4445, 4
      %v4448 = vrot.slane %v3603, 5
      %v4449 = vsel %vm1241, %v4447, %v4448
      %v4450 = vrot.slane %v4302, 5
      %v4451 = vrot.slane %v4450, 4
      %v4452 = vrot.slane %v3605, 5
      %v4453 = vsel %vm1241, %v4451, %v4452
      %v4454 = vrot.slane %v4452, 4
      %v4455 = vrot.slane %v3606, 5
      %v4456 = vsel %vm1241, %v4454, %v4455
      %v4457 = vrot.slane %v4303, 5
      %v4458 = vrot.slane %v4457, 4
      %v4459 = vrot.slane %v3608, 5
      %v4460 = vsel %vm1241, %v4458, %v4459
      %v4461 = vrot.slane %v4459, 4
      %v4462 = vrot.slane %v3609, 5
      %v4463 = vsel %vm1241, %v4461, %v4462
      %s4464 = scalar_lea.vmem %s1, 16
      %v4465 = vld [vmem:[%s4464] sm:$0x3]
      %v4466 = vunpack.c.l.b16 %v4355
      %v4467 = vunpack.c.l.b16 %v4358
      %v4468 = vunpack.c.l.b16 %v4362
      %v4469 = vunpack.c.l.b16 %v4365
      %v4470 = vunpack.c.l.b16 %v4369
      %v4471 = vunpack.c.l.b16 %v4372
      %v4472 = vunpack.c.l.b16 %v4376
      %v4473 = vunpack.c.l.b16 %v4379
      %v4474 = vunpack.c.l.b16 %v4383
      %v4475 = vunpack.c.l.b16 %v4386
      %v4476 = vunpack.c.l.b16 %v4390
      %v4477 = vunpack.c.l.b16 %v4393
      %v4478 = vunpack.c.l.b16 %v4397
      %v4479 = vunpack.c.l.b16 %v4400
      %v4480 = vunpack.c.l.b16 %v4404
      %v4481 = vunpack.c.l.b16 %v4407
      %v4482 = vunpack.c.l.b16 %v4411
      %v4483 = vunpack.c.l.b16 %v4414
      %v4484 = vunpack.c.l.b16 %v4418
      %v4485 = vunpack.c.l.b16 %v4421
      %v4486 = vunpack.c.l.b16 %v4425
      %v4487 = vunpack.c.l.b16 %v4428
      %v4488 = vunpack.c.l.b16 %v4432
      %v4489 = vunpack.c.l.b16 %v4435
      %v4490 = vunpack.c.l.b16 %v4439
      %v4491 = vunpack.c.l.b16 %v4442
      %v4492 = vunpack.c.l.b16 %v4446
      %v4493 = vunpack.c.l.b16 %v4449
      %v4494 = vunpack.c.l.b16 %v4453
      %v4495 = vunpack.c.l.b16 %v4456
      %v4496 = vunpack.c.l.b16 %v4460
      %v4497 = vunpack.c.l.b16 %v4463
      %v4498 = vpack.c.b16 %v4467, %v4466
      %v4499 = vpack.c.b16 %v4469, %v4468
      %v4500 = vpack.c.b16 %v4471, %v4470
      %v4501 = vpack.c.b16 %v4473, %v4472
      %v4502 = vpack.c.b16 %v4475, %v4474
      %v4503 = vpack.c.b16 %v4477, %v4476
      %v4504 = vpack.c.b16 %v4479, %v4478
      %v4505 = vpack.c.b16 %v4481, %v4480
      %v4506 = vpack.c.b16 %v4483, %v4482
      %v4507 = vpack.c.b16 %v4485, %v4484
      %v4508 = vpack.c.b16 %v4487, %v4486
      %v4509 = vpack.c.b16 %v4489, %v4488
      %v4510 = vpack.c.b16 %v4491, %v4490
      %v4511 = vpack.c.b16 %v4493, %v4492
      %v4512 = vpack.c.b16 %v4495, %v4494
      %v4513 = vpack.c.b16 %v4497, %v4496
      %v4515 = vsel %vm685, %v4498, 0
      %v4518 = vsel %vm685, %v4499, 0
      %v4521 = vsel %vm685, %v4500, 0
      %v4524 = vsel %vm685, %v4501, 0
      %v4527 = vsel %vm685, %v4502, 0
      %v4530 = vsel %vm685, %v4503, 0
      %v4533 = vsel %vm685, %v4504, 0
      %v4536 = vsel %vm685, %v4505, 0
      %v4539 = vsel %vm685, %v4506, 0
      %v4542 = vsel %vm685, %v4507, 0
      %v4545 = vsel %vm685, %v4508, 0
      %v4548 = vsel %vm685, %v4509, 0
      %v4551 = vsel %vm685, %v4510, 0
      %v4554 = vsel %vm685, %v4511, 0
      %v4557 = vsel %vm685, %v4512, 0
      %v4560 = vsel %vm685, %v4513, 0
      %v4563 = vsel %vm734, %v4465, 0
      %4565 = vmatprep.subr.bf16.mxu0 0
      %4566 = vmatpush1.bf16.msra.mxu0 %v4563
      %4567 = vmatprep.subr.bf16.mxu0 0
      %4568 = vmatpush1.bf16.msra.mxu0 0
      %4569 = vmatprep.subr.bf16.mxu0 0
      %4570 = vmatpush1.bf16.msra.mxu0 0
      %4571 = vmatprep.subr.bf16.mxu0 0
      %4572 = vmatpush1.bf16.msra.mxu0 0
      %4573 = vmatprep.subr.bf16.mxu0 0
      %4574 = vmatpush1.bf16.msra.mxu0 0
      %4575 = vmatprep.subr.bf16.mxu0 0
      %4576 = vmatpush1.bf16.msra.mxu0 0
      %4577 = vmatprep.subr.bf16.mxu0 0
      %4578 = vmatpush1.bf16.msra.mxu0 0
      %4579 = vmatprep.subr.bf16.mxu0 0
      %4580 = vmatpush1.bf16.msra.mxu0 0
      %4581 = vmatprep.subr.bf16.mxu0 0
      %4582 = vmatpush1.bf16.msra.mxu0 0
      %4583 = vmatprep.subr.bf16.mxu0 0
      %4584 = vmatpush1.bf16.msra.mxu0 0
      %4585 = vmatprep.subr.bf16.mxu0 0
      %4586 = vmatpush1.bf16.msra.mxu0 0
      %4587 = vmatprep.subr.bf16.mxu0 0
      %4588 = vmatpush1.bf16.msra.mxu0 0
      %4589 = vmatprep.subr.bf16.mxu0 0
      %4590 = vmatpush1.bf16.msra.mxu0 0
      %4591 = vmatprep.subr.bf16.mxu0 0
      %4592 = vmatpush1.bf16.msra.mxu0 0
      %4593 = vmatprep.subr.bf16.mxu0 0
      %4594 = vmatpush1.bf16.msra.mxu0 0
      %4595 = vmatprep.subr.bf16.mxu0 0
      %4596 = vmatpush1.bf16.msra.mxu0 0
      %4597 = vmatprep.mubr.bf16.mxu0 0
      %4598 = vmatmul.mubr.bf16.gmra.mrb[0].mxu0 %v4515
      %v4599 = vpop.f32.mrb[0].mxu0
      %v4600 = vadd.f32 0.0, %v4599
      %v4601 = vpop.f32.mrb[0].mxu0
      %v4602 = vpop.f32.mrb[0].mxu0
      %v4603 = vadd.f32 0.0, %v4602
      %v4604 = vpop.f32.mrb[0].mxu0
      %4605 = vmatprep.mubr.bf16.mxu0 0
      %4606 = vmatmul.mubr.bf16.gmra.mrb[0].mxu0 %v4518
      %v4607 = vpop.f32.mrb[0].mxu0
      %v4608 = vadd.f32 0.0, %v4607
      %v4609 = vpop.f32.mrb[0].mxu0
      %v4610 = vpop.f32.mrb[0].mxu0
      %v4611 = vadd.f32 0.0, %v4610
      %v4612 = vpop.f32.mrb[0].mxu0
      %4613 = vmatprep.mubr.bf16.mxu0 0
      %4614 = vmatmul.mubr.bf16.gmra.mrb[0].mxu0 %v4521
      %v4615 = vpop.f32.mrb[0].mxu0
      %v4616 = vadd.f32 0.0, %v4615
      %v4617 = vpop.f32.mrb[0].mxu0
      %v4618 = vpop.f32.mrb[0].mxu0
      %v4619 = vadd.f32 0.0, %v4618
      %v4620 = vpop.f32.mrb[0].mxu0
      %4621 = vmatprep.mubr.bf16.mxu0 0
      %4622 = vmatmul.mubr.bf16.gmra.mrb[0].mxu0 %v4524
      %v4623 = vpop.f32.mrb[0].mxu0
      %v4624 = vadd.f32 0.0, %v4623
      %v4625 = vpop.f32.mrb[0].mxu0
      %v4626 = vpop.f32.mrb[0].mxu0
      %v4627 = vadd.f32 0.0, %v4626
      %v4628 = vpop.f32.mrb[0].mxu0
      %4629 = vmatprep.mubr.bf16.mxu0 0
      %4630 = vmatmul.mubr.bf16.gmra.mrb[0].mxu0 %v4527
      %v4631 = vpop.f32.mrb[0].mxu0
      %v4632 = vadd.f32 0.0, %v4631
      %v4633 = vpop.f32.mrb[0].mxu0
      %v4634 = vpop.f32.mrb[0].mxu0
      %v4635 = vadd.f32 0.0, %v4634
      %v4636 = vpop.f32.mrb[0].mxu0
      %4637 = vmatprep.mubr.bf16.mxu0 0
      %4638 = vmatmul.mubr.bf16.gmra.mrb[0].mxu0 %v4530
      %v4639 = vpop.f32.mrb[0].mxu0
      %v4640 = vadd.f32 0.0, %v4639
      %v4641 = vpop.f32.mrb[0].mxu0
      %v4642 = vpop.f32.mrb[0].mxu0
      %v4643 = vadd.f32 0.0, %v4642
      %v4644 = vpop.f32.mrb[0].mxu0
      %4645 = vmatprep.mubr.bf16.mxu0 0
      %4646 = vmatmul.mubr.bf16.gmra.mrb[0].mxu0 %v4533
      %v4647 = vpop.f32.mrb[0].mxu0
      %v4648 = vadd.f32 0.0, %v4647
      %v4649 = vpop.f32.mrb[0].mxu0
      %v4650 = vpop.f32.mrb[0].mxu0
      %v4651 = vadd.f32 0.0, %v4650
      %v4652 = vpop.f32.mrb[0].mxu0
      %4653 = vmatprep.mubr.bf16.mxu0 0
      %4654 = vmatmul.mubr.bf16.gmra.mrb[0].mxu0 %v4536
      %v4655 = vpop.f32.mrb[0].mxu0
      %v4656 = vadd.f32 0.0, %v4655
      %v4657 = vpop.f32.mrb[0].mxu0
      %v4658 = vpop.f32.mrb[0].mxu0
      %v4659 = vadd.f32 0.0, %v4658
      %v4660 = vpop.f32.mrb[0].mxu0
      %4661 = vmatprep.mubr.bf16.mxu0 0
      %4662 = vmatmul.mubr.bf16.gmra.mrb[0].mxu0 %v4539
      %v4663 = vpop.f32.mrb[0].mxu0
      %v4664 = vadd.f32 0.0, %v4663
      %v4665 = vpop.f32.mrb[0].mxu0
      %v4666 = vpop.f32.mrb[0].mxu0
      %v4667 = vadd.f32 0.0, %v4666
      %v4668 = vpop.f32.mrb[0].mxu0
      %4669 = vmatprep.mubr.bf16.mxu0 0
      %4670 = vmatmul.mubr.bf16.gmra.mrb[0].mxu0 %v4542
      %v4671 = vpop.f32.mrb[0].mxu0
      %v4672 = vadd.f32 0.0, %v4671
      %v4673 = vpop.f32.mrb[0].mxu0
      %v4674 = vpop.f32.mrb[0].mxu0
      %v4675 = vadd.f32 0.0, %v4674
      %v4676 = vpop.f32.mrb[0].mxu0
      %4677 = vmatprep.mubr.bf16.mxu0 0
      %4678 = vmatmul.mubr.bf16.gmra.mrb[0].mxu0 %v4545
      %v4679 = vpop.f32.mrb[0].mxu0
      %v4680 = vadd.f32 0.0, %v4679
      %v4681 = vpop.f32.mrb[0].mxu0
      %v4682 = vpop.f32.mrb[0].mxu0
      %v4683 = vadd.f32 0.0, %v4682
      %v4684 = vpop.f32.mrb[0].mxu0
      %4685 = vmatprep.mubr.bf16.mxu0 0
      %4686 = vmatmul.mubr.bf16.gmra.mrb[0].mxu0 %v4548
      %v4687 = vpop.f32.mrb[0].mxu0
      %v4688 = vadd.f32 0.0, %v4687
      %v4689 = vpop.f32.mrb[0].mxu0
      %v4690 = vpop.f32.mrb[0].mxu0
      %v4691 = vadd.f32 0.0, %v4690
      %v4692 = vpop.f32.mrb[0].mxu0
      %4693 = vmatprep.mubr.bf16.mxu0 0
      %4694 = vmatmul.mubr.bf16.gmra.mrb[0].mxu0 %v4551
      %v4695 = vpop.f32.mrb[0].mxu0
      %v4696 = vadd.f32 0.0, %v4695
      %v4697 = vpop.f32.mrb[0].mxu0
      %v4698 = vpop.f32.mrb[0].mxu0
      %v4699 = vadd.f32 0.0, %v4698
      %v4700 = vpop.f32.mrb[0].mxu0
      %4701 = vmatprep.mubr.bf16.mxu0 0
      %4702 = vmatmul.mubr.bf16.gmra.mrb[0].mxu0 %v4554
      %v4703 = vpop.f32.mrb[0].mxu0
      %v4704 = vadd.f32 0.0, %v4703
      %v4705 = vpop.f32.mrb[0].mxu0
      %v4706 = vpop.f32.mrb[0].mxu0
      %v4707 = vadd.f32 0.0, %v4706
      %v4708 = vpop.f32.mrb[0].mxu0
      %4709 = vmatprep.mubr.bf16.mxu0 0
      %4710 = vmatmul.mubr.bf16.gmra.mrb[0].mxu0 %v4557
      %v4711 = vpop.f32.mrb[0].mxu0
      %v4712 = vadd.f32 0.0, %v4711
      %v4713 = vpop.f32.mrb[0].mxu0
      %v4714 = vpop.f32.mrb[0].mxu0
      %v4715 = vadd.f32 0.0, %v4714
      %v4716 = vpop.f32.mrb[0].mxu0
      %4717 = vmatprep.mubr.bf16.mxu0 0
      %4718 = vmatmul.mubr.bf16.gmra.mrb[0].mxu0 %v4560
      %v4719 = vpop.f32.mrb[0].mxu0
      %v4720 = vadd.f32 0.0, %v4719
      %v4721 = vpop.f32.mrb[0].mxu0
      %v4722 = vpop.f32.mrb[0].mxu0
      %v4723 = vadd.f32 0.0, %v4722
      %v4724 = vpop.f32.mrb[0].mxu0
      %4725 = vdwg.mxu0
      %v4726 = vadd.f32 %v4256, %v4600
      %v4727 = vadd.f32 %v4257, %v4603
      %v4728 = vadd.f32 %v4258, %v4608
      %v4729 = vadd.f32 %v4259, %v4611
      %v4730 = vadd.f32 %v4260, %v4616
      %v4731 = vadd.f32 %v4261, %v4619
      %v4732 = vadd.f32 %v4262, %v4624
      %v4733 = vadd.f32 %v4263, %v4627
      %v4734 = vadd.f32 %v4264, %v4632
      %v4735 = vadd.f32 %v4265, %v4635
      %v4736 = vadd.f32 %v4266, %v4640
      %v4737 = vadd.f32 %v4267, %v4643
      %v4738 = vadd.f32 %v4268, %v4648
      %v4739 = vadd.f32 %v4269, %v4651
      %v4740 = vadd.f32 %v4270, %v4656
      %v4741 = vadd.f32 %v4271, %v4659
      %v4742 = vadd.f32 %v4272, %v4664
      %v4743 = vadd.f32 %v4273, %v4667
      %v4744 = vadd.f32 %v4274, %v4672
      %v4745 = vadd.f32 %v4275, %v4675
      %v4746 = vadd.f32 %v4276, %v4680
      %v4747 = vadd.f32 %v4277, %v4683
      %v4748 = vadd.f32 %v4278, %v4688
      %v4749 = vadd.f32 %v4279, %v4691
      %v4750 = vadd.f32 %v4280, %v4696
      %v4751 = vadd.f32 %v4281, %v4699
      %v4752 = vadd.f32 %v4282, %v4704
      %v4753 = vadd.f32 %v4283, %v4707
      %v4754 = vadd.f32 %v4284, %v4712
      %v4755 = vadd.f32 %v4285, %v4715
      %v4756 = vadd.f32 %v4286, %v4720
      %v4757 = vadd.f32 %v4287, %v4723
      %v4758 = vld [vmem:[%s2] sm:$0x1]
      %v4760 = vlaneseq
      %v4761 = vshrl.u32 %v4760, 7
      %v4762 = vsub.s32 0, %v4761
      %v4763 = vrot.slane %v4758, %v4762
      %v4765 = vmul.f32 %v4726, %v4763
      %v4766 = vmul.f32 %v4727, %v4763
      %v4767 = vmul.f32 %v4728, %v4763
      %v4768 = vmul.f32 %v4729, %v4763
      %v4769 = vmul.f32 %v4730, %v4763
      %v4770 = vmul.f32 %v4731, %v4763
      %v4771 = vmul.f32 %v4732, %v4763
      %v4772 = vmul.f32 %v4733, %v4763
      %v4773 = vmul.f32 %v4734, %v4763
      %v4774 = vmul.f32 %v4735, %v4763
      %v4775 = vmul.f32 %v4736, %v4763
      %v4776 = vmul.f32 %v4737, %v4763
      %v4777 = vmul.f32 %v4738, %v4763
      %v4778 = vmul.f32 %v4739, %v4763
      %v4779 = vmul.f32 %v4740, %v4763
      %v4780 = vmul.f32 %v4741, %v4763
      %v4781 = vmul.f32 %v4742, %v4763
      %v4782 = vmul.f32 %v4743, %v4763
      %v4783 = vmul.f32 %v4744, %v4763
      %v4784 = vmul.f32 %v4745, %v4763
      %v4785 = vmul.f32 %v4746, %v4763
      %v4786 = vmul.f32 %v4747, %v4763
      %v4787 = vmul.f32 %v4748, %v4763
      %v4788 = vmul.f32 %v4749, %v4763
      %v4789 = vmul.f32 %v4750, %v4763
      %v4790 = vmul.f32 %v4751, %v4763
      %v4791 = vmul.f32 %v4752, %v4763
      %v4792 = vmul.f32 %v4753, %v4763
      %v4793 = vmul.f32 %v4754, %v4763
      %v4794 = vmul.f32 %v4755, %v4763
      %v4795 = vmul.f32 %v4756, %v4763
      %v4796 = vmul.f32 %v4757, %v4763
      %v4797 = vld [vmem:[%s3] sm:$0x1]
      %v4799 = vlaneseq
      %v4800 = vshrl.u32 %v4799, 7
      %v4801 = vsub.s32 0, %v4800
      %v4802 = vrot.slane %v4797, %v4801
      %v4804 = vadd.f32 %v4765, %v4802
      %v4805 = vadd.f32 %v4766, %v4802
      %v4806 = vadd.f32 %v4767, %v4802
      %v4807 = vadd.f32 %v4768, %v4802
      %v4808 = vadd.f32 %v4769, %v4802
      %v4809 = vadd.f32 %v4770, %v4802
      %v4810 = vadd.f32 %v4771, %v4802
      %v4811 = vadd.f32 %v4772, %v4802
      %v4812 = vadd.f32 %v4773, %v4802
      %v4813 = vadd.f32 %v4774, %v4802
      %v4814 = vadd.f32 %v4775, %v4802
      %v4815 = vadd.f32 %v4776, %v4802
      %v4816 = vadd.f32 %v4777, %v4802
      %v4817 = vadd.f32 %v4778, %v4802
      %v4818 = vadd.f32 %v4779, %v4802
      %v4819 = vadd.f32 %v4780, %v4802
      %v4820 = vadd.f32 %v4781, %v4802
      %v4821 = vadd.f32 %v4782, %v4802
      %v4822 = vadd.f32 %v4783, %v4802
      %v4823 = vadd.f32 %v4784, %v4802
      %v4824 = vadd.f32 %v4785, %v4802
      %v4825 = vadd.f32 %v4786, %v4802
      %v4826 = vadd.f32 %v4787, %v4802
      %v4827 = vadd.f32 %v4788, %v4802
      %v4828 = vadd.f32 %v4789, %v4802
      %v4829 = vadd.f32 %v4790, %v4802
      %v4830 = vadd.f32 %v4791, %v4802
      %v4831 = vadd.f32 %v4792, %v4802
      %v4832 = vadd.f32 %v4793, %v4802
      %v4833 = vadd.f32 %v4794, %v4802
      %v4834 = vadd.f32 %v4795, %v4802
      %v4835 = vadd.f32 %v4796, %v4802
      %v4836 = vxor.u32 %v4804, 2147483648
      %v4837 = vxor.u32 %v4805, 2147483648
      %v4838 = vxor.u32 %v4806, 2147483648
      %v4839 = vxor.u32 %v4807, 2147483648
      %v4840 = vxor.u32 %v4808, 2147483648
      %v4841 = vxor.u32 %v4809, 2147483648
      %v4842 = vxor.u32 %v4810, 2147483648
      %v4843 = vxor.u32 %v4811, 2147483648
      %v4844 = vxor.u32 %v4812, 2147483648
      %v4845 = vxor.u32 %v4813, 2147483648
      %v4846 = vxor.u32 %v4814, 2147483648
      %v4847 = vxor.u32 %v4815, 2147483648
      %v4848 = vxor.u32 %v4816, 2147483648
      %v4849 = vxor.u32 %v4817, 2147483648
      %v4850 = vxor.u32 %v4818, 2147483648
      %v4851 = vxor.u32 %v4819, 2147483648
      %v4852 = vxor.u32 %v4820, 2147483648
      %v4853 = vxor.u32 %v4821, 2147483648
      %v4854 = vxor.u32 %v4822, 2147483648
      %v4855 = vxor.u32 %v4823, 2147483648
      %v4856 = vxor.u32 %v4824, 2147483648
      %v4857 = vxor.u32 %v4825, 2147483648
      %v4858 = vxor.u32 %v4826, 2147483648
      %v4859 = vxor.u32 %v4827, 2147483648
      %v4860 = vxor.u32 %v4828, 2147483648
      %v4861 = vxor.u32 %v4829, 2147483648
      %v4862 = vxor.u32 %v4830, 2147483648
      %v4863 = vxor.u32 %v4831, 2147483648
      %v4864 = vxor.u32 %v4832, 2147483648
      %v4865 = vxor.u32 %v4833, 2147483648
      %v4866 = vxor.u32 %v4834, 2147483648
      %v4867 = vxor.u32 %v4835, 2147483648
      %v4868 = vmul.f32 %v4836, 1.442695
      %v4869 = vpow.pop %v4868
      %v4870 = vmul.f32 %v4837, 1.442695
      %v4871 = vpow.pop %v4870
      %v4872 = vmul.f32 %v4838, 1.442695
      %v4873 = vpow.pop %v4872
      %v4874 = vmul.f32 %v4839, 1.442695
      %v4875 = vpow.pop %v4874
      %v4876 = vmul.f32 %v4840, 1.442695
      %v4877 = vpow.pop %v4876
      %v4878 = vmul.f32 %v4841, 1.442695
      %v4879 = vpow.pop %v4878
      %v4880 = vmul.f32 %v4842, 1.442695
      %v4881 = vpow.pop %v4880
      %v4882 = vmul.f32 %v4843, 1.442695
      %v4883 = vpow.pop %v4882
      %v4884 = vmul.f32 %v4844, 1.442695
      %v4885 = vpow.pop %v4884
      %v4886 = vmul.f32 %v4845, 1.442695
      %v4887 = vpow.pop %v4886
      %v4888 = vmul.f32 %v4846, 1.442695
      %v4889 = vpow.pop %v4888
      %v4890 = vmul.f32 %v4847, 1.442695
      %v4891 = vpow.pop %v4890
      %v4892 = vmul.f32 %v4848, 1.442695
      %v4893 = vpow.pop %v4892
      %v4894 = vmul.f32 %v4849, 1.442695
      %v4895 = vpow.pop %v4894
      %v4896 = vmul.f32 %v4850, 1.442695
      %v4897 = vpow.pop %v4896
      %v4898 = vmul.f32 %v4851, 1.442695
      %v4899 = vpow.pop %v4898
      %v4900 = vmul.f32 %v4852, 1.442695
      %v4901 = vpow.pop %v4900
      %v4902 = vmul.f32 %v4853, 1.442695
      %v4903 = vpow.pop %v4902
      %v4904 = vmul.f32 %v4854, 1.442695
      %v4905 = vpow.pop %v4904
      %v4906 = vmul.f32 %v4855, 1.442695
      %v4907 = vpow.pop %v4906
      %v4908 = vmul.f32 %v4856, 1.442695
      %v4909 = vpow.pop %v4908
      %v4910 = vmul.f32 %v4857, 1.442695
      %v4911 = vpow.pop %v4910
      %v4912 = vmul.f32 %v4858, 1.442695
      %v4913 = vpow.pop %v4912
      %v4914 = vmul.f32 %v4859, 1.442695
      %v4915 = vpow.pop %v4914
      %v4916 = vmul.f32 %v4860, 1.442695
      %v4917 = vpow.pop %v4916
      %v4918 = vmul.f32 %v4861, 1.442695
      %v4919 = vpow.pop %v4918
      %v4920 = vmul.f32 %v4862, 1.442695
      %v4921 = vpow.pop %v4920
      %v4922 = vmul.f32 %v4863, 1.442695
      %v4923 = vpow.pop %v4922
      %v4924 = vmul.f32 %v4864, 1.442695
      %v4925 = vpow.pop %v4924
      %v4926 = vmul.f32 %v4865, 1.442695
      %v4927 = vpow.pop %v4926
      %v4928 = vmul.f32 %v4866, 1.442695
      %v4929 = vpow.pop %v4928
      %v4930 = vmul.f32 %v4867, 1.442695
      %v4931 = vpow.pop %v4930
      %v4932 = vadd.f32 %v4869, 1.0
      %v4933 = vadd.f32 %v4871, 1.0
      %v4934 = vadd.f32 %v4873, 1.0
      %v4935 = vadd.f32 %v4875, 1.0
      %v4936 = vadd.f32 %v4877, 1.0
      %v4937 = vadd.f32 %v4879, 1.0
      %v4938 = vadd.f32 %v4881, 1.0
      %v4939 = vadd.f32 %v4883, 1.0
      %v4940 = vadd.f32 %v4885, 1.0
      %v4941 = vadd.f32 %v4887, 1.0
      %v4942 = vadd.f32 %v4889, 1.0
      %v4943 = vadd.f32 %v4891, 1.0
      %v4944 = vadd.f32 %v4893, 1.0
      %v4945 = vadd.f32 %v4895, 1.0
      %v4946 = vadd.f32 %v4897, 1.0
      %v4947 = vadd.f32 %v4899, 1.0
      %v4948 = vadd.f32 %v4901, 1.0
      %v4949 = vadd.f32 %v4903, 1.0
      %v4950 = vadd.f32 %v4905, 1.0
      %v4951 = vadd.f32 %v4907, 1.0
      %v4952 = vadd.f32 %v4909, 1.0
      %v4953 = vadd.f32 %v4911, 1.0
      %v4954 = vadd.f32 %v4913, 1.0
      %v4955 = vadd.f32 %v4915, 1.0
      %v4956 = vadd.f32 %v4917, 1.0
      %v4957 = vadd.f32 %v4919, 1.0
      %v4958 = vadd.f32 %v4921, 1.0
      %v4959 = vadd.f32 %v4923, 1.0
      %v4960 = vadd.f32 %v4925, 1.0
      %v4961 = vadd.f32 %v4927, 1.0
      %v4962 = vadd.f32 %v4929, 1.0
      %v4963 = vadd.f32 %v4931, 1.0
      %v4964 = vrcp.pop %v4932
      %v4965 = vmul.f32 1.0, %v4964
      %v4966 = vrcp.pop %v4933
      %v4967 = vmul.f32 1.0, %v4966
      %v4968 = vrcp.pop %v4934
      %v4969 = vmul.f32 1.0, %v4968
      %v4970 = vrcp.pop %v4935
      %v4971 = vmul.f32 1.0, %v4970
      %v4972 = vrcp.pop %v4936
      %v4973 = vmul.f32 1.0, %v4972
      %v4974 = vrcp.pop %v4937
      %v4975 = vmul.f32 1.0, %v4974
      %v4976 = vrcp.pop %v4938
      %v4977 = vmul.f32 1.0, %v4976
      %v4978 = vrcp.pop %v4939
      %v4979 = vmul.f32 1.0, %v4978
      %v4980 = vrcp.pop %v4940
      %v4981 = vmul.f32 1.0, %v4980
      %v4982 = vrcp.pop %v4941
      %v4983 = vmul.f32 1.0, %v4982
      %v4984 = vrcp.pop %v4942
      %v4985 = vmul.f32 1.0, %v4984
      %v4986 = vrcp.pop %v4943
      %v4987 = vmul.f32 1.0, %v4986
      %v4988 = vrcp.pop %v4944
      %v4989 = vmul.f32 1.0, %v4988
      %v4990 = vrcp.pop %v4945
      %v4991 = vmul.f32 1.0, %v4990
      %v4992 = vrcp.pop %v4946
      %v4993 = vmul.f32 1.0, %v4992
      %v4994 = vrcp.pop %v4947
      %v4995 = vmul.f32 1.0, %v4994
      %v4996 = vrcp.pop %v4948
      %v4997 = vmul.f32 1.0, %v4996
      %v4998 = vrcp.pop %v4949
      %v4999 = vmul.f32 1.0, %v4998
      %v5000 = vrcp.pop %v4950
      %v5001 = vmul.f32 1.0, %v5000
      %v5002 = vrcp.pop %v4951
      %v5003 = vmul.f32 1.0, %v5002
      %v5004 = vrcp.pop %v4952
      %v5005 = vmul.f32 1.0, %v5004
      %v5006 = vrcp.pop %v4953
      %v5007 = vmul.f32 1.0, %v5006
      %v5008 = vrcp.pop %v4954
      %v5009 = vmul.f32 1.0, %v5008
      %v5010 = vrcp.pop %v4955
      %v5011 = vmul.f32 1.0, %v5010
      %v5012 = vrcp.pop %v4956
      %v5013 = vmul.f32 1.0, %v5012
      %v5014 = vrcp.pop %v4957
      %v5015 = vmul.f32 1.0, %v5014
      %v5016 = vrcp.pop %v4958
      %v5017 = vmul.f32 1.0, %v5016
      %v5018 = vrcp.pop %v4959
      %v5019 = vmul.f32 1.0, %v5018
      %v5020 = vrcp.pop %v4960
      %v5021 = vmul.f32 1.0, %v5020
      %v5022 = vrcp.pop %v4961
      %v5023 = vmul.f32 1.0, %v5022
      %v5024 = vrcp.pop %v4962
      %v5025 = vmul.f32 1.0, %v5024
      %v5026 = vrcp.pop %v4963
      %v5027 = vmul.f32 1.0, %v5026
      %v5028 = vmul.f32 %v4804, %v4965
      %v5029 = vmul.f32 %v4805, %v4967
      %v5030 = vmul.f32 %v4806, %v4969
      %v5031 = vmul.f32 %v4807, %v4971
      %v5032 = vmul.f32 %v4808, %v4973
      %v5033 = vmul.f32 %v4809, %v4975
      %v5034 = vmul.f32 %v4810, %v4977
      %v5035 = vmul.f32 %v4811, %v4979
      %v5036 = vmul.f32 %v4812, %v4981
      %v5037 = vmul.f32 %v4813, %v4983
      %v5038 = vmul.f32 %v4814, %v4985
      %v5039 = vmul.f32 %v4815, %v4987
      %v5040 = vmul.f32 %v4816, %v4989
      %v5041 = vmul.f32 %v4817, %v4991
      %v5042 = vmul.f32 %v4818, %v4993
      %v5043 = vmul.f32 %v4819, %v4995
      %v5044 = vmul.f32 %v4820, %v4997
      %v5045 = vmul.f32 %v4821, %v4999
      %v5046 = vmul.f32 %v4822, %v5001
      %v5047 = vmul.f32 %v4823, %v5003
      %v5048 = vmul.f32 %v4824, %v5005
      %v5049 = vmul.f32 %v4825, %v5007
      %v5050 = vmul.f32 %v4826, %v5009
      %v5051 = vmul.f32 %v4827, %v5011
      %v5052 = vmul.f32 %v4828, %v5013
      %v5053 = vmul.f32 %v4829, %v5015
      %v5054 = vmul.f32 %v4830, %v5017
      %v5055 = vmul.f32 %v4831, %v5019
      %v5056 = vmul.f32 %v4832, %v5021
      %v5057 = vmul.f32 %v4833, %v5023
      %v5058 = vmul.f32 %v4834, %v5025
      %v5059 = vmul.f32 %v4835, %v5027
      %5060 = vxpose.xlu0.b32.start [1/16] %v5028, 128
      %5061 = vxpose.xlu0.b32.cont [2/16] %v5029, 128
      %5062 = vxpose.xlu0.b32.cont [3/16] %v5030, 128
      %5063 = vxpose.xlu0.b32.cont [4/16] %v5031, 128
      %5064 = vxpose.xlu0.b32.cont [5/16] %v5032, 128
      %5065 = vxpose.xlu0.b32.cont [6/16] %v5033, 128
      %5066 = vxpose.xlu0.b32.cont [7/16] %v5034, 128
      %5067 = vxpose.xlu0.b32.cont [8/16] %v5035, 128
      %5068 = vxpose.xlu0.b32.cont [9/16] %v5036, 128
      %5069 = vxpose.xlu0.b32.cont [10/16] %v5037, 128
      %5070 = vxpose.xlu0.b32.cont [11/16] %v5038, 128
      %5071 = vxpose.xlu0.b32.cont [12/16] %v5039, 128
      %5072 = vxpose.xlu0.b32.cont [13/16] %v5040, 128
      %5073 = vxpose.xlu0.b32.cont [14/16] %v5041, 128
      %5074 = vxpose.xlu0.b32.cont [15/16] %v5042, 128
      %5075 = vxpose.xlu0.b32.end [16/16] %v5043, 128
      %v5076 = vpop.trf.xlu0
      %v5077 = vpop.trf.xlu0
      %v5078 = vpop.trf.xlu0
      %v5079 = vpop.trf.xlu0
      %v5080 = vpop.trf.xlu0
      %v5081 = vpop.trf.xlu0
      %v5082 = vpop.trf.xlu0
      %v5083 = vpop.trf.xlu0
      %v5084 = vpop.trf.xlu0
      %v5085 = vpop.trf.xlu0
      %v5086 = vpop.trf.xlu0
      %v5087 = vpop.trf.xlu0
      %v5088 = vpop.trf.xlu0
      %v5089 = vpop.trf.xlu0
      %v5090 = vpop.trf.xlu0
      %v5091 = vpop.trf.xlu0
      %5092 = vxpose.xlu0.b32.start [1/16] %v5044, 128
      %5093 = vxpose.xlu0.b32.cont [2/16] %v5045, 128
      %5094 = vxpose.xlu0.b32.cont [3/16] %v5046, 128
      %5095 = vxpose.xlu0.b32.cont [4/16] %v5047, 128
      %5096 = vxpose.xlu0.b32.cont [5/16] %v5048, 128
      %5097 = vxpose.xlu0.b32.cont [6/16] %v5049, 128
      %5098 = vxpose.xlu0.b32.cont [7/16] %v5050, 128
      %5099 = vxpose.xlu0.b32.cont [8/16] %v5051, 128
      %5100 = vxpose.xlu0.b32.cont [9/16] %v5052, 128
      %5101 = vxpose.xlu0.b32.cont [10/16] %v5053, 128
      %5102 = vxpose.xlu0.b32.cont [11/16] %v5054, 128
      %5103 = vxpose.xlu0.b32.cont [12/16] %v5055, 128
      %5104 = vxpose.xlu0.b32.cont [13/16] %v5056, 128
      %5105 = vxpose.xlu0.b32.cont [14/16] %v5057, 128
      %5106 = vxpose.xlu0.b32.cont [15/16] %v5058, 128
      %5107 = vxpose.xlu0.b32.end [16/16] %v5059, 128
      %v5108 = vpop.trf.xlu0
      %v5109 = vpop.trf.xlu0
      %v5110 = vpop.trf.xlu0
      %v5111 = vpop.trf.xlu0
      %v5112 = vpop.trf.xlu0
      %v5113 = vpop.trf.xlu0
      %v5114 = vpop.trf.xlu0
      %v5115 = vpop.trf.xlu0
      %v5116 = vpop.trf.xlu0
      %v5117 = vpop.trf.xlu0
      %v5118 = vpop.trf.xlu0
      %v5119 = vpop.trf.xlu0
      %v5120 = vpop.trf.xlu0
      %v5121 = vpop.trf.xlu0
      %v5122 = vpop.trf.xlu0
      %v5123 = vpop.trf.xlu0
      %5124 = vst [vmem:[%s197] sm:$0xff] %v5076
      %5125 = vst [vmem:[%s197 + $0x8] sm:$0xff] %v5108
      %p5126 = scmp.lt.s32.totalorder %s15, 1
      %s5127 = scalar_select %p5126, %s15, 1
      %s5128 = smul.addr %s5127, 2
      %s5129 = smul.addr %s5128, 8
      %s5130 = scalar_lea.vmem %s4, %s5129
      // Predicated region
      $region37: #{conv_layer_2d.3} parent=35 // pred_check
        %p5131 = pneg %p122
      $region38: #{conv_layer_2d.3} parent=35 // pred_check_branch
        %5133 = sbr.rel (%p5131) target = $region40
      $region39: #{conv_layer_2d.3} parent=35 // pred_region
        _
      $region40: #{conv_layer_2d.3} parent=35 // pred_fallthru
        _
    $region36: #{conv_layer_2d.3} parent=5 // pred_fallthru
      _
    %p5134 = scmp.le.s32.totalorder 2, %s10
    // Predicated region
    $region41: #{conv_layer_2d.3} parent=5 // pred_check
      %p5135 = pneg %p5134
    $region42: #{conv_layer_2d.3} parent=5 // pred_check_branch
      %5137 = sbr.rel (%p5135) target = $region44
    $region43: #{conv_layer_2d.3} parent=5 // pred_region
      %s5138 = ssub.s32 %s10, 2
      // Predicated region
      $region45: #{conv_layer_2d.3} parent=43 // pred_check
        %p5139 = pneg %p128
      $region46: #{conv_layer_2d.3} parent=43 // pred_check_branch
        %5141 = sbr.rel (%p5139) target = $region48
      $region47: #{conv_layer_2d.3} parent=43 // pred_region
        %p5142 = scmp.lt.s32.totalorder %s16, 1
        %s5143 = scalar_select %p5142, %s16, 1
        %s5144 = smul.addr %s5143, 2
        %s5145 = smul.addr %s5144, 8
        %s5146 = scalar_lea.vmem %s4, %s5145
      $region48: #{conv_layer_2d.3} parent=43 // pred_fallthru
        _
    $region44: #{conv_layer_2d.3} parent=5 // pred_fallthru
      _
  $region6: #{conv_layer_2d.3} parent=0 // loop_footer
    %s14 = sadd.s32 1, %s10
  $region7: #{conv_layer_2d.3} parent=0 // loop_footer_branch
    %9 = sbr.rel target = $region3
  $region8: #{conv_layer_2d.3} parent=0 // loop_exit
    _

</llo_original>
